<compile_context>
chip_gen: v7x
topology: tpu7x:2x2x1
jax: 0.10.0
libtpu: 0.0.40
codegen_flags: <defaults>
</compile_context>

<pallas_src>
import functools

import jax
import jax.numpy as jnp
import numpy as np
from jax import lax
from jax.experimental import pallas as pl
from jax.experimental.pallas import tpu as pltpu

jax.config.update("jax_default_matmul_precision", "highest")


def _round_up(x, m):
    return ((x + m - 1) // m) * m


# ----------------------------- Pallas kernels -----------------------------

def _linear_kernel(x_ref, w_ref, b_ref, o_ref, *, relu):
    """o = relu?(x @ w + b);  x:(TM,K)  w:(K,Np)  b:(1,Np)."""
    y = jnp.dot(x_ref[...], w_ref[...], preferred_element_type=jnp.float32)
    y = y + b_ref[...]
    if relu:
        y = jnp.maximum(y, 0.0)
    o_ref[...] = y


def linear(x, w_t, b, *, relu=False, tm=512):
    """y = relu?(x @ w_t + b), row-tiled over M; lane-padded N -> mult of 128."""
    M, K = x.shape
    N = w_t.shape[1]
    Np = _round_up(N, 128)
    tm_eff = min(tm, _round_up(M, 8))        # row tile, multiple of 8 sublanes
    Mp = _round_up(M, tm_eff)

    xp = x if Mp == M else jnp.pad(x, ((0, Mp - M), (0, 0)))
    wp = w_t if Np == N else jnp.pad(w_t, ((0, 0), (0, Np - N)))
    bp = b if Np == N else jnp.pad(b, ((0, Np - N),))

    out = pl.pallas_call(
        functools.partial(_linear_kernel, relu=relu),
        out_shape=jax.ShapeDtypeStruct((Mp, Np), jnp.float32),
        grid_spec=pltpu.PrefetchScalarGridSpec(
            num_scalar_prefetch=0,
            grid=(Mp // tm_eff,),
            in_specs=[pl.BlockSpec((tm_eff, K), lambda i: (i, 0)),
                      pl.BlockSpec((K, Np), lambda i: (0, 0)),
                      pl.BlockSpec((1, Np), lambda i: (0, 0))],
            out_specs=pl.BlockSpec((tm_eff, Np), lambda i: (i, 0)),
        ),
        compiler_params=pltpu.CompilerParams(
            dimension_semantics=("parallel",)),
    )(xp, wp, bp.reshape(1, Np))
    return out[:M, :N]


def _lstm_kernel(gx_ref, whh_ref, h_out_ref, h_ref, c_ref, *, t_blk, hidden):
    """t_blk LSTM steps (cuDNN i,f,g,o gate order); emits h only."""
    @pl.when(pl.program_id(0) == 0)
    def _():
        h_ref[...] = jnp.zeros_like(h_ref)
        c_ref[...] = jnp.zeros_like(c_ref)

    H = hidden

    def step(i, carry):
        # gx already contains x0 @ w_ih.T + b_ih + b_hh (no recurrence needed)
        gates = gx_ref[i] + jnp.dot(h_ref[...], whh_ref[...],
                                    preferred_element_type=jnp.float32)
        i_g = jax.nn.sigmoid(gates[:, 0:H])
        f_g = jax.nn.sigmoid(gates[:, H:2 * H])
        g_g = jnp.tanh(gates[:, 2 * H:3 * H])
        o_g = jax.nn.sigmoid(gates[:, 3 * H:4 * H])
        c_new = f_g * c_ref[...] + i_g * g_g
        h_new = o_g * jnp.tanh(c_new)
        c_ref[...] = c_new
        h_ref[...] = h_new
        h_out_ref[i] = h_new
        return carry

    # Unrolled inner loop over the time block: amortizes per-grid-step overhead
    # and exposes MXU/EUP overlap to the scheduler.
    lax.fori_loop(0, t_blk, step, 0, unroll=True)


def lstm_hidden(gx, w_hh_t, *, t_blk=16):
    """gx:(nt,ngrid,4H), w_hh_t:(H,4H) -> h:(nt,ngrid,H) (sequential over nt)."""
    nt, ngrid, G = gx.shape
    H = G // 4
    tb = min(t_blk, nt)
    ntp = _round_up(nt, tb)
    gxp = gx if ntp == nt else jnp.pad(gx, ((0, ntp - nt), (0, 0), (0, 0)))

    h = pl.pallas_call(
        functools.partial(_lstm_kernel, t_blk=tb, hidden=H),
        out_shape=jax.ShapeDtypeStruct((ntp, ngrid, H), jnp.float32),
        grid_spec=pltpu.PrefetchScalarGridSpec(
            num_scalar_prefetch=0,
            grid=(ntp // tb,),
            in_specs=[pl.BlockSpec((tb, ngrid, G), lambda t: (t, 0, 0)),
                      pl.BlockSpec((H, G), lambda t: (0, 0))],
            out_specs=pl.BlockSpec((tb, ngrid, H), lambda t: (t, 0, 0)),
            scratch_shapes=[pltpu.VMEM((ngrid, H), jnp.float32),   # h carry
                            pltpu.VMEM((ngrid, H), jnp.float32)],  # c carry
        ),
        compiler_params=pltpu.CompilerParams(
            dimension_semantics=("arbitrary",)),  # time recurrence is serial
    )(gxp, w_hh_t)
    return h[:nt]


# ----------------------------- model forward ------------------------------

def conv_out_len(lin, k, s):
    return (lin - k) // s + 1


def cnn1d_lstm_forward(x, z, p, cfg):
    """x:(nt,ngrid,nx), z:(nt,ngrid,nobs) -> (nt,ngrid,ny)."""
    nt, ngrid, nobs = z.shape
    nx = x.shape[2]
    C1, C2 = cfg["nkernel"]
    K1, K2 = cfg["kernelSize"]
    S1, S2 = cfg["stride"]
    H = cfg["hiddenSize"]
    ny = cfg["ny"]
    L1 = conv_out_len(nobs, K1, S1)
    L2 = conv_out_len(L1, K2, S2)
    B = nt * ngrid

    # ---- CNN layer 1: im2col (glue) + matmul/bias/ReLU (Pallas) ----
    zf = z.reshape(B, nobs)
    idx1 = jnp.arange(L1)[:, None] * S1 + jnp.arange(K1)[None, :]      # (L1,K1)
    zcol1 = zf[:, idx1].reshape(B * L1, K1)
    h1 = linear(zcol1, p["w1"].T, p["b1"], relu=True)                  # (B*L1,C1)
    h1 = h1.reshape(B, L1, C1)

    # ---- CNN layer 2 ----
    pos2 = jnp.arange(L2) * S2
    zcol2 = jnp.concatenate([h1[:, pos2 + k, :] for k in range(K2)],
                            axis=-1)                                   # (B,L2,K2*C1)
    w2flat = jnp.transpose(p["w2"], (0, 2, 1)).reshape(C2, K2 * C1)    # [d, k*C1+c]
    h2 = linear(zcol2.reshape(B * L2, K2 * C1), w2flat.T, p["b2"], relu=True)
    h2 = h2.reshape(B, L2, C2)
    # PyTorch view flattens (C2, L2) channel-major: feature index = c*L2 + l
    z0 = jnp.transpose(h2, (0, 2, 1)).reshape(nt, ngrid, C2 * L2)

    # ---- linearIn + ReLU ----
    xh = linear(x.reshape(B, nx), p["w_in"].T, p["b_in"],
                relu=True).reshape(nt, ngrid, H)

    # ---- LSTM input-side gates: cat(x, z0) @ w_ih.T + b_ih + b_hh ----
    x0 = jnp.concatenate([xh, z0], axis=2)                             # (nt,ngrid,Nf)
    Nf = x0.shape[2]
    gx = linear(x0.reshape(B, Nf), p["w_ih"].T,
                p["b_ih"] + p["b_hh"]).reshape(nt, ngrid, 4 * H)

    # ---- LSTM recurrence (Pallas, sequential over nt; h only) ----
    h = lstm_hidden(gx, p["w_hh"].T, t_blk=cfg.get("t_blk", 16))       # (nt,ngrid,H)

    # ---- linearOut hoisted out of the recurrence: one batched matmul ----
    out = linear(h.reshape(B, H), p["w_out"].T, p["b_out"])
    return out.reshape(nt, ngrid, ny)


# ------------------------- deterministic parameters ------------------------

def init_params(key, cfg):
    nx, ny, nobs, H = cfg["nx"], cfg["ny"], cfg["nobs"], cfg["hiddenSize"]
    C1, C2 = cfg["nkernel"]
    K1, K2 = cfg["kernelSize"]
    S1, S2 = cfg["stride"]
    L1 = conv_out_len(nobs, K1, S1)
    L2 = conv_out_len(L1, K2, S2)
    Ncnnout = C2 * L2
    Nf = Ncnnout + H
    ks = jax.random.split(key, 12)

    def u(k, shape, fan_in):
        b = 1.0 / np.sqrt(fan_in)
        return jax.random.uniform(k, shape, jnp.float32, -b, b)

    return dict(
        w1=u(ks[0], (C1, K1), 1 * K1),        b1=u(ks[1], (C1,), 1 * K1),
        w2=u(ks[2], (C2, C1, K2), C1 * K2),   b2=u(ks[3], (C2,), C1 * K2),
        w_in=u(ks[4], (H, nx), nx),           b_in=u(ks[5], (H,), nx),
        w_ih=u(ks[6], (4 * H, Nf), H),        w_hh=u(ks[7], (4 * H, H), H),
        b_ih=u(ks[8], (4 * H,), H),           b_hh=u(ks[9], (4 * H,), H),
        w_out=u(ks[10], (ny, H), H),          b_out=u(ks[11], (ny,), H),
    )


# --------------------------- pure-JAX reference ----------------------------

def reference_forward(x, z, p, cfg):
    nt, ngrid, nobs = z.shape
    S1, S2 = cfg["stride"]
    H = cfg["hiddenSize"]
    dn = ("NCH", "OIH", "NCH")
    zf = z.reshape(nt * ngrid, 1, nobs)
    h1 = lax.conv_general_dilated(zf, p["w1"][:, None, :], (S1,), "VALID",
                                  dimension_numbers=dn)
    h1 = jax.nn.relu(h1 + p["b1"][None, :, None])
    h2 = lax.conv_general_dilated(h1, p["w2"], (S2,), "VALID",
                                  dimension_numbers=dn)
    h2 = jax.nn.relu(h2 + p["b2"][None, :, None])
    z0 = h2.reshape(nt, ngrid, -1)
    xh = jax.nn.relu(jnp.einsum("tgi,hi->tgh", x, p["w_in"]) + p["b_in"])
    x0 = jnp.concatenate([xh, z0], axis=2)

    def step(carry, xt):
        h, c = carry
        gates = xt @ p["w_ih"].T + p["b_ih"] + h @ p["w_hh"].T + p["b_hh"]
        i, f, g, o = jnp.split(gates, 4, axis=1)
        c = jax.nn.sigmoid(f) * c + jax.nn.sigmoid(i) * jnp.tanh(g)
        h = jax.nn.sigmoid(o) * jnp.tanh(c)
        return (h, c), h

    init = (jnp.zeros((ngrid, H), jnp.float32), jnp.zeros((ngrid, H), jnp.float32))
    _, hs = lax.scan(step, init, x0)
    return hs @ p["w_out"].T + p["b_out"]


# ---------------------------------- main -----------------------------------

if __name__ == "__main__":
    cfg = dict(nx=4, ny=2, nobs=16, hiddenSize=32,
               nkernel=(10, 5), kernelSize=(3, 3), stride=(2, 1),
               t_blk=16)
    nt, ngrid = 8, 4

    key = jax.random.PRNGKey(0)
    kp, kx, kz = jax.random.split(key, 3)
    params = init_params(kp, cfg)
    x = jax.random.normal(kx, (nt, ngrid, cfg["nx"]), jnp.float32)
    z = jax.random.normal(kz, (nt, ngrid, cfg["nobs"]), jnp.float32)

    fwd = jax.jit(lambda x_, z_: cnn1d_lstm_forward(x_, z_, params, cfg))
    out = jax.block_until_ready(fwd(x, z))

    ref = reference_forward(x, z, params, cfg)
    np.testing.assert_allclose(np.asarray(out), np.asarray(ref),
                               rtol=5e-3, atol=5e-3)
    print("KERNEL_OK")
</pallas_src>

<mosaic_0001>
module attributes {stable_mosaic.version = 11 : i64} {
  func.func @_linear_kernel(%arg0: i32, %arg1: memref<224x3xf32, #tpu.memory_space<vmem>>, %arg2: memref<3x128xf32, #tpu.memory_space<vmem>>, %arg3: memref<1x128xf32, #tpu.memory_space<vmem>>, %arg4: memref<224x128xf32, #tpu.memory_space<vmem>>) attributes {dimension_semantics = [#tpu.dimension_semantics<parallel>], iteration_bounds = array<i64: 1>, scalar_prefetch = 0 : i64, scratch_operands = 0 : i64, tpu.core_type = #tpu.core_type<tc>, window_params = [{transform_indices = @transform_0, window_bounds = array<i64: 224, 3>}, {pipeline_mode = #tpu.pipeline_mode<synchronous>, transform_indices = @transform_1, window_bounds = array<i64: 3, 128>}, {pipeline_mode = #tpu.pipeline_mode<synchronous>, transform_indices = @transform_2, window_bounds = array<i64: 1, 128>}, {transform_indices = @transform_3, window_bounds = array<i64: 224, 128>}]} {
    %c0 = arith.constant 0 : index
    %c0_0 = arith.constant 0 : index
    %0 = vector.load %arg1[%c0, %c0_0] : memref<224x3xf32, #tpu.memory_space<vmem>>, vector<224x3xf32>
    %c0_1 = arith.constant 0 : index
    %c0_2 = arith.constant 0 : index
    %1 = vector.load %arg2[%c0_1, %c0_2] : memref<3x128xf32, #tpu.memory_space<vmem>>, vector<3x128xf32>
    %cst = arith.constant dense<0.000000e+00> : vector<224x128xf32>
    %2 = tpu.matmul %0, %1, %cst {dimension_numbers = #tpu.dot_dimension_numbers<[1], [0], [0], [1], [0, 0, 1, 1], [], []>, precision = #tpu.contract_precision<fp32>} : vector<224x3xf32>, vector<3x128xf32>, vector<224x128xf32> -> vector<224x128xf32>
    %c0_3 = arith.constant 0 : index
    %c0_4 = arith.constant 0 : index
    %3 = vector.load %arg3[%c0_3, %c0_4] : memref<1x128xf32, #tpu.memory_space<vmem>>, vector<1x128xf32>
    %4 = vector.broadcast %3 : vector<1x128xf32> to vector<224x128xf32>
    %5 = arith.addf %2, %4 : vector<224x128xf32>
    %cst_5 = arith.constant 0.000000e+00 : f32
    %6 = vector.broadcast %cst_5 : f32 to vector<224x128xf32>
    %7 = arith.maximumf %5, %6 : vector<224x128xf32>
    %c0_6 = arith.constant 0 : index
    %c0_7 = arith.constant 0 : index
    %8 = vector.load %arg4[%c0_6, %c0_7] : memref<224x128xf32, #tpu.memory_space<vmem>>, vector<224x128xf32>
    tpu.vector_store %arg4[%c0_6, %c0_7], %7 {strides = array<i32>} : memref<224x128xf32, #tpu.memory_space<vmem>>, vector<224x128xf32>,
    return
  }
  func.func @transform_0(%arg0: i32) -> (i32, i32) {
    %c0_i32 = arith.constant 0 : i32
    %c0_i32_0 = arith.constant 0 : i32
    return %arg0, %c0_i32 : i32, i32
  }
  func.func @transform_1(%arg0: i32) -> (i32, i32) {
    %c0_i32 = arith.constant 0 : i32
    %c0_i32_0 = arith.constant 0 : i32
    %c0_i32_1 = arith.constant 0 : i32
    return %c0_i32, %c0_i32_0 : i32, i32
  }
  func.func @transform_2(%arg0: i32) -> (i32, i32) {
    %c0_i32 = arith.constant 0 : i32
    %c0_i32_0 = arith.constant 0 : i32
    %c0_i32_1 = arith.constant 0 : i32
    return %c0_i32, %c0_i32_0 : i32, i32
  }
  func.func @transform_3(%arg0: i32) -> (i32, i32) {
    %c0_i32 = arith.constant 0 : i32
    %c0_i32_0 = arith.constant 0 : i32
    return %arg0, %c0_i32 : i32, i32
  }
}

module attributes {stable_mosaic.version = 11 : i64} {
  func.func @_linear_kernel(%arg0: i32, %arg1: memref<160x30xf32, #tpu.memory_space<vmem>>, %arg2: memref<30x128xf32, #tpu.memory_space<vmem>>, %arg3: memref<1x128xf32, #tpu.memory_space<vmem>>, %arg4: memref<160x128xf32, #tpu.memory_space<vmem>>) attributes {dimension_semantics = [#tpu.dimension_semantics<parallel>], iteration_bounds = array<i64: 1>, scalar_prefetch = 0 : i64, scratch_operands = 0 : i64, tpu.core_type = #tpu.core_type<tc>, window_params = [{transform_indices = @transform_0, window_bounds = array<i64: 160, 30>}, {pipeline_mode = #tpu.pipeline_mode<synchronous>, transform_indices = @transform_1, window_bounds = array<i64: 30, 128>}, {pipeline_mode = #tpu.pipeline_mode<synchronous>, transform_indices = @transform_2, window_bounds = array<i64: 1, 128>}, {transform_indices = @transform_3, window_bounds = array<i64: 160, 128>}]} {
    %c0 = arith.constant 0 : index
    %c0_0 = arith.constant 0 : index
    %0 = vector.load %arg1[%c0, %c0_0] : memref<160x30xf32, #tpu.memory_space<vmem>>, vector<160x30xf32>
    %c0_1 = arith.constant 0 : index
    %c0_2 = arith.constant 0 : index
    %1 = vector.load %arg2[%c0_1, %c0_2] : memref<30x128xf32, #tpu.memory_space<vmem>>, vector<30x128xf32>
    %cst = arith.constant dense<0.000000e+00> : vector<160x128xf32>
    %2 = tpu.matmul %0, %1, %cst {dimension_numbers = #tpu.dot_dimension_numbers<[1], [0], [0], [1], [0, 0, 1, 1], [], []>, precision = #tpu.contract_precision<fp32>} : vector<160x30xf32>, vector<30x128xf32>, vector<160x128xf32> -> vector<160x128xf32>
    %c0_3 = arith.constant 0 : index
    %c0_4 = arith.constant 0 : index
    %3 = vector.load %arg3[%c0_3, %c0_4] : memref<1x128xf32, #tpu.memory_space<vmem>>, vector<1x128xf32>
    %4 = vector.broadcast %3 : vector<1x128xf32> to vector<160x128xf32>
    %5 = arith.addf %2, %4 : vector<160x128xf32>
    %cst_5 = arith.constant 0.000000e+00 : f32
    %6 = vector.broadcast %cst_5 : f32 to vector<160x128xf32>
    %7 = arith.maximumf %5, %6 : vector<160x128xf32>
    %c0_6 = arith.constant 0 : index
    %c0_7 = arith.constant 0 : index
    %8 = vector.load %arg4[%c0_6, %c0_7] : memref<160x128xf32, #tpu.memory_space<vmem>>, vector<160x128xf32>
    tpu.vector_store %arg4[%c0_6, %c0_7], %7 {strides = array<i32>} : memref<160x128xf32, #tpu.memory_space<vmem>>, vector<160x128xf32>,
    return
  }
  func.func @transform_0(%arg0: i32) -> (i32, i32) {
    %c0_i32 = arith.constant 0 : i32
    %c0_i32_0 = arith.constant 0 : i32
    return %arg0, %c0_i32 : i32, i32
  }
  func.func @transform_1(%arg0: i32) -> (i32, i32) {
    %c0_i32 = arith.constant 0 : i32
    %c0_i32_0 = arith.constant 0 : i32
    %c0_i32_1 = arith.constant 0 : i32
    return %c0_i32, %c0_i32_0 : i32, i32
  }
  func.func @transform_2(%arg0: i32) -> (i32, i32) {
    %c0_i32 = arith.constant 0 : i32
    %c0_i32_0 = arith.constant 0 : i32
    %c0_i32_1 = arith.constant 0 : i32
    return %c0_i32, %c0_i32_0 : i32, i32
  }
  func.func @transform_3(%arg0: i32) -> (i32, i32) {
    %c0_i32 = arith.constant 0 : i32
    %c0_i32_0 = arith.constant 0 : i32
    return %arg0, %c0_i32 : i32, i32
  }
}

module attributes {stable_mosaic.version = 11 : i64} {
  func.func @_linear_kernel(%arg0: i32, %arg1: memref<32x4xf32, #tpu.memory_space<vmem>>, %arg2: memref<4x128xf32, #tpu.memory_space<vmem>>, %arg3: memref<1x128xf32, #tpu.memory_space<vmem>>, %arg4: memref<32x128xf32, #tpu.memory_space<vmem>>) attributes {dimension_semantics = [#tpu.dimension_semantics<parallel>], iteration_bounds = array<i64: 1>, scalar_prefetch = 0 : i64, scratch_operands = 0 : i64, tpu.core_type = #tpu.core_type<tc>, window_params = [{transform_indices = @transform_0, window_bounds = array<i64: 32, 4>}, {pipeline_mode = #tpu.pipeline_mode<synchronous>, transform_indices = @transform_1, window_bounds = array<i64: 4, 128>}, {pipeline_mode = #tpu.pipeline_mode<synchronous>, transform_indices = @transform_2, window_bounds = array<i64: 1, 128>}, {transform_indices = @transform_3, window_bounds = array<i64: 32, 128>}]} {
    %c0 = arith.constant 0 : index
    %c0_0 = arith.constant 0 : index
    %0 = vector.load %arg1[%c0, %c0_0] : memref<32x4xf32, #tpu.memory_space<vmem>>, vector<32x4xf32>
    %c0_1 = arith.constant 0 : index
    %c0_2 = arith.constant 0 : index
    %1 = vector.load %arg2[%c0_1, %c0_2] : memref<4x128xf32, #tpu.memory_space<vmem>>, vector<4x128xf32>
    %cst = arith.constant dense<0.000000e+00> : vector<32x128xf32>
    %2 = tpu.matmul %0, %1, %cst {dimension_numbers = #tpu.dot_dimension_numbers<[1], [0], [0], [1], [0, 0, 1, 1], [], []>, precision = #tpu.contract_precision<fp32>} : vector<32x4xf32>, vector<4x128xf32>, vector<32x128xf32> -> vector<32x128xf32>
    %c0_3 = arith.constant 0 : index
    %c0_4 = arith.constant 0 : index
    %3 = vector.load %arg3[%c0_3, %c0_4] : memref<1x128xf32, #tpu.memory_space<vmem>>, vector<1x128xf32>
    %4 = vector.broadcast %3 : vector<1x128xf32> to vector<32x128xf32>
    %5 = arith.addf %2, %4 : vector<32x128xf32>
    %cst_5 = arith.constant 0.000000e+00 : f32
    %6 = vector.broadcast %cst_5 : f32 to vector<32x128xf32>
    %7 = arith.maximumf %5, %6 : vector<32x128xf32>
    %c0_6 = arith.constant 0 : index
    %c0_7 = arith.constant 0 : index
    %8 = vector.load %arg4[%c0_6, %c0_7] : memref<32x128xf32, #tpu.memory_space<vmem>>, vector<32x128xf32>
    tpu.vector_store %arg4[%c0_6, %c0_7], %7 {strides = array<i32>} : memref<32x128xf32, #tpu.memory_space<vmem>>, vector<32x128xf32>,
    return
  }
  func.func @transform_0(%arg0: i32) -> (i32, i32) {
    %c0_i32 = arith.constant 0 : i32
    %c0_i32_0 = arith.constant 0 : i32
    return %arg0, %c0_i32 : i32, i32
  }
  func.func @transform_1(%arg0: i32) -> (i32, i32) {
    %c0_i32 = arith.constant 0 : i32
    %c0_i32_0 = arith.constant 0 : i32
    %c0_i32_1 = arith.constant 0 : i32
    return %c0_i32, %c0_i32_0 : i32, i32
  }
  func.func @transform_2(%arg0: i32) -> (i32, i32) {
    %c0_i32 = arith.constant 0 : i32
    %c0_i32_0 = arith.constant 0 : i32
    %c0_i32_1 = arith.constant 0 : i32
    return %c0_i32, %c0_i32_0 : i32, i32
  }
  func.func @transform_3(%arg0: i32) -> (i32, i32) {
    %c0_i32 = arith.constant 0 : i32
    %c0_i32_0 = arith.constant 0 : i32
    return %arg0, %c0_i32 : i32, i32
  }
}

module attributes {stable_mosaic.version = 11 : i64} {
  func.func @_linear_kernel(%arg0: i32, %arg1: memref<32x57xf32, #tpu.memory_space<vmem>>, %arg2: memref<57x128xf32, #tpu.memory_space<vmem>>, %arg3: memref<1x128xf32, #tpu.memory_space<vmem>>, %arg4: memref<32x128xf32, #tpu.memory_space<vmem>>) attributes {dimension_semantics = [#tpu.dimension_semantics<parallel>], iteration_bounds = array<i64: 1>, scalar_prefetch = 0 : i64, scratch_operands = 0 : i64, tpu.core_type = #tpu.core_type<tc>, window_params = [{transform_indices = @transform_0, window_bounds = array<i64: 32, 57>}, {pipeline_mode = #tpu.pipeline_mode<synchronous>, transform_indices = @transform_1, window_bounds = array<i64: 57, 128>}, {pipeline_mode = #tpu.pipeline_mode<synchronous>, transform_indices = @transform_2, window_bounds = array<i64: 1, 128>}, {transform_indices = @transform_3, window_bounds = array<i64: 32, 128>}]} {
    %c0 = arith.constant 0 : index
    %c0_0 = arith.constant 0 : index
    %0 = vector.load %arg1[%c0, %c0_0] : memref<32x57xf32, #tpu.memory_space<vmem>>, vector<32x57xf32>
    %c0_1 = arith.constant 0 : index
    %c0_2 = arith.constant 0 : index
    %1 = vector.load %arg2[%c0_1, %c0_2] : memref<57x128xf32, #tpu.memory_space<vmem>>, vector<57x128xf32>
    %cst = arith.constant dense<0.000000e+00> : vector<32x128xf32>
    %2 = tpu.matmul %0, %1, %cst {dimension_numbers = #tpu.dot_dimension_numbers<[1], [0], [0], [1], [0, 0, 1, 1], [], []>, precision = #tpu.contract_precision<fp32>} : vector<32x57xf32>, vector<57x128xf32>, vector<32x128xf32> -> vector<32x128xf32>
    %c0_3 = arith.constant 0 : index
    %c0_4 = arith.constant 0 : index
    %3 = vector.load %arg3[%c0_3, %c0_4] : memref<1x128xf32, #tpu.memory_space<vmem>>, vector<1x128xf32>
    %4 = vector.broadcast %3 : vector<1x128xf32> to vector<32x128xf32>
    %5 = arith.addf %2, %4 : vector<32x128xf32>
    %c0_5 = arith.constant 0 : index
    %c0_6 = arith.constant 0 : index
    %6 = vector.load %arg4[%c0_5, %c0_6] : memref<32x128xf32, #tpu.memory_space<vmem>>, vector<32x128xf32>
    tpu.vector_store %arg4[%c0_5, %c0_6], %5 {strides = array<i32>} : memref<32x128xf32, #tpu.memory_space<vmem>>, vector<32x128xf32>,
    return
  }
  func.func @transform_0(%arg0: i32) -> (i32, i32) {
    %c0_i32 = arith.constant 0 : i32
    %c0_i32_0 = arith.constant 0 : i32
    return %arg0, %c0_i32 : i32, i32
  }
  func.func @transform_1(%arg0: i32) -> (i32, i32) {
    %c0_i32 = arith.constant 0 : i32
    %c0_i32_0 = arith.constant 0 : i32
    %c0_i32_1 = arith.constant 0 : i32
    return %c0_i32, %c0_i32_0 : i32, i32
  }
  func.func @transform_2(%arg0: i32) -> (i32, i32) {
    %c0_i32 = arith.constant 0 : i32
    %c0_i32_0 = arith.constant 0 : i32
    %c0_i32_1 = arith.constant 0 : i32
    return %c0_i32, %c0_i32_0 : i32, i32
  }
  func.func @transform_3(%arg0: i32) -> (i32, i32) {
    %c0_i32 = arith.constant 0 : i32
    %c0_i32_0 = arith.constant 0 : i32
    return %arg0, %c0_i32 : i32, i32
  }
}

module attributes {stable_mosaic.version = 11 : i64} {
  func.func @_linear_kernel(%arg0: i32, %arg1: memref<32x32xf32, #tpu.memory_space<vmem>>, %arg2: memref<32x128xf32, #tpu.memory_space<vmem>>, %arg3: memref<1x128xf32, #tpu.memory_space<vmem>>, %arg4: memref<32x128xf32, #tpu.memory_space<vmem>>) attributes {dimension_semantics = [#tpu.dimension_semantics<parallel>], iteration_bounds = array<i64: 1>, scalar_prefetch = 0 : i64, scratch_operands = 0 : i64, tpu.core_type = #tpu.core_type<tc>, window_params = [{transform_indices = @transform_0, window_bounds = array<i64: 32, 32>}, {pipeline_mode = #tpu.pipeline_mode<synchronous>, transform_indices = @transform_1, window_bounds = array<i64: 32, 128>}, {pipeline_mode = #tpu.pipeline_mode<synchronous>, transform_indices = @transform_2, window_bounds = array<i64: 1, 128>}, {transform_indices = @transform_3, window_bounds = array<i64: 32, 128>}]} {
    %c0 = arith.constant 0 : index
    %c0_0 = arith.constant 0 : index
    %0 = vector.load %arg1[%c0, %c0_0] : memref<32x32xf32, #tpu.memory_space<vmem>>, vector<32x32xf32>
    %c0_1 = arith.constant 0 : index
    %c0_2 = arith.constant 0 : index
    %1 = vector.load %arg2[%c0_1, %c0_2] : memref<32x128xf32, #tpu.memory_space<vmem>>, vector<32x128xf32>
    %cst = arith.constant dense<0.000000e+00> : vector<32x128xf32>
    %2 = tpu.matmul %0, %1, %cst {dimension_numbers = #tpu.dot_dimension_numbers<[1], [0], [0], [1], [0, 0, 1, 1], [], []>, precision = #tpu.contract_precision<fp32>} : vector<32x32xf32>, vector<32x128xf32>, vector<32x128xf32> -> vector<32x128xf32>
    %c0_3 = arith.constant 0 : index
    %c0_4 = arith.constant 0 : index
    %3 = vector.load %arg3[%c0_3, %c0_4] : memref<1x128xf32, #tpu.memory_space<vmem>>, vector<1x128xf32>
    %4 = vector.broadcast %3 : vector<1x128xf32> to vector<32x128xf32>
    %5 = arith.addf %2, %4 : vector<32x128xf32>
    %c0_5 = arith.constant 0 : index
    %c0_6 = arith.constant 0 : index
    %6 = vector.load %arg4[%c0_5, %c0_6] : memref<32x128xf32, #tpu.memory_space<vmem>>, vector<32x128xf32>
    tpu.vector_store %arg4[%c0_5, %c0_6], %5 {strides = array<i32>} : memref<32x128xf32, #tpu.memory_space<vmem>>, vector<32x128xf32>,
    return
  }
  func.func @transform_0(%arg0: i32) -> (i32, i32) {
    %c0_i32 = arith.constant 0 : i32
    %c0_i32_0 = arith.constant 0 : i32
    return %arg0, %c0_i32 : i32, i32
  }
  func.func @transform_1(%arg0: i32) -> (i32, i32) {
    %c0_i32 = arith.constant 0 : i32
    %c0_i32_0 = arith.constant 0 : i32
    %c0_i32_1 = arith.constant 0 : i32
    return %c0_i32, %c0_i32_0 : i32, i32
  }
  func.func @transform_2(%arg0: i32) -> (i32, i32) {
    %c0_i32 = arith.constant 0 : i32
    %c0_i32_0 = arith.constant 0 : i32
    %c0_i32_1 = arith.constant 0 : i32
    return %c0_i32, %c0_i32_0 : i32, i32
  }
  func.func @transform_3(%arg0: i32) -> (i32, i32) {
    %c0_i32 = arith.constant 0 : i32
    %c0_i32_0 = arith.constant 0 : i32
    return %arg0, %c0_i32 : i32, i32
  }
}

module attributes {stable_mosaic.version = 11 : i64} {
  func.func @_lstm_kernel(%arg0: i32, %arg1: memref<8x4x128xf32, #tpu.memory_space<vmem>>, %arg2: memref<32x128xf32, #tpu.memory_space<vmem>>, %arg3: memref<8x4x32xf32, #tpu.memory_space<vmem>>, %arg4: memref<4x32xf32, #tpu.memory_space<vmem>>, %arg5: memref<4x32xf32, #tpu.memory_space<vmem>>) attributes {dimension_semantics = [#tpu.dimension_semantics<arbitrary>], iteration_bounds = array<i64: 1>, scalar_prefetch = 0 : i64, scratch_operands = 2 : i64, tpu.core_type = #tpu.core_type<tc>, window_params = [{transform_indices = @transform_0, window_bounds = array<i64: 8, 4, 128>}, {pipeline_mode = #tpu.pipeline_mode<synchronous>, transform_indices = @transform_1, window_bounds = array<i64: 32, 128>}, {transform_indices = @transform_2, window_bounds = array<i64: 8, 4, 32>}]} {
    %c0_i32 = arith.constant 0 : i32
    %0 = arith.cmpi eq, %arg0, %c0_i32 : i32
    %1 = arith.extui %0 : i1 to i32
    %c0_i32_0 = arith.constant 0 : i32
    %2 = arith.cmpi ne, %1, %c0_i32_0 : i32
    scf.if %2 {
      %cst_144 = arith.constant 0.000000e+00 : f32
      %315 = vector.broadcast %cst_144 : f32 to vector<4x32xf32>
      %c0_145 = arith.constant 0 : index
      %c0_146 = arith.constant 0 : index
      %316 = vector.load %arg4[%c0_145, %c0_146] : memref<4x32xf32, #tpu.memory_space<vmem>>, vector<4x32xf32>
      tpu.vector_store %arg4[%c0_145, %c0_146], %315 {strides = array<i32>} : memref<4x32xf32, #tpu.memory_space<vmem>>, vector<4x32xf32>,
      %cst_147 = arith.constant 0.000000e+00 : f32
      %317 = vector.broadcast %cst_147 : f32 to vector<4x32xf32>
      %c0_148 = arith.constant 0 : index
      %c0_149 = arith.constant 0 : index
      %318 = vector.load %arg5[%c0_148, %c0_149] : memref<4x32xf32, #tpu.memory_space<vmem>>, vector<4x32xf32>
      tpu.vector_store %arg5[%c0_148, %c0_149], %317 {strides = array<i32>} : memref<4x32xf32, #tpu.memory_space<vmem>>, vector<4x32xf32>,
    } else {
    }
    %c0_i32_1 = arith.constant 0 : i32
    %3 = arith.index_cast %c0_i32_1 : i32 to index
    %c0 = arith.constant 0 : index
    %c0_2 = arith.constant 0 : index
    %4 = vector.load %arg1[%3, %c0, %c0_2] : memref<8x4x128xf32, #tpu.memory_space<vmem>>, vector<1x4x128xf32>
    %5 = vector.shape_cast %4 : vector<1x4x128xf32> to vector<4x128xf32>
    %c0_3 = arith.constant 0 : index
    %c0_4 = arith.constant 0 : index
    %6 = vector.load %arg4[%c0_3, %c0_4] : memref<4x32xf32, #tpu.memory_space<vmem>>, vector<4x32xf32>
    %c0_5 = arith.constant 0 : index
    %c0_6 = arith.constant 0 : index
    %7 = vector.load %arg2[%c0_5, %c0_6] : memref<32x128xf32, #tpu.memory_space<vmem>>, vector<32x128xf32>
    %cst = arith.constant dense<0.000000e+00> : vector<4x128xf32>
    %8 = tpu.matmul %6, %7, %cst {dimension_numbers = #tpu.dot_dimension_numbers<[1], [0], [0], [1], [0, 0, 1, 1], [], []>, precision = #tpu.contract_precision<fp32>} : vector<4x32xf32>, vector<32x128xf32>, vector<4x128xf32> -> vector<4x128xf32>
    %9 = arith.addf %5, %8 : vector<4x128xf32>
    %10 = vector.extract_strided_slice %9 {offsets = [0, 0], sizes = [4, 32], strides = [1, 1]} : vector<4x128xf32> to vector<4x32xf32>
    %11 = arith.negf %10 : vector<4x32xf32>
    %12 = math.exp %11 : vector<4x32xf32>
    %cst_7 = arith.constant 1.000000e+00 : f32
    %13 = vector.broadcast %cst_7 : f32 to vector<4x32xf32>
    %14 = arith.addf %13, %12 : vector<4x32xf32>
    %15 = arith.divf %13, %14 : vector<4x32xf32>
    %16 = vector.extract_strided_slice %9 {offsets = [0, 32], sizes = [4, 32], strides = [1, 1]} : vector<4x128xf32> to vector<4x32xf32>
    %17 = arith.negf %16 : vector<4x32xf32>
    %18 = math.exp %17 : vector<4x32xf32>
    %cst_8 = arith.constant 1.000000e+00 : f32
    %19 = vector.broadcast %cst_8 : f32 to vector<4x32xf32>
    %20 = arith.addf %19, %18 : vector<4x32xf32>
    %21 = arith.divf %19, %20 : vector<4x32xf32>
    %22 = vector.extract_strided_slice %9 {offsets = [0, 64], sizes = [4, 32], strides = [1, 1]} : vector<4x128xf32> to vector<4x32xf32>
    %23 = math.tanh %22 : vector<4x32xf32>
    %24 = vector.extract_strided_slice %9 {offsets = [0, 96], sizes = [4, 32], strides = [1, 1]} : vector<4x128xf32> to vector<4x32xf32>
    %25 = arith.negf %24 : vector<4x32xf32>
    %26 = math.exp %25 : vector<4x32xf32>
    %cst_9 = arith.constant 1.000000e+00 : f32
    %27 = vector.broadcast %cst_9 : f32 to vector<4x32xf32>
    %28 = arith.addf %27, %26 : vector<4x32xf32>
    %29 = arith.divf %27, %28 : vector<4x32xf32>
    %c0_10 = arith.constant 0 : index
    %c0_11 = arith.constant 0 : index
    %30 = vector.load %arg5[%c0_10, %c0_11] : memref<4x32xf32, #tpu.memory_space<vmem>>, vector<4x32xf32>
    %31 = arith.mulf %21, %30 : vector<4x32xf32>
    %32 = arith.mulf %15, %23 : vector<4x32xf32>
    %33 = arith.addf %31, %32 : vector<4x32xf32>
    %34 = math.tanh %33 : vector<4x32xf32>
    %35 = arith.mulf %29, %34 : vector<4x32xf32>
    %c0_12 = arith.constant 0 : index
    %c0_13 = arith.constant 0 : index
    %36 = vector.load %arg5[%c0_12, %c0_13] : memref<4x32xf32, #tpu.memory_space<vmem>>, vector<4x32xf32>
    tpu.vector_store %arg5[%c0_12, %c0_13], %33 {strides = array<i32>} : memref<4x32xf32, #tpu.memory_space<vmem>>, vector<4x32xf32>,
    %c0_14 = arith.constant 0 : index
    %c0_15 = arith.constant 0 : index
    %37 = vector.load %arg4[%c0_14, %c0_15] : memref<4x32xf32, #tpu.memory_space<vmem>>, vector<4x32xf32>
    tpu.vector_store %arg4[%c0_14, %c0_15], %35 {strides = array<i32>} : memref<4x32xf32, #tpu.memory_space<vmem>>, vector<4x32xf32>,
    %38 = arith.index_cast %c0_i32_1 : i32 to index
    %c0_16 = arith.constant 0 : index
    %c0_17 = arith.constant 0 : index
    %39 = vector.load %arg3[%38, %c0_16, %c0_17] : memref<8x4x32xf32, #tpu.memory_space<vmem>>, vector<1x4x32xf32>
    %40 = vector.shape_cast %39 : vector<1x4x32xf32> to vector<4x32xf32>
    %41 = vector.shape_cast %35 : vector<4x32xf32> to vector<1x4x32xf32>
    tpu.vector_store %arg3[%38, %c0_16, %c0_17], %41 {strides = array<i32>} : memref<8x4x32xf32, #tpu.memory_space<vmem>>, vector<1x4x32xf32>,
    %c1_i32 = arith.constant 1 : i32
    %42 = arith.index_cast %c1_i32 : i32 to index
    %c0_18 = arith.constant 0 : index
    %c0_19 = arith.constant 0 : index
    %43 = vector.load %arg1[%42, %c0_18, %c0_19] : memref<8x4x128xf32, #tpu.memory_space<vmem>>, vector<1x4x128xf32>
    %44 = vector.shape_cast %43 : vector<1x4x128xf32> to vector<4x128xf32>
    %c0_20 = arith.constant 0 : index
    %c0_21 = arith.constant 0 : index
    %45 = vector.load %arg4[%c0_20, %c0_21] : memref<4x32xf32, #tpu.memory_space<vmem>>, vector<4x32xf32>
    %c0_22 = arith.constant 0 : index
    %c0_23 = arith.constant 0 : index
    %46 = vector.load %arg2[%c0_22, %c0_23] : memref<32x128xf32, #tpu.memory_space<vmem>>, vector<32x128xf32>
    %cst_24 = arith.constant dense<0.000000e+00> : vector<4x128xf32>
    %47 = tpu.matmul %45, %46, %cst_24 {dimension_numbers = #tpu.dot_dimension_numbers<[1], [0], [0], [1], [0, 0, 1, 1], [], []>, precision = #tpu.contract_precision<fp32>} : vector<4x32xf32>, vector<32x128xf32>, vector<4x128xf32> -> vector<4x128xf32>
    %48 = arith.addf %44, %47 : vector<4x128xf32>
    %49 = vector.extract_strided_slice %48 {offsets = [0, 0], sizes = [4, 32], strides = [1, 1]} : vector<4x128xf32> to vector<4x32xf32>
    %50 = arith.negf %49 : vector<4x32xf32>
    %51 = math.exp %50 : vector<4x32xf32>
    %cst_25 = arith.constant 1.000000e+00 : f32
    %52 = vector.broadcast %cst_25 : f32 to vector<4x32xf32>
    %53 = arith.addf %52, %51 : vector<4x32xf32>
    %54 = arith.divf %52, %53 : vector<4x32xf32>
    %55 = vector.extract_strided_slice %48 {offsets = [0, 32], sizes = [4, 32], strides = [1, 1]} : vector<4x128xf32> to vector<4x32xf32>
    %56 = arith.negf %55 : vector<4x32xf32>
    %57 = math.exp %56 : vector<4x32xf32>
    %cst_26 = arith.constant 1.000000e+00 : f32
    %58 = vector.broadcast %cst_26 : f32 to vector<4x32xf32>
    %59 = arith.addf %58, %57 : vector<4x32xf32>
    %60 = arith.divf %58, %59 : vector<4x32xf32>
    %61 = vector.extract_strided_slice %48 {offsets = [0, 64], sizes = [4, 32], strides = [1, 1]} : vector<4x128xf32> to vector<4x32xf32>
    %62 = math.tanh %61 : vector<4x32xf32>
    %63 = vector.extract_strided_slice %48 {offsets = [0, 96], sizes = [4, 32], strides = [1, 1]} : vector<4x128xf32> to vector<4x32xf32>
    %64 = arith.negf %63 : vector<4x32xf32>
    %65 = math.exp %64 : vector<4x32xf32>
    %cst_27 = arith.constant 1.000000e+00 : f32
    %66 = vector.broadcast %cst_27 : f32 to vector<4x32xf32>
    %67 = arith.addf %66, %65 : vector<4x32xf32>
    %68 = arith.divf %66, %67 : vector<4x32xf32>
    %c0_28 = arith.constant 0 : index
    %c0_29 = arith.constant 0 : index
    %69 = vector.load %arg5[%c0_28, %c0_29] : memref<4x32xf32, #tpu.memory_space<vmem>>, vector<4x32xf32>
    %70 = arith.mulf %60, %69 : vector<4x32xf32>
    %71 = arith.mulf %54, %62 : vector<4x32xf32>
    %72 = arith.addf %70, %71 : vector<4x32xf32>
    %73 = math.tanh %72 : vector<4x32xf32>
    %74 = arith.mulf %68, %73 : vector<4x32xf32>
    %c0_30 = arith.constant 0 : index
    %c0_31 = arith.constant 0 : index
    %75 = vector.load %arg5[%c0_30, %c0_31] : memref<4x32xf32, #tpu.memory_space<vmem>>, vector<4x32xf32>
    tpu.vector_store %arg5[%c0_30, %c0_31], %72 {strides = array<i32>} : memref<4x32xf32, #tpu.memory_space<vmem>>, vector<4x32xf32>,
    %c0_32 = arith.constant 0 : index
    %c0_33 = arith.constant 0 : index
    %76 = vector.load %arg4[%c0_32, %c0_33] : memref<4x32xf32, #tpu.memory_space<vmem>>, vector<4x32xf32>
    tpu.vector_store %arg4[%c0_32, %c0_33], %74 {strides = array<i32>} : memref<4x32xf32, #tpu.memory_space<vmem>>, vector<4x32xf32>,
    %77 = arith.index_cast %c1_i32 : i32 to index
    %c0_34 = arith.constant 0 : index
    %c0_35 = arith.constant 0 : index
    %78 = vector.load %arg3[%77, %c0_34, %c0_35] : memref<8x4x32xf32, #tpu.memory_space<vmem>>, vector<1x4x32xf32>
    %79 = vector.shape_cast %78 : vector<1x4x32xf32> to vector<4x32xf32>
    %80 = vector.shape_cast %74 : vector<4x32xf32> to vector<1x4x32xf32>
    tpu.vector_store %arg3[%77, %c0_34, %c0_35], %80 {strides = array<i32>} : memref<8x4x32xf32, #tpu.memory_space<vmem>>, vector<1x4x32xf32>,
    %c2_i32 = arith.constant 2 : i32
    %81 = arith.index_cast %c2_i32 : i32 to index
    %c0_36 = arith.constant 0 : index
    %c0_37 = arith.constant 0 : index
    %82 = vector.load %arg1[%81, %c0_36, %c0_37] : memref<8x4x128xf32, #tpu.memory_space<vmem>>, vector<1x4x128xf32>
    %83 = vector.shape_cast %82 : vector<1x4x128xf32> to vector<4x128xf32>
    %c0_38 = arith.constant 0 : index
    %c0_39 = arith.constant 0 : index
    %84 = vector.load %arg4[%c0_38, %c0_39] : memref<4x32xf32, #tpu.memory_space<vmem>>, vector<4x32xf32>
    %c0_40 = arith.constant 0 : index
    %c0_41 = arith.constant 0 : index
    %85 = vector.load %arg2[%c0_40, %c0_41] : memref<32x128xf32, #tpu.memory_space<vmem>>, vector<32x128xf32>
    %cst_42 = arith.constant dense<0.000000e+00> : vector<4x128xf32>
    %86 = tpu.matmul %84, %85, %cst_42 {dimension_numbers = #tpu.dot_dimension_numbers<[1], [0], [0], [1], [0, 0, 1, 1], [], []>, precision = #tpu.contract_precision<fp32>} : vector<4x32xf32>, vector<32x128xf32>, vector<4x128xf32> -> vector<4x128xf32>
    %87 = arith.addf %83, %86 : vector<4x128xf32>
    %88 = vector.extract_strided_slice %87 {offsets = [0, 0], sizes = [4, 32], strides = [1, 1]} : vector<4x128xf32> to vector<4x32xf32>
    %89 = arith.negf %88 : vector<4x32xf32>
    %90 = math.exp %89 : vector<4x32xf32>
    %cst_43 = arith.constant 1.000000e+00 : f32
    %91 = vector.broadcast %cst_43 : f32 to vector<4x32xf32>
    %92 = arith.addf %91, %90 : vector<4x32xf32>
    %93 = arith.divf %91, %92 : vector<4x32xf32>
    %94 = vector.extract_strided_slice %87 {offsets = [0, 32], sizes = [4, 32], strides = [1, 1]} : vector<4x128xf32> to vector<4x32xf32>
    %95 = arith.negf %94 : vector<4x32xf32>
    %96 = math.exp %95 : vector<4x32xf32>
    %cst_44 = arith.constant 1.000000e+00 : f32
    %97 = vector.broadcast %cst_44 : f32 to vector<4x32xf32>
    %98 = arith.addf %97, %96 : vector<4x32xf32>
    %99 = arith.divf %97, %98 : vector<4x32xf32>
    %100 = vector.extract_strided_slice %87 {offsets = [0, 64], sizes = [4, 32], strides = [1, 1]} : vector<4x128xf32> to vector<4x32xf32>
    %101 = math.tanh %100 : vector<4x32xf32>
    %102 = vector.extract_strided_slice %87 {offsets = [0, 96], sizes = [4, 32], strides = [1, 1]} : vector<4x128xf32> to vector<4x32xf32>
    %103 = arith.negf %102 : vector<4x32xf32>
    %104 = math.exp %103 : vector<4x32xf32>
    %cst_45 = arith.constant 1.000000e+00 : f32
    %105 = vector.broadcast %cst_45 : f32 to vector<4x32xf32>
    %106 = arith.addf %105, %104 : vector<4x32xf32>
    %107 = arith.divf %105, %106 : vector<4x32xf32>
    %c0_46 = arith.constant 0 : index
    %c0_47 = arith.constant 0 : index
    %108 = vector.load %arg5[%c0_46, %c0_47] : memref<4x32xf32, #tpu.memory_space<vmem>>, vector<4x32xf32>
    %109 = arith.mulf %99, %108 : vector<4x32xf32>
    %110 = arith.mulf %93, %101 : vector<4x32xf32>
    %111 = arith.addf %109, %110 : vector<4x32xf32>
    %112 = math.tanh %111 : vector<4x32xf32>
    %113 = arith.mulf %107, %112 : vector<4x32xf32>
    %c0_48 = arith.constant 0 : index
    %c0_49 = arith.constant 0 : index
    %114 = vector.load %arg5[%c0_48, %c0_49] : memref<4x32xf32, #tpu.memory_space<vmem>>, vector<4x32xf32>
    tpu.vector_store %arg5[%c0_48, %c0_49], %111 {strides = array<i32>} : memref<4x32xf32, #tpu.memory_space<vmem>>, vector<4x32xf32>,
    %c0_50 = arith.constant 0 : index
    %c0_51 = arith.constant 0 : index
    %115 = vector.load %arg4[%c0_50, %c0_51] : memref<4x32xf32, #tpu.memory_space<vmem>>, vector<4x32xf32>
    tpu.vector_store %arg4[%c0_50, %c0_51], %113 {strides = array<i32>} : memref<4x32xf32, #tpu.memory_space<vmem>>, vector<4x32xf32>,
    %116 = arith.index_cast %c2_i32 : i32 to index
    %c0_52 = arith.constant 0 : index
    %c0_53 = arith.constant 0 : index
    %117 = vector.load %arg3[%116, %c0_52, %c0_53] : memref<8x4x32xf32, #tpu.memory_space<vmem>>, vector<1x4x32xf32>
    %118 = vector.shape_cast %117 : vector<1x4x32xf32> to vector<4x32xf32>
    %119 = vector.shape_cast %113 : vector<4x32xf32> to vector<1x4x32xf32>
    tpu.vector_store %arg3[%116, %c0_52, %c0_53], %119 {strides = array<i32>} : memref<8x4x32xf32, #tpu.memory_space<vmem>>, vector<1x4x32xf32>,
    %c3_i32 = arith.constant 3 : i32
    %120 = arith.index_cast %c3_i32 : i32 to index
    %c0_54 = arith.constant 0 : index
    %c0_55 = arith.constant 0 : index
    %121 = vector.load %arg1[%120, %c0_54, %c0_55] : memref<8x4x128xf32, #tpu.memory_space<vmem>>, vector<1x4x128xf32>
    %122 = vector.shape_cast %121 : vector<1x4x128xf32> to vector<4x128xf32>
    %c0_56 = arith.constant 0 : index
    %c0_57 = arith.constant 0 : index
    %123 = vector.load %arg4[%c0_56, %c0_57] : memref<4x32xf32, #tpu.memory_space<vmem>>, vector<4x32xf32>
    %c0_58 = arith.constant 0 : index
    %c0_59 = arith.constant 0 : index
    %124 = vector.load %arg2[%c0_58, %c0_59] : memref<32x128xf32, #tpu.memory_space<vmem>>, vector<32x128xf32>
    %cst_60 = arith.constant dense<0.000000e+00> : vector<4x128xf32>
    %125 = tpu.matmul %123, %124, %cst_60 {dimension_numbers = #tpu.dot_dimension_numbers<[1], [0], [0], [1], [0, 0, 1, 1], [], []>, precision = #tpu.contract_precision<fp32>} : vector<4x32xf32>, vector<32x128xf32>, vector<4x128xf32> -> vector<4x128xf32>
    %126 = arith.addf %122, %125 : vector<4x128xf32>
    %127 = vector.extract_strided_slice %126 {offsets = [0, 0], sizes = [4, 32], strides = [1, 1]} : vector<4x128xf32> to vector<4x32xf32>
    %128 = arith.negf %127 : vector<4x32xf32>
    %129 = math.exp %128 : vector<4x32xf32>
    %cst_61 = arith.constant 1.000000e+00 : f32
    %130 = vector.broadcast %cst_61 : f32 to vector<4x32xf32>
    %131 = arith.addf %130, %129 : vector<4x32xf32>
    %132 = arith.divf %130, %131 : vector<4x32xf32>
    %133 = vector.extract_strided_slice %126 {offsets = [0, 32], sizes = [4, 32], strides = [1, 1]} : vector<4x128xf32> to vector<4x32xf32>
    %134 = arith.negf %133 : vector<4x32xf32>
    %135 = math.exp %134 : vector<4x32xf32>
    %cst_62 = arith.constant 1.000000e+00 : f32
    %136 = vector.broadcast %cst_62 : f32 to vector<4x32xf32>
    %137 = arith.addf %136, %135 : vector<4x32xf32>
    %138 = arith.divf %136, %137 : vector<4x32xf32>
    %139 = vector.extract_strided_slice %126 {offsets = [0, 64], sizes = [4, 32], strides = [1, 1]} : vector<4x128xf32> to vector<4x32xf32>
    %140 = math.tanh %139 : vector<4x32xf32>
    %141 = vector.extract_strided_slice %126 {offsets = [0, 96], sizes = [4, 32], strides = [1, 1]} : vector<4x128xf32> to vector<4x32xf32>
    %142 = arith.negf %141 : vector<4x32xf32>
    %143 = math.exp %142 : vector<4x32xf32>
    %cst_63 = arith.constant 1.000000e+00 : f32
    %144 = vector.broadcast %cst_63 : f32 to vector<4x32xf32>
    %145 = arith.addf %144, %143 : vector<4x32xf32>
    %146 = arith.divf %144, %145 : vector<4x32xf32>
    %c0_64 = arith.constant 0 : index
    %c0_65 = arith.constant 0 : index
    %147 = vector.load %arg5[%c0_64, %c0_65] : memref<4x32xf32, #tpu.memory_space<vmem>>, vector<4x32xf32>
    %148 = arith.mulf %138, %147 : vector<4x32xf32>
    %149 = arith.mulf %132, %140 : vector<4x32xf32>
    %150 = arith.addf %148, %149 : vector<4x32xf32>
    %151 = math.tanh %150 : vector<4x32xf32>
    %152 = arith.mulf %146, %151 : vector<4x32xf32>
    %c0_66 = arith.constant 0 : index
    %c0_67 = arith.constant 0 : index
    %153 = vector.load %arg5[%c0_66, %c0_67] : memref<4x32xf32, #tpu.memory_space<vmem>>, vector<4x32xf32>
    tpu.vector_store %arg5[%c0_66, %c0_67], %150 {strides = array<i32>} : memref<4x32xf32, #tpu.memory_space<vmem>>, vector<4x32xf32>,
    %c0_68 = arith.constant 0 : index
    %c0_69 = arith.constant 0 : index
    %154 = vector.load %arg4[%c0_68, %c0_69] : memref<4x32xf32, #tpu.memory_space<vmem>>, vector<4x32xf32>
    tpu.vector_store %arg4[%c0_68, %c0_69], %152 {strides = array<i32>} : memref<4x32xf32, #tpu.memory_space<vmem>>, vector<4x32xf32>,
    %155 = arith.index_cast %c3_i32 : i32 to index
    %c0_70 = arith.constant 0 : index
    %c0_71 = arith.constant 0 : index
    %156 = vector.load %arg3[%155, %c0_70, %c0_71] : memref<8x4x32xf32, #tpu.memory_space<vmem>>, vector<1x4x32xf32>
    %157 = vector.shape_cast %156 : vector<1x4x32xf32> to vector<4x32xf32>
    %158 = vector.shape_cast %152 : vector<4x32xf32> to vector<1x4x32xf32>
    tpu.vector_store %arg3[%155, %c0_70, %c0_71], %158 {strides = array<i32>} : memref<8x4x32xf32, #tpu.memory_space<vmem>>, vector<1x4x32xf32>,
    %c4_i32 = arith.constant 4 : i32
    %159 = arith.index_cast %c4_i32 : i32 to index
    %c0_72 = arith.constant 0 : index
    %c0_73 = arith.constant 0 : index
    %160 = vector.load %arg1[%159, %c0_72, %c0_73] : memref<8x4x128xf32, #tpu.memory_space<vmem>>, vector<1x4x128xf32>
    %161 = vector.shape_cast %160 : vector<1x4x128xf32> to vector<4x128xf32>
    %c0_74 = arith.constant 0 : index
    %c0_75 = arith.constant 0 : index
    %162 = vector.load %arg4[%c0_74, %c0_75] : memref<4x32xf32, #tpu.memory_space<vmem>>, vector<4x32xf32>
    %c0_76 = arith.constant 0 : index
    %c0_77 = arith.constant 0 : index
    %163 = vector.load %arg2[%c0_76, %c0_77] : memref<32x128xf32, #tpu.memory_space<vmem>>, vector<32x128xf32>
    %cst_78 = arith.constant dense<0.000000e+00> : vector<4x128xf32>
    %164 = tpu.matmul %162, %163, %cst_78 {dimension_numbers = #tpu.dot_dimension_numbers<[1], [0], [0], [1], [0, 0, 1, 1], [], []>, precision = #tpu.contract_precision<fp32>} : vector<4x32xf32>, vector<32x128xf32>, vector<4x128xf32> -> vector<4x128xf32>
    %165 = arith.addf %161, %164 : vector<4x128xf32>
    %166 = vector.extract_strided_slice %165 {offsets = [0, 0], sizes = [4, 32], strides = [1, 1]} : vector<4x128xf32> to vector<4x32xf32>
    %167 = arith.negf %166 : vector<4x32xf32>
    %168 = math.exp %167 : vector<4x32xf32>
    %cst_79 = arith.constant 1.000000e+00 : f32
    %169 = vector.broadcast %cst_79 : f32 to vector<4x32xf32>
    %170 = arith.addf %169, %168 : vector<4x32xf32>
    %171 = arith.divf %169, %170 : vector<4x32xf32>
    %172 = vector.extract_strided_slice %165 {offsets = [0, 32], sizes = [4, 32], strides = [1, 1]} : vector<4x128xf32> to vector<4x32xf32>
    %173 = arith.negf %172 : vector<4x32xf32>
    %174 = math.exp %173 : vector<4x32xf32>
    %cst_80 = arith.constant 1.000000e+00 : f32
    %175 = vector.broadcast %cst_80 : f32 to vector<4x32xf32>
    %176 = arith.addf %175, %174 : vector<4x32xf32>
    %177 = arith.divf %175, %176 : vector<4x32xf32>
    %178 = vector.extract_strided_slice %165 {offsets = [0, 64], sizes = [4, 32], strides = [1, 1]} : vector<4x128xf32> to vector<4x32xf32>
    %179 = math.tanh %178 : vector<4x32xf32>
    %180 = vector.extract_strided_slice %165 {offsets = [0, 96], sizes = [4, 32], strides = [1, 1]} : vector<4x128xf32> to vector<4x32xf32>
    %181 = arith.negf %180 : vector<4x32xf32>
    %182 = math.exp %181 : vector<4x32xf32>
    %cst_81 = arith.constant 1.000000e+00 : f32
    %183 = vector.broadcast %cst_81 : f32 to vector<4x32xf32>
    %184 = arith.addf %183, %182 : vector<4x32xf32>
    %185 = arith.divf %183, %184 : vector<4x32xf32>
    %c0_82 = arith.constant 0 : index
    %c0_83 = arith.constant 0 : index
    %186 = vector.load %arg5[%c0_82, %c0_83] : memref<4x32xf32, #tpu.memory_space<vmem>>, vector<4x32xf32>
    %187 = arith.mulf %177, %186 : vector<4x32xf32>
    %188 = arith.mulf %171, %179 : vector<4x32xf32>
    %189 = arith.addf %187, %188 : vector<4x32xf32>
    %190 = math.tanh %189 : vector<4x32xf32>
    %191 = arith.mulf %185, %190 : vector<4x32xf32>
    %c0_84 = arith.constant 0 : index
    %c0_85 = arith.constant 0 : index
    %192 = vector.load %arg5[%c0_84, %c0_85] : memref<4x32xf32, #tpu.memory_space<vmem>>, vector<4x32xf32>
    tpu.vector_store %arg5[%c0_84, %c0_85], %189 {strides = array<i32>} : memref<4x32xf32, #tpu.memory_space<vmem>>, vector<4x32xf32>,
    %c0_86 = arith.constant 0 : index
    %c0_87 = arith.constant 0 : index
    %193 = vector.load %arg4[%c0_86, %c0_87] : memref<4x32xf32, #tpu.memory_space<vmem>>, vector<4x32xf32>
    tpu.vector_store %arg4[%c0_86, %c0_87], %191 {strides = array<i32>} : memref<4x32xf32, #tpu.memory_space<vmem>>, vector<4x32xf32>,
    %194 = arith.index_cast %c4_i32 : i32 to index
    %c0_88 = arith.constant 0 : index
    %c0_89 = arith.constant 0 : index
    %195 = vector.load %arg3[%194, %c0_88, %c0_89] : memref<8x4x32xf32, #tpu.memory_space<vmem>>, vector<1x4x32xf32>
    %196 = vector.shape_cast %195 : vector<1x4x32xf32> to vector<4x32xf32>
    %197 = vector.shape_cast %191 : vector<4x32xf32> to vector<1x4x32xf32>
    tpu.vector_store %arg3[%194, %c0_88, %c0_89], %197 {strides = array<i32>} : memref<8x4x32xf32, #tpu.memory_space<vmem>>, vector<1x4x32xf32>,
    %c5_i32 = arith.constant 5 : i32
    %198 = arith.index_cast %c5_i32 : i32 to index
    %c0_90 = arith.constant 0 : index
    %c0_91 = arith.constant 0 : index
    %199 = vector.load %arg1[%198, %c0_90, %c0_91] : memref<8x4x128xf32, #tpu.memory_space<vmem>>, vector<1x4x128xf32>
    %200 = vector.shape_cast %199 : vector<1x4x128xf32> to vector<4x128xf32>
    %c0_92 = arith.constant 0 : index
    %c0_93 = arith.constant 0 : index
    %201 = vector.load %arg4[%c0_92, %c0_93] : memref<4x32xf32, #tpu.memory_space<vmem>>, vector<4x32xf32>
    %c0_94 = arith.constant 0 : index
    %c0_95 = arith.constant 0 : index
    %202 = vector.load %arg2[%c0_94, %c0_95] : memref<32x128xf32, #tpu.memory_space<vmem>>, vector<32x128xf32>
    %cst_96 = arith.constant dense<0.000000e+00> : vector<4x128xf32>
    %203 = tpu.matmul %201, %202, %cst_96 {dimension_numbers = #tpu.dot_dimension_numbers<[1], [0], [0], [1], [0, 0, 1, 1], [], []>, precision = #tpu.contract_precision<fp32>} : vector<4x32xf32>, vector<32x128xf32>, vector<4x128xf32> -> vector<4x128xf32>
    %204 = arith.addf %200, %203 : vector<4x128xf32>
    %205 = vector.extract_strided_slice %204 {offsets = [0, 0], sizes = [4, 32], strides = [1, 1]} : vector<4x128xf32> to vector<4x32xf32>
    %206 = arith.negf %205 : vector<4x32xf32>
    %207 = math.exp %206 : vector<4x32xf32>
    %cst_97 = arith.constant 1.000000e+00 : f32
    %208 = vector.broadcast %cst_97 : f32 to vector<4x32xf32>
    %209 = arith.addf %208, %207 : vector<4x32xf32>
    %210 = arith.divf %208, %209 : vector<4x32xf32>
    %211 = vector.extract_strided_slice %204 {offsets = [0, 32], sizes = [4, 32], strides = [1, 1]} : vector<4x128xf32> to vector<4x32xf32>
    %212 = arith.negf %211 : vector<4x32xf32>
    %213 = math.exp %212 : vector<4x32xf32>
    %cst_98 = arith.constant 1.000000e+00 : f32
    %214 = vector.broadcast %cst_98 : f32 to vector<4x32xf32>
    %215 = arith.addf %214, %213 : vector<4x32xf32>
    %216 = arith.divf %214, %215 : vector<4x32xf32>
    %217 = vector.extract_strided_slice %204 {offsets = [0, 64], sizes = [4, 32], strides = [1, 1]} : vector<4x128xf32> to vector<4x32xf32>
    %218 = math.tanh %217 : vector<4x32xf32>
    %219 = vector.extract_strided_slice %204 {offsets = [0, 96], sizes = [4, 32], strides = [1, 1]} : vector<4x128xf32> to vector<4x32xf32>
    %220 = arith.negf %219 : vector<4x32xf32>
    %221 = math.exp %220 : vector<4x32xf32>
    %cst_99 = arith.constant 1.000000e+00 : f32
    %222 = vector.broadcast %cst_99 : f32 to vector<4x32xf32>
    %223 = arith.addf %222, %221 : vector<4x32xf32>
    %224 = arith.divf %222, %223 : vector<4x32xf32>
    %c0_100 = arith.constant 0 : index
    %c0_101 = arith.constant 0 : index
    %225 = vector.load %arg5[%c0_100, %c0_101] : memref<4x32xf32, #tpu.memory_space<vmem>>, vector<4x32xf32>
    %226 = arith.mulf %216, %225 : vector<4x32xf32>
    %227 = arith.mulf %210, %218 : vector<4x32xf32>
    %228 = arith.addf %226, %227 : vector<4x32xf32>
    %229 = math.tanh %228 : vector<4x32xf32>
    %230 = arith.mulf %224, %229 : vector<4x32xf32>
    %c0_102 = arith.constant 0 : index
    %c0_103 = arith.constant 0 : index
    %231 = vector.load %arg5[%c0_102, %c0_103] : memref<4x32xf32, #tpu.memory_space<vmem>>, vector<4x32xf32>
    tpu.vector_store %arg5[%c0_102, %c0_103], %228 {strides = array<i32>} : memref<4x32xf32, #tpu.memory_space<vmem>>, vector<4x32xf32>,
    %c0_104 = arith.constant 0 : index
    %c0_105 = arith.constant 0 : index
    %232 = vector.load %arg4[%c0_104, %c0_105] : memref<4x32xf32, #tpu.memory_space<vmem>>, vector<4x32xf32>
    tpu.vector_store %arg4[%c0_104, %c0_105], %230 {strides = array<i32>} : memref<4x32xf32, #tpu.memory_space<vmem>>, vector<4x32xf32>,
    %233 = arith.index_cast %c5_i32 : i32 to index
    %c0_106 = arith.constant 0 : index
    %c0_107 = arith.constant 0 : index
    %234 = vector.load %arg3[%233, %c0_106, %c0_107] : memref<8x4x32xf32, #tpu.memory_space<vmem>>, vector<1x4x32xf32>
    %235 = vector.shape_cast %234 : vector<1x4x32xf32> to vector<4x32xf32>
    %236 = vector.shape_cast %230 : vector<4x32xf32> to vector<1x4x32xf32>
    tpu.vector_store %arg3[%233, %c0_106, %c0_107], %236 {strides = array<i32>} : memref<8x4x32xf32, #tpu.memory_space<vmem>>, vector<1x4x32xf32>,
    %c6_i32 = arith.constant 6 : i32
    %237 = arith.index_cast %c6_i32 : i32 to index
    %c0_108 = arith.constant 0 : index
    %c0_109 = arith.constant 0 : index
    %238 = vector.load %arg1[%237, %c0_108, %c0_109] : memref<8x4x128xf32, #tpu.memory_space<vmem>>, vector<1x4x128xf32>
    %239 = vector.shape_cast %238 : vector<1x4x128xf32> to vector<4x128xf32>
    %c0_110 = arith.constant 0 : index
    %c0_111 = arith.constant 0 : index
    %240 = vector.load %arg4[%c0_110, %c0_111] : memref<4x32xf32, #tpu.memory_space<vmem>>, vector<4x32xf32>
    %c0_112 = arith.constant 0 : index
    %c0_113 = arith.constant 0 : index
    %241 = vector.load %arg2[%c0_112, %c0_113] : memref<32x128xf32, #tpu.memory_space<vmem>>, vector<32x128xf32>
    %cst_114 = arith.constant dense<0.000000e+00> : vector<4x128xf32>
    %242 = tpu.matmul %240, %241, %cst_114 {dimension_numbers = #tpu.dot_dimension_numbers<[1], [0], [0], [1], [0, 0, 1, 1], [], []>, precision = #tpu.contract_precision<fp32>} : vector<4x32xf32>, vector<32x128xf32>, vector<4x128xf32> -> vector<4x128xf32>
    %243 = arith.addf %239, %242 : vector<4x128xf32>
    %244 = vector.extract_strided_slice %243 {offsets = [0, 0], sizes = [4, 32], strides = [1, 1]} : vector<4x128xf32> to vector<4x32xf32>
    %245 = arith.negf %244 : vector<4x32xf32>
    %246 = math.exp %245 : vector<4x32xf32>
    %cst_115 = arith.constant 1.000000e+00 : f32
    %247 = vector.broadcast %cst_115 : f32 to vector<4x32xf32>
    %248 = arith.addf %247, %246 : vector<4x32xf32>
    %249 = arith.divf %247, %248 : vector<4x32xf32>
    %250 = vector.extract_strided_slice %243 {offsets = [0, 32], sizes = [4, 32], strides = [1, 1]} : vector<4x128xf32> to vector<4x32xf32>
    %251 = arith.negf %250 : vector<4x32xf32>
    %252 = math.exp %251 : vector<4x32xf32>
    %cst_116 = arith.constant 1.000000e+00 : f32
    %253 = vector.broadcast %cst_116 : f32 to vector<4x32xf32>
    %254 = arith.addf %253, %252 : vector<4x32xf32>
    %255 = arith.divf %253, %254 : vector<4x32xf32>
    %256 = vector.extract_strided_slice %243 {offsets = [0, 64], sizes = [4, 32], strides = [1, 1]} : vector<4x128xf32> to vector<4x32xf32>
    %257 = math.tanh %256 : vector<4x32xf32>
    %258 = vector.extract_strided_slice %243 {offsets = [0, 96], sizes = [4, 32], strides = [1, 1]} : vector<4x128xf32> to vector<4x32xf32>
    %259 = arith.negf %258 : vector<4x32xf32>
    %260 = math.exp %259 : vector<4x32xf32>
    %cst_117 = arith.constant 1.000000e+00 : f32
    %261 = vector.broadcast %cst_117 : f32 to vector<4x32xf32>
    %262 = arith.addf %261, %260 : vector<4x32xf32>
    %263 = arith.divf %261, %262 : vector<4x32xf32>
    %c0_118 = arith.constant 0 : index
    %c0_119 = arith.constant 0 : index
    %264 = vector.load %arg5[%c0_118, %c0_119] : memref<4x32xf32, #tpu.memory_space<vmem>>, vector<4x32xf32>
    %265 = arith.mulf %255, %264 : vector<4x32xf32>
    %266 = arith.mulf %249, %257 : vector<4x32xf32>
    %267 = arith.addf %265, %266 : vector<4x32xf32>
    %268 = math.tanh %267 : vector<4x32xf32>
    %269 = arith.mulf %263, %268 : vector<4x32xf32>
    %c0_120 = arith.constant 0 : index
    %c0_121 = arith.constant 0 : index
    %270 = vector.load %arg5[%c0_120, %c0_121] : memref<4x32xf32, #tpu.memory_space<vmem>>, vector<4x32xf32>
    tpu.vector_store %arg5[%c0_120, %c0_121], %267 {strides = array<i32>} : memref<4x32xf32, #tpu.memory_space<vmem>>, vector<4x32xf32>,
    %c0_122 = arith.constant 0 : index
    %c0_123 = arith.constant 0 : index
    %271 = vector.load %arg4[%c0_122, %c0_123] : memref<4x32xf32, #tpu.memory_space<vmem>>, vector<4x32xf32>
    tpu.vector_store %arg4[%c0_122, %c0_123], %269 {strides = array<i32>} : memref<4x32xf32, #tpu.memory_space<vmem>>, vector<4x32xf32>,
    %272 = arith.index_cast %c6_i32 : i32 to index
    %c0_124 = arith.constant 0 : index
    %c0_125 = arith.constant 0 : index
    %273 = vector.load %arg3[%272, %c0_124, %c0_125] : memref<8x4x32xf32, #tpu.memory_space<vmem>>, vector<1x4x32xf32>
    %274 = vector.shape_cast %273 : vector<1x4x32xf32> to vector<4x32xf32>
    %275 = vector.shape_cast %269 : vector<4x32xf32> to vector<1x4x32xf32>
    tpu.vector_store %arg3[%272, %c0_124, %c0_125], %275 {strides = array<i32>} : memref<8x4x32xf32, #tpu.memory_space<vmem>>, vector<1x4x32xf32>,
    %c7_i32 = arith.constant 7 : i32
    %276 = arith.index_cast %c7_i32 : i32 to index
    %c0_126 = arith.constant 0 : index
    %c0_127 = arith.constant 0 : index
    %277 = vector.load %arg1[%276, %c0_126, %c0_127] : memref<8x4x128xf32, #tpu.memory_space<vmem>>, vector<1x4x128xf32>
    %278 = vector.shape_cast %277 : vector<1x4x128xf32> to vector<4x128xf32>
    %c0_128 = arith.constant 0 : index
    %c0_129 = arith.constant 0 : index
    %279 = vector.load %arg4[%c0_128, %c0_129] : memref<4x32xf32, #tpu.memory_space<vmem>>, vector<4x32xf32>
    %c0_130 = arith.constant 0 : index
    %c0_131 = arith.constant 0 : index
    %280 = vector.load %arg2[%c0_130, %c0_131] : memref<32x128xf32, #tpu.memory_space<vmem>>, vector<32x128xf32>
    %cst_132 = arith.constant dense<0.000000e+00> : vector<4x128xf32>
    %281 = tpu.matmul %279, %280, %cst_132 {dimension_numbers = #tpu.dot_dimension_numbers<[1], [0], [0], [1], [0, 0, 1, 1], [], []>, precision = #tpu.contract_precision<fp32>} : vector<4x32xf32>, vector<32x128xf32>, vector<4x128xf32> -> vector<4x128xf32>
    %282 = arith.addf %278, %281 : vector<4x128xf32>
    %283 = vector.extract_strided_slice %282 {offsets = [0, 0], sizes = [4, 32], strides = [1, 1]} : vector<4x128xf32> to vector<4x32xf32>
    %284 = arith.negf %283 : vector<4x32xf32>
    %285 = math.exp %284 : vector<4x32xf32>
    %cst_133 = arith.constant 1.000000e+00 : f32
    %286 = vector.broadcast %cst_133 : f32 to vector<4x32xf32>
    %287 = arith.addf %286, %285 : vector<4x32xf32>
    %288 = arith.divf %286, %287 : vector<4x32xf32>
    %289 = vector.extract_strided_slice %282 {offsets = [0, 32], sizes = [4, 32], strides = [1, 1]} : vector<4x128xf32> to vector<4x32xf32>
    %290 = arith.negf %289 : vector<4x32xf32>
    %291 = math.exp %290 : vector<4x32xf32>
    %cst_134 = arith.constant 1.000000e+00 : f32
    %292 = vector.broadcast %cst_134 : f32 to vector<4x32xf32>
    %293 = arith.addf %292, %291 : vector<4x32xf32>
    %294 = arith.divf %292, %293 : vector<4x32xf32>
    %295 = vector.extract_strided_slice %282 {offsets = [0, 64], sizes = [4, 32], strides = [1, 1]} : vector<4x128xf32> to vector<4x32xf32>
    %296 = math.tanh %295 : vector<4x32xf32>
    %297 = vector.extract_strided_slice %282 {offsets = [0, 96], sizes = [4, 32], strides = [1, 1]} : vector<4x128xf32> to vector<4x32xf32>
    %298 = arith.negf %297 : vector<4x32xf32>
    %299 = math.exp %298 : vector<4x32xf32>
    %cst_135 = arith.constant 1.000000e+00 : f32
    %300 = vector.broadcast %cst_135 : f32 to vector<4x32xf32>
    %301 = arith.addf %300, %299 : vector<4x32xf32>
    %302 = arith.divf %300, %301 : vector<4x32xf32>
    %c0_136 = arith.constant 0 : index
    %c0_137 = arith.constant 0 : index
    %303 = vector.load %arg5[%c0_136, %c0_137] : memref<4x32xf32, #tpu.memory_space<vmem>>, vector<4x32xf32>
    %304 = arith.mulf %294, %303 : vector<4x32xf32>
    %305 = arith.mulf %288, %296 : vector<4x32xf32>
    %306 = arith.addf %304, %305 : vector<4x32xf32>
    %307 = math.tanh %306 : vector<4x32xf32>
    %308 = arith.mulf %302, %307 : vector<4x32xf32>
    %c0_138 = arith.constant 0 : index
    %c0_139 = arith.constant 0 : index
    %309 = vector.load %arg5[%c0_138, %c0_139] : memref<4x32xf32, #tpu.memory_space<vmem>>, vector<4x32xf32>
    tpu.vector_store %arg5[%c0_138, %c0_139], %306 {strides = array<i32>} : memref<4x32xf32, #tpu.memory_space<vmem>>, vector<4x32xf32>,
    %c0_140 = arith.constant 0 : index
    %c0_141 = arith.constant 0 : index
    %310 = vector.load %arg4[%c0_140, %c0_141] : memref<4x32xf32, #tpu.memory_space<vmem>>, vector<4x32xf32>
    tpu.vector_store %arg4[%c0_140, %c0_141], %308 {strides = array<i32>} : memref<4x32xf32, #tpu.memory_space<vmem>>, vector<4x32xf32>,
    %311 = arith.index_cast %c7_i32 : i32 to index
    %c0_142 = arith.constant 0 : index
    %c0_143 = arith.constant 0 : index
    %312 = vector.load %arg3[%311, %c0_142, %c0_143] : memref<8x4x32xf32, #tpu.memory_space<vmem>>, vector<1x4x32xf32>
    %313 = vector.shape_cast %312 : vector<1x4x32xf32> to vector<4x32xf32>
    %314 = vector.shape_cast %308 : vector<4x32xf32> to vector<1x4x32xf32>
    tpu.vector_store %arg3[%311, %c0_142, %c0_143], %314 {strides = array<i32>} : memref<8x4x32xf32, #tpu.memory_space<vmem>>, vector<1x4x32xf32>,
    %c8_i32 = arith.constant 8 : i32
    return
  }
  func.func @transform_0(%arg0: i32) -> (i32, i32, i32) {
    %c0_i32 = arith.constant 0 : i32
    %c0_i32_0 = arith.constant 0 : i32
    %c0_i32_1 = arith.constant 0 : i32
    return %arg0, %c0_i32, %c0_i32_0 : i32, i32, i32
  }
  func.func @transform_1(%arg0: i32) -> (i32, i32) {
    %c0_i32 = arith.constant 0 : i32
    %c0_i32_0 = arith.constant 0 : i32
    %c0_i32_1 = arith.constant 0 : i32
    return %c0_i32, %c0_i32_0 : i32, i32
  }
  func.func @transform_2(%arg0: i32) -> (i32, i32, i32) {
    %c0_i32 = arith.constant 0 : i32
    %c0_i32_0 = arith.constant 0 : i32
    %c0_i32_1 = arith.constant 0 : i32
    return %arg0, %c0_i32, %c0_i32_0 : i32, i32, i32
  }
}

</mosaic_0001>

<llo_original>
// kernel: _lambda_.7
$region0: #{_lambda_.7}
  #allocation0 [shape = 'u32[]', space=smem, size = 0x4, offset = 0x4, fixed_abs, tag = 'smem constant byte address 0x4 - core index']
  #allocation1 [shape = 'u32[144,128]{1,0:T(1,128)}', space=vmem, size = 0x12000, scoped, tag = 'internal scratch']
  %s0 = inlined_call_operand.vmem [shape: f32[160,30], index: 0, kind: input, shape index: {}]
  %s1 = inlined_call_operand.vmem [shape: f32[30,128], index: 1, kind: input, shape index: {}]
  %s2 = inlined_call_operand.vmem [shape: f32[1,128], index: 2, kind: input, shape index: {}]
  %s3 = inlined_call_operand.vmem [shape: f32[160,128], index: 3, kind: output, shape index: {}]
  %s4 = sld [smem:[#allocation0]]
  $region22: #{_lambda_.7} parent=0
    _
  %s6 = ssub.s32 1, %s4
  %s7 = scalar_select 0, %s6, %s4
  // Predicated region
  $region2: #{_lambda_.7} parent=0 // pred_check
    _
  $region3: #{_lambda_.7} parent=0 // pred_check_branch
    %9 = sbr.rel (0) target = $region5
  $region4: #{_lambda_.7} parent=0 // pred_region
    _
  $region5: #{_lambda_.7} parent=0 // pred_fallthru
    _
  // Predicated region
  $region6: #{_lambda_.7} parent=0 // pred_check
    _
  $region7: #{_lambda_.7} parent=0 // pred_check_branch
    %11 = sbr.rel (0) target = $region9
  $region8: #{_lambda_.7} parent=0 // pred_region
    _
  $region9: #{_lambda_.7} parent=0 // pred_fallthru
    _
  // Predicated region
  $region10: #{_lambda_.7} parent=0 // pred_check
    _
  $region11: #{_lambda_.7} parent=0 // pred_check_branch
    %13 = sbr.rel (0) target = $region13
  $region12: #{_lambda_.7} parent=0 // pred_region
    _
  $region13: #{_lambda_.7} parent=0 // pred_fallthru
    _
  %v14 = vld [vmem:[%s0] sm:$0xff]
  %v15 = vld [vmem:[%s0 + $0x8] sm:$0xff]
  %v16 = vld [vmem:[%s0 + $0x10] sm:$0xff]
  %v17 = vld [vmem:[%s0 + $0x18] sm:$0xff]
  %v18 = vld [vmem:[%s0 + $0x20] sm:$0xff]
  %v19 = vld [vmem:[%s0 + $0x28] sm:$0xff]
  %v20 = vld [vmem:[%s0 + $0x30] sm:$0xff]
  %v21 = vld [vmem:[%s0 + $0x38] sm:$0xff]
  %v22 = vld [vmem:[%s0 + $0x40] sm:$0xff]
  %v23 = vld [vmem:[%s0 + $0x48] sm:$0xff]
  %v24 = vld [vmem:[%s0 + $0x50] sm:$0xff]
  %v25 = vld [vmem:[%s0 + $0x58] sm:$0xff]
  %v26 = vld [vmem:[%s0 + $0x60] sm:$0xff]
  %v27 = vld [vmem:[%s0 + $0x68] sm:$0xff]
  %v28 = vld [vmem:[%s0 + $0x70] sm:$0xff]
  %v29 = vld [vmem:[%s0 + $0x78] sm:$0xff]
  %v30 = vld [vmem:[%s0 + $0x80] sm:$0xff]
  %v31 = vld [vmem:[%s0 + $0x88] sm:$0xff]
  %v32 = vld [vmem:[%s0 + $0x90] sm:$0xff]
  %v33 = vld [vmem:[%s0 + $0x98] sm:$0xff]
  %v34 = vld [vmem:[%s1] sm:$0xff]
  %v35 = vld [vmem:[%s1 + $0x8] sm:$0xff]
  %v36 = vld [vmem:[%s1 + $0x10] sm:$0xff]
  %v37 = vld [vmem:[%s1 + $0x18] sm:$0x3f]
  %v38 = vld [vmem:[%s2] sm:$0x1]
  %v40 = vlaneseq
  %v41 = vshrl.u32 %v40, 7
  %v42 = vsub.s32 0, %v41
  %v43 = vrot.slane %v38, %v42
  %vm45 = vcmask 244736
  %v47 = vsel %vm45, %v14, 0
  %v50 = vsel %vm45, %v15, 0
  %v53 = vsel %vm45, %v16, 0
  %v56 = vsel %vm45, %v17, 0
  %v59 = vsel %vm45, %v18, 0
  %v62 = vsel %vm45, %v19, 0
  %v65 = vsel %vm45, %v20, 0
  %v68 = vsel %vm45, %v21, 0
  %v71 = vsel %vm45, %v22, 0
  %v74 = vsel %vm45, %v23, 0
  %v77 = vsel %vm45, %v24, 0
  %v80 = vsel %vm45, %v25, 0
  %v83 = vsel %vm45, %v26, 0
  %v86 = vsel %vm45, %v27, 0
  %v89 = vsel %vm45, %v28, 0
  %v92 = vsel %vm45, %v29, 0
  %v95 = vsel %vm45, %v30, 0
  %v98 = vsel %vm45, %v31, 0
  %v101 = vsel %vm45, %v32, 0
  %v104 = vsel %vm45, %v33, 0
  %vm106 = vcmask 1045504
  %v108 = vsel %vm106, %v37, 0
  %110 = vmatprep.subr.mxu0 0.0
  %v111 = vand.u32 %v34, 4294901760
  %112 = vmatpush1.msra.mxu0 %v111
  %113 = vmatprep.subr.mxu0 0.0
  %v114 = vand.u32 %v35, 4294901760
  %115 = vmatpush1.msra.mxu0 %v114
  %116 = vmatprep.subr.mxu0 0.0
  %v117 = vand.u32 %v36, 4294901760
  %118 = vmatpush1.msra.mxu0 %v117
  %119 = vmatprep.subr.mxu0 0.0
  %v120 = vand.u32 %v108, 4294901760
  %121 = vmatpush1.msra.mxu0 %v120
  %122 = vmatprep.subr.mxu0 0.0
  %123 = vmatpush1.msra.mxu0 0.0
  %124 = vmatprep.subr.mxu0 0.0
  %125 = vmatpush1.msra.mxu0 0.0
  %126 = vmatprep.subr.mxu0 0.0
  %127 = vmatpush1.msra.mxu0 0.0
  %128 = vmatprep.subr.mxu0 0.0
  %129 = vmatpush1.msra.mxu0 0.0
  %130 = vmatprep.subr.mxu0 0.0
  %131 = vmatpush1.msra.mxu0 0.0
  %132 = vmatprep.subr.mxu0 0.0
  %133 = vmatpush1.msra.mxu0 0.0
  %134 = vmatprep.subr.mxu0 0.0
  %135 = vmatpush1.msra.mxu0 0.0
  %136 = vmatprep.subr.mxu0 0.0
  %137 = vmatpush1.msra.mxu0 0.0
  %138 = vmatprep.subr.mxu0 0.0
  %139 = vmatpush1.msra.mxu0 0.0
  %140 = vmatprep.subr.mxu0 0.0
  %141 = vmatpush1.msra.mxu0 0.0
  %142 = vmatprep.subr.mxu0 0.0
  %143 = vmatpush1.msra.mxu0 0.0
  %144 = vmatprep.subr.mxu0 0.0
  %145 = vmatpush1.msra.mxu0 0.0
  %146 = vmatprep.subr.mxu0 0.0
  %147 = vmatpush1.msra.mxu0 0.0
  %148 = vmatprep.subr.mxu0 0.0
  %149 = vmatpush1.msra.mxu0 0.0
  %150 = vmatprep.subr.mxu0 0.0
  %151 = vmatpush1.msra.mxu0 0.0
  %152 = vmatprep.subr.mxu0 0.0
  %153 = vmatpush1.msra.mxu0 0.0
  %154 = vmatprep.subr.mxu0 0.0
  %155 = vmatpush1.msra.mxu0 0.0
  %156 = vmatprep.subr.mxu0 0.0
  %157 = vmatpush1.msra.mxu0 0.0
  %158 = vmatprep.subr.mxu0 0.0
  %159 = vmatpush1.msra.mxu0 0.0
  %160 = vmatprep.subr.mxu0 0.0
  %161 = vmatpush1.msra.mxu0 0.0
  %162 = vmatprep.subr.mxu0 0.0
  %163 = vmatpush1.msra.mxu0 0.0
  %164 = vmatprep.subr.mxu0 0.0
  %165 = vmatpush1.msra.mxu0 0.0
  %166 = vmatprep.subr.mxu0 0.0
  %167 = vmatpush1.msra.mxu0 0.0
  %168 = vmatprep.subr.mxu0 0.0
  %169 = vmatpush1.msra.mxu0 0.0
  %170 = vmatprep.subr.mxu0 0.0
  %171 = vmatpush1.msra.mxu0 0.0
  %172 = vmatprep.subr.mxu0 0.0
  %173 = vmatpush1.msra.mxu0 0.0
  %174 = vmatprep.subr.mxu0 0.0
  %175 = vmatpush1.msra.mxu0 0.0
  %176 = vmatprep.subr.mxu0 0.0
  %177 = vmatpush1.msra.mxu0 0.0
  %178 = vmatprep.mubr.f32.mxu0 0.0
  %v179 = vand.u32 %v47, 4294901760
  %v180 = vsub.f32 %v47, %v179
  %v181 = vand.u32 %v180, 4294901760
  %v182 = vsub.f32 %v180, %v181
  %v183 = vand.u32 %v182, 4294901760
  %184 = vmatmul.mubr.f32.gmra.mrb[0].mxu0 %v183
  %v185 = vpop.f32.mrb[0].mxu0
  %v186 = vadd.f32 %v43, %v185
  %v187 = vpop.f32.mrb[0].mxu0
  %188 = vmatprep.mubr.f32.mxu0 0.0
  %v189 = vand.u32 %v50, 4294901760
  %v190 = vsub.f32 %v50, %v189
  %v191 = vand.u32 %v190, 4294901760
  %v192 = vsub.f32 %v190, %v191
  %v193 = vand.u32 %v192, 4294901760
  %194 = vmatmul.mubr.f32.gmra.mrb[0].mxu0 %v193
  %v195 = vpop.f32.mrb[0].mxu0
  %v196 = vadd.f32 %v43, %v195
  %v197 = vpop.f32.mrb[0].mxu0
  %198 = vmatprep.mubr.f32.mxu0 0.0
  %v199 = vand.u32 %v53, 4294901760
  %v200 = vsub.f32 %v53, %v199
  %v201 = vand.u32 %v200, 4294901760
  %v202 = vsub.f32 %v200, %v201
  %v203 = vand.u32 %v202, 4294901760
  %204 = vmatmul.mubr.f32.gmra.mrb[0].mxu0 %v203
  %v205 = vpop.f32.mrb[0].mxu0
  %v206 = vadd.f32 %v43, %v205
  %v207 = vpop.f32.mrb[0].mxu0
  %208 = vmatprep.mubr.f32.mxu0 0.0
  %v209 = vand.u32 %v56, 4294901760
  %v210 = vsub.f32 %v56, %v209
  %v211 = vand.u32 %v210, 4294901760
  %v212 = vsub.f32 %v210, %v211
  %v213 = vand.u32 %v212, 4294901760
  %214 = vmatmul.mubr.f32.gmra.mrb[0].mxu0 %v213
  %v215 = vpop.f32.mrb[0].mxu0
  %v216 = vadd.f32 %v43, %v215
  %v217 = vpop.f32.mrb[0].mxu0
  %218 = vmatprep.mubr.f32.mxu0 0.0
  %v219 = vand.u32 %v59, 4294901760
  %v220 = vsub.f32 %v59, %v219
  %v221 = vand.u32 %v220, 4294901760
  %v222 = vsub.f32 %v220, %v221
  %v223 = vand.u32 %v222, 4294901760
  %224 = vmatmul.mubr.f32.gmra.mrb[0].mxu0 %v223
  %v225 = vpop.f32.mrb[0].mxu0
  %v226 = vadd.f32 %v43, %v225
  %v227 = vpop.f32.mrb[0].mxu0
  %228 = vmatprep.mubr.f32.mxu0 0.0
  %v229 = vand.u32 %v62, 4294901760
  %v230 = vsub.f32 %v62, %v229
  %v231 = vand.u32 %v230, 4294901760
  %v232 = vsub.f32 %v230, %v231
  %v233 = vand.u32 %v232, 4294901760
  %234 = vmatmul.mubr.f32.gmra.mrb[0].mxu0 %v233
  %v235 = vpop.f32.mrb[0].mxu0
  %v236 = vadd.f32 %v43, %v235
  %v237 = vpop.f32.mrb[0].mxu0
  %238 = vmatprep.mubr.f32.mxu0 0.0
  %v239 = vand.u32 %v65, 4294901760
  %v240 = vsub.f32 %v65, %v239
  %v241 = vand.u32 %v240, 4294901760
  %v242 = vsub.f32 %v240, %v241
  %v243 = vand.u32 %v242, 4294901760
  %244 = vmatmul.mubr.f32.gmra.mrb[0].mxu0 %v243
  %v245 = vpop.f32.mrb[0].mxu0
  %v246 = vadd.f32 %v43, %v245
  %v247 = vpop.f32.mrb[0].mxu0
  %248 = vmatprep.mubr.f32.mxu0 0.0
  %v249 = vand.u32 %v68, 4294901760
  %v250 = vsub.f32 %v68, %v249
  %v251 = vand.u32 %v250, 4294901760
  %v252 = vsub.f32 %v250, %v251
  %v253 = vand.u32 %v252, 4294901760
  %254 = vmatmul.mubr.f32.gmra.mrb[0].mxu0 %v253
  %v255 = vpop.f32.mrb[0].mxu0
  %v256 = vadd.f32 %v43, %v255
  %v257 = vpop.f32.mrb[0].mxu0
  %258 = vmatprep.mubr.f32.mxu0 0.0
  %v259 = vand.u32 %v71, 4294901760
  %v260 = vsub.f32 %v71, %v259
  %v261 = vand.u32 %v260, 4294901760
  %v262 = vsub.f32 %v260, %v261
  %v263 = vand.u32 %v262, 4294901760
  %264 = vmatmul.mubr.f32.gmra.mrb[0].mxu0 %v263
  %v265 = vpop.f32.mrb[0].mxu0
  %v266 = vadd.f32 %v43, %v265
  %v267 = vpop.f32.mrb[0].mxu0
  %268 = vmatprep.mubr.f32.mxu0 0.0
  %v269 = vand.u32 %v74, 4294901760
  %v270 = vsub.f32 %v74, %v269
  %v271 = vand.u32 %v270, 4294901760
  %v272 = vsub.f32 %v270, %v271
  %v273 = vand.u32 %v272, 4294901760
  %274 = vmatmul.mubr.f32.gmra.mrb[0].mxu0 %v273
  %v275 = vpop.f32.mrb[0].mxu0
  %v276 = vadd.f32 %v43, %v275
  %v277 = vpop.f32.mrb[0].mxu0
  %278 = vmatprep.mubr.f32.mxu0 0.0
  %v279 = vand.u32 %v77, 4294901760
  %v280 = vsub.f32 %v77, %v279
  %v281 = vand.u32 %v280, 4294901760
  %v282 = vsub.f32 %v280, %v281
  %v283 = vand.u32 %v282, 4294901760
  %284 = vmatmul.mubr.f32.gmra.mrb[0].mxu0 %v283
  %v285 = vpop.f32.mrb[0].mxu0
  %v286 = vadd.f32 %v43, %v285
  %v287 = vpop.f32.mrb[0].mxu0
  %288 = vmatprep.mubr.f32.mxu0 0.0
  %v289 = vand.u32 %v80, 4294901760
  %v290 = vsub.f32 %v80, %v289
  %v291 = vand.u32 %v290, 4294901760
  %v292 = vsub.f32 %v290, %v291
  %v293 = vand.u32 %v292, 4294901760
  %294 = vmatmul.mubr.f32.gmra.mrb[0].mxu0 %v293
  %v295 = vpop.f32.mrb[0].mxu0
  %v296 = vadd.f32 %v43, %v295
  %v297 = vpop.f32.mrb[0].mxu0
  %298 = vmatprep.mubr.f32.mxu0 0.0
  %v299 = vand.u32 %v83, 4294901760
  %v300 = vsub.f32 %v83, %v299
  %v301 = vand.u32 %v300, 4294901760
  %v302 = vsub.f32 %v300, %v301
  %v303 = vand.u32 %v302, 4294901760
  %304 = vmatmul.mubr.f32.gmra.mrb[0].mxu0 %v303
  %v305 = vpop.f32.mrb[0].mxu0
  %v306 = vadd.f32 %v43, %v305
  %v307 = vpop.f32.mrb[0].mxu0
  %308 = vmatprep.mubr.f32.mxu0 0.0
  %v309 = vand.u32 %v86, 4294901760
  %v310 = vsub.f32 %v86, %v309
  %v311 = vand.u32 %v310, 4294901760
  %v312 = vsub.f32 %v310, %v311
  %v313 = vand.u32 %v312, 4294901760
  %314 = vmatmul.mubr.f32.gmra.mrb[0].mxu0 %v313
  %v315 = vpop.f32.mrb[0].mxu0
  %v316 = vadd.f32 %v43, %v315
  %v317 = vpop.f32.mrb[0].mxu0
  %318 = vmatprep.mubr.f32.mxu0 0.0
  %v319 = vand.u32 %v89, 4294901760
  %v320 = vsub.f32 %v89, %v319
  %v321 = vand.u32 %v320, 4294901760
  %v322 = vsub.f32 %v320, %v321
  %v323 = vand.u32 %v322, 4294901760
  %324 = vmatmul.mubr.f32.gmra.mrb[0].mxu0 %v323
  %v325 = vpop.f32.mrb[0].mxu0
  %v326 = vadd.f32 %v43, %v325
  %v327 = vpop.f32.mrb[0].mxu0
  %328 = vmatprep.mubr.f32.mxu0 0.0
  %v329 = vand.u32 %v92, 4294901760
  %v330 = vsub.f32 %v92, %v329
  %v331 = vand.u32 %v330, 4294901760
  %v332 = vsub.f32 %v330, %v331
  %v333 = vand.u32 %v332, 4294901760
  %334 = vmatmul.mubr.f32.gmra.mrb[0].mxu0 %v333
  %v335 = vpop.f32.mrb[0].mxu0
  %v336 = vadd.f32 %v43, %v335
  %v337 = vpop.f32.mrb[0].mxu0
  %338 = vmatprep.mubr.f32.mxu0 0.0
  %v339 = vand.u32 %v95, 4294901760
  %v340 = vsub.f32 %v95, %v339
  %v341 = vand.u32 %v340, 4294901760
  %v342 = vsub.f32 %v340, %v341
  %v343 = vand.u32 %v342, 4294901760
  %344 = vmatmul.mubr.f32.gmra.mrb[0].mxu0 %v343
  %v345 = vpop.f32.mrb[0].mxu0
  %v346 = vadd.f32 %v43, %v345
  %v347 = vpop.f32.mrb[0].mxu0
  %348 = vmatprep.mubr.f32.mxu0 0.0
  %v349 = vand.u32 %v98, 4294901760
  %v350 = vsub.f32 %v98, %v349
  %v351 = vand.u32 %v350, 4294901760
  %v352 = vsub.f32 %v350, %v351
  %v353 = vand.u32 %v352, 4294901760
  %354 = vmatmul.mubr.f32.gmra.mrb[0].mxu0 %v353
  %v355 = vpop.f32.mrb[0].mxu0
  %v356 = vadd.f32 %v43, %v355
  %v357 = vpop.f32.mrb[0].mxu0
  %358 = vmatprep.mubr.f32.mxu0 0.0
  %v359 = vand.u32 %v101, 4294901760
  %v360 = vsub.f32 %v101, %v359
  %v361 = vand.u32 %v360, 4294901760
  %v362 = vsub.f32 %v360, %v361
  %v363 = vand.u32 %v362, 4294901760
  %364 = vmatmul.mubr.f32.gmra.mrb[0].mxu0 %v363
  %v365 = vpop.f32.mrb[0].mxu0
  %v366 = vadd.f32 %v43, %v365
  %v367 = vpop.f32.mrb[0].mxu0
  %368 = vmatprep.mubr.f32.mxu0 0.0
  %v369 = vand.u32 %v104, 4294901760
  %v370 = vsub.f32 %v104, %v369
  %v371 = vand.u32 %v370, 4294901760
  %v372 = vsub.f32 %v370, %v371
  %v373 = vand.u32 %v372, 4294901760
  %374 = vmatmul.mubr.f32.gmra.mrb[0].mxu0 %v373
  %v375 = vpop.f32.mrb[0].mxu0
  %v376 = vadd.f32 %v43, %v375
  %v377 = vpop.f32.mrb[0].mxu0
  %378 = vdwg.mxu0
  %379 = vmatprep.subr.mxu0 0.0
  %v380 = vand.u32 %v34, 4294901760
  %v381 = vsub.f32 %v34, %v380
  %v382 = vand.u32 %v381, 4294901760
  %v383 = vsub.f32 %v381, %v382
  %v384 = vand.u32 %v383, 4294901760
  %385 = vmatpush1.msra.mxu0 %v384
  %386 = vmatprep.subr.mxu0 0.0
  %v387 = vand.u32 %v35, 4294901760
  %v388 = vsub.f32 %v35, %v387
  %v389 = vand.u32 %v388, 4294901760
  %v390 = vsub.f32 %v388, %v389
  %v391 = vand.u32 %v390, 4294901760
  %392 = vmatpush1.msra.mxu0 %v391
  %393 = vmatprep.subr.mxu0 0.0
  %v394 = vand.u32 %v36, 4294901760
  %v395 = vsub.f32 %v36, %v394
  %v396 = vand.u32 %v395, 4294901760
  %v397 = vsub.f32 %v395, %v396
  %v398 = vand.u32 %v397, 4294901760
  %399 = vmatpush1.msra.mxu0 %v398
  %400 = vmatprep.subr.mxu0 0.0
  %v401 = vand.u32 %v108, 4294901760
  %v402 = vsub.f32 %v108, %v401
  %v403 = vand.u32 %v402, 4294901760
  %v404 = vsub.f32 %v402, %v403
  %v405 = vand.u32 %v404, 4294901760
  %406 = vmatpush1.msra.mxu0 %v405
  %407 = vmatprep.subr.mxu0 0.0
  %408 = vmatpush1.msra.mxu0 0.0
  %409 = vmatprep.subr.mxu0 0.0
  %410 = vmatpush1.msra.mxu0 0.0
  %411 = vmatprep.subr.mxu0 0.0
  %412 = vmatpush1.msra.mxu0 0.0
  %413 = vmatprep.subr.mxu0 0.0
  %414 = vmatpush1.msra.mxu0 0.0
  %415 = vmatprep.subr.mxu0 0.0
  %416 = vmatpush1.msra.mxu0 0.0
  %417 = vmatprep.subr.mxu0 0.0
  %418 = vmatpush1.msra.mxu0 0.0
  %419 = vmatprep.subr.mxu0 0.0
  %420 = vmatpush1.msra.mxu0 0.0
  %421 = vmatprep.subr.mxu0 0.0
  %422 = vmatpush1.msra.mxu0 0.0
  %423 = vmatprep.subr.mxu0 0.0
  %424 = vmatpush1.msra.mxu0 0.0
  %425 = vmatprep.subr.mxu0 0.0
  %426 = vmatpush1.msra.mxu0 0.0
  %427 = vmatprep.subr.mxu0 0.0
  %428 = vmatpush1.msra.mxu0 0.0
  %429 = vmatprep.subr.mxu0 0.0
  %430 = vmatpush1.msra.mxu0 0.0
  %431 = vmatprep.subr.mxu0 0.0
  %432 = vmatpush1.msra.mxu0 0.0
  %433 = vmatprep.subr.mxu0 0.0
  %434 = vmatpush1.msra.mxu0 0.0
  %435 = vmatprep.subr.mxu0 0.0
  %436 = vmatpush1.msra.mxu0 0.0
  %437 = vmatprep.subr.mxu0 0.0
  %438 = vmatpush1.msra.mxu0 0.0
  %439 = vmatprep.subr.mxu0 0.0
  %440 = vmatpush1.msra.mxu0 0.0
  %441 = vmatprep.subr.mxu0 0.0
  %442 = vmatpush1.msra.mxu0 0.0
  %443 = vmatprep.subr.mxu0 0.0
  %444 = vmatpush1.msra.mxu0 0.0
  %445 = vmatprep.subr.mxu0 0.0
  %446 = vmatpush1.msra.mxu0 0.0
  %447 = vmatprep.subr.mxu0 0.0
  %448 = vmatpush1.msra.mxu0 0.0
  %449 = vmatprep.subr.mxu0 0.0
  %450 = vmatpush1.msra.mxu0 0.0
  %451 = vmatprep.subr.mxu0 0.0
  %452 = vmatpush1.msra.mxu0 0.0
  %453 = vmatprep.subr.mxu0 0.0
  %454 = vmatpush1.msra.mxu0 0.0
  %455 = vmatprep.subr.mxu0 0.0
  %456 = vmatpush1.msra.mxu0 0.0
  %457 = vmatprep.subr.mxu0 0.0
  %458 = vmatpush1.msra.mxu0 0.0
  %459 = vmatprep.subr.mxu0 0.0
  %460 = vmatpush1.msra.mxu0 0.0
  %461 = vmatprep.subr.mxu0 0.0
  %462 = vmatpush1.msra.mxu0 0.0
  %463 = vmatprep.mubr.f32.mxu0 0.0
  %v464 = vand.u32 %v47, 4294901760
  %465 = vmatmul.mubr.f32.gmra.mrb[0].mxu0 %v464
  %v466 = vpop.f32.mrb[0].mxu0
  %v467 = vadd.f32 %v186, %v466
  %v468 = vpop.f32.mrb[0].mxu0
  %469 = vmatprep.mubr.f32.mxu0 0.0
  %v470 = vand.u32 %v50, 4294901760
  %471 = vmatmul.mubr.f32.gmra.mrb[0].mxu0 %v470
  %v472 = vpop.f32.mrb[0].mxu0
  %v473 = vadd.f32 %v196, %v472
  %v474 = vpop.f32.mrb[0].mxu0
  %475 = vmatprep.mubr.f32.mxu0 0.0
  %v476 = vand.u32 %v53, 4294901760
  %477 = vmatmul.mubr.f32.gmra.mrb[0].mxu0 %v476
  %v478 = vpop.f32.mrb[0].mxu0
  %v479 = vadd.f32 %v206, %v478
  %v480 = vpop.f32.mrb[0].mxu0
  %481 = vmatprep.mubr.f32.mxu0 0.0
  %v482 = vand.u32 %v56, 4294901760
  %483 = vmatmul.mubr.f32.gmra.mrb[0].mxu0 %v482
  %v484 = vpop.f32.mrb[0].mxu0
  %v485 = vadd.f32 %v216, %v484
  %v486 = vpop.f32.mrb[0].mxu0
  %487 = vmatprep.mubr.f32.mxu0 0.0
  %v488 = vand.u32 %v59, 4294901760
  %489 = vmatmul.mubr.f32.gmra.mrb[0].mxu0 %v488
  %v490 = vpop.f32.mrb[0].mxu0
  %v491 = vadd.f32 %v226, %v490
  %v492 = vpop.f32.mrb[0].mxu0
  %493 = vmatprep.mubr.f32.mxu0 0.0
  %v494 = vand.u32 %v62, 4294901760
  %495 = vmatmul.mubr.f32.gmra.mrb[0].mxu0 %v494
  %v496 = vpop.f32.mrb[0].mxu0
  %v497 = vadd.f32 %v236, %v496
  %v498 = vpop.f32.mrb[0].mxu0
  %499 = vmatprep.mubr.f32.mxu0 0.0
  %v500 = vand.u32 %v65, 4294901760
  %501 = vmatmul.mubr.f32.gmra.mrb[0].mxu0 %v500
  %v502 = vpop.f32.mrb[0].mxu0
  %v503 = vadd.f32 %v246, %v502
  %v504 = vpop.f32.mrb[0].mxu0
  %505 = vmatprep.mubr.f32.mxu0 0.0
  %v506 = vand.u32 %v68, 4294901760
  %507 = vmatmul.mubr.f32.gmra.mrb[0].mxu0 %v506
  %v508 = vpop.f32.mrb[0].mxu0
  %v509 = vadd.f32 %v256, %v508
  %v510 = vpop.f32.mrb[0].mxu0
  %511 = vmatprep.mubr.f32.mxu0 0.0
  %v512 = vand.u32 %v71, 4294901760
  %513 = vmatmul.mubr.f32.gmra.mrb[0].mxu0 %v512
  %v514 = vpop.f32.mrb[0].mxu0
  %v515 = vadd.f32 %v266, %v514
  %v516 = vpop.f32.mrb[0].mxu0
  %517 = vmatprep.mubr.f32.mxu0 0.0
  %v518 = vand.u32 %v74, 4294901760
  %519 = vmatmul.mubr.f32.gmra.mrb[0].mxu0 %v518
  %v520 = vpop.f32.mrb[0].mxu0
  %v521 = vadd.f32 %v276, %v520
  %v522 = vpop.f32.mrb[0].mxu0
  %523 = vmatprep.mubr.f32.mxu0 0.0
  %v524 = vand.u32 %v77, 4294901760
  %525 = vmatmul.mubr.f32.gmra.mrb[0].mxu0 %v524
  %v526 = vpop.f32.mrb[0].mxu0
  %v527 = vadd.f32 %v286, %v526
  %v528 = vpop.f32.mrb[0].mxu0
  %529 = vmatprep.mubr.f32.mxu0 0.0
  %v530 = vand.u32 %v80, 4294901760
  %531 = vmatmul.mubr.f32.gmra.mrb[0].mxu0 %v530
  %v532 = vpop.f32.mrb[0].mxu0
  %v533 = vadd.f32 %v296, %v532
  %v534 = vpop.f32.mrb[0].mxu0
  %535 = vmatprep.mubr.f32.mxu0 0.0
  %v536 = vand.u32 %v83, 4294901760
  %537 = vmatmul.mubr.f32.gmra.mrb[0].mxu0 %v536
  %v538 = vpop.f32.mrb[0].mxu0
  %v539 = vadd.f32 %v306, %v538
  %v540 = vpop.f32.mrb[0].mxu0
  %541 = vmatprep.mubr.f32.mxu0 0.0
  %v542 = vand.u32 %v86, 4294901760
  %543 = vmatmul.mubr.f32.gmra.mrb[0].mxu0 %v542
  %v544 = vpop.f32.mrb[0].mxu0
  %v545 = vadd.f32 %v316, %v544
  %v546 = vpop.f32.mrb[0].mxu0
  %547 = vmatprep.mubr.f32.mxu0 0.0
  %v548 = vand.u32 %v89, 4294901760
  %549 = vmatmul.mubr.f32.gmra.mrb[0].mxu0 %v548
  %v550 = vpop.f32.mrb[0].mxu0
  %v551 = vadd.f32 %v326, %v550
  %v552 = vpop.f32.mrb[0].mxu0
  %553 = vmatprep.mubr.f32.mxu0 0.0
  %v554 = vand.u32 %v92, 4294901760
  %555 = vmatmul.mubr.f32.gmra.mrb[0].mxu0 %v554
  %v556 = vpop.f32.mrb[0].mxu0
  %v557 = vadd.f32 %v336, %v556
  %v558 = vpop.f32.mrb[0].mxu0
  %559 = vmatprep.mubr.f32.mxu0 0.0
  %v560 = vand.u32 %v95, 4294901760
  %561 = vmatmul.mubr.f32.gmra.mrb[0].mxu0 %v560
  %v562 = vpop.f32.mrb[0].mxu0
  %v563 = vadd.f32 %v346, %v562
  %v564 = vpop.f32.mrb[0].mxu0
  %565 = vmatprep.mubr.f32.mxu0 0.0
  %v566 = vand.u32 %v98, 4294901760
  %567 = vmatmul.mubr.f32.gmra.mrb[0].mxu0 %v566
  %v568 = vpop.f32.mrb[0].mxu0
  %v569 = vadd.f32 %v356, %v568
  %v570 = vpop.f32.mrb[0].mxu0
  %571 = vmatprep.mubr.f32.mxu0 0.0
  %v572 = vand.u32 %v101, 4294901760
  %573 = vmatmul.mubr.f32.gmra.mrb[0].mxu0 %v572
  %v574 = vpop.f32.mrb[0].mxu0
  %v575 = vadd.f32 %v366, %v574
  %v576 = vpop.f32.mrb[0].mxu0
  %577 = vmatprep.mubr.f32.mxu0 0.0
  %v578 = vand.u32 %v104, 4294901760
  %579 = vmatmul.mubr.f32.gmra.mrb[0].mxu0 %v578
  %v580 = vpop.f32.mrb[0].mxu0
  %v581 = vadd.f32 %v376, %v580
  %v582 = vpop.f32.mrb[0].mxu0
  %583 = vdwg.mxu0
  %584 = vmatprep.subr.mxu0 0.0
  %v585 = vand.u32 %v34, 4294901760
  %v586 = vsub.f32 %v34, %v585
  %587 = vmatpush1.msra.mxu0 %v586
  %588 = vmatprep.subr.mxu0 0.0
  %v589 = vand.u32 %v35, 4294901760
  %v590 = vsub.f32 %v35, %v589
  %591 = vmatpush1.msra.mxu0 %v590
  %592 = vmatprep.subr.mxu0 0.0
  %v593 = vand.u32 %v36, 4294901760
  %v594 = vsub.f32 %v36, %v593
  %595 = vmatpush1.msra.mxu0 %v594
  %596 = vmatprep.subr.mxu0 0.0
  %v597 = vand.u32 %v108, 4294901760
  %v598 = vsub.f32 %v108, %v597
  %599 = vmatpush1.msra.mxu0 %v598
  %600 = vmatprep.subr.mxu0 0.0
  %601 = vmatpush1.msra.mxu0 0.0
  %602 = vmatprep.subr.mxu0 0.0
  %603 = vmatpush1.msra.mxu0 0.0
  %604 = vmatprep.subr.mxu0 0.0
  %605 = vmatpush1.msra.mxu0 0.0
  %606 = vmatprep.subr.mxu0 0.0
  %607 = vmatpush1.msra.mxu0 0.0
  %608 = vmatprep.subr.mxu0 0.0
  %609 = vmatpush1.msra.mxu0 0.0
  %610 = vmatprep.subr.mxu0 0.0
  %611 = vmatpush1.msra.mxu0 0.0
  %612 = vmatprep.subr.mxu0 0.0
  %613 = vmatpush1.msra.mxu0 0.0
  %614 = vmatprep.subr.mxu0 0.0
  %615 = vmatpush1.msra.mxu0 0.0
  %616 = vmatprep.subr.mxu0 0.0
  %617 = vmatpush1.msra.mxu0 0.0
  %618 = vmatprep.subr.mxu0 0.0
  %619 = vmatpush1.msra.mxu0 0.0
  %620 = vmatprep.subr.mxu0 0.0
  %621 = vmatpush1.msra.mxu0 0.0
  %622 = vmatprep.subr.mxu0 0.0
  %623 = vmatpush1.msra.mxu0 0.0
  %624 = vmatprep.subr.mxu0 0.0
  %625 = vmatpush1.msra.mxu0 0.0
  %626 = vmatprep.subr.mxu0 0.0
  %627 = vmatpush1.msra.mxu0 0.0
  %628 = vmatprep.subr.mxu0 0.0
  %629 = vmatpush1.msra.mxu0 0.0
  %630 = vmatprep.subr.mxu0 0.0
  %631 = vmatpush1.msra.mxu0 0.0
  %632 = vmatprep.subr.mxu0 0.0
  %633 = vmatpush1.msra.mxu0 0.0
  %634 = vmatprep.subr.mxu0 0.0
  %635 = vmatpush1.msra.mxu0 0.0
  %636 = vmatprep.subr.mxu0 0.0
  %637 = vmatpush1.msra.mxu0 0.0
  %638 = vmatprep.subr.mxu0 0.0
  %639 = vmatpush1.msra.mxu0 0.0
  %640 = vmatprep.subr.mxu0 0.0
  %641 = vmatpush1.msra.mxu0 0.0
  %642 = vmatprep.subr.mxu0 0.0
  %643 = vmatpush1.msra.mxu0 0.0
  %644 = vmatprep.subr.mxu0 0.0
  %645 = vmatpush1.msra.mxu0 0.0
  %646 = vmatprep.subr.mxu0 0.0
  %647 = vmatpush1.msra.mxu0 0.0
  %648 = vmatprep.subr.mxu0 0.0
  %649 = vmatpush1.msra.mxu0 0.0
  %650 = vmatprep.subr.mxu0 0.0
  %651 = vmatpush1.msra.mxu0 0.0
  %652 = vmatprep.subr.mxu0 0.0
  %653 = vmatpush1.msra.mxu0 0.0
  %654 = vmatprep.subr.mxu0 0.0
  %655 = vmatpush1.msra.mxu0 0.0
  %656 = vmatprep.mubr.f32.mxu0 0.0
  %v657 = vand.u32 %v47, 4294901760
  %v658 = vsub.f32 %v47, %v657
  %659 = vmatmul.mubr.f32.gmra.mrb[0].mxu0 %v658
  %v660 = vpop.f32.mrb[0].mxu0
  %v661 = vadd.f32 %v467, %v660
  %v662 = vpop.f32.mrb[0].mxu0
  %663 = vmatprep.mubr.f32.mxu0 0.0
  %v664 = vand.u32 %v50, 4294901760
  %v665 = vsub.f32 %v50, %v664
  %666 = vmatmul.mubr.f32.gmra.mrb[0].mxu0 %v665
  %v667 = vpop.f32.mrb[0].mxu0
  %v668 = vadd.f32 %v473, %v667
  %v669 = vpop.f32.mrb[0].mxu0
  %670 = vmatprep.mubr.f32.mxu0 0.0
  %v671 = vand.u32 %v53, 4294901760
  %v672 = vsub.f32 %v53, %v671
  %673 = vmatmul.mubr.f32.gmra.mrb[0].mxu0 %v672
  %v674 = vpop.f32.mrb[0].mxu0
  %v675 = vadd.f32 %v479, %v674
  %v676 = vpop.f32.mrb[0].mxu0
  %677 = vmatprep.mubr.f32.mxu0 0.0
  %v678 = vand.u32 %v56, 4294901760
  %v679 = vsub.f32 %v56, %v678
  %680 = vmatmul.mubr.f32.gmra.mrb[0].mxu0 %v679
  %v681 = vpop.f32.mrb[0].mxu0
  %v682 = vadd.f32 %v485, %v681
  %v683 = vpop.f32.mrb[0].mxu0
  %684 = vmatprep.mubr.f32.mxu0 0.0
  %v685 = vand.u32 %v59, 4294901760
  %v686 = vsub.f32 %v59, %v685
  %687 = vmatmul.mubr.f32.gmra.mrb[0].mxu0 %v686
  %v688 = vpop.f32.mrb[0].mxu0
  %v689 = vadd.f32 %v491, %v688
  %v690 = vpop.f32.mrb[0].mxu0
  %691 = vmatprep.mubr.f32.mxu0 0.0
  %v692 = vand.u32 %v62, 4294901760
  %v693 = vsub.f32 %v62, %v692
  %694 = vmatmul.mubr.f32.gmra.mrb[0].mxu0 %v693
  %v695 = vpop.f32.mrb[0].mxu0
  %v696 = vadd.f32 %v497, %v695
  %v697 = vpop.f32.mrb[0].mxu0
  %698 = vmatprep.mubr.f32.mxu0 0.0
  %v699 = vand.u32 %v65, 4294901760
  %v700 = vsub.f32 %v65, %v699
  %701 = vmatmul.mubr.f32.gmra.mrb[0].mxu0 %v700
  %v702 = vpop.f32.mrb[0].mxu0
  %v703 = vadd.f32 %v503, %v702
  %v704 = vpop.f32.mrb[0].mxu0
  %705 = vmatprep.mubr.f32.mxu0 0.0
  %v706 = vand.u32 %v68, 4294901760
  %v707 = vsub.f32 %v68, %v706
  %708 = vmatmul.mubr.f32.gmra.mrb[0].mxu0 %v707
  %v709 = vpop.f32.mrb[0].mxu0
  %v710 = vadd.f32 %v509, %v709
  %v711 = vpop.f32.mrb[0].mxu0
  %712 = vmatprep.mubr.f32.mxu0 0.0
  %v713 = vand.u32 %v71, 4294901760
  %v714 = vsub.f32 %v71, %v713
  %715 = vmatmul.mubr.f32.gmra.mrb[0].mxu0 %v714
  %v716 = vpop.f32.mrb[0].mxu0
  %v717 = vadd.f32 %v515, %v716
  %v718 = vpop.f32.mrb[0].mxu0
  %719 = vmatprep.mubr.f32.mxu0 0.0
  %v720 = vand.u32 %v74, 4294901760
  %v721 = vsub.f32 %v74, %v720
  %722 = vmatmul.mubr.f32.gmra.mrb[0].mxu0 %v721
  %v723 = vpop.f32.mrb[0].mxu0
  %v724 = vadd.f32 %v521, %v723
  %v725 = vpop.f32.mrb[0].mxu0
  %726 = vmatprep.mubr.f32.mxu0 0.0
  %v727 = vand.u32 %v77, 4294901760
  %v728 = vsub.f32 %v77, %v727
  %729 = vmatmul.mubr.f32.gmra.mrb[0].mxu0 %v728
  %v730 = vpop.f32.mrb[0].mxu0
  %v731 = vadd.f32 %v527, %v730
  %v732 = vpop.f32.mrb[0].mxu0
  %733 = vmatprep.mubr.f32.mxu0 0.0
  %v734 = vand.u32 %v80, 4294901760
  %v735 = vsub.f32 %v80, %v734
  %736 = vmatmul.mubr.f32.gmra.mrb[0].mxu0 %v735
  %v737 = vpop.f32.mrb[0].mxu0
  %v738 = vadd.f32 %v533, %v737
  %v739 = vpop.f32.mrb[0].mxu0
  %740 = vmatprep.mubr.f32.mxu0 0.0
  %v741 = vand.u32 %v83, 4294901760
  %v742 = vsub.f32 %v83, %v741
  %743 = vmatmul.mubr.f32.gmra.mrb[0].mxu0 %v742
  %v744 = vpop.f32.mrb[0].mxu0
  %v745 = vadd.f32 %v539, %v744
  %v746 = vpop.f32.mrb[0].mxu0
  %747 = vmatprep.mubr.f32.mxu0 0.0
  %v748 = vand.u32 %v86, 4294901760
  %v749 = vsub.f32 %v86, %v748
  %750 = vmatmul.mubr.f32.gmra.mrb[0].mxu0 %v749
  %v751 = vpop.f32.mrb[0].mxu0
  %v752 = vadd.f32 %v545, %v751
  %v753 = vpop.f32.mrb[0].mxu0
  %754 = vmatprep.mubr.f32.mxu0 0.0
  %v755 = vand.u32 %v89, 4294901760
  %v756 = vsub.f32 %v89, %v755
  %757 = vmatmul.mubr.f32.gmra.mrb[0].mxu0 %v756
  %v758 = vpop.f32.mrb[0].mxu0
  %v759 = vadd.f32 %v551, %v758
  %v760 = vpop.f32.mrb[0].mxu0
  %761 = vmatprep.mubr.f32.mxu0 0.0
  %v762 = vand.u32 %v92, 4294901760
  %v763 = vsub.f32 %v92, %v762
  %764 = vmatmul.mubr.f32.gmra.mrb[0].mxu0 %v763
  %v765 = vpop.f32.mrb[0].mxu0
  %v766 = vadd.f32 %v557, %v765
  %v767 = vpop.f32.mrb[0].mxu0
  %768 = vmatprep.mubr.f32.mxu0 0.0
  %v769 = vand.u32 %v95, 4294901760
  %v770 = vsub.f32 %v95, %v769
  %771 = vmatmul.mubr.f32.gmra.mrb[0].mxu0 %v770
  %v772 = vpop.f32.mrb[0].mxu0
  %v773 = vadd.f32 %v563, %v772
  %v774 = vpop.f32.mrb[0].mxu0
  %775 = vmatprep.mubr.f32.mxu0 0.0
  %v776 = vand.u32 %v98, 4294901760
  %v777 = vsub.f32 %v98, %v776
  %778 = vmatmul.mubr.f32.gmra.mrb[0].mxu0 %v777
  %v779 = vpop.f32.mrb[0].mxu0
  %v780 = vadd.f32 %v569, %v779
  %v781 = vpop.f32.mrb[0].mxu0
  %782 = vmatprep.mubr.f32.mxu0 0.0
  %v783 = vand.u32 %v101, 4294901760
  %v784 = vsub.f32 %v101, %v783
  %785 = vmatmul.mubr.f32.gmra.mrb[0].mxu0 %v784
  %v786 = vpop.f32.mrb[0].mxu0
  %v787 = vadd.f32 %v575, %v786
  %v788 = vpop.f32.mrb[0].mxu0
  %789 = vmatprep.mubr.f32.mxu0 0.0
  %v790 = vand.u32 %v104, 4294901760
  %v791 = vsub.f32 %v104, %v790
  %792 = vmatmul.mubr.f32.gmra.mrb[0].mxu0 %v791
  %v793 = vpop.f32.mrb[0].mxu0
  %v794 = vadd.f32 %v581, %v793
  %v795 = vpop.f32.mrb[0].mxu0
  %796 = vdwg.mxu0
  %797 = vmatprep.subr.mxu0 0.0
  %v798 = vand.u32 %v34, 4294901760
  %799 = vmatpush1.msra.mxu0 %v798
  %800 = vmatprep.subr.mxu0 0.0
  %v801 = vand.u32 %v35, 4294901760
  %802 = vmatpush1.msra.mxu0 %v801
  %803 = vmatprep.subr.mxu0 0.0
  %v804 = vand.u32 %v36, 4294901760
  %805 = vmatpush1.msra.mxu0 %v804
  %806 = vmatprep.subr.mxu0 0.0
  %v807 = vand.u32 %v108, 4294901760
  %808 = vmatpush1.msra.mxu0 %v807
  %809 = vmatprep.subr.mxu0 0.0
  %810 = vmatpush1.msra.mxu0 0.0
  %811 = vmatprep.subr.mxu0 0.0
  %812 = vmatpush1.msra.mxu0 0.0
  %813 = vmatprep.subr.mxu0 0.0
  %814 = vmatpush1.msra.mxu0 0.0
  %815 = vmatprep.subr.mxu0 0.0
  %816 = vmatpush1.msra.mxu0 0.0
  %817 = vmatprep.subr.mxu0 0.0
  %818 = vmatpush1.msra.mxu0 0.0
  %819 = vmatprep.subr.mxu0 0.0
  %820 = vmatpush1.msra.mxu0 0.0
  %821 = vmatprep.subr.mxu0 0.0
  %822 = vmatpush1.msra.mxu0 0.0
  %823 = vmatprep.subr.mxu0 0.0
  %824 = vmatpush1.msra.mxu0 0.0
  %825 = vmatprep.subr.mxu0 0.0
  %826 = vmatpush1.msra.mxu0 0.0
  %827 = vmatprep.subr.mxu0 0.0
  %828 = vmatpush1.msra.mxu0 0.0
  %829 = vmatprep.subr.mxu0 0.0
  %830 = vmatpush1.msra.mxu0 0.0
  %831 = vmatprep.subr.mxu0 0.0
  %832 = vmatpush1.msra.mxu0 0.0
  %833 = vmatprep.subr.mxu0 0.0
  %834 = vmatpush1.msra.mxu0 0.0
  %835 = vmatprep.subr.mxu0 0.0
  %836 = vmatpush1.msra.mxu0 0.0
  %837 = vmatprep.subr.mxu0 0.0
  %838 = vmatpush1.msra.mxu0 0.0
  %839 = vmatprep.subr.mxu0 0.0
  %840 = vmatpush1.msra.mxu0 0.0
  %841 = vmatprep.subr.mxu0 0.0
  %842 = vmatpush1.msra.mxu0 0.0
  %843 = vmatprep.subr.mxu0 0.0
  %844 = vmatpush1.msra.mxu0 0.0
  %845 = vmatprep.subr.mxu0 0.0
  %846 = vmatpush1.msra.mxu0 0.0
  %847 = vmatprep.subr.mxu0 0.0
  %848 = vmatpush1.msra.mxu0 0.0
  %849 = vmatprep.subr.mxu0 0.0
  %850 = vmatpush1.msra.mxu0 0.0
  %851 = vmatprep.subr.mxu0 0.0
  %852 = vmatpush1.msra.mxu0 0.0
  %853 = vmatprep.subr.mxu0 0.0
  %854 = vmatpush1.msra.mxu0 0.0
  %855 = vmatprep.subr.mxu0 0.0
  %856 = vmatpush1.msra.mxu0 0.0
  %857 = vmatprep.subr.mxu0 0.0
  %858 = vmatpush1.msra.mxu0 0.0
  %859 = vmatprep.subr.mxu0 0.0
  %860 = vmatpush1.msra.mxu0 0.0
  %861 = vmatprep.subr.mxu0 0.0
  %862 = vmatpush1.msra.mxu0 0.0
  %863 = vmatprep.subr.mxu0 0.0
  %864 = vmatpush1.msra.mxu0 0.0
  %865 = vmatprep.mubr.f32.mxu0 0.0
  %v866 = vand.u32 %v47, 4294901760
  %v867 = vsub.f32 %v47, %v866
  %v868 = vand.u32 %v867, 4294901760
  %869 = vmatmul.mubr.f32.gmra.mrb[0].mxu0 %v868
  %v870 = vpop.f32.mrb[0].mxu0
  %v871 = vadd.f32 %v661, %v870
  %v872 = vpop.f32.mrb[0].mxu0
  %873 = vmatprep.mubr.f32.mxu0 0.0
  %v874 = vand.u32 %v50, 4294901760
  %v875 = vsub.f32 %v50, %v874
  %v876 = vand.u32 %v875, 4294901760
  %877 = vmatmul.mubr.f32.gmra.mrb[0].mxu0 %v876
  %v878 = vpop.f32.mrb[0].mxu0
  %v879 = vadd.f32 %v668, %v878
  %v880 = vpop.f32.mrb[0].mxu0
  %881 = vmatprep.mubr.f32.mxu0 0.0
  %v882 = vand.u32 %v53, 4294901760
  %v883 = vsub.f32 %v53, %v882
  %v884 = vand.u32 %v883, 4294901760
  %885 = vmatmul.mubr.f32.gmra.mrb[0].mxu0 %v884
  %v886 = vpop.f32.mrb[0].mxu0
  %v887 = vadd.f32 %v675, %v886
  %v888 = vpop.f32.mrb[0].mxu0
  %889 = vmatprep.mubr.f32.mxu0 0.0
  %v890 = vand.u32 %v56, 4294901760
  %v891 = vsub.f32 %v56, %v890
  %v892 = vand.u32 %v891, 4294901760
  %893 = vmatmul.mubr.f32.gmra.mrb[0].mxu0 %v892
  %v894 = vpop.f32.mrb[0].mxu0
  %v895 = vadd.f32 %v682, %v894
  %v896 = vpop.f32.mrb[0].mxu0
  %897 = vmatprep.mubr.f32.mxu0 0.0
  %v898 = vand.u32 %v59, 4294901760
  %v899 = vsub.f32 %v59, %v898
  %v900 = vand.u32 %v899, 4294901760
  %901 = vmatmul.mubr.f32.gmra.mrb[0].mxu0 %v900
  %v902 = vpop.f32.mrb[0].mxu0
  %v903 = vadd.f32 %v689, %v902
  %v904 = vpop.f32.mrb[0].mxu0
  %905 = vmatprep.mubr.f32.mxu0 0.0
  %v906 = vand.u32 %v62, 4294901760
  %v907 = vsub.f32 %v62, %v906
  %v908 = vand.u32 %v907, 4294901760
  %909 = vmatmul.mubr.f32.gmra.mrb[0].mxu0 %v908
  %v910 = vpop.f32.mrb[0].mxu0
  %v911 = vadd.f32 %v696, %v910
  %v912 = vpop.f32.mrb[0].mxu0
  %913 = vmatprep.mubr.f32.mxu0 0.0
  %v914 = vand.u32 %v65, 4294901760
  %v915 = vsub.f32 %v65, %v914
  %v916 = vand.u32 %v915, 4294901760
  %917 = vmatmul.mubr.f32.gmra.mrb[0].mxu0 %v916
  %v918 = vpop.f32.mrb[0].mxu0
  %v919 = vadd.f32 %v703, %v918
  %v920 = vpop.f32.mrb[0].mxu0
  %921 = vmatprep.mubr.f32.mxu0 0.0
  %v922 = vand.u32 %v68, 4294901760
  %v923 = vsub.f32 %v68, %v922
  %v924 = vand.u32 %v923, 4294901760
  %925 = vmatmul.mubr.f32.gmra.mrb[0].mxu0 %v924
  %v926 = vpop.f32.mrb[0].mxu0
  %v927 = vadd.f32 %v710, %v926
  %v928 = vpop.f32.mrb[0].mxu0
  %929 = vmatprep.mubr.f32.mxu0 0.0
  %v930 = vand.u32 %v71, 4294901760
  %v931 = vsub.f32 %v71, %v930
  %v932 = vand.u32 %v931, 4294901760
  %933 = vmatmul.mubr.f32.gmra.mrb[0].mxu0 %v932
  %v934 = vpop.f32.mrb[0].mxu0
  %v935 = vadd.f32 %v717, %v934
  %v936 = vpop.f32.mrb[0].mxu0
  %937 = vmatprep.mubr.f32.mxu0 0.0
  %v938 = vand.u32 %v74, 4294901760
  %v939 = vsub.f32 %v74, %v938
  %v940 = vand.u32 %v939, 4294901760
  %941 = vmatmul.mubr.f32.gmra.mrb[0].mxu0 %v940
  %v942 = vpop.f32.mrb[0].mxu0
  %v943 = vadd.f32 %v724, %v942
  %v944 = vpop.f32.mrb[0].mxu0
  %945 = vmatprep.mubr.f32.mxu0 0.0
  %v946 = vand.u32 %v77, 4294901760
  %v947 = vsub.f32 %v77, %v946
  %v948 = vand.u32 %v947, 4294901760
  %949 = vmatmul.mubr.f32.gmra.mrb[0].mxu0 %v948
  %v950 = vpop.f32.mrb[0].mxu0
  %v951 = vadd.f32 %v731, %v950
  %v952 = vpop.f32.mrb[0].mxu0
  %953 = vmatprep.mubr.f32.mxu0 0.0
  %v954 = vand.u32 %v80, 4294901760
  %v955 = vsub.f32 %v80, %v954
  %v956 = vand.u32 %v955, 4294901760
  %957 = vmatmul.mubr.f32.gmra.mrb[0].mxu0 %v956
  %v958 = vpop.f32.mrb[0].mxu0
  %v959 = vadd.f32 %v738, %v958
  %v960 = vpop.f32.mrb[0].mxu0
  %961 = vmatprep.mubr.f32.mxu0 0.0
  %v962 = vand.u32 %v83, 4294901760
  %v963 = vsub.f32 %v83, %v962
  %v964 = vand.u32 %v963, 4294901760
  %965 = vmatmul.mubr.f32.gmra.mrb[0].mxu0 %v964
  %v966 = vpop.f32.mrb[0].mxu0
  %v967 = vadd.f32 %v745, %v966
  %v968 = vpop.f32.mrb[0].mxu0
  %969 = vmatprep.mubr.f32.mxu0 0.0
  %v970 = vand.u32 %v86, 4294901760
  %v971 = vsub.f32 %v86, %v970
  %v972 = vand.u32 %v971, 4294901760
  %973 = vmatmul.mubr.f32.gmra.mrb[0].mxu0 %v972
  %v974 = vpop.f32.mrb[0].mxu0
  %v975 = vadd.f32 %v752, %v974
  %v976 = vpop.f32.mrb[0].mxu0
  %977 = vmatprep.mubr.f32.mxu0 0.0
  %v978 = vand.u32 %v89, 4294901760
  %v979 = vsub.f32 %v89, %v978
  %v980 = vand.u32 %v979, 4294901760
  %981 = vmatmul.mubr.f32.gmra.mrb[0].mxu0 %v980
  %v982 = vpop.f32.mrb[0].mxu0
  %v983 = vadd.f32 %v759, %v982
  %v984 = vpop.f32.mrb[0].mxu0
  %985 = vmatprep.mubr.f32.mxu0 0.0
  %v986 = vand.u32 %v92, 4294901760
  %v987 = vsub.f32 %v92, %v986
  %v988 = vand.u32 %v987, 4294901760
  %989 = vmatmul.mubr.f32.gmra.mrb[0].mxu0 %v988
  %v990 = vpop.f32.mrb[0].mxu0
  %v991 = vadd.f32 %v766, %v990
  %v992 = vpop.f32.mrb[0].mxu0
  %993 = vmatprep.mubr.f32.mxu0 0.0
  %v994 = vand.u32 %v95, 4294901760
  %v995 = vsub.f32 %v95, %v994
  %v996 = vand.u32 %v995, 4294901760
  %997 = vmatmul.mubr.f32.gmra.mrb[0].mxu0 %v996
  %v998 = vpop.f32.mrb[0].mxu0
  %v999 = vadd.f32 %v773, %v998
  %v1000 = vpop.f32.mrb[0].mxu0
  %1001 = vmatprep.mubr.f32.mxu0 0.0
  %v1002 = vand.u32 %v98, 4294901760
  %v1003 = vsub.f32 %v98, %v1002
  %v1004 = vand.u32 %v1003, 4294901760
  %1005 = vmatmul.mubr.f32.gmra.mrb[0].mxu0 %v1004
  %v1006 = vpop.f32.mrb[0].mxu0
  %v1007 = vadd.f32 %v780, %v1006
  %v1008 = vpop.f32.mrb[0].mxu0
  %1009 = vmatprep.mubr.f32.mxu0 0.0
  %v1010 = vand.u32 %v101, 4294901760
  %v1011 = vsub.f32 %v101, %v1010
  %v1012 = vand.u32 %v1011, 4294901760
  %1013 = vmatmul.mubr.f32.gmra.mrb[0].mxu0 %v1012
  %v1014 = vpop.f32.mrb[0].mxu0
  %v1015 = vadd.f32 %v787, %v1014
  %v1016 = vpop.f32.mrb[0].mxu0
  %1017 = vmatprep.mubr.f32.mxu0 0.0
  %v1018 = vand.u32 %v104, 4294901760
  %v1019 = vsub.f32 %v104, %v1018
  %v1020 = vand.u32 %v1019, 4294901760
  %1021 = vmatmul.mubr.f32.gmra.mrb[0].mxu0 %v1020
  %v1022 = vpop.f32.mrb[0].mxu0
  %v1023 = vadd.f32 %v794, %v1022
  %v1024 = vpop.f32.mrb[0].mxu0
  %1025 = vdwg.mxu0
  %1026 = vmatprep.subr.mxu0 0.0
  %v1027 = vand.u32 %v34, 4294901760
  %v1028 = vsub.f32 %v34, %v1027
  %v1029 = vand.u32 %v1028, 4294901760
  %1030 = vmatpush1.msra.mxu0 %v1029
  %1031 = vmatprep.subr.mxu0 0.0
  %v1032 = vand.u32 %v35, 4294901760
  %v1033 = vsub.f32 %v35, %v1032
  %v1034 = vand.u32 %v1033, 4294901760
  %1035 = vmatpush1.msra.mxu0 %v1034
  %1036 = vmatprep.subr.mxu0 0.0
  %v1037 = vand.u32 %v36, 4294901760
  %v1038 = vsub.f32 %v36, %v1037
  %v1039 = vand.u32 %v1038, 4294901760
  %1040 = vmatpush1.msra.mxu0 %v1039
  %1041 = vmatprep.subr.mxu0 0.0
  %v1042 = vand.u32 %v108, 4294901760
  %v1043 = vsub.f32 %v108, %v1042
  %v1044 = vand.u32 %v1043, 4294901760
  %1045 = vmatpush1.msra.mxu0 %v1044
  %1046 = vmatprep.subr.mxu0 0.0
  %1047 = vmatpush1.msra.mxu0 0.0
  %1048 = vmatprep.subr.mxu0 0.0
  %1049 = vmatpush1.msra.mxu0 0.0
  %1050 = vmatprep.subr.mxu0 0.0
  %1051 = vmatpush1.msra.mxu0 0.0
  %1052 = vmatprep.subr.mxu0 0.0
  %1053 = vmatpush1.msra.mxu0 0.0
  %1054 = vmatprep.subr.mxu0 0.0
  %1055 = vmatpush1.msra.mxu0 0.0
  %1056 = vmatprep.subr.mxu0 0.0
  %1057 = vmatpush1.msra.mxu0 0.0
  %1058 = vmatprep.subr.mxu0 0.0
  %1059 = vmatpush1.msra.mxu0 0.0
  %1060 = vmatprep.subr.mxu0 0.0
  %1061 = vmatpush1.msra.mxu0 0.0
  %1062 = vmatprep.subr.mxu0 0.0
  %1063 = vmatpush1.msra.mxu0 0.0
  %1064 = vmatprep.subr.mxu0 0.0
  %1065 = vmatpush1.msra.mxu0 0.0
  %1066 = vmatprep.subr.mxu0 0.0
  %1067 = vmatpush1.msra.mxu0 0.0
  %1068 = vmatprep.subr.mxu0 0.0
  %1069 = vmatpush1.msra.mxu0 0.0
  %1070 = vmatprep.subr.mxu0 0.0
  %1071 = vmatpush1.msra.mxu0 0.0
  %1072 = vmatprep.subr.mxu0 0.0
  %1073 = vmatpush1.msra.mxu0 0.0
  %1074 = vmatprep.subr.mxu0 0.0
  %1075 = vmatpush1.msra.mxu0 0.0
  %1076 = vmatprep.subr.mxu0 0.0
  %1077 = vmatpush1.msra.mxu0 0.0
  %1078 = vmatprep.subr.mxu0 0.0
  %1079 = vmatpush1.msra.mxu0 0.0
  %1080 = vmatprep.subr.mxu0 0.0
  %1081 = vmatpush1.msra.mxu0 0.0
  %1082 = vmatprep.subr.mxu0 0.0
  %1083 = vmatpush1.msra.mxu0 0.0
  %1084 = vmatprep.subr.mxu0 0.0
  %1085 = vmatpush1.msra.mxu0 0.0
  %1086 = vmatprep.subr.mxu0 0.0
  %1087 = vmatpush1.msra.mxu0 0.0
  %1088 = vmatprep.subr.mxu0 0.0
  %1089 = vmatpush1.msra.mxu0 0.0
  %1090 = vmatprep.subr.mxu0 0.0
  %1091 = vmatpush1.msra.mxu0 0.0
  %1092 = vmatprep.subr.mxu0 0.0
  %1093 = vmatpush1.msra.mxu0 0.0
  %1094 = vmatprep.subr.mxu0 0.0
  %1095 = vmatpush1.msra.mxu0 0.0
  %1096 = vmatprep.subr.mxu0 0.0
  %1097 = vmatpush1.msra.mxu0 0.0
  %1098 = vmatprep.subr.mxu0 0.0
  %1099 = vmatpush1.msra.mxu0 0.0
  %1100 = vmatprep.subr.mxu0 0.0
  %1101 = vmatpush1.msra.mxu0 0.0
  %1102 = vmatprep.mubr.f32.mxu0 0.0
  %v1103 = vand.u32 %v47, 4294901760
  %1104 = vmatmul.mubr.f32.gmra.mrb[0].mxu0 %v1103
  %v1105 = vpop.f32.mrb[0].mxu0
  %v1106 = vadd.f32 %v871, %v1105
  %v1107 = vpop.f32.mrb[0].mxu0
  %1108 = vmatprep.mubr.f32.mxu0 0.0
  %v1109 = vand.u32 %v50, 4294901760
  %1110 = vmatmul.mubr.f32.gmra.mrb[0].mxu0 %v1109
  %v1111 = vpop.f32.mrb[0].mxu0
  %v1112 = vadd.f32 %v879, %v1111
  %v1113 = vpop.f32.mrb[0].mxu0
  %1114 = vmatprep.mubr.f32.mxu0 0.0
  %v1115 = vand.u32 %v53, 4294901760
  %1116 = vmatmul.mubr.f32.gmra.mrb[0].mxu0 %v1115
  %v1117 = vpop.f32.mrb[0].mxu0
  %v1118 = vadd.f32 %v887, %v1117
  %v1119 = vpop.f32.mrb[0].mxu0
  %1120 = vmatprep.mubr.f32.mxu0 0.0
  %v1121 = vand.u32 %v56, 4294901760
  %1122 = vmatmul.mubr.f32.gmra.mrb[0].mxu0 %v1121
  %v1123 = vpop.f32.mrb[0].mxu0
  %v1124 = vadd.f32 %v895, %v1123
  %v1125 = vpop.f32.mrb[0].mxu0
  %1126 = vmatprep.mubr.f32.mxu0 0.0
  %v1127 = vand.u32 %v59, 4294901760
  %1128 = vmatmul.mubr.f32.gmra.mrb[0].mxu0 %v1127
  %v1129 = vpop.f32.mrb[0].mxu0
  %v1130 = vadd.f32 %v903, %v1129
  %v1131 = vpop.f32.mrb[0].mxu0
  %1132 = vmatprep.mubr.f32.mxu0 0.0
  %v1133 = vand.u32 %v62, 4294901760
  %1134 = vmatmul.mubr.f32.gmra.mrb[0].mxu0 %v1133
  %v1135 = vpop.f32.mrb[0].mxu0
  %v1136 = vadd.f32 %v911, %v1135
  %v1137 = vpop.f32.mrb[0].mxu0
  %1138 = vmatprep.mubr.f32.mxu0 0.0
  %v1139 = vand.u32 %v65, 4294901760
  %1140 = vmatmul.mubr.f32.gmra.mrb[0].mxu0 %v1139
  %v1141 = vpop.f32.mrb[0].mxu0
  %v1142 = vadd.f32 %v919, %v1141
  %v1143 = vpop.f32.mrb[0].mxu0
  %1144 = vmatprep.mubr.f32.mxu0 0.0
  %v1145 = vand.u32 %v68, 4294901760
  %1146 = vmatmul.mubr.f32.gmra.mrb[0].mxu0 %v1145
  %v1147 = vpop.f32.mrb[0].mxu0
  %v1148 = vadd.f32 %v927, %v1147
  %v1149 = vpop.f32.mrb[0].mxu0
  %1150 = vmatprep.mubr.f32.mxu0 0.0
  %v1151 = vand.u32 %v71, 4294901760
  %1152 = vmatmul.mubr.f32.gmra.mrb[0].mxu0 %v1151
  %v1153 = vpop.f32.mrb[0].mxu0
  %v1154 = vadd.f32 %v935, %v1153
  %v1155 = vpop.f32.mrb[0].mxu0
  %1156 = vmatprep.mubr.f32.mxu0 0.0
  %v1157 = vand.u32 %v74, 4294901760
  %1158 = vmatmul.mubr.f32.gmra.mrb[0].mxu0 %v1157
  %v1159 = vpop.f32.mrb[0].mxu0
  %v1160 = vadd.f32 %v943, %v1159
  %v1161 = vpop.f32.mrb[0].mxu0
  %1162 = vmatprep.mubr.f32.mxu0 0.0
  %v1163 = vand.u32 %v77, 4294901760
  %1164 = vmatmul.mubr.f32.gmra.mrb[0].mxu0 %v1163
  %v1165 = vpop.f32.mrb[0].mxu0
  %v1166 = vadd.f32 %v951, %v1165
  %v1167 = vpop.f32.mrb[0].mxu0
  %1168 = vmatprep.mubr.f32.mxu0 0.0
  %v1169 = vand.u32 %v80, 4294901760
  %1170 = vmatmul.mubr.f32.gmra.mrb[0].mxu0 %v1169
  %v1171 = vpop.f32.mrb[0].mxu0
  %v1172 = vadd.f32 %v959, %v1171
  %v1173 = vpop.f32.mrb[0].mxu0
  %1174 = vmatprep.mubr.f32.mxu0 0.0
  %v1175 = vand.u32 %v83, 4294901760
  %1176 = vmatmul.mubr.f32.gmra.mrb[0].mxu0 %v1175
  %v1177 = vpop.f32.mrb[0].mxu0
  %v1178 = vadd.f32 %v967, %v1177
  %v1179 = vpop.f32.mrb[0].mxu0
  %1180 = vmatprep.mubr.f32.mxu0 0.0
  %v1181 = vand.u32 %v86, 4294901760
  %1182 = vmatmul.mubr.f32.gmra.mrb[0].mxu0 %v1181
  %v1183 = vpop.f32.mrb[0].mxu0
  %v1184 = vadd.f32 %v975, %v1183
  %v1185 = vpop.f32.mrb[0].mxu0
  %1186 = vmatprep.mubr.f32.mxu0 0.0
  %v1187 = vand.u32 %v89, 4294901760
  %1188 = vmatmul.mubr.f32.gmra.mrb[0].mxu0 %v1187
  %v1189 = vpop.f32.mrb[0].mxu0
  %v1190 = vadd.f32 %v983, %v1189
  %v1191 = vpop.f32.mrb[0].mxu0
  %1192 = vmatprep.mubr.f32.mxu0 0.0
  %v1193 = vand.u32 %v92, 4294901760
  %1194 = vmatmul.mubr.f32.gmra.mrb[0].mxu0 %v1193
  %v1195 = vpop.f32.mrb[0].mxu0
  %v1196 = vadd.f32 %v991, %v1195
  %v1197 = vpop.f32.mrb[0].mxu0
  %1198 = vmatprep.mubr.f32.mxu0 0.0
  %v1199 = vand.u32 %v95, 4294901760
  %1200 = vmatmul.mubr.f32.gmra.mrb[0].mxu0 %v1199
  %v1201 = vpop.f32.mrb[0].mxu0
  %v1202 = vadd.f32 %v999, %v1201
  %v1203 = vpop.f32.mrb[0].mxu0
  %1204 = vmatprep.mubr.f32.mxu0 0.0
  %v1205 = vand.u32 %v98, 4294901760
  %1206 = vmatmul.mubr.f32.gmra.mrb[0].mxu0 %v1205
  %v1207 = vpop.f32.mrb[0].mxu0
  %v1208 = vadd.f32 %v1007, %v1207
  %v1209 = vpop.f32.mrb[0].mxu0
  %1210 = vmatprep.mubr.f32.mxu0 0.0
  %v1211 = vand.u32 %v101, 4294901760
  %1212 = vmatmul.mubr.f32.gmra.mrb[0].mxu0 %v1211
  %v1213 = vpop.f32.mrb[0].mxu0
  %v1214 = vadd.f32 %v1015, %v1213
  %v1215 = vpop.f32.mrb[0].mxu0
  %1216 = vmatprep.mubr.f32.mxu0 0.0
  %v1217 = vand.u32 %v104, 4294901760
  %1218 = vmatmul.mubr.f32.gmra.mrb[0].mxu0 %v1217
  %v1219 = vpop.f32.mrb[0].mxu0
  %v1220 = vadd.f32 %v1023, %v1219
  %v1221 = vpop.f32.mrb[0].mxu0
  %1222 = vdwg.mxu0
  %1223 = vmatprep.subr.mxu0 0.0
  %v1224 = vand.u32 %v34, 4294901760
  %1225 = vmatpush1.msra.mxu0 %v1224
  %1226 = vmatprep.subr.mxu0 0.0
  %v1227 = vand.u32 %v35, 4294901760
  %1228 = vmatpush1.msra.mxu0 %v1227
  %1229 = vmatprep.subr.mxu0 0.0
  %v1230 = vand.u32 %v36, 4294901760
  %1231 = vmatpush1.msra.mxu0 %v1230
  %1232 = vmatprep.subr.mxu0 0.0
  %v1233 = vand.u32 %v108, 4294901760
  %1234 = vmatpush1.msra.mxu0 %v1233
  %1235 = vmatprep.subr.mxu0 0.0
  %1236 = vmatpush1.msra.mxu0 0.0
  %1237 = vmatprep.subr.mxu0 0.0
  %1238 = vmatpush1.msra.mxu0 0.0
  %1239 = vmatprep.subr.mxu0 0.0
  %1240 = vmatpush1.msra.mxu0 0.0
  %1241 = vmatprep.subr.mxu0 0.0
  %1242 = vmatpush1.msra.mxu0 0.0
  %1243 = vmatprep.subr.mxu0 0.0
  %1244 = vmatpush1.msra.mxu0 0.0
  %1245 = vmatprep.subr.mxu0 0.0
  %1246 = vmatpush1.msra.mxu0 0.0
  %1247 = vmatprep.subr.mxu0 0.0
  %1248 = vmatpush1.msra.mxu0 0.0
  %1249 = vmatprep.subr.mxu0 0.0
  %1250 = vmatpush1.msra.mxu0 0.0
  %1251 = vmatprep.subr.mxu0 0.0
  %1252 = vmatpush1.msra.mxu0 0.0
  %1253 = vmatprep.subr.mxu0 0.0
  %1254 = vmatpush1.msra.mxu0 0.0
  %1255 = vmatprep.subr.mxu0 0.0
  %1256 = vmatpush1.msra.mxu0 0.0
  %1257 = vmatprep.subr.mxu0 0.0
  %1258 = vmatpush1.msra.mxu0 0.0
  %1259 = vmatprep.subr.mxu0 0.0
  %1260 = vmatpush1.msra.mxu0 0.0
  %1261 = vmatprep.subr.mxu0 0.0
  %1262 = vmatpush1.msra.mxu0 0.0
  %1263 = vmatprep.subr.mxu0 0.0
  %1264 = vmatpush1.msra.mxu0 0.0
  %1265 = vmatprep.subr.mxu0 0.0
  %1266 = vmatpush1.msra.mxu0 0.0
  %1267 = vmatprep.subr.mxu0 0.0
  %1268 = vmatpush1.msra.mxu0 0.0
  %1269 = vmatprep.subr.mxu0 0.0
  %1270 = vmatpush1.msra.mxu0 0.0
  %1271 = vmatprep.subr.mxu0 0.0
  %1272 = vmatpush1.msra.mxu0 0.0
  %1273 = vmatprep.subr.mxu0 0.0
  %1274 = vmatpush1.msra.mxu0 0.0
  %1275 = vmatprep.subr.mxu0 0.0
  %1276 = vmatpush1.msra.mxu0 0.0
  %1277 = vmatprep.subr.mxu0 0.0
  %1278 = vmatpush1.msra.mxu0 0.0
  %1279 = vmatprep.subr.mxu0 0.0
  %1280 = vmatpush1.msra.mxu0 0.0
  %1281 = vmatprep.subr.mxu0 0.0
  %1282 = vmatpush1.msra.mxu0 0.0
  %1283 = vmatprep.subr.mxu0 0.0
  %1284 = vmatpush1.msra.mxu0 0.0
  %1285 = vmatprep.subr.mxu0 0.0
  %1286 = vmatpush1.msra.mxu0 0.0
  %1287 = vmatprep.subr.mxu0 0.0
  %1288 = vmatpush1.msra.mxu0 0.0
  %1289 = vmatprep.subr.mxu0 0.0
  %1290 = vmatpush1.msra.mxu0 0.0
  %1291 = vmatprep.mubr.f32.mxu0 0.0
  %v1292 = vand.u32 %v47, 4294901760
  %1293 = vmatmul.mubr.f32.gmra.mrb[0].mxu0 %v1292
  %v1294 = vpop.f32.mrb[0].mxu0
  %v1295 = vadd.f32 %v1106, %v1294
  %v1296 = vpop.f32.mrb[0].mxu0
  %1297 = vmatprep.mubr.f32.mxu0 0.0
  %v1298 = vand.u32 %v50, 4294901760
  %1299 = vmatmul.mubr.f32.gmra.mrb[0].mxu0 %v1298
  %v1300 = vpop.f32.mrb[0].mxu0
  %v1301 = vadd.f32 %v1112, %v1300
  %v1302 = vpop.f32.mrb[0].mxu0
  %1303 = vmatprep.mubr.f32.mxu0 0.0
  %v1304 = vand.u32 %v53, 4294901760
  %1305 = vmatmul.mubr.f32.gmra.mrb[0].mxu0 %v1304
  %v1306 = vpop.f32.mrb[0].mxu0
  %v1307 = vadd.f32 %v1118, %v1306
  %v1308 = vpop.f32.mrb[0].mxu0
  %1309 = vmatprep.mubr.f32.mxu0 0.0
  %v1310 = vand.u32 %v56, 4294901760
  %1311 = vmatmul.mubr.f32.gmra.mrb[0].mxu0 %v1310
  %v1312 = vpop.f32.mrb[0].mxu0
  %v1313 = vadd.f32 %v1124, %v1312
  %v1314 = vpop.f32.mrb[0].mxu0
  %1315 = vmatprep.mubr.f32.mxu0 0.0
  %v1316 = vand.u32 %v59, 4294901760
  %1317 = vmatmul.mubr.f32.gmra.mrb[0].mxu0 %v1316
  %v1318 = vpop.f32.mrb[0].mxu0
  %v1319 = vadd.f32 %v1130, %v1318
  %v1320 = vpop.f32.mrb[0].mxu0
  %1321 = vmatprep.mubr.f32.mxu0 0.0
  %v1322 = vand.u32 %v62, 4294901760
  %1323 = vmatmul.mubr.f32.gmra.mrb[0].mxu0 %v1322
  %v1324 = vpop.f32.mrb[0].mxu0
  %v1325 = vadd.f32 %v1136, %v1324
  %v1326 = vpop.f32.mrb[0].mxu0
  %1327 = vmatprep.mubr.f32.mxu0 0.0
  %v1328 = vand.u32 %v65, 4294901760
  %1329 = vmatmul.mubr.f32.gmra.mrb[0].mxu0 %v1328
  %v1330 = vpop.f32.mrb[0].mxu0
  %v1331 = vadd.f32 %v1142, %v1330
  %v1332 = vpop.f32.mrb[0].mxu0
  %1333 = vmatprep.mubr.f32.mxu0 0.0
  %v1334 = vand.u32 %v68, 4294901760
  %1335 = vmatmul.mubr.f32.gmra.mrb[0].mxu0 %v1334
  %v1336 = vpop.f32.mrb[0].mxu0
  %v1337 = vadd.f32 %v1148, %v1336
  %v1338 = vpop.f32.mrb[0].mxu0
  %1339 = vmatprep.mubr.f32.mxu0 0.0
  %v1340 = vand.u32 %v71, 4294901760
  %1341 = vmatmul.mubr.f32.gmra.mrb[0].mxu0 %v1340
  %v1342 = vpop.f32.mrb[0].mxu0
  %v1343 = vadd.f32 %v1154, %v1342
  %v1344 = vpop.f32.mrb[0].mxu0
  %1345 = vmatprep.mubr.f32.mxu0 0.0
  %v1346 = vand.u32 %v74, 4294901760
  %1347 = vmatmul.mubr.f32.gmra.mrb[0].mxu0 %v1346
  %v1348 = vpop.f32.mrb[0].mxu0
  %v1349 = vadd.f32 %v1160, %v1348
  %v1350 = vpop.f32.mrb[0].mxu0
  %1351 = vmatprep.mubr.f32.mxu0 0.0
  %v1352 = vand.u32 %v77, 4294901760
  %1353 = vmatmul.mubr.f32.gmra.mrb[0].mxu0 %v1352
  %v1354 = vpop.f32.mrb[0].mxu0
  %v1355 = vadd.f32 %v1166, %v1354
  %v1356 = vpop.f32.mrb[0].mxu0
  %1357 = vmatprep.mubr.f32.mxu0 0.0
  %v1358 = vand.u32 %v80, 4294901760
  %1359 = vmatmul.mubr.f32.gmra.mrb[0].mxu0 %v1358
  %v1360 = vpop.f32.mrb[0].mxu0
  %v1361 = vadd.f32 %v1172, %v1360
  %v1362 = vpop.f32.mrb[0].mxu0
  %1363 = vmatprep.mubr.f32.mxu0 0.0
  %v1364 = vand.u32 %v83, 4294901760
  %1365 = vmatmul.mubr.f32.gmra.mrb[0].mxu0 %v1364
  %v1366 = vpop.f32.mrb[0].mxu0
  %v1367 = vadd.f32 %v1178, %v1366
  %v1368 = vpop.f32.mrb[0].mxu0
  %1369 = vmatprep.mubr.f32.mxu0 0.0
  %v1370 = vand.u32 %v86, 4294901760
  %1371 = vmatmul.mubr.f32.gmra.mrb[0].mxu0 %v1370
  %v1372 = vpop.f32.mrb[0].mxu0
  %v1373 = vadd.f32 %v1184, %v1372
  %v1374 = vpop.f32.mrb[0].mxu0
  %1375 = vmatprep.mubr.f32.mxu0 0.0
  %v1376 = vand.u32 %v89, 4294901760
  %1377 = vmatmul.mubr.f32.gmra.mrb[0].mxu0 %v1376
  %v1378 = vpop.f32.mrb[0].mxu0
  %v1379 = vadd.f32 %v1190, %v1378
  %v1380 = vpop.f32.mrb[0].mxu0
  %1381 = vmatprep.mubr.f32.mxu0 0.0
  %v1382 = vand.u32 %v92, 4294901760
  %1383 = vmatmul.mubr.f32.gmra.mrb[0].mxu0 %v1382
  %v1384 = vpop.f32.mrb[0].mxu0
  %v1385 = vadd.f32 %v1196, %v1384
  %v1386 = vpop.f32.mrb[0].mxu0
  %1387 = vmatprep.mubr.f32.mxu0 0.0
  %v1388 = vand.u32 %v95, 4294901760
  %1389 = vmatmul.mubr.f32.gmra.mrb[0].mxu0 %v1388
  %v1390 = vpop.f32.mrb[0].mxu0
  %v1391 = vadd.f32 %v1202, %v1390
  %v1392 = vpop.f32.mrb[0].mxu0
  %1393 = vmatprep.mubr.f32.mxu0 0.0
  %v1394 = vand.u32 %v98, 4294901760
  %1395 = vmatmul.mubr.f32.gmra.mrb[0].mxu0 %v1394
  %v1396 = vpop.f32.mrb[0].mxu0
  %v1397 = vadd.f32 %v1208, %v1396
  %v1398 = vpop.f32.mrb[0].mxu0
  %1399 = vmatprep.mubr.f32.mxu0 0.0
  %v1400 = vand.u32 %v101, 4294901760
  %1401 = vmatmul.mubr.f32.gmra.mrb[0].mxu0 %v1400
  %v1402 = vpop.f32.mrb[0].mxu0
  %v1403 = vadd.f32 %v1214, %v1402
  %v1404 = vpop.f32.mrb[0].mxu0
  %1405 = vmatprep.mubr.f32.mxu0 0.0
  %v1406 = vand.u32 %v104, 4294901760
  %1407 = vmatmul.mubr.f32.gmra.mrb[0].mxu0 %v1406
  %v1408 = vpop.f32.mrb[0].mxu0
  %v1409 = vadd.f32 %v1220, %v1408
  %v1410 = vpop.f32.mrb[0].mxu0
  %1411 = vdwg.mxu0
  %v1412 = vmax.f32 %v1295, 0.0
  %v1413 = vmax.f32 %v1301, 0.0
  %v1414 = vmax.f32 %v1307, 0.0
  %v1415 = vmax.f32 %v1313, 0.0
  %v1416 = vmax.f32 %v1319, 0.0
  %v1417 = vmax.f32 %v1325, 0.0
  %v1418 = vmax.f32 %v1331, 0.0
  %v1419 = vmax.f32 %v1337, 0.0
  %v1420 = vmax.f32 %v1343, 0.0
  %v1421 = vmax.f32 %v1349, 0.0
  %v1422 = vmax.f32 %v1355, 0.0
  %v1423 = vmax.f32 %v1361, 0.0
  %v1424 = vmax.f32 %v1367, 0.0
  %v1425 = vmax.f32 %v1373, 0.0
  %v1426 = vmax.f32 %v1379, 0.0
  %v1427 = vmax.f32 %v1385, 0.0
  %v1428 = vmax.f32 %v1391, 0.0
  %v1429 = vmax.f32 %v1397, 0.0
  %v1430 = vmax.f32 %v1403, 0.0
  %v1431 = vmax.f32 %v1409, 0.0
  %1432 = vst [vmem:[%s3] sm:$0xff] %v1412
  %1433 = vst [vmem:[%s3 + $0x8] sm:$0xff] %v1413
  %1434 = vst [vmem:[%s3 + $0x10] sm:$0xff] %v1414
  %1435 = vst [vmem:[%s3 + $0x18] sm:$0xff] %v1415
  %1436 = vst [vmem:[%s3 + $0x20] sm:$0xff] %v1416
  %1437 = vst [vmem:[%s3 + $0x28] sm:$0xff] %v1417
  %1438 = vst [vmem:[%s3 + $0x30] sm:$0xff] %v1418
  %1439 = vst [vmem:[%s3 + $0x38] sm:$0xff] %v1419
  %1440 = vst [vmem:[%s3 + $0x40] sm:$0xff] %v1420
  %1441 = vst [vmem:[%s3 + $0x48] sm:$0xff] %v1421
  %1442 = vst [vmem:[%s3 + $0x50] sm:$0xff] %v1422
  %1443 = vst [vmem:[%s3 + $0x58] sm:$0xff] %v1423
  %1444 = vst [vmem:[%s3 + $0x60] sm:$0xff] %v1424
  %1445 = vst [vmem:[%s3 + $0x68] sm:$0xff] %v1425
  %1446 = vst [vmem:[%s3 + $0x70] sm:$0xff] %v1426
  %1447 = vst [vmem:[%s3 + $0x78] sm:$0xff] %v1427
  %1448 = vst [vmem:[%s3 + $0x80] sm:$0xff] %v1428
  %1449 = vst [vmem:[%s3 + $0x88] sm:$0xff] %v1429
  %1450 = vst [vmem:[%s3 + $0x90] sm:$0xff] %v1430
  %1451 = vst [vmem:[%s3 + $0x98] sm:$0xff] %v1431
  // Predicated region
  $region14: #{_lambda_.7} parent=0 // pred_check
    _
  $region15: #{_lambda_.7} parent=0 // pred_check_branch
    %1453 = sbr.rel (0) target = $region17
  $region16: #{_lambda_.7} parent=0 // pred_region
    _
  $region17: #{_lambda_.7} parent=0 // pred_fallthru
    _
  // Predicated region
  $region18: #{_lambda_.7} parent=0 // pred_check
    _
  $region19: #{_lambda_.7} parent=0 // pred_check_branch
    %1455 = sbr.rel (0) target = $region21
  $region20: #{_lambda_.7} parent=0 // pred_region
    _
  $region21: #{_lambda_.7} parent=0 // pred_fallthru
    _

// kernel: _lambda_.6
$region0: #{_lambda_.6}
  #allocation0 [shape = 'u32[]', space=smem, size = 0x4, offset = 0x4, fixed_abs, tag = 'smem constant byte address 0x4 - core index']
  #allocation1 [shape = 'u32[144,128]{1,0:T(1,128)}', space=vmem, size = 0x12000, scoped, tag = 'internal scratch']
  %s0 = inlined_call_operand.vmem [shape: f32[224,3], index: 0, kind: input, shape index: {}]
  %s1 = inlined_call_operand.vmem [shape: f32[3,128], index: 1, kind: input, shape index: {}]
  %s2 = inlined_call_operand.vmem [shape: f32[1,128], index: 2, kind: input, shape index: {}]
  %s3 = inlined_call_operand.vmem [shape: f32[224,128], index: 3, kind: output, shape index: {}]
  %s4 = sld [smem:[#allocation0]]
  $region22: #{_lambda_.6} parent=0
    _
  %s6 = ssub.s32 1, %s4
  %s7 = scalar_select 0, %s6, %s4
  // Predicated region
  $region2: #{_lambda_.6} parent=0 // pred_check
    _
  $region3: #{_lambda_.6} parent=0 // pred_check_branch
    %9 = sbr.rel (0) target = $region5
  $region4: #{_lambda_.6} parent=0 // pred_region
    _
  $region5: #{_lambda_.6} parent=0 // pred_fallthru
    _
  // Predicated region
  $region6: #{_lambda_.6} parent=0 // pred_check
    _
  $region7: #{_lambda_.6} parent=0 // pred_check_branch
    %11 = sbr.rel (0) target = $region9
  $region8: #{_lambda_.6} parent=0 // pred_region
    _
  $region9: #{_lambda_.6} parent=0 // pred_fallthru
    _
  // Predicated region
  $region10: #{_lambda_.6} parent=0 // pred_check
    _
  $region11: #{_lambda_.6} parent=0 // pred_check_branch
    %13 = sbr.rel (0) target = $region13
  $region12: #{_lambda_.6} parent=0 // pred_region
    _
  $region13: #{_lambda_.6} parent=0 // pred_fallthru
    _
  %v14 = vld [vmem:[%s0] sm:$0xff]
  %v15 = vld [vmem:[%s0 + $0x8] sm:$0xff]
  %v16 = vld [vmem:[%s0 + $0x10] sm:$0xff]
  %v17 = vld [vmem:[%s0 + $0x18] sm:$0xff]
  %v18 = vld [vmem:[%s0 + $0x20] sm:$0xff]
  %v19 = vld [vmem:[%s0 + $0x28] sm:$0xff]
  %v20 = vld [vmem:[%s0 + $0x30] sm:$0xff]
  %v21 = vld [vmem:[%s0 + $0x38] sm:$0xff]
  %v22 = vld [vmem:[%s0 + $0x40] sm:$0xff]
  %v23 = vld [vmem:[%s0 + $0x48] sm:$0xff]
  %v24 = vld [vmem:[%s0 + $0x50] sm:$0xff]
  %v25 = vld [vmem:[%s0 + $0x58] sm:$0xff]
  %v26 = vld [vmem:[%s0 + $0x60] sm:$0xff]
  %v27 = vld [vmem:[%s0 + $0x68] sm:$0xff]
  %v28 = vld [vmem:[%s0 + $0x70] sm:$0xff]
  %v29 = vld [vmem:[%s0 + $0x78] sm:$0xff]
  %v30 = vld [vmem:[%s0 + $0x80] sm:$0xff]
  %v31 = vld [vmem:[%s0 + $0x88] sm:$0xff]
  %v32 = vld [vmem:[%s0 + $0x90] sm:$0xff]
  %v33 = vld [vmem:[%s0 + $0x98] sm:$0xff]
  %v34 = vld [vmem:[%s0 + $0xa0] sm:$0xff]
  %v35 = vld [vmem:[%s0 + $0xa8] sm:$0xff]
  %v36 = vld [vmem:[%s0 + $0xb0] sm:$0xff]
  %v37 = vld [vmem:[%s0 + $0xb8] sm:$0xff]
  %v38 = vld [vmem:[%s0 + $0xc0] sm:$0xff]
  %v39 = vld [vmem:[%s0 + $0xc8] sm:$0xff]
  %v40 = vld [vmem:[%s0 + $0xd0] sm:$0xff]
  %v41 = vld [vmem:[%s0 + $0xd8] sm:$0xff]
  %v42 = vld [vmem:[%s1] sm:$0x7]
  %v43 = vld [vmem:[%s2] sm:$0x1]
  %v45 = vlaneseq
  %v46 = vshrl.u32 %v45, 7
  %v47 = vsub.s32 0, %v46
  %v48 = vrot.slane %v43, %v47
  %vm50 = vcmask 23552
  %v52 = vsel %vm50, %v14, 0
  %v55 = vsel %vm50, %v15, 0
  %v58 = vsel %vm50, %v16, 0
  %v61 = vsel %vm50, %v17, 0
  %v64 = vsel %vm50, %v18, 0
  %v67 = vsel %vm50, %v19, 0
  %v70 = vsel %vm50, %v20, 0
  %v73 = vsel %vm50, %v21, 0
  %v76 = vsel %vm50, %v22, 0
  %v79 = vsel %vm50, %v23, 0
  %v82 = vsel %vm50, %v24, 0
  %v85 = vsel %vm50, %v25, 0
  %v88 = vsel %vm50, %v26, 0
  %v91 = vsel %vm50, %v27, 0
  %v94 = vsel %vm50, %v28, 0
  %v97 = vsel %vm50, %v29, 0
  %v100 = vsel %vm50, %v30, 0
  %v103 = vsel %vm50, %v31, 0
  %v106 = vsel %vm50, %v32, 0
  %v109 = vsel %vm50, %v33, 0
  %v112 = vsel %vm50, %v34, 0
  %v115 = vsel %vm50, %v35, 0
  %v118 = vsel %vm50, %v36, 0
  %v121 = vsel %vm50, %v37, 0
  %v124 = vsel %vm50, %v38, 0
  %v127 = vsel %vm50, %v39, 0
  %v130 = vsel %vm50, %v40, 0
  %v133 = vsel %vm50, %v41, 0
  %vm135 = vcmask 1042432
  %v137 = vsel %vm135, %v42, 0
  %139 = vmatprep.subr.mxu0 0.0
  %v140 = vand.u32 %v137, 4294901760
  %141 = vmatpush1.msra.mxu0 %v140
  %142 = vmatprep.subr.mxu0 0.0
  %143 = vmatpush1.msra.mxu0 0.0
  %144 = vmatprep.subr.mxu0 0.0
  %145 = vmatpush1.msra.mxu0 0.0
  %146 = vmatprep.subr.mxu0 0.0
  %147 = vmatpush1.msra.mxu0 0.0
  %148 = vmatprep.subr.mxu0 0.0
  %149 = vmatpush1.msra.mxu0 0.0
  %150 = vmatprep.subr.mxu0 0.0
  %151 = vmatpush1.msra.mxu0 0.0
  %152 = vmatprep.subr.mxu0 0.0
  %153 = vmatpush1.msra.mxu0 0.0
  %154 = vmatprep.subr.mxu0 0.0
  %155 = vmatpush1.msra.mxu0 0.0
  %156 = vmatprep.subr.mxu0 0.0
  %157 = vmatpush1.msra.mxu0 0.0
  %158 = vmatprep.subr.mxu0 0.0
  %159 = vmatpush1.msra.mxu0 0.0
  %160 = vmatprep.subr.mxu0 0.0
  %161 = vmatpush1.msra.mxu0 0.0
  %162 = vmatprep.subr.mxu0 0.0
  %163 = vmatpush1.msra.mxu0 0.0
  %164 = vmatprep.subr.mxu0 0.0
  %165 = vmatpush1.msra.mxu0 0.0
  %166 = vmatprep.subr.mxu0 0.0
  %167 = vmatpush1.msra.mxu0 0.0
  %168 = vmatprep.subr.mxu0 0.0
  %169 = vmatpush1.msra.mxu0 0.0
  %170 = vmatprep.subr.mxu0 0.0
  %171 = vmatpush1.msra.mxu0 0.0
  %172 = vmatprep.subr.mxu0 0.0
  %173 = vmatpush1.msra.mxu0 0.0
  %174 = vmatprep.subr.mxu0 0.0
  %175 = vmatpush1.msra.mxu0 0.0
  %176 = vmatprep.subr.mxu0 0.0
  %177 = vmatpush1.msra.mxu0 0.0
  %178 = vmatprep.subr.mxu0 0.0
  %179 = vmatpush1.msra.mxu0 0.0
  %180 = vmatprep.subr.mxu0 0.0
  %181 = vmatpush1.msra.mxu0 0.0
  %182 = vmatprep.subr.mxu0 0.0
  %183 = vmatpush1.msra.mxu0 0.0
  %184 = vmatprep.subr.mxu0 0.0
  %185 = vmatpush1.msra.mxu0 0.0
  %186 = vmatprep.subr.mxu0 0.0
  %187 = vmatpush1.msra.mxu0 0.0
  %188 = vmatprep.subr.mxu0 0.0
  %189 = vmatpush1.msra.mxu0 0.0
  %190 = vmatprep.subr.mxu0 0.0
  %191 = vmatpush1.msra.mxu0 0.0
  %192 = vmatprep.subr.mxu0 0.0
  %193 = vmatpush1.msra.mxu0 0.0
  %194 = vmatprep.subr.mxu0 0.0
  %195 = vmatpush1.msra.mxu0 0.0
  %196 = vmatprep.subr.mxu0 0.0
  %197 = vmatpush1.msra.mxu0 0.0
  %198 = vmatprep.subr.mxu0 0.0
  %199 = vmatpush1.msra.mxu0 0.0
  %200 = vmatprep.subr.mxu0 0.0
  %201 = vmatpush1.msra.mxu0 0.0
  %202 = vmatprep.subr.mxu0 0.0
  %203 = vmatpush1.msra.mxu0 0.0
  %204 = vmatprep.mubr.f32.mxu0 0.0
  %v205 = vand.u32 %v52, 4294901760
  %v206 = vsub.f32 %v52, %v205
  %v207 = vand.u32 %v206, 4294901760
  %v208 = vsub.f32 %v206, %v207
  %v209 = vand.u32 %v208, 4294901760
  %210 = vmatmul.mubr.f32.gmra.mrb[0].mxu0 %v209
  %v211 = vpop.f32.mrb[0].mxu0
  %v212 = vadd.f32 %v48, %v211
  %v213 = vpop.f32.mrb[0].mxu0
  %214 = vmatprep.mubr.f32.mxu0 0.0
  %v215 = vand.u32 %v55, 4294901760
  %v216 = vsub.f32 %v55, %v215
  %v217 = vand.u32 %v216, 4294901760
  %v218 = vsub.f32 %v216, %v217
  %v219 = vand.u32 %v218, 4294901760
  %220 = vmatmul.mubr.f32.gmra.mrb[0].mxu0 %v219
  %v221 = vpop.f32.mrb[0].mxu0
  %v222 = vadd.f32 %v48, %v221
  %v223 = vpop.f32.mrb[0].mxu0
  %224 = vmatprep.mubr.f32.mxu0 0.0
  %v225 = vand.u32 %v58, 4294901760
  %v226 = vsub.f32 %v58, %v225
  %v227 = vand.u32 %v226, 4294901760
  %v228 = vsub.f32 %v226, %v227
  %v229 = vand.u32 %v228, 4294901760
  %230 = vmatmul.mubr.f32.gmra.mrb[0].mxu0 %v229
  %v231 = vpop.f32.mrb[0].mxu0
  %v232 = vadd.f32 %v48, %v231
  %v233 = vpop.f32.mrb[0].mxu0
  %234 = vmatprep.mubr.f32.mxu0 0.0
  %v235 = vand.u32 %v61, 4294901760
  %v236 = vsub.f32 %v61, %v235
  %v237 = vand.u32 %v236, 4294901760
  %v238 = vsub.f32 %v236, %v237
  %v239 = vand.u32 %v238, 4294901760
  %240 = vmatmul.mubr.f32.gmra.mrb[0].mxu0 %v239
  %v241 = vpop.f32.mrb[0].mxu0
  %v242 = vadd.f32 %v48, %v241
  %v243 = vpop.f32.mrb[0].mxu0
  %244 = vmatprep.mubr.f32.mxu0 0.0
  %v245 = vand.u32 %v64, 4294901760
  %v246 = vsub.f32 %v64, %v245
  %v247 = vand.u32 %v246, 4294901760
  %v248 = vsub.f32 %v246, %v247
  %v249 = vand.u32 %v248, 4294901760
  %250 = vmatmul.mubr.f32.gmra.mrb[0].mxu0 %v249
  %v251 = vpop.f32.mrb[0].mxu0
  %v252 = vadd.f32 %v48, %v251
  %v253 = vpop.f32.mrb[0].mxu0
  %254 = vmatprep.mubr.f32.mxu0 0.0
  %v255 = vand.u32 %v67, 4294901760
  %v256 = vsub.f32 %v67, %v255
  %v257 = vand.u32 %v256, 4294901760
  %v258 = vsub.f32 %v256, %v257
  %v259 = vand.u32 %v258, 4294901760
  %260 = vmatmul.mubr.f32.gmra.mrb[0].mxu0 %v259
  %v261 = vpop.f32.mrb[0].mxu0
  %v262 = vadd.f32 %v48, %v261
  %v263 = vpop.f32.mrb[0].mxu0
  %264 = vmatprep.mubr.f32.mxu0 0.0
  %v265 = vand.u32 %v70, 4294901760
  %v266 = vsub.f32 %v70, %v265
  %v267 = vand.u32 %v266, 4294901760
  %v268 = vsub.f32 %v266, %v267
  %v269 = vand.u32 %v268, 4294901760
  %270 = vmatmul.mubr.f32.gmra.mrb[0].mxu0 %v269
  %v271 = vpop.f32.mrb[0].mxu0
  %v272 = vadd.f32 %v48, %v271
  %v273 = vpop.f32.mrb[0].mxu0
  %274 = vmatprep.mubr.f32.mxu0 0.0
  %v275 = vand.u32 %v73, 4294901760
  %v276 = vsub.f32 %v73, %v275
  %v277 = vand.u32 %v276, 4294901760
  %v278 = vsub.f32 %v276, %v277
  %v279 = vand.u32 %v278, 4294901760
  %280 = vmatmul.mubr.f32.gmra.mrb[0].mxu0 %v279
  %v281 = vpop.f32.mrb[0].mxu0
  %v282 = vadd.f32 %v48, %v281
  %v283 = vpop.f32.mrb[0].mxu0
  %284 = vmatprep.mubr.f32.mxu0 0.0
  %v285 = vand.u32 %v76, 4294901760
  %v286 = vsub.f32 %v76, %v285
  %v287 = vand.u32 %v286, 4294901760
  %v288 = vsub.f32 %v286, %v287
  %v289 = vand.u32 %v288, 4294901760
  %290 = vmatmul.mubr.f32.gmra.mrb[0].mxu0 %v289
  %v291 = vpop.f32.mrb[0].mxu0
  %v292 = vadd.f32 %v48, %v291
  %v293 = vpop.f32.mrb[0].mxu0
  %294 = vmatprep.mubr.f32.mxu0 0.0
  %v295 = vand.u32 %v79, 4294901760
  %v296 = vsub.f32 %v79, %v295
  %v297 = vand.u32 %v296, 4294901760
  %v298 = vsub.f32 %v296, %v297
  %v299 = vand.u32 %v298, 4294901760
  %300 = vmatmul.mubr.f32.gmra.mrb[0].mxu0 %v299
  %v301 = vpop.f32.mrb[0].mxu0
  %v302 = vadd.f32 %v48, %v301
  %v303 = vpop.f32.mrb[0].mxu0
  %304 = vmatprep.mubr.f32.mxu0 0.0
  %v305 = vand.u32 %v82, 4294901760
  %v306 = vsub.f32 %v82, %v305
  %v307 = vand.u32 %v306, 4294901760
  %v308 = vsub.f32 %v306, %v307
  %v309 = vand.u32 %v308, 4294901760
  %310 = vmatmul.mubr.f32.gmra.mrb[0].mxu0 %v309
  %v311 = vpop.f32.mrb[0].mxu0
  %v312 = vadd.f32 %v48, %v311
  %v313 = vpop.f32.mrb[0].mxu0
  %314 = vmatprep.mubr.f32.mxu0 0.0
  %v315 = vand.u32 %v85, 4294901760
  %v316 = vsub.f32 %v85, %v315
  %v317 = vand.u32 %v316, 4294901760
  %v318 = vsub.f32 %v316, %v317
  %v319 = vand.u32 %v318, 4294901760
  %320 = vmatmul.mubr.f32.gmra.mrb[0].mxu0 %v319
  %v321 = vpop.f32.mrb[0].mxu0
  %v322 = vadd.f32 %v48, %v321
  %v323 = vpop.f32.mrb[0].mxu0
  %324 = vmatprep.mubr.f32.mxu0 0.0
  %v325 = vand.u32 %v88, 4294901760
  %v326 = vsub.f32 %v88, %v325
  %v327 = vand.u32 %v326, 4294901760
  %v328 = vsub.f32 %v326, %v327
  %v329 = vand.u32 %v328, 4294901760
  %330 = vmatmul.mubr.f32.gmra.mrb[0].mxu0 %v329
  %v331 = vpop.f32.mrb[0].mxu0
  %v332 = vadd.f32 %v48, %v331
  %v333 = vpop.f32.mrb[0].mxu0
  %334 = vmatprep.mubr.f32.mxu0 0.0
  %v335 = vand.u32 %v91, 4294901760
  %v336 = vsub.f32 %v91, %v335
  %v337 = vand.u32 %v336, 4294901760
  %v338 = vsub.f32 %v336, %v337
  %v339 = vand.u32 %v338, 4294901760
  %340 = vmatmul.mubr.f32.gmra.mrb[0].mxu0 %v339
  %v341 = vpop.f32.mrb[0].mxu0
  %v342 = vadd.f32 %v48, %v341
  %v343 = vpop.f32.mrb[0].mxu0
  %344 = vmatprep.mubr.f32.mxu0 0.0
  %v345 = vand.u32 %v94, 4294901760
  %v346 = vsub.f32 %v94, %v345
  %v347 = vand.u32 %v346, 4294901760
  %v348 = vsub.f32 %v346, %v347
  %v349 = vand.u32 %v348, 4294901760
  %350 = vmatmul.mubr.f32.gmra.mrb[0].mxu0 %v349
  %v351 = vpop.f32.mrb[0].mxu0
  %v352 = vadd.f32 %v48, %v351
  %v353 = vpop.f32.mrb[0].mxu0
  %354 = vmatprep.mubr.f32.mxu0 0.0
  %v355 = vand.u32 %v97, 4294901760
  %v356 = vsub.f32 %v97, %v355
  %v357 = vand.u32 %v356, 4294901760
  %v358 = vsub.f32 %v356, %v357
  %v359 = vand.u32 %v358, 4294901760
  %360 = vmatmul.mubr.f32.gmra.mrb[0].mxu0 %v359
  %v361 = vpop.f32.mrb[0].mxu0
  %v362 = vadd.f32 %v48, %v361
  %v363 = vpop.f32.mrb[0].mxu0
  %364 = vmatprep.mubr.f32.mxu0 0.0
  %v365 = vand.u32 %v100, 4294901760
  %v366 = vsub.f32 %v100, %v365
  %v367 = vand.u32 %v366, 4294901760
  %v368 = vsub.f32 %v366, %v367
  %v369 = vand.u32 %v368, 4294901760
  %370 = vmatmul.mubr.f32.gmra.mrb[0].mxu0 %v369
  %v371 = vpop.f32.mrb[0].mxu0
  %v372 = vadd.f32 %v48, %v371
  %v373 = vpop.f32.mrb[0].mxu0
  %374 = vmatprep.mubr.f32.mxu0 0.0
  %v375 = vand.u32 %v103, 4294901760
  %v376 = vsub.f32 %v103, %v375
  %v377 = vand.u32 %v376, 4294901760
  %v378 = vsub.f32 %v376, %v377
  %v379 = vand.u32 %v378, 4294901760
  %380 = vmatmul.mubr.f32.gmra.mrb[0].mxu0 %v379
  %v381 = vpop.f32.mrb[0].mxu0
  %v382 = vadd.f32 %v48, %v381
  %v383 = vpop.f32.mrb[0].mxu0
  %384 = vmatprep.mubr.f32.mxu0 0.0
  %v385 = vand.u32 %v106, 4294901760
  %v386 = vsub.f32 %v106, %v385
  %v387 = vand.u32 %v386, 4294901760
  %v388 = vsub.f32 %v386, %v387
  %v389 = vand.u32 %v388, 4294901760
  %390 = vmatmul.mubr.f32.gmra.mrb[0].mxu0 %v389
  %v391 = vpop.f32.mrb[0].mxu0
  %v392 = vadd.f32 %v48, %v391
  %v393 = vpop.f32.mrb[0].mxu0
  %394 = vmatprep.mubr.f32.mxu0 0.0
  %v395 = vand.u32 %v109, 4294901760
  %v396 = vsub.f32 %v109, %v395
  %v397 = vand.u32 %v396, 4294901760
  %v398 = vsub.f32 %v396, %v397
  %v399 = vand.u32 %v398, 4294901760
  %400 = vmatmul.mubr.f32.gmra.mrb[0].mxu0 %v399
  %v401 = vpop.f32.mrb[0].mxu0
  %v402 = vadd.f32 %v48, %v401
  %v403 = vpop.f32.mrb[0].mxu0
  %404 = vmatprep.mubr.f32.mxu0 0.0
  %v405 = vand.u32 %v112, 4294901760
  %v406 = vsub.f32 %v112, %v405
  %v407 = vand.u32 %v406, 4294901760
  %v408 = vsub.f32 %v406, %v407
  %v409 = vand.u32 %v408, 4294901760
  %410 = vmatmul.mubr.f32.gmra.mrb[0].mxu0 %v409
  %v411 = vpop.f32.mrb[0].mxu0
  %v412 = vadd.f32 %v48, %v411
  %v413 = vpop.f32.mrb[0].mxu0
  %414 = vmatprep.mubr.f32.mxu0 0.0
  %v415 = vand.u32 %v115, 4294901760
  %v416 = vsub.f32 %v115, %v415
  %v417 = vand.u32 %v416, 4294901760
  %v418 = vsub.f32 %v416, %v417
  %v419 = vand.u32 %v418, 4294901760
  %420 = vmatmul.mubr.f32.gmra.mrb[0].mxu0 %v419
  %v421 = vpop.f32.mrb[0].mxu0
  %v422 = vadd.f32 %v48, %v421
  %v423 = vpop.f32.mrb[0].mxu0
  %424 = vmatprep.mubr.f32.mxu0 0.0
  %v425 = vand.u32 %v118, 4294901760
  %v426 = vsub.f32 %v118, %v425
  %v427 = vand.u32 %v426, 4294901760
  %v428 = vsub.f32 %v426, %v427
  %v429 = vand.u32 %v428, 4294901760
  %430 = vmatmul.mubr.f32.gmra.mrb[0].mxu0 %v429
  %v431 = vpop.f32.mrb[0].mxu0
  %v432 = vadd.f32 %v48, %v431
  %v433 = vpop.f32.mrb[0].mxu0
  %434 = vmatprep.mubr.f32.mxu0 0.0
  %v435 = vand.u32 %v121, 4294901760
  %v436 = vsub.f32 %v121, %v435
  %v437 = vand.u32 %v436, 4294901760
  %v438 = vsub.f32 %v436, %v437
  %v439 = vand.u32 %v438, 4294901760
  %440 = vmatmul.mubr.f32.gmra.mrb[0].mxu0 %v439
  %v441 = vpop.f32.mrb[0].mxu0
  %v442 = vadd.f32 %v48, %v441
  %v443 = vpop.f32.mrb[0].mxu0
  %444 = vmatprep.mubr.f32.mxu0 0.0
  %v445 = vand.u32 %v124, 4294901760
  %v446 = vsub.f32 %v124, %v445
  %v447 = vand.u32 %v446, 4294901760
  %v448 = vsub.f32 %v446, %v447
  %v449 = vand.u32 %v448, 4294901760
  %450 = vmatmul.mubr.f32.gmra.mrb[0].mxu0 %v449
  %v451 = vpop.f32.mrb[0].mxu0
  %v452 = vadd.f32 %v48, %v451
  %v453 = vpop.f32.mrb[0].mxu0
  %454 = vmatprep.mubr.f32.mxu0 0.0
  %v455 = vand.u32 %v127, 4294901760
  %v456 = vsub.f32 %v127, %v455
  %v457 = vand.u32 %v456, 4294901760
  %v458 = vsub.f32 %v456, %v457
  %v459 = vand.u32 %v458, 4294901760
  %460 = vmatmul.mubr.f32.gmra.mrb[0].mxu0 %v459
  %v461 = vpop.f32.mrb[0].mxu0
  %v462 = vadd.f32 %v48, %v461
  %v463 = vpop.f32.mrb[0].mxu0
  %464 = vmatprep.mubr.f32.mxu0 0.0
  %v465 = vand.u32 %v130, 4294901760
  %v466 = vsub.f32 %v130, %v465
  %v467 = vand.u32 %v466, 4294901760
  %v468 = vsub.f32 %v466, %v467
  %v469 = vand.u32 %v468, 4294901760
  %470 = vmatmul.mubr.f32.gmra.mrb[0].mxu0 %v469
  %v471 = vpop.f32.mrb[0].mxu0
  %v472 = vadd.f32 %v48, %v471
  %v473 = vpop.f32.mrb[0].mxu0
  %474 = vmatprep.mubr.f32.mxu0 0.0
  %v475 = vand.u32 %v133, 4294901760
  %v476 = vsub.f32 %v133, %v475
  %v477 = vand.u32 %v476, 4294901760
  %v478 = vsub.f32 %v476, %v477
  %v479 = vand.u32 %v478, 4294901760
  %480 = vmatmul.mubr.f32.gmra.mrb[0].mxu0 %v479
  %v481 = vpop.f32.mrb[0].mxu0
  %v482 = vadd.f32 %v48, %v481
  %v483 = vpop.f32.mrb[0].mxu0
  %484 = vdwg.mxu0
  %485 = vmatprep.subr.mxu0 0.0
  %v486 = vand.u32 %v137, 4294901760
  %v487 = vsub.f32 %v137, %v486
  %v488 = vand.u32 %v487, 4294901760
  %v489 = vsub.f32 %v487, %v488
  %v490 = vand.u32 %v489, 4294901760
  %491 = vmatpush1.msra.mxu0 %v490
  %492 = vmatprep.subr.mxu0 0.0
  %493 = vmatpush1.msra.mxu0 0.0
  %494 = vmatprep.subr.mxu0 0.0
  %495 = vmatpush1.msra.mxu0 0.0
  %496 = vmatprep.subr.mxu0 0.0
  %497 = vmatpush1.msra.mxu0 0.0
  %498 = vmatprep.subr.mxu0 0.0
  %499 = vmatpush1.msra.mxu0 0.0
  %500 = vmatprep.subr.mxu0 0.0
  %501 = vmatpush1.msra.mxu0 0.0
  %502 = vmatprep.subr.mxu0 0.0
  %503 = vmatpush1.msra.mxu0 0.0
  %504 = vmatprep.subr.mxu0 0.0
  %505 = vmatpush1.msra.mxu0 0.0
  %506 = vmatprep.subr.mxu0 0.0
  %507 = vmatpush1.msra.mxu0 0.0
  %508 = vmatprep.subr.mxu0 0.0
  %509 = vmatpush1.msra.mxu0 0.0
  %510 = vmatprep.subr.mxu0 0.0
  %511 = vmatpush1.msra.mxu0 0.0
  %512 = vmatprep.subr.mxu0 0.0
  %513 = vmatpush1.msra.mxu0 0.0
  %514 = vmatprep.subr.mxu0 0.0
  %515 = vmatpush1.msra.mxu0 0.0
  %516 = vmatprep.subr.mxu0 0.0
  %517 = vmatpush1.msra.mxu0 0.0
  %518 = vmatprep.subr.mxu0 0.0
  %519 = vmatpush1.msra.mxu0 0.0
  %520 = vmatprep.subr.mxu0 0.0
  %521 = vmatpush1.msra.mxu0 0.0
  %522 = vmatprep.subr.mxu0 0.0
  %523 = vmatpush1.msra.mxu0 0.0
  %524 = vmatprep.subr.mxu0 0.0
  %525 = vmatpush1.msra.mxu0 0.0
  %526 = vmatprep.subr.mxu0 0.0
  %527 = vmatpush1.msra.mxu0 0.0
  %528 = vmatprep.subr.mxu0 0.0
  %529 = vmatpush1.msra.mxu0 0.0
  %530 = vmatprep.subr.mxu0 0.0
  %531 = vmatpush1.msra.mxu0 0.0
  %532 = vmatprep.subr.mxu0 0.0
  %533 = vmatpush1.msra.mxu0 0.0
  %534 = vmatprep.subr.mxu0 0.0
  %535 = vmatpush1.msra.mxu0 0.0
  %536 = vmatprep.subr.mxu0 0.0
  %537 = vmatpush1.msra.mxu0 0.0
  %538 = vmatprep.subr.mxu0 0.0
  %539 = vmatpush1.msra.mxu0 0.0
  %540 = vmatprep.subr.mxu0 0.0
  %541 = vmatpush1.msra.mxu0 0.0
  %542 = vmatprep.subr.mxu0 0.0
  %543 = vmatpush1.msra.mxu0 0.0
  %544 = vmatprep.subr.mxu0 0.0
  %545 = vmatpush1.msra.mxu0 0.0
  %546 = vmatprep.subr.mxu0 0.0
  %547 = vmatpush1.msra.mxu0 0.0
  %548 = vmatprep.subr.mxu0 0.0
  %549 = vmatpush1.msra.mxu0 0.0
  %550 = vmatprep.subr.mxu0 0.0
  %551 = vmatpush1.msra.mxu0 0.0
  %552 = vmatprep.subr.mxu0 0.0
  %553 = vmatpush1.msra.mxu0 0.0
  %554 = vmatprep.mubr.f32.mxu0 0.0
  %v555 = vand.u32 %v52, 4294901760
  %556 = vmatmul.mubr.f32.gmra.mrb[0].mxu0 %v555
  %v557 = vpop.f32.mrb[0].mxu0
  %v558 = vadd.f32 %v212, %v557
  %v559 = vpop.f32.mrb[0].mxu0
  %560 = vmatprep.mubr.f32.mxu0 0.0
  %v561 = vand.u32 %v55, 4294901760
  %562 = vmatmul.mubr.f32.gmra.mrb[0].mxu0 %v561
  %v563 = vpop.f32.mrb[0].mxu0
  %v564 = vadd.f32 %v222, %v563
  %v565 = vpop.f32.mrb[0].mxu0
  %566 = vmatprep.mubr.f32.mxu0 0.0
  %v567 = vand.u32 %v58, 4294901760
  %568 = vmatmul.mubr.f32.gmra.mrb[0].mxu0 %v567
  %v569 = vpop.f32.mrb[0].mxu0
  %v570 = vadd.f32 %v232, %v569
  %v571 = vpop.f32.mrb[0].mxu0
  %572 = vmatprep.mubr.f32.mxu0 0.0
  %v573 = vand.u32 %v61, 4294901760
  %574 = vmatmul.mubr.f32.gmra.mrb[0].mxu0 %v573
  %v575 = vpop.f32.mrb[0].mxu0
  %v576 = vadd.f32 %v242, %v575
  %v577 = vpop.f32.mrb[0].mxu0
  %578 = vmatprep.mubr.f32.mxu0 0.0
  %v579 = vand.u32 %v64, 4294901760
  %580 = vmatmul.mubr.f32.gmra.mrb[0].mxu0 %v579
  %v581 = vpop.f32.mrb[0].mxu0
  %v582 = vadd.f32 %v252, %v581
  %v583 = vpop.f32.mrb[0].mxu0
  %584 = vmatprep.mubr.f32.mxu0 0.0
  %v585 = vand.u32 %v67, 4294901760
  %586 = vmatmul.mubr.f32.gmra.mrb[0].mxu0 %v585
  %v587 = vpop.f32.mrb[0].mxu0
  %v588 = vadd.f32 %v262, %v587
  %v589 = vpop.f32.mrb[0].mxu0
  %590 = vmatprep.mubr.f32.mxu0 0.0
  %v591 = vand.u32 %v70, 4294901760
  %592 = vmatmul.mubr.f32.gmra.mrb[0].mxu0 %v591
  %v593 = vpop.f32.mrb[0].mxu0
  %v594 = vadd.f32 %v272, %v593
  %v595 = vpop.f32.mrb[0].mxu0
  %596 = vmatprep.mubr.f32.mxu0 0.0
  %v597 = vand.u32 %v73, 4294901760
  %598 = vmatmul.mubr.f32.gmra.mrb[0].mxu0 %v597
  %v599 = vpop.f32.mrb[0].mxu0
  %v600 = vadd.f32 %v282, %v599
  %v601 = vpop.f32.mrb[0].mxu0
  %602 = vmatprep.mubr.f32.mxu0 0.0
  %v603 = vand.u32 %v76, 4294901760
  %604 = vmatmul.mubr.f32.gmra.mrb[0].mxu0 %v603
  %v605 = vpop.f32.mrb[0].mxu0
  %v606 = vadd.f32 %v292, %v605
  %v607 = vpop.f32.mrb[0].mxu0
  %608 = vmatprep.mubr.f32.mxu0 0.0
  %v609 = vand.u32 %v79, 4294901760
  %610 = vmatmul.mubr.f32.gmra.mrb[0].mxu0 %v609
  %v611 = vpop.f32.mrb[0].mxu0
  %v612 = vadd.f32 %v302, %v611
  %v613 = vpop.f32.mrb[0].mxu0
  %614 = vmatprep.mubr.f32.mxu0 0.0
  %v615 = vand.u32 %v82, 4294901760
  %616 = vmatmul.mubr.f32.gmra.mrb[0].mxu0 %v615
  %v617 = vpop.f32.mrb[0].mxu0
  %v618 = vadd.f32 %v312, %v617
  %v619 = vpop.f32.mrb[0].mxu0
  %620 = vmatprep.mubr.f32.mxu0 0.0
  %v621 = vand.u32 %v85, 4294901760
  %622 = vmatmul.mubr.f32.gmra.mrb[0].mxu0 %v621
  %v623 = vpop.f32.mrb[0].mxu0
  %v624 = vadd.f32 %v322, %v623
  %v625 = vpop.f32.mrb[0].mxu0
  %626 = vmatprep.mubr.f32.mxu0 0.0
  %v627 = vand.u32 %v88, 4294901760
  %628 = vmatmul.mubr.f32.gmra.mrb[0].mxu0 %v627
  %v629 = vpop.f32.mrb[0].mxu0
  %v630 = vadd.f32 %v332, %v629
  %v631 = vpop.f32.mrb[0].mxu0
  %632 = vmatprep.mubr.f32.mxu0 0.0
  %v633 = vand.u32 %v91, 4294901760
  %634 = vmatmul.mubr.f32.gmra.mrb[0].mxu0 %v633
  %v635 = vpop.f32.mrb[0].mxu0
  %v636 = vadd.f32 %v342, %v635
  %v637 = vpop.f32.mrb[0].mxu0
  %638 = vmatprep.mubr.f32.mxu0 0.0
  %v639 = vand.u32 %v94, 4294901760
  %640 = vmatmul.mubr.f32.gmra.mrb[0].mxu0 %v639
  %v641 = vpop.f32.mrb[0].mxu0
  %v642 = vadd.f32 %v352, %v641
  %v643 = vpop.f32.mrb[0].mxu0
  %644 = vmatprep.mubr.f32.mxu0 0.0
  %v645 = vand.u32 %v97, 4294901760
  %646 = vmatmul.mubr.f32.gmra.mrb[0].mxu0 %v645
  %v647 = vpop.f32.mrb[0].mxu0
  %v648 = vadd.f32 %v362, %v647
  %v649 = vpop.f32.mrb[0].mxu0
  %650 = vmatprep.mubr.f32.mxu0 0.0
  %v651 = vand.u32 %v100, 4294901760
  %652 = vmatmul.mubr.f32.gmra.mrb[0].mxu0 %v651
  %v653 = vpop.f32.mrb[0].mxu0
  %v654 = vadd.f32 %v372, %v653
  %v655 = vpop.f32.mrb[0].mxu0
  %656 = vmatprep.mubr.f32.mxu0 0.0
  %v657 = vand.u32 %v103, 4294901760
  %658 = vmatmul.mubr.f32.gmra.mrb[0].mxu0 %v657
  %v659 = vpop.f32.mrb[0].mxu0
  %v660 = vadd.f32 %v382, %v659
  %v661 = vpop.f32.mrb[0].mxu0
  %662 = vmatprep.mubr.f32.mxu0 0.0
  %v663 = vand.u32 %v106, 4294901760
  %664 = vmatmul.mubr.f32.gmra.mrb[0].mxu0 %v663
  %v665 = vpop.f32.mrb[0].mxu0
  %v666 = vadd.f32 %v392, %v665
  %v667 = vpop.f32.mrb[0].mxu0
  %668 = vmatprep.mubr.f32.mxu0 0.0
  %v669 = vand.u32 %v109, 4294901760
  %670 = vmatmul.mubr.f32.gmra.mrb[0].mxu0 %v669
  %v671 = vpop.f32.mrb[0].mxu0
  %v672 = vadd.f32 %v402, %v671
  %v673 = vpop.f32.mrb[0].mxu0
  %674 = vmatprep.mubr.f32.mxu0 0.0
  %v675 = vand.u32 %v112, 4294901760
  %676 = vmatmul.mubr.f32.gmra.mrb[0].mxu0 %v675
  %v677 = vpop.f32.mrb[0].mxu0
  %v678 = vadd.f32 %v412, %v677
  %v679 = vpop.f32.mrb[0].mxu0
  %680 = vmatprep.mubr.f32.mxu0 0.0
  %v681 = vand.u32 %v115, 4294901760
  %682 = vmatmul.mubr.f32.gmra.mrb[0].mxu0 %v681
  %v683 = vpop.f32.mrb[0].mxu0
  %v684 = vadd.f32 %v422, %v683
  %v685 = vpop.f32.mrb[0].mxu0
  %686 = vmatprep.mubr.f32.mxu0 0.0
  %v687 = vand.u32 %v118, 4294901760
  %688 = vmatmul.mubr.f32.gmra.mrb[0].mxu0 %v687
  %v689 = vpop.f32.mrb[0].mxu0
  %v690 = vadd.f32 %v432, %v689
  %v691 = vpop.f32.mrb[0].mxu0
  %692 = vmatprep.mubr.f32.mxu0 0.0
  %v693 = vand.u32 %v121, 4294901760
  %694 = vmatmul.mubr.f32.gmra.mrb[0].mxu0 %v693
  %v695 = vpop.f32.mrb[0].mxu0
  %v696 = vadd.f32 %v442, %v695
  %v697 = vpop.f32.mrb[0].mxu0
  %698 = vmatprep.mubr.f32.mxu0 0.0
  %v699 = vand.u32 %v124, 4294901760
  %700 = vmatmul.mubr.f32.gmra.mrb[0].mxu0 %v699
  %v701 = vpop.f32.mrb[0].mxu0
  %v702 = vadd.f32 %v452, %v701
  %v703 = vpop.f32.mrb[0].mxu0
  %704 = vmatprep.mubr.f32.mxu0 0.0
  %v705 = vand.u32 %v127, 4294901760
  %706 = vmatmul.mubr.f32.gmra.mrb[0].mxu0 %v705
  %v707 = vpop.f32.mrb[0].mxu0
  %v708 = vadd.f32 %v462, %v707
  %v709 = vpop.f32.mrb[0].mxu0
  %710 = vmatprep.mubr.f32.mxu0 0.0
  %v711 = vand.u32 %v130, 4294901760
  %712 = vmatmul.mubr.f32.gmra.mrb[0].mxu0 %v711
  %v713 = vpop.f32.mrb[0].mxu0
  %v714 = vadd.f32 %v472, %v713
  %v715 = vpop.f32.mrb[0].mxu0
  %716 = vmatprep.mubr.f32.mxu0 0.0
  %v717 = vand.u32 %v133, 4294901760
  %718 = vmatmul.mubr.f32.gmra.mrb[0].mxu0 %v717
  %v719 = vpop.f32.mrb[0].mxu0
  %v720 = vadd.f32 %v482, %v719
  %v721 = vpop.f32.mrb[0].mxu0
  %722 = vdwg.mxu0
  %723 = vmatprep.subr.mxu0 0.0
  %v724 = vand.u32 %v137, 4294901760
  %v725 = vsub.f32 %v137, %v724
  %726 = vmatpush1.msra.mxu0 %v725
  %727 = vmatprep.subr.mxu0 0.0
  %728 = vmatpush1.msra.mxu0 0.0
  %729 = vmatprep.subr.mxu0 0.0
  %730 = vmatpush1.msra.mxu0 0.0
  %731 = vmatprep.subr.mxu0 0.0
  %732 = vmatpush1.msra.mxu0 0.0
  %733 = vmatprep.subr.mxu0 0.0
  %734 = vmatpush1.msra.mxu0 0.0
  %735 = vmatprep.subr.mxu0 0.0
  %736 = vmatpush1.msra.mxu0 0.0
  %737 = vmatprep.subr.mxu0 0.0
  %738 = vmatpush1.msra.mxu0 0.0
  %739 = vmatprep.subr.mxu0 0.0
  %740 = vmatpush1.msra.mxu0 0.0
  %741 = vmatprep.subr.mxu0 0.0
  %742 = vmatpush1.msra.mxu0 0.0
  %743 = vmatprep.subr.mxu0 0.0
  %744 = vmatpush1.msra.mxu0 0.0
  %745 = vmatprep.subr.mxu0 0.0
  %746 = vmatpush1.msra.mxu0 0.0
  %747 = vmatprep.subr.mxu0 0.0
  %748 = vmatpush1.msra.mxu0 0.0
  %749 = vmatprep.subr.mxu0 0.0
  %750 = vmatpush1.msra.mxu0 0.0
  %751 = vmatprep.subr.mxu0 0.0
  %752 = vmatpush1.msra.mxu0 0.0
  %753 = vmatprep.subr.mxu0 0.0
  %754 = vmatpush1.msra.mxu0 0.0
  %755 = vmatprep.subr.mxu0 0.0
  %756 = vmatpush1.msra.mxu0 0.0
  %757 = vmatprep.subr.mxu0 0.0
  %758 = vmatpush1.msra.mxu0 0.0
  %759 = vmatprep.subr.mxu0 0.0
  %760 = vmatpush1.msra.mxu0 0.0
  %761 = vmatprep.subr.mxu0 0.0
  %762 = vmatpush1.msra.mxu0 0.0
  %763 = vmatprep.subr.mxu0 0.0
  %764 = vmatpush1.msra.mxu0 0.0
  %765 = vmatprep.subr.mxu0 0.0
  %766 = vmatpush1.msra.mxu0 0.0
  %767 = vmatprep.subr.mxu0 0.0
  %768 = vmatpush1.msra.mxu0 0.0
  %769 = vmatprep.subr.mxu0 0.0
  %770 = vmatpush1.msra.mxu0 0.0
  %771 = vmatprep.subr.mxu0 0.0
  %772 = vmatpush1.msra.mxu0 0.0
  %773 = vmatprep.subr.mxu0 0.0
  %774 = vmatpush1.msra.mxu0 0.0
  %775 = vmatprep.subr.mxu0 0.0
  %776 = vmatpush1.msra.mxu0 0.0
  %777 = vmatprep.subr.mxu0 0.0
  %778 = vmatpush1.msra.mxu0 0.0
  %779 = vmatprep.subr.mxu0 0.0
  %780 = vmatpush1.msra.mxu0 0.0
  %781 = vmatprep.subr.mxu0 0.0
  %782 = vmatpush1.msra.mxu0 0.0
  %783 = vmatprep.subr.mxu0 0.0
  %784 = vmatpush1.msra.mxu0 0.0
  %785 = vmatprep.subr.mxu0 0.0
  %786 = vmatpush1.msra.mxu0 0.0
  %787 = vmatprep.subr.mxu0 0.0
  %788 = vmatpush1.msra.mxu0 0.0
  %789 = vmatprep.mubr.f32.mxu0 0.0
  %v790 = vand.u32 %v52, 4294901760
  %v791 = vsub.f32 %v52, %v790
  %792 = vmatmul.mubr.f32.gmra.mrb[0].mxu0 %v791
  %v793 = vpop.f32.mrb[0].mxu0
  %v794 = vadd.f32 %v558, %v793
  %v795 = vpop.f32.mrb[0].mxu0
  %796 = vmatprep.mubr.f32.mxu0 0.0
  %v797 = vand.u32 %v55, 4294901760
  %v798 = vsub.f32 %v55, %v797
  %799 = vmatmul.mubr.f32.gmra.mrb[0].mxu0 %v798
  %v800 = vpop.f32.mrb[0].mxu0
  %v801 = vadd.f32 %v564, %v800
  %v802 = vpop.f32.mrb[0].mxu0
  %803 = vmatprep.mubr.f32.mxu0 0.0
  %v804 = vand.u32 %v58, 4294901760
  %v805 = vsub.f32 %v58, %v804
  %806 = vmatmul.mubr.f32.gmra.mrb[0].mxu0 %v805
  %v807 = vpop.f32.mrb[0].mxu0
  %v808 = vadd.f32 %v570, %v807
  %v809 = vpop.f32.mrb[0].mxu0
  %810 = vmatprep.mubr.f32.mxu0 0.0
  %v811 = vand.u32 %v61, 4294901760
  %v812 = vsub.f32 %v61, %v811
  %813 = vmatmul.mubr.f32.gmra.mrb[0].mxu0 %v812
  %v814 = vpop.f32.mrb[0].mxu0
  %v815 = vadd.f32 %v576, %v814
  %v816 = vpop.f32.mrb[0].mxu0
  %817 = vmatprep.mubr.f32.mxu0 0.0
  %v818 = vand.u32 %v64, 4294901760
  %v819 = vsub.f32 %v64, %v818
  %820 = vmatmul.mubr.f32.gmra.mrb[0].mxu0 %v819
  %v821 = vpop.f32.mrb[0].mxu0
  %v822 = vadd.f32 %v582, %v821
  %v823 = vpop.f32.mrb[0].mxu0
  %824 = vmatprep.mubr.f32.mxu0 0.0
  %v825 = vand.u32 %v67, 4294901760
  %v826 = vsub.f32 %v67, %v825
  %827 = vmatmul.mubr.f32.gmra.mrb[0].mxu0 %v826
  %v828 = vpop.f32.mrb[0].mxu0
  %v829 = vadd.f32 %v588, %v828
  %v830 = vpop.f32.mrb[0].mxu0
  %831 = vmatprep.mubr.f32.mxu0 0.0
  %v832 = vand.u32 %v70, 4294901760
  %v833 = vsub.f32 %v70, %v832
  %834 = vmatmul.mubr.f32.gmra.mrb[0].mxu0 %v833
  %v835 = vpop.f32.mrb[0].mxu0
  %v836 = vadd.f32 %v594, %v835
  %v837 = vpop.f32.mrb[0].mxu0
  %838 = vmatprep.mubr.f32.mxu0 0.0
  %v839 = vand.u32 %v73, 4294901760
  %v840 = vsub.f32 %v73, %v839
  %841 = vmatmul.mubr.f32.gmra.mrb[0].mxu0 %v840
  %v842 = vpop.f32.mrb[0].mxu0
  %v843 = vadd.f32 %v600, %v842
  %v844 = vpop.f32.mrb[0].mxu0
  %845 = vmatprep.mubr.f32.mxu0 0.0
  %v846 = vand.u32 %v76, 4294901760
  %v847 = vsub.f32 %v76, %v846
  %848 = vmatmul.mubr.f32.gmra.mrb[0].mxu0 %v847
  %v849 = vpop.f32.mrb[0].mxu0
  %v850 = vadd.f32 %v606, %v849
  %v851 = vpop.f32.mrb[0].mxu0
  %852 = vmatprep.mubr.f32.mxu0 0.0
  %v853 = vand.u32 %v79, 4294901760
  %v854 = vsub.f32 %v79, %v853
  %855 = vmatmul.mubr.f32.gmra.mrb[0].mxu0 %v854
  %v856 = vpop.f32.mrb[0].mxu0
  %v857 = vadd.f32 %v612, %v856
  %v858 = vpop.f32.mrb[0].mxu0
  %859 = vmatprep.mubr.f32.mxu0 0.0
  %v860 = vand.u32 %v82, 4294901760
  %v861 = vsub.f32 %v82, %v860
  %862 = vmatmul.mubr.f32.gmra.mrb[0].mxu0 %v861
  %v863 = vpop.f32.mrb[0].mxu0
  %v864 = vadd.f32 %v618, %v863
  %v865 = vpop.f32.mrb[0].mxu0
  %866 = vmatprep.mubr.f32.mxu0 0.0
  %v867 = vand.u32 %v85, 4294901760
  %v868 = vsub.f32 %v85, %v867
  %869 = vmatmul.mubr.f32.gmra.mrb[0].mxu0 %v868
  %v870 = vpop.f32.mrb[0].mxu0
  %v871 = vadd.f32 %v624, %v870
  %v872 = vpop.f32.mrb[0].mxu0
  %873 = vmatprep.mubr.f32.mxu0 0.0
  %v874 = vand.u32 %v88, 4294901760
  %v875 = vsub.f32 %v88, %v874
  %876 = vmatmul.mubr.f32.gmra.mrb[0].mxu0 %v875
  %v877 = vpop.f32.mrb[0].mxu0
  %v878 = vadd.f32 %v630, %v877
  %v879 = vpop.f32.mrb[0].mxu0
  %880 = vmatprep.mubr.f32.mxu0 0.0
  %v881 = vand.u32 %v91, 4294901760
  %v882 = vsub.f32 %v91, %v881
  %883 = vmatmul.mubr.f32.gmra.mrb[0].mxu0 %v882
  %v884 = vpop.f32.mrb[0].mxu0
  %v885 = vadd.f32 %v636, %v884
  %v886 = vpop.f32.mrb[0].mxu0
  %887 = vmatprep.mubr.f32.mxu0 0.0
  %v888 = vand.u32 %v94, 4294901760
  %v889 = vsub.f32 %v94, %v888
  %890 = vmatmul.mubr.f32.gmra.mrb[0].mxu0 %v889
  %v891 = vpop.f32.mrb[0].mxu0
  %v892 = vadd.f32 %v642, %v891
  %v893 = vpop.f32.mrb[0].mxu0
  %894 = vmatprep.mubr.f32.mxu0 0.0
  %v895 = vand.u32 %v97, 4294901760
  %v896 = vsub.f32 %v97, %v895
  %897 = vmatmul.mubr.f32.gmra.mrb[0].mxu0 %v896
  %v898 = vpop.f32.mrb[0].mxu0
  %v899 = vadd.f32 %v648, %v898
  %v900 = vpop.f32.mrb[0].mxu0
  %901 = vmatprep.mubr.f32.mxu0 0.0
  %v902 = vand.u32 %v100, 4294901760
  %v903 = vsub.f32 %v100, %v902
  %904 = vmatmul.mubr.f32.gmra.mrb[0].mxu0 %v903
  %v905 = vpop.f32.mrb[0].mxu0
  %v906 = vadd.f32 %v654, %v905
  %v907 = vpop.f32.mrb[0].mxu0
  %908 = vmatprep.mubr.f32.mxu0 0.0
  %v909 = vand.u32 %v103, 4294901760
  %v910 = vsub.f32 %v103, %v909
  %911 = vmatmul.mubr.f32.gmra.mrb[0].mxu0 %v910
  %v912 = vpop.f32.mrb[0].mxu0
  %v913 = vadd.f32 %v660, %v912
  %v914 = vpop.f32.mrb[0].mxu0
  %915 = vmatprep.mubr.f32.mxu0 0.0
  %v916 = vand.u32 %v106, 4294901760
  %v917 = vsub.f32 %v106, %v916
  %918 = vmatmul.mubr.f32.gmra.mrb[0].mxu0 %v917
  %v919 = vpop.f32.mrb[0].mxu0
  %v920 = vadd.f32 %v666, %v919
  %v921 = vpop.f32.mrb[0].mxu0
  %922 = vmatprep.mubr.f32.mxu0 0.0
  %v923 = vand.u32 %v109, 4294901760
  %v924 = vsub.f32 %v109, %v923
  %925 = vmatmul.mubr.f32.gmra.mrb[0].mxu0 %v924
  %v926 = vpop.f32.mrb[0].mxu0
  %v927 = vadd.f32 %v672, %v926
  %v928 = vpop.f32.mrb[0].mxu0
  %929 = vmatprep.mubr.f32.mxu0 0.0
  %v930 = vand.u32 %v112, 4294901760
  %v931 = vsub.f32 %v112, %v930
  %932 = vmatmul.mubr.f32.gmra.mrb[0].mxu0 %v931
  %v933 = vpop.f32.mrb[0].mxu0
  %v934 = vadd.f32 %v678, %v933
  %v935 = vpop.f32.mrb[0].mxu0
  %936 = vmatprep.mubr.f32.mxu0 0.0
  %v937 = vand.u32 %v115, 4294901760
  %v938 = vsub.f32 %v115, %v937
  %939 = vmatmul.mubr.f32.gmra.mrb[0].mxu0 %v938
  %v940 = vpop.f32.mrb[0].mxu0
  %v941 = vadd.f32 %v684, %v940
  %v942 = vpop.f32.mrb[0].mxu0
  %943 = vmatprep.mubr.f32.mxu0 0.0
  %v944 = vand.u32 %v118, 4294901760
  %v945 = vsub.f32 %v118, %v944
  %946 = vmatmul.mubr.f32.gmra.mrb[0].mxu0 %v945
  %v947 = vpop.f32.mrb[0].mxu0
  %v948 = vadd.f32 %v690, %v947
  %v949 = vpop.f32.mrb[0].mxu0
  %950 = vmatprep.mubr.f32.mxu0 0.0
  %v951 = vand.u32 %v121, 4294901760
  %v952 = vsub.f32 %v121, %v951
  %953 = vmatmul.mubr.f32.gmra.mrb[0].mxu0 %v952
  %v954 = vpop.f32.mrb[0].mxu0
  %v955 = vadd.f32 %v696, %v954
  %v956 = vpop.f32.mrb[0].mxu0
  %957 = vmatprep.mubr.f32.mxu0 0.0
  %v958 = vand.u32 %v124, 4294901760
  %v959 = vsub.f32 %v124, %v958
  %960 = vmatmul.mubr.f32.gmra.mrb[0].mxu0 %v959
  %v961 = vpop.f32.mrb[0].mxu0
  %v962 = vadd.f32 %v702, %v961
  %v963 = vpop.f32.mrb[0].mxu0
  %964 = vmatprep.mubr.f32.mxu0 0.0
  %v965 = vand.u32 %v127, 4294901760
  %v966 = vsub.f32 %v127, %v965
  %967 = vmatmul.mubr.f32.gmra.mrb[0].mxu0 %v966
  %v968 = vpop.f32.mrb[0].mxu0
  %v969 = vadd.f32 %v708, %v968
  %v970 = vpop.f32.mrb[0].mxu0
  %971 = vmatprep.mubr.f32.mxu0 0.0
  %v972 = vand.u32 %v130, 4294901760
  %v973 = vsub.f32 %v130, %v972
  %974 = vmatmul.mubr.f32.gmra.mrb[0].mxu0 %v973
  %v975 = vpop.f32.mrb[0].mxu0
  %v976 = vadd.f32 %v714, %v975
  %v977 = vpop.f32.mrb[0].mxu0
  %978 = vmatprep.mubr.f32.mxu0 0.0
  %v979 = vand.u32 %v133, 4294901760
  %v980 = vsub.f32 %v133, %v979
  %981 = vmatmul.mubr.f32.gmra.mrb[0].mxu0 %v980
  %v982 = vpop.f32.mrb[0].mxu0
  %v983 = vadd.f32 %v720, %v982
  %v984 = vpop.f32.mrb[0].mxu0
  %985 = vdwg.mxu0
  %986 = vmatprep.subr.mxu0 0.0
  %v987 = vand.u32 %v137, 4294901760
  %988 = vmatpush1.msra.mxu0 %v987
  %989 = vmatprep.subr.mxu0 0.0
  %990 = vmatpush1.msra.mxu0 0.0
  %991 = vmatprep.subr.mxu0 0.0
  %992 = vmatpush1.msra.mxu0 0.0
  %993 = vmatprep.subr.mxu0 0.0
  %994 = vmatpush1.msra.mxu0 0.0
  %995 = vmatprep.subr.mxu0 0.0
  %996 = vmatpush1.msra.mxu0 0.0
  %997 = vmatprep.subr.mxu0 0.0
  %998 = vmatpush1.msra.mxu0 0.0
  %999 = vmatprep.subr.mxu0 0.0
  %1000 = vmatpush1.msra.mxu0 0.0
  %1001 = vmatprep.subr.mxu0 0.0
  %1002 = vmatpush1.msra.mxu0 0.0
  %1003 = vmatprep.subr.mxu0 0.0
  %1004 = vmatpush1.msra.mxu0 0.0
  %1005 = vmatprep.subr.mxu0 0.0
  %1006 = vmatpush1.msra.mxu0 0.0
  %1007 = vmatprep.subr.mxu0 0.0
  %1008 = vmatpush1.msra.mxu0 0.0
  %1009 = vmatprep.subr.mxu0 0.0
  %1010 = vmatpush1.msra.mxu0 0.0
  %1011 = vmatprep.subr.mxu0 0.0
  %1012 = vmatpush1.msra.mxu0 0.0
  %1013 = vmatprep.subr.mxu0 0.0
  %1014 = vmatpush1.msra.mxu0 0.0
  %1015 = vmatprep.subr.mxu0 0.0
  %1016 = vmatpush1.msra.mxu0 0.0
  %1017 = vmatprep.subr.mxu0 0.0
  %1018 = vmatpush1.msra.mxu0 0.0
  %1019 = vmatprep.subr.mxu0 0.0
  %1020 = vmatpush1.msra.mxu0 0.0
  %1021 = vmatprep.subr.mxu0 0.0
  %1022 = vmatpush1.msra.mxu0 0.0
  %1023 = vmatprep.subr.mxu0 0.0
  %1024 = vmatpush1.msra.mxu0 0.0
  %1025 = vmatprep.subr.mxu0 0.0
  %1026 = vmatpush1.msra.mxu0 0.0
  %1027 = vmatprep.subr.mxu0 0.0
  %1028 = vmatpush1.msra.mxu0 0.0
  %1029 = vmatprep.subr.mxu0 0.0
  %1030 = vmatpush1.msra.mxu0 0.0
  %1031 = vmatprep.subr.mxu0 0.0
  %1032 = vmatpush1.msra.mxu0 0.0
  %1033 = vmatprep.subr.mxu0 0.0
  %1034 = vmatpush1.msra.mxu0 0.0
  %1035 = vmatprep.subr.mxu0 0.0
  %1036 = vmatpush1.msra.mxu0 0.0
  %1037 = vmatprep.subr.mxu0 0.0
  %1038 = vmatpush1.msra.mxu0 0.0
  %1039 = vmatprep.subr.mxu0 0.0
  %1040 = vmatpush1.msra.mxu0 0.0
  %1041 = vmatprep.subr.mxu0 0.0
  %1042 = vmatpush1.msra.mxu0 0.0
  %1043 = vmatprep.subr.mxu0 0.0
  %1044 = vmatpush1.msra.mxu0 0.0
  %1045 = vmatprep.subr.mxu0 0.0
  %1046 = vmatpush1.msra.mxu0 0.0
  %1047 = vmatprep.subr.mxu0 0.0
  %1048 = vmatpush1.msra.mxu0 0.0
  %1049 = vmatprep.subr.mxu0 0.0
  %1050 = vmatpush1.msra.mxu0 0.0
  %1051 = vmatprep.mubr.f32.mxu0 0.0
  %v1052 = vand.u32 %v52, 4294901760
  %v1053 = vsub.f32 %v52, %v1052
  %v1054 = vand.u32 %v1053, 4294901760
  %1055 = vmatmul.mubr.f32.gmra.mrb[0].mxu0 %v1054
  %v1056 = vpop.f32.mrb[0].mxu0
  %v1057 = vadd.f32 %v794, %v1056
  %v1058 = vpop.f32.mrb[0].mxu0
  %1059 = vmatprep.mubr.f32.mxu0 0.0
  %v1060 = vand.u32 %v55, 4294901760
  %v1061 = vsub.f32 %v55, %v1060
  %v1062 = vand.u32 %v1061, 4294901760
  %1063 = vmatmul.mubr.f32.gmra.mrb[0].mxu0 %v1062
  %v1064 = vpop.f32.mrb[0].mxu0
  %v1065 = vadd.f32 %v801, %v1064
  %v1066 = vpop.f32.mrb[0].mxu0
  %1067 = vmatprep.mubr.f32.mxu0 0.0
  %v1068 = vand.u32 %v58, 4294901760
  %v1069 = vsub.f32 %v58, %v1068
  %v1070 = vand.u32 %v1069, 4294901760
  %1071 = vmatmul.mubr.f32.gmra.mrb[0].mxu0 %v1070
  %v1072 = vpop.f32.mrb[0].mxu0
  %v1073 = vadd.f32 %v808, %v1072
  %v1074 = vpop.f32.mrb[0].mxu0
  %1075 = vmatprep.mubr.f32.mxu0 0.0
  %v1076 = vand.u32 %v61, 4294901760
  %v1077 = vsub.f32 %v61, %v1076
  %v1078 = vand.u32 %v1077, 4294901760
  %1079 = vmatmul.mubr.f32.gmra.mrb[0].mxu0 %v1078
  %v1080 = vpop.f32.mrb[0].mxu0
  %v1081 = vadd.f32 %v815, %v1080
  %v1082 = vpop.f32.mrb[0].mxu0
  %1083 = vmatprep.mubr.f32.mxu0 0.0
  %v1084 = vand.u32 %v64, 4294901760
  %v1085 = vsub.f32 %v64, %v1084
  %v1086 = vand.u32 %v1085, 4294901760
  %1087 = vmatmul.mubr.f32.gmra.mrb[0].mxu0 %v1086
  %v1088 = vpop.f32.mrb[0].mxu0
  %v1089 = vadd.f32 %v822, %v1088
  %v1090 = vpop.f32.mrb[0].mxu0
  %1091 = vmatprep.mubr.f32.mxu0 0.0
  %v1092 = vand.u32 %v67, 4294901760
  %v1093 = vsub.f32 %v67, %v1092
  %v1094 = vand.u32 %v1093, 4294901760
  %1095 = vmatmul.mubr.f32.gmra.mrb[0].mxu0 %v1094
  %v1096 = vpop.f32.mrb[0].mxu0
  %v1097 = vadd.f32 %v829, %v1096
  %v1098 = vpop.f32.mrb[0].mxu0
  %1099 = vmatprep.mubr.f32.mxu0 0.0
  %v1100 = vand.u32 %v70, 4294901760
  %v1101 = vsub.f32 %v70, %v1100
  %v1102 = vand.u32 %v1101, 4294901760
  %1103 = vmatmul.mubr.f32.gmra.mrb[0].mxu0 %v1102
  %v1104 = vpop.f32.mrb[0].mxu0
  %v1105 = vadd.f32 %v836, %v1104
  %v1106 = vpop.f32.mrb[0].mxu0
  %1107 = vmatprep.mubr.f32.mxu0 0.0
  %v1108 = vand.u32 %v73, 4294901760
  %v1109 = vsub.f32 %v73, %v1108
  %v1110 = vand.u32 %v1109, 4294901760
  %1111 = vmatmul.mubr.f32.gmra.mrb[0].mxu0 %v1110
  %v1112 = vpop.f32.mrb[0].mxu0
  %v1113 = vadd.f32 %v843, %v1112
  %v1114 = vpop.f32.mrb[0].mxu0
  %1115 = vmatprep.mubr.f32.mxu0 0.0
  %v1116 = vand.u32 %v76, 4294901760
  %v1117 = vsub.f32 %v76, %v1116
  %v1118 = vand.u32 %v1117, 4294901760
  %1119 = vmatmul.mubr.f32.gmra.mrb[0].mxu0 %v1118
  %v1120 = vpop.f32.mrb[0].mxu0
  %v1121 = vadd.f32 %v850, %v1120
  %v1122 = vpop.f32.mrb[0].mxu0
  %1123 = vmatprep.mubr.f32.mxu0 0.0
  %v1124 = vand.u32 %v79, 4294901760
  %v1125 = vsub.f32 %v79, %v1124
  %v1126 = vand.u32 %v1125, 4294901760
  %1127 = vmatmul.mubr.f32.gmra.mrb[0].mxu0 %v1126
  %v1128 = vpop.f32.mrb[0].mxu0
  %v1129 = vadd.f32 %v857, %v1128
  %v1130 = vpop.f32.mrb[0].mxu0
  %1131 = vmatprep.mubr.f32.mxu0 0.0
  %v1132 = vand.u32 %v82, 4294901760
  %v1133 = vsub.f32 %v82, %v1132
  %v1134 = vand.u32 %v1133, 4294901760
  %1135 = vmatmul.mubr.f32.gmra.mrb[0].mxu0 %v1134
  %v1136 = vpop.f32.mrb[0].mxu0
  %v1137 = vadd.f32 %v864, %v1136
  %v1138 = vpop.f32.mrb[0].mxu0
  %1139 = vmatprep.mubr.f32.mxu0 0.0
  %v1140 = vand.u32 %v85, 4294901760
  %v1141 = vsub.f32 %v85, %v1140
  %v1142 = vand.u32 %v1141, 4294901760
  %1143 = vmatmul.mubr.f32.gmra.mrb[0].mxu0 %v1142
  %v1144 = vpop.f32.mrb[0].mxu0
  %v1145 = vadd.f32 %v871, %v1144
  %v1146 = vpop.f32.mrb[0].mxu0
  %1147 = vmatprep.mubr.f32.mxu0 0.0
  %v1148 = vand.u32 %v88, 4294901760
  %v1149 = vsub.f32 %v88, %v1148
  %v1150 = vand.u32 %v1149, 4294901760
  %1151 = vmatmul.mubr.f32.gmra.mrb[0].mxu0 %v1150
  %v1152 = vpop.f32.mrb[0].mxu0
  %v1153 = vadd.f32 %v878, %v1152
  %v1154 = vpop.f32.mrb[0].mxu0
  %1155 = vmatprep.mubr.f32.mxu0 0.0
  %v1156 = vand.u32 %v91, 4294901760
  %v1157 = vsub.f32 %v91, %v1156
  %v1158 = vand.u32 %v1157, 4294901760
  %1159 = vmatmul.mubr.f32.gmra.mrb[0].mxu0 %v1158
  %v1160 = vpop.f32.mrb[0].mxu0
  %v1161 = vadd.f32 %v885, %v1160
  %v1162 = vpop.f32.mrb[0].mxu0
  %1163 = vmatprep.mubr.f32.mxu0 0.0
  %v1164 = vand.u32 %v94, 4294901760
  %v1165 = vsub.f32 %v94, %v1164
  %v1166 = vand.u32 %v1165, 4294901760
  %1167 = vmatmul.mubr.f32.gmra.mrb[0].mxu0 %v1166
  %v1168 = vpop.f32.mrb[0].mxu0
  %v1169 = vadd.f32 %v892, %v1168
  %v1170 = vpop.f32.mrb[0].mxu0
  %1171 = vmatprep.mubr.f32.mxu0 0.0
  %v1172 = vand.u32 %v97, 4294901760
  %v1173 = vsub.f32 %v97, %v1172
  %v1174 = vand.u32 %v1173, 4294901760
  %1175 = vmatmul.mubr.f32.gmra.mrb[0].mxu0 %v1174
  %v1176 = vpop.f32.mrb[0].mxu0
  %v1177 = vadd.f32 %v899, %v1176
  %v1178 = vpop.f32.mrb[0].mxu0
  %1179 = vmatprep.mubr.f32.mxu0 0.0
  %v1180 = vand.u32 %v100, 4294901760
  %v1181 = vsub.f32 %v100, %v1180
  %v1182 = vand.u32 %v1181, 4294901760
  %1183 = vmatmul.mubr.f32.gmra.mrb[0].mxu0 %v1182
  %v1184 = vpop.f32.mrb[0].mxu0
  %v1185 = vadd.f32 %v906, %v1184
  %v1186 = vpop.f32.mrb[0].mxu0
  %1187 = vmatprep.mubr.f32.mxu0 0.0
  %v1188 = vand.u32 %v103, 4294901760
  %v1189 = vsub.f32 %v103, %v1188
  %v1190 = vand.u32 %v1189, 4294901760
  %1191 = vmatmul.mubr.f32.gmra.mrb[0].mxu0 %v1190
  %v1192 = vpop.f32.mrb[0].mxu0
  %v1193 = vadd.f32 %v913, %v1192
  %v1194 = vpop.f32.mrb[0].mxu0
  %1195 = vmatprep.mubr.f32.mxu0 0.0
  %v1196 = vand.u32 %v106, 4294901760
  %v1197 = vsub.f32 %v106, %v1196
  %v1198 = vand.u32 %v1197, 4294901760
  %1199 = vmatmul.mubr.f32.gmra.mrb[0].mxu0 %v1198
  %v1200 = vpop.f32.mrb[0].mxu0
  %v1201 = vadd.f32 %v920, %v1200
  %v1202 = vpop.f32.mrb[0].mxu0
  %1203 = vmatprep.mubr.f32.mxu0 0.0
  %v1204 = vand.u32 %v109, 4294901760
  %v1205 = vsub.f32 %v109, %v1204
  %v1206 = vand.u32 %v1205, 4294901760
  %1207 = vmatmul.mubr.f32.gmra.mrb[0].mxu0 %v1206
  %v1208 = vpop.f32.mrb[0].mxu0
  %v1209 = vadd.f32 %v927, %v1208
  %v1210 = vpop.f32.mrb[0].mxu0
  %1211 = vmatprep.mubr.f32.mxu0 0.0
  %v1212 = vand.u32 %v112, 4294901760
  %v1213 = vsub.f32 %v112, %v1212
  %v1214 = vand.u32 %v1213, 4294901760
  %1215 = vmatmul.mubr.f32.gmra.mrb[0].mxu0 %v1214
  %v1216 = vpop.f32.mrb[0].mxu0
  %v1217 = vadd.f32 %v934, %v1216
  %v1218 = vpop.f32.mrb[0].mxu0
  %1219 = vmatprep.mubr.f32.mxu0 0.0
  %v1220 = vand.u32 %v115, 4294901760
  %v1221 = vsub.f32 %v115, %v1220
  %v1222 = vand.u32 %v1221, 4294901760
  %1223 = vmatmul.mubr.f32.gmra.mrb[0].mxu0 %v1222
  %v1224 = vpop.f32.mrb[0].mxu0
  %v1225 = vadd.f32 %v941, %v1224
  %v1226 = vpop.f32.mrb[0].mxu0
  %1227 = vmatprep.mubr.f32.mxu0 0.0
  %v1228 = vand.u32 %v118, 4294901760
  %v1229 = vsub.f32 %v118, %v1228
  %v1230 = vand.u32 %v1229, 4294901760
  %1231 = vmatmul.mubr.f32.gmra.mrb[0].mxu0 %v1230
  %v1232 = vpop.f32.mrb[0].mxu0
  %v1233 = vadd.f32 %v948, %v1232
  %v1234 = vpop.f32.mrb[0].mxu0
  %1235 = vmatprep.mubr.f32.mxu0 0.0
  %v1236 = vand.u32 %v121, 4294901760
  %v1237 = vsub.f32 %v121, %v1236
  %v1238 = vand.u32 %v1237, 4294901760
  %1239 = vmatmul.mubr.f32.gmra.mrb[0].mxu0 %v1238
  %v1240 = vpop.f32.mrb[0].mxu0
  %v1241 = vadd.f32 %v955, %v1240
  %v1242 = vpop.f32.mrb[0].mxu0
  %1243 = vmatprep.mubr.f32.mxu0 0.0
  %v1244 = vand.u32 %v124, 4294901760
  %v1245 = vsub.f32 %v124, %v1244
  %v1246 = vand.u32 %v1245, 4294901760
  %1247 = vmatmul.mubr.f32.gmra.mrb[0].mxu0 %v1246
  %v1248 = vpop.f32.mrb[0].mxu0
  %v1249 = vadd.f32 %v962, %v1248
  %v1250 = vpop.f32.mrb[0].mxu0
  %1251 = vmatprep.mubr.f32.mxu0 0.0
  %v1252 = vand.u32 %v127, 4294901760
  %v1253 = vsub.f32 %v127, %v1252
  %v1254 = vand.u32 %v1253, 4294901760
  %1255 = vmatmul.mubr.f32.gmra.mrb[0].mxu0 %v1254
  %v1256 = vpop.f32.mrb[0].mxu0
  %v1257 = vadd.f32 %v969, %v1256
  %v1258 = vpop.f32.mrb[0].mxu0
  %1259 = vmatprep.mubr.f32.mxu0 0.0
  %v1260 = vand.u32 %v130, 4294901760
  %v1261 = vsub.f32 %v130, %v1260
  %v1262 = vand.u32 %v1261, 4294901760
  %1263 = vmatmul.mubr.f32.gmra.mrb[0].mxu0 %v1262
  %v1264 = vpop.f32.mrb[0].mxu0
  %v1265 = vadd.f32 %v976, %v1264
  %v1266 = vpop.f32.mrb[0].mxu0
  %1267 = vmatprep.mubr.f32.mxu0 0.0
  %v1268 = vand.u32 %v133, 4294901760
  %v1269 = vsub.f32 %v133, %v1268
  %v1270 = vand.u32 %v1269, 4294901760
  %1271 = vmatmul.mubr.f32.gmra.mrb[0].mxu0 %v1270
  %v1272 = vpop.f32.mrb[0].mxu0
  %v1273 = vadd.f32 %v983, %v1272
  %v1274 = vpop.f32.mrb[0].mxu0
  %1275 = vdwg.mxu0
  %1276 = vmatprep.subr.mxu0 0.0
  %v1277 = vand.u32 %v137, 4294901760
  %v1278 = vsub.f32 %v137, %v1277
  %v1279 = vand.u32 %v1278, 4294901760
  %1280 = vmatpush1.msra.mxu0 %v1279
  %1281 = vmatprep.subr.mxu0 0.0
  %1282 = vmatpush1.msra.mxu0 0.0
  %1283 = vmatprep.subr.mxu0 0.0
  %1284 = vmatpush1.msra.mxu0 0.0
  %1285 = vmatprep.subr.mxu0 0.0
  %1286 = vmatpush1.msra.mxu0 0.0
  %1287 = vmatprep.subr.mxu0 0.0
  %1288 = vmatpush1.msra.mxu0 0.0
  %1289 = vmatprep.subr.mxu0 0.0
  %1290 = vmatpush1.msra.mxu0 0.0
  %1291 = vmatprep.subr.mxu0 0.0
  %1292 = vmatpush1.msra.mxu0 0.0
  %1293 = vmatprep.subr.mxu0 0.0
  %1294 = vmatpush1.msra.mxu0 0.0
  %1295 = vmatprep.subr.mxu0 0.0
  %1296 = vmatpush1.msra.mxu0 0.0
  %1297 = vmatprep.subr.mxu0 0.0
  %1298 = vmatpush1.msra.mxu0 0.0
  %1299 = vmatprep.subr.mxu0 0.0
  %1300 = vmatpush1.msra.mxu0 0.0
  %1301 = vmatprep.subr.mxu0 0.0
  %1302 = vmatpush1.msra.mxu0 0.0
  %1303 = vmatprep.subr.mxu0 0.0
  %1304 = vmatpush1.msra.mxu0 0.0
  %1305 = vmatprep.subr.mxu0 0.0
  %1306 = vmatpush1.msra.mxu0 0.0
  %1307 = vmatprep.subr.mxu0 0.0
  %1308 = vmatpush1.msra.mxu0 0.0
  %1309 = vmatprep.subr.mxu0 0.0
  %1310 = vmatpush1.msra.mxu0 0.0
  %1311 = vmatprep.subr.mxu0 0.0
  %1312 = vmatpush1.msra.mxu0 0.0
  %1313 = vmatprep.subr.mxu0 0.0
  %1314 = vmatpush1.msra.mxu0 0.0
  %1315 = vmatprep.subr.mxu0 0.0
  %1316 = vmatpush1.msra.mxu0 0.0
  %1317 = vmatprep.subr.mxu0 0.0
  %1318 = vmatpush1.msra.mxu0 0.0
  %1319 = vmatprep.subr.mxu0 0.0
  %1320 = vmatpush1.msra.mxu0 0.0
  %1321 = vmatprep.subr.mxu0 0.0
  %1322 = vmatpush1.msra.mxu0 0.0
  %1323 = vmatprep.subr.mxu0 0.0
  %1324 = vmatpush1.msra.mxu0 0.0
  %1325 = vmatprep.subr.mxu0 0.0
  %1326 = vmatpush1.msra.mxu0 0.0
  %1327 = vmatprep.subr.mxu0 0.0
  %1328 = vmatpush1.msra.mxu0 0.0
  %1329 = vmatprep.subr.mxu0 0.0
  %1330 = vmatpush1.msra.mxu0 0.0
  %1331 = vmatprep.subr.mxu0 0.0
  %1332 = vmatpush1.msra.mxu0 0.0
  %1333 = vmatprep.subr.mxu0 0.0
  %1334 = vmatpush1.msra.mxu0 0.0
  %1335 = vmatprep.subr.mxu0 0.0
  %1336 = vmatpush1.msra.mxu0 0.0
  %1337 = vmatprep.subr.mxu0 0.0
  %1338 = vmatpush1.msra.mxu0 0.0
  %1339 = vmatprep.subr.mxu0 0.0
  %1340 = vmatpush1.msra.mxu0 0.0
  %1341 = vmatprep.subr.mxu0 0.0
  %1342 = vmatpush1.msra.mxu0 0.0
  %1343 = vmatprep.mubr.f32.mxu0 0.0
  %v1344 = vand.u32 %v52, 4294901760
  %1345 = vmatmul.mubr.f32.gmra.mrb[0].mxu0 %v1344
  %v1346 = vpop.f32.mrb[0].mxu0
  %v1347 = vadd.f32 %v1057, %v1346
  %v1348 = vpop.f32.mrb[0].mxu0
  %1349 = vmatprep.mubr.f32.mxu0 0.0
  %v1350 = vand.u32 %v55, 4294901760
  %1351 = vmatmul.mubr.f32.gmra.mrb[0].mxu0 %v1350
  %v1352 = vpop.f32.mrb[0].mxu0
  %v1353 = vadd.f32 %v1065, %v1352
  %v1354 = vpop.f32.mrb[0].mxu0
  %1355 = vmatprep.mubr.f32.mxu0 0.0
  %v1356 = vand.u32 %v58, 4294901760
  %1357 = vmatmul.mubr.f32.gmra.mrb[0].mxu0 %v1356
  %v1358 = vpop.f32.mrb[0].mxu0
  %v1359 = vadd.f32 %v1073, %v1358
  %v1360 = vpop.f32.mrb[0].mxu0
  %1361 = vmatprep.mubr.f32.mxu0 0.0
  %v1362 = vand.u32 %v61, 4294901760
  %1363 = vmatmul.mubr.f32.gmra.mrb[0].mxu0 %v1362
  %v1364 = vpop.f32.mrb[0].mxu0
  %v1365 = vadd.f32 %v1081, %v1364
  %v1366 = vpop.f32.mrb[0].mxu0
  %1367 = vmatprep.mubr.f32.mxu0 0.0
  %v1368 = vand.u32 %v64, 4294901760
  %1369 = vmatmul.mubr.f32.gmra.mrb[0].mxu0 %v1368
  %v1370 = vpop.f32.mrb[0].mxu0
  %v1371 = vadd.f32 %v1089, %v1370
  %v1372 = vpop.f32.mrb[0].mxu0
  %1373 = vmatprep.mubr.f32.mxu0 0.0
  %v1374 = vand.u32 %v67, 4294901760
  %1375 = vmatmul.mubr.f32.gmra.mrb[0].mxu0 %v1374
  %v1376 = vpop.f32.mrb[0].mxu0
  %v1377 = vadd.f32 %v1097, %v1376
  %v1378 = vpop.f32.mrb[0].mxu0
  %1379 = vmatprep.mubr.f32.mxu0 0.0
  %v1380 = vand.u32 %v70, 4294901760
  %1381 = vmatmul.mubr.f32.gmra.mrb[0].mxu0 %v1380
  %v1382 = vpop.f32.mrb[0].mxu0
  %v1383 = vadd.f32 %v1105, %v1382
  %v1384 = vpop.f32.mrb[0].mxu0
  %1385 = vmatprep.mubr.f32.mxu0 0.0
  %v1386 = vand.u32 %v73, 4294901760
  %1387 = vmatmul.mubr.f32.gmra.mrb[0].mxu0 %v1386
  %v1388 = vpop.f32.mrb[0].mxu0
  %v1389 = vadd.f32 %v1113, %v1388
  %v1390 = vpop.f32.mrb[0].mxu0
  %1391 = vmatprep.mubr.f32.mxu0 0.0
  %v1392 = vand.u32 %v76, 4294901760
  %1393 = vmatmul.mubr.f32.gmra.mrb[0].mxu0 %v1392
  %v1394 = vpop.f32.mrb[0].mxu0
  %v1395 = vadd.f32 %v1121, %v1394
  %v1396 = vpop.f32.mrb[0].mxu0
  %1397 = vmatprep.mubr.f32.mxu0 0.0
  %v1398 = vand.u32 %v79, 4294901760
  %1399 = vmatmul.mubr.f32.gmra.mrb[0].mxu0 %v1398
  %v1400 = vpop.f32.mrb[0].mxu0
  %v1401 = vadd.f32 %v1129, %v1400
  %v1402 = vpop.f32.mrb[0].mxu0
  %1403 = vmatprep.mubr.f32.mxu0 0.0
  %v1404 = vand.u32 %v82, 4294901760
  %1405 = vmatmul.mubr.f32.gmra.mrb[0].mxu0 %v1404
  %v1406 = vpop.f32.mrb[0].mxu0
  %v1407 = vadd.f32 %v1137, %v1406
  %v1408 = vpop.f32.mrb[0].mxu0
  %1409 = vmatprep.mubr.f32.mxu0 0.0
  %v1410 = vand.u32 %v85, 4294901760
  %1411 = vmatmul.mubr.f32.gmra.mrb[0].mxu0 %v1410
  %v1412 = vpop.f32.mrb[0].mxu0
  %v1413 = vadd.f32 %v1145, %v1412
  %v1414 = vpop.f32.mrb[0].mxu0
  %1415 = vmatprep.mubr.f32.mxu0 0.0
  %v1416 = vand.u32 %v88, 4294901760
  %1417 = vmatmul.mubr.f32.gmra.mrb[0].mxu0 %v1416
  %v1418 = vpop.f32.mrb[0].mxu0
  %v1419 = vadd.f32 %v1153, %v1418
  %v1420 = vpop.f32.mrb[0].mxu0
  %1421 = vmatprep.mubr.f32.mxu0 0.0
  %v1422 = vand.u32 %v91, 4294901760
  %1423 = vmatmul.mubr.f32.gmra.mrb[0].mxu0 %v1422
  %v1424 = vpop.f32.mrb[0].mxu0
  %v1425 = vadd.f32 %v1161, %v1424
  %v1426 = vpop.f32.mrb[0].mxu0
  %1427 = vmatprep.mubr.f32.mxu0 0.0
  %v1428 = vand.u32 %v94, 4294901760
  %1429 = vmatmul.mubr.f32.gmra.mrb[0].mxu0 %v1428
  %v1430 = vpop.f32.mrb[0].mxu0
  %v1431 = vadd.f32 %v1169, %v1430
  %v1432 = vpop.f32.mrb[0].mxu0
  %1433 = vmatprep.mubr.f32.mxu0 0.0
  %v1434 = vand.u32 %v97, 4294901760
  %1435 = vmatmul.mubr.f32.gmra.mrb[0].mxu0 %v1434
  %v1436 = vpop.f32.mrb[0].mxu0
  %v1437 = vadd.f32 %v1177, %v1436
  %v1438 = vpop.f32.mrb[0].mxu0
  %1439 = vmatprep.mubr.f32.mxu0 0.0
  %v1440 = vand.u32 %v100, 4294901760
  %1441 = vmatmul.mubr.f32.gmra.mrb[0].mxu0 %v1440
  %v1442 = vpop.f32.mrb[0].mxu0
  %v1443 = vadd.f32 %v1185, %v1442
  %v1444 = vpop.f32.mrb[0].mxu0
  %1445 = vmatprep.mubr.f32.mxu0 0.0
  %v1446 = vand.u32 %v103, 4294901760
  %1447 = vmatmul.mubr.f32.gmra.mrb[0].mxu0 %v1446
  %v1448 = vpop.f32.mrb[0].mxu0
  %v1449 = vadd.f32 %v1193, %v1448
  %v1450 = vpop.f32.mrb[0].mxu0
  %1451 = vmatprep.mubr.f32.mxu0 0.0
  %v1452 = vand.u32 %v106, 4294901760
  %1453 = vmatmul.mubr.f32.gmra.mrb[0].mxu0 %v1452
  %v1454 = vpop.f32.mrb[0].mxu0
  %v1455 = vadd.f32 %v1201, %v1454
  %v1456 = vpop.f32.mrb[0].mxu0
  %1457 = vmatprep.mubr.f32.mxu0 0.0
  %v1458 = vand.u32 %v109, 4294901760
  %1459 = vmatmul.mubr.f32.gmra.mrb[0].mxu0 %v1458
  %v1460 = vpop.f32.mrb[0].mxu0
  %v1461 = vadd.f32 %v1209, %v1460
  %v1462 = vpop.f32.mrb[0].mxu0
  %1463 = vmatprep.mubr.f32.mxu0 0.0
  %v1464 = vand.u32 %v112, 4294901760
  %1465 = vmatmul.mubr.f32.gmra.mrb[0].mxu0 %v1464
  %v1466 = vpop.f32.mrb[0].mxu0
  %v1467 = vadd.f32 %v1217, %v1466
  %v1468 = vpop.f32.mrb[0].mxu0
  %1469 = vmatprep.mubr.f32.mxu0 0.0
  %v1470 = vand.u32 %v115, 4294901760
  %1471 = vmatmul.mubr.f32.gmra.mrb[0].mxu0 %v1470
  %v1472 = vpop.f32.mrb[0].mxu0
  %v1473 = vadd.f32 %v1225, %v1472
  %v1474 = vpop.f32.mrb[0].mxu0
  %1475 = vmatprep.mubr.f32.mxu0 0.0
  %v1476 = vand.u32 %v118, 4294901760
  %1477 = vmatmul.mubr.f32.gmra.mrb[0].mxu0 %v1476
  %v1478 = vpop.f32.mrb[0].mxu0
  %v1479 = vadd.f32 %v1233, %v1478
  %v1480 = vpop.f32.mrb[0].mxu0
  %1481 = vmatprep.mubr.f32.mxu0 0.0
  %v1482 = vand.u32 %v121, 4294901760
  %1483 = vmatmul.mubr.f32.gmra.mrb[0].mxu0 %v1482
  %v1484 = vpop.f32.mrb[0].mxu0
  %v1485 = vadd.f32 %v1241, %v1484
  %v1486 = vpop.f32.mrb[0].mxu0
  %1487 = vmatprep.mubr.f32.mxu0 0.0
  %v1488 = vand.u32 %v124, 4294901760
  %1489 = vmatmul.mubr.f32.gmra.mrb[0].mxu0 %v1488
  %v1490 = vpop.f32.mrb[0].mxu0
  %v1491 = vadd.f32 %v1249, %v1490
  %v1492 = vpop.f32.mrb[0].mxu0
  %1493 = vmatprep.mubr.f32.mxu0 0.0
  %v1494 = vand.u32 %v127, 4294901760
  %1495 = vmatmul.mubr.f32.gmra.mrb[0].mxu0 %v1494
  %v1496 = vpop.f32.mrb[0].mxu0
  %v1497 = vadd.f32 %v1257, %v1496
  %v1498 = vpop.f32.mrb[0].mxu0
  %1499 = vmatprep.mubr.f32.mxu0 0.0
  %v1500 = vand.u32 %v130, 4294901760
  %1501 = vmatmul.mubr.f32.gmra.mrb[0].mxu0 %v1500
  %v1502 = vpop.f32.mrb[0].mxu0
  %v1503 = vadd.f32 %v1265, %v1502
  %v1504 = vpop.f32.mrb[0].mxu0
  %1505 = vmatprep.mubr.f32.mxu0 0.0
  %v1506 = vand.u32 %v133, 4294901760
  %1507 = vmatmul.mubr.f32.gmra.mrb[0].mxu0 %v1506
  %v1508 = vpop.f32.mrb[0].mxu0
  %v1509 = vadd.f32 %v1273, %v1508
  %v1510 = vpop.f32.mrb[0].mxu0
  %1511 = vdwg.mxu0
  %1512 = vmatprep.subr.mxu0 0.0
  %v1513 = vand.u32 %v137, 4294901760
  %1514 = vmatpush1.msra.mxu0 %v1513
  %1515 = vmatprep.subr.mxu0 0.0
  %1516 = vmatpush1.msra.mxu0 0.0
  %1517 = vmatprep.subr.mxu0 0.0
  %1518 = vmatpush1.msra.mxu0 0.0
  %1519 = vmatprep.subr.mxu0 0.0
  %1520 = vmatpush1.msra.mxu0 0.0
  %1521 = vmatprep.subr.mxu0 0.0
  %1522 = vmatpush1.msra.mxu0 0.0
  %1523 = vmatprep.subr.mxu0 0.0
  %1524 = vmatpush1.msra.mxu0 0.0
  %1525 = vmatprep.subr.mxu0 0.0
  %1526 = vmatpush1.msra.mxu0 0.0
  %1527 = vmatprep.subr.mxu0 0.0
  %1528 = vmatpush1.msra.mxu0 0.0
  %1529 = vmatprep.subr.mxu0 0.0
  %1530 = vmatpush1.msra.mxu0 0.0
  %1531 = vmatprep.subr.mxu0 0.0
  %1532 = vmatpush1.msra.mxu0 0.0
  %1533 = vmatprep.subr.mxu0 0.0
  %1534 = vmatpush1.msra.mxu0 0.0
  %1535 = vmatprep.subr.mxu0 0.0
  %1536 = vmatpush1.msra.mxu0 0.0
  %1537 = vmatprep.subr.mxu0 0.0
  %1538 = vmatpush1.msra.mxu0 0.0
  %1539 = vmatprep.subr.mxu0 0.0
  %1540 = vmatpush1.msra.mxu0 0.0
  %1541 = vmatprep.subr.mxu0 0.0
  %1542 = vmatpush1.msra.mxu0 0.0
  %1543 = vmatprep.subr.mxu0 0.0
  %1544 = vmatpush1.msra.mxu0 0.0
  %1545 = vmatprep.subr.mxu0 0.0
  %1546 = vmatpush1.msra.mxu0 0.0
  %1547 = vmatprep.subr.mxu0 0.0
  %1548 = vmatpush1.msra.mxu0 0.0
  %1549 = vmatprep.subr.mxu0 0.0
  %1550 = vmatpush1.msra.mxu0 0.0
  %1551 = vmatprep.subr.mxu0 0.0
  %1552 = vmatpush1.msra.mxu0 0.0
  %1553 = vmatprep.subr.mxu0 0.0
  %1554 = vmatpush1.msra.mxu0 0.0
  %1555 = vmatprep.subr.mxu0 0.0
  %1556 = vmatpush1.msra.mxu0 0.0
  %1557 = vmatprep.subr.mxu0 0.0
  %1558 = vmatpush1.msra.mxu0 0.0
  %1559 = vmatprep.subr.mxu0 0.0
  %1560 = vmatpush1.msra.mxu0 0.0
  %1561 = vmatprep.subr.mxu0 0.0
  %1562 = vmatpush1.msra.mxu0 0.0
  %1563 = vmatprep.subr.mxu0 0.0
  %1564 = vmatpush1.msra.mxu0 0.0
  %1565 = vmatprep.subr.mxu0 0.0
  %1566 = vmatpush1.msra.mxu0 0.0
  %1567 = vmatprep.subr.mxu0 0.0
  %1568 = vmatpush1.msra.mxu0 0.0
  %1569 = vmatprep.subr.mxu0 0.0
  %1570 = vmatpush1.msra.mxu0 0.0
  %1571 = vmatprep.subr.mxu0 0.0
  %1572 = vmatpush1.msra.mxu0 0.0
  %1573 = vmatprep.subr.mxu0 0.0
  %1574 = vmatpush1.msra.mxu0 0.0
  %1575 = vmatprep.subr.mxu0 0.0
  %1576 = vmatpush1.msra.mxu0 0.0
  %1577 = vmatprep.mubr.f32.mxu0 0.0
  %v1578 = vand.u32 %v52, 4294901760
  %1579 = vmatmul.mubr.f32.gmra.mrb[0].mxu0 %v1578
  %v1580 = vpop.f32.mrb[0].mxu0
  %v1581 = vadd.f32 %v1347, %v1580
  %v1582 = vpop.f32.mrb[0].mxu0
  %1583 = vmatprep.mubr.f32.mxu0 0.0
  %v1584 = vand.u32 %v55, 4294901760
  %1585 = vmatmul.mubr.f32.gmra.mrb[0].mxu0 %v1584
  %v1586 = vpop.f32.mrb[0].mxu0
  %v1587 = vadd.f32 %v1353, %v1586
  %v1588 = vpop.f32.mrb[0].mxu0
  %1589 = vmatprep.mubr.f32.mxu0 0.0
  %v1590 = vand.u32 %v58, 4294901760
  %1591 = vmatmul.mubr.f32.gmra.mrb[0].mxu0 %v1590
  %v1592 = vpop.f32.mrb[0].mxu0
  %v1593 = vadd.f32 %v1359, %v1592
  %v1594 = vpop.f32.mrb[0].mxu0
  %1595 = vmatprep.mubr.f32.mxu0 0.0
  %v1596 = vand.u32 %v61, 4294901760
  %1597 = vmatmul.mubr.f32.gmra.mrb[0].mxu0 %v1596
  %v1598 = vpop.f32.mrb[0].mxu0
  %v1599 = vadd.f32 %v1365, %v1598
  %v1600 = vpop.f32.mrb[0].mxu0
  %1601 = vmatprep.mubr.f32.mxu0 0.0
  %v1602 = vand.u32 %v64, 4294901760
  %1603 = vmatmul.mubr.f32.gmra.mrb[0].mxu0 %v1602
  %v1604 = vpop.f32.mrb[0].mxu0
  %v1605 = vadd.f32 %v1371, %v1604
  %v1606 = vpop.f32.mrb[0].mxu0
  %1607 = vmatprep.mubr.f32.mxu0 0.0
  %v1608 = vand.u32 %v67, 4294901760
  %1609 = vmatmul.mubr.f32.gmra.mrb[0].mxu0 %v1608
  %v1610 = vpop.f32.mrb[0].mxu0
  %v1611 = vadd.f32 %v1377, %v1610
  %v1612 = vpop.f32.mrb[0].mxu0
  %1613 = vmatprep.mubr.f32.mxu0 0.0
  %v1614 = vand.u32 %v70, 4294901760
  %1615 = vmatmul.mubr.f32.gmra.mrb[0].mxu0 %v1614
  %v1616 = vpop.f32.mrb[0].mxu0
  %v1617 = vadd.f32 %v1383, %v1616
  %v1618 = vpop.f32.mrb[0].mxu0
  %1619 = vmatprep.mubr.f32.mxu0 0.0
  %v1620 = vand.u32 %v73, 4294901760
  %1621 = vmatmul.mubr.f32.gmra.mrb[0].mxu0 %v1620
  %v1622 = vpop.f32.mrb[0].mxu0
  %v1623 = vadd.f32 %v1389, %v1622
  %v1624 = vpop.f32.mrb[0].mxu0
  %1625 = vmatprep.mubr.f32.mxu0 0.0
  %v1626 = vand.u32 %v76, 4294901760
  %1627 = vmatmul.mubr.f32.gmra.mrb[0].mxu0 %v1626
  %v1628 = vpop.f32.mrb[0].mxu0
  %v1629 = vadd.f32 %v1395, %v1628
  %v1630 = vpop.f32.mrb[0].mxu0
  %1631 = vmatprep.mubr.f32.mxu0 0.0
  %v1632 = vand.u32 %v79, 4294901760
  %1633 = vmatmul.mubr.f32.gmra.mrb[0].mxu0 %v1632
  %v1634 = vpop.f32.mrb[0].mxu0
  %v1635 = vadd.f32 %v1401, %v1634
  %v1636 = vpop.f32.mrb[0].mxu0
  %1637 = vmatprep.mubr.f32.mxu0 0.0
  %v1638 = vand.u32 %v82, 4294901760
  %1639 = vmatmul.mubr.f32.gmra.mrb[0].mxu0 %v1638
  %v1640 = vpop.f32.mrb[0].mxu0
  %v1641 = vadd.f32 %v1407, %v1640
  %v1642 = vpop.f32.mrb[0].mxu0
  %1643 = vmatprep.mubr.f32.mxu0 0.0
  %v1644 = vand.u32 %v85, 4294901760
  %1645 = vmatmul.mubr.f32.gmra.mrb[0].mxu0 %v1644
  %v1646 = vpop.f32.mrb[0].mxu0
  %v1647 = vadd.f32 %v1413, %v1646
  %v1648 = vpop.f32.mrb[0].mxu0
  %1649 = vmatprep.mubr.f32.mxu0 0.0
  %v1650 = vand.u32 %v88, 4294901760
  %1651 = vmatmul.mubr.f32.gmra.mrb[0].mxu0 %v1650
  %v1652 = vpop.f32.mrb[0].mxu0
  %v1653 = vadd.f32 %v1419, %v1652
  %v1654 = vpop.f32.mrb[0].mxu0
  %1655 = vmatprep.mubr.f32.mxu0 0.0
  %v1656 = vand.u32 %v91, 4294901760
  %1657 = vmatmul.mubr.f32.gmra.mrb[0].mxu0 %v1656
  %v1658 = vpop.f32.mrb[0].mxu0
  %v1659 = vadd.f32 %v1425, %v1658
  %v1660 = vpop.f32.mrb[0].mxu0
  %1661 = vmatprep.mubr.f32.mxu0 0.0
  %v1662 = vand.u32 %v94, 4294901760
  %1663 = vmatmul.mubr.f32.gmra.mrb[0].mxu0 %v1662
  %v1664 = vpop.f32.mrb[0].mxu0
  %v1665 = vadd.f32 %v1431, %v1664
  %v1666 = vpop.f32.mrb[0].mxu0
  %1667 = vmatprep.mubr.f32.mxu0 0.0
  %v1668 = vand.u32 %v97, 4294901760
  %1669 = vmatmul.mubr.f32.gmra.mrb[0].mxu0 %v1668
  %v1670 = vpop.f32.mrb[0].mxu0
  %v1671 = vadd.f32 %v1437, %v1670
  %v1672 = vpop.f32.mrb[0].mxu0
  %1673 = vmatprep.mubr.f32.mxu0 0.0
  %v1674 = vand.u32 %v100, 4294901760
  %1675 = vmatmul.mubr.f32.gmra.mrb[0].mxu0 %v1674
  %v1676 = vpop.f32.mrb[0].mxu0
  %v1677 = vadd.f32 %v1443, %v1676
  %v1678 = vpop.f32.mrb[0].mxu0
  %1679 = vmatprep.mubr.f32.mxu0 0.0
  %v1680 = vand.u32 %v103, 4294901760
  %1681 = vmatmul.mubr.f32.gmra.mrb[0].mxu0 %v1680
  %v1682 = vpop.f32.mrb[0].mxu0
  %v1683 = vadd.f32 %v1449, %v1682
  %v1684 = vpop.f32.mrb[0].mxu0
  %1685 = vmatprep.mubr.f32.mxu0 0.0
  %v1686 = vand.u32 %v106, 4294901760
  %1687 = vmatmul.mubr.f32.gmra.mrb[0].mxu0 %v1686
  %v1688 = vpop.f32.mrb[0].mxu0
  %v1689 = vadd.f32 %v1455, %v1688
  %v1690 = vpop.f32.mrb[0].mxu0
  %1691 = vmatprep.mubr.f32.mxu0 0.0
  %v1692 = vand.u32 %v109, 4294901760
  %1693 = vmatmul.mubr.f32.gmra.mrb[0].mxu0 %v1692
  %v1694 = vpop.f32.mrb[0].mxu0
  %v1695 = vadd.f32 %v1461, %v1694
  %v1696 = vpop.f32.mrb[0].mxu0
  %1697 = vmatprep.mubr.f32.mxu0 0.0
  %v1698 = vand.u32 %v112, 4294901760
  %1699 = vmatmul.mubr.f32.gmra.mrb[0].mxu0 %v1698
  %v1700 = vpop.f32.mrb[0].mxu0
  %v1701 = vadd.f32 %v1467, %v1700
  %v1702 = vpop.f32.mrb[0].mxu0
  %1703 = vmatprep.mubr.f32.mxu0 0.0
  %v1704 = vand.u32 %v115, 4294901760
  %1705 = vmatmul.mubr.f32.gmra.mrb[0].mxu0 %v1704
  %v1706 = vpop.f32.mrb[0].mxu0
  %v1707 = vadd.f32 %v1473, %v1706
  %v1708 = vpop.f32.mrb[0].mxu0
  %1709 = vmatprep.mubr.f32.mxu0 0.0
  %v1710 = vand.u32 %v118, 4294901760
  %1711 = vmatmul.mubr.f32.gmra.mrb[0].mxu0 %v1710
  %v1712 = vpop.f32.mrb[0].mxu0
  %v1713 = vadd.f32 %v1479, %v1712
  %v1714 = vpop.f32.mrb[0].mxu0
  %1715 = vmatprep.mubr.f32.mxu0 0.0
  %v1716 = vand.u32 %v121, 4294901760
  %1717 = vmatmul.mubr.f32.gmra.mrb[0].mxu0 %v1716
  %v1718 = vpop.f32.mrb[0].mxu0
  %v1719 = vadd.f32 %v1485, %v1718
  %v1720 = vpop.f32.mrb[0].mxu0
  %1721 = vmatprep.mubr.f32.mxu0 0.0
  %v1722 = vand.u32 %v124, 4294901760
  %1723 = vmatmul.mubr.f32.gmra.mrb[0].mxu0 %v1722
  %v1724 = vpop.f32.mrb[0].mxu0
  %v1725 = vadd.f32 %v1491, %v1724
  %v1726 = vpop.f32.mrb[0].mxu0
  %1727 = vmatprep.mubr.f32.mxu0 0.0
  %v1728 = vand.u32 %v127, 4294901760
  %1729 = vmatmul.mubr.f32.gmra.mrb[0].mxu0 %v1728
  %v1730 = vpop.f32.mrb[0].mxu0
  %v1731 = vadd.f32 %v1497, %v1730
  %v1732 = vpop.f32.mrb[0].mxu0
  %1733 = vmatprep.mubr.f32.mxu0 0.0
  %v1734 = vand.u32 %v130, 4294901760
  %1735 = vmatmul.mubr.f32.gmra.mrb[0].mxu0 %v1734
  %v1736 = vpop.f32.mrb[0].mxu0
  %v1737 = vadd.f32 %v1503, %v1736
  %v1738 = vpop.f32.mrb[0].mxu0
  %1739 = vmatprep.mubr.f32.mxu0 0.0
  %v1740 = vand.u32 %v133, 4294901760
  %1741 = vmatmul.mubr.f32.gmra.mrb[0].mxu0 %v1740
  %v1742 = vpop.f32.mrb[0].mxu0
  %v1743 = vadd.f32 %v1509, %v1742
  %v1744 = vpop.f32.mrb[0].mxu0
  %1745 = vdwg.mxu0
  %v1746 = vmax.f32 %v1581, 0.0
  %v1747 = vmax.f32 %v1587, 0.0
  %v1748 = vmax.f32 %v1593, 0.0
  %v1749 = vmax.f32 %v1599, 0.0
  %v1750 = vmax.f32 %v1605, 0.0
  %v1751 = vmax.f32 %v1611, 0.0
  %v1752 = vmax.f32 %v1617, 0.0
  %v1753 = vmax.f32 %v1623, 0.0
  %v1754 = vmax.f32 %v1629, 0.0
  %v1755 = vmax.f32 %v1635, 0.0
  %v1756 = vmax.f32 %v1641, 0.0
  %v1757 = vmax.f32 %v1647, 0.0
  %v1758 = vmax.f32 %v1653, 0.0
  %v1759 = vmax.f32 %v1659, 0.0
  %v1760 = vmax.f32 %v1665, 0.0
  %v1761 = vmax.f32 %v1671, 0.0
  %v1762 = vmax.f32 %v1677, 0.0
  %v1763 = vmax.f32 %v1683, 0.0
  %v1764 = vmax.f32 %v1689, 0.0
  %v1765 = vmax.f32 %v1695, 0.0
  %v1766 = vmax.f32 %v1701, 0.0
  %v1767 = vmax.f32 %v1707, 0.0
  %v1768 = vmax.f32 %v1713, 0.0
  %v1769 = vmax.f32 %v1719, 0.0
  %v1770 = vmax.f32 %v1725, 0.0
  %v1771 = vmax.f32 %v1731, 0.0
  %v1772 = vmax.f32 %v1737, 0.0
  %v1773 = vmax.f32 %v1743, 0.0
  %1774 = vst [vmem:[%s3] sm:$0xff] %v1746
  %1775 = vst [vmem:[%s3 + $0x8] sm:$0xff] %v1747
  %1776 = vst [vmem:[%s3 + $0x10] sm:$0xff] %v1748
  %1777 = vst [vmem:[%s3 + $0x18] sm:$0xff] %v1749
  %1778 = vst [vmem:[%s3 + $0x20] sm:$0xff] %v1750
  %1779 = vst [vmem:[%s3 + $0x28] sm:$0xff] %v1751
  %1780 = vst [vmem:[%s3 + $0x30] sm:$0xff] %v1752
  %1781 = vst [vmem:[%s3 + $0x38] sm:$0xff] %v1753
  %1782 = vst [vmem:[%s3 + $0x40] sm:$0xff] %v1754
  %1783 = vst [vmem:[%s3 + $0x48] sm:$0xff] %v1755
  %1784 = vst [vmem:[%s3 + $0x50] sm:$0xff] %v1756
  %1785 = vst [vmem:[%s3 + $0x58] sm:$0xff] %v1757
  %1786 = vst [vmem:[%s3 + $0x60] sm:$0xff] %v1758
  %1787 = vst [vmem:[%s3 + $0x68] sm:$0xff] %v1759
  %1788 = vst [vmem:[%s3 + $0x70] sm:$0xff] %v1760
  %1789 = vst [vmem:[%s3 + $0x78] sm:$0xff] %v1761
  %1790 = vst [vmem:[%s3 + $0x80] sm:$0xff] %v1762
  %1791 = vst [vmem:[%s3 + $0x88] sm:$0xff] %v1763
  %1792 = vst [vmem:[%s3 + $0x90] sm:$0xff] %v1764
  %1793 = vst [vmem:[%s3 + $0x98] sm:$0xff] %v1765
  %1794 = vst [vmem:[%s3 + $0xa0] sm:$0xff] %v1766
  %1795 = vst [vmem:[%s3 + $0xa8] sm:$0xff] %v1767
  %1796 = vst [vmem:[%s3 + $0xb0] sm:$0xff] %v1768
  %1797 = vst [vmem:[%s3 + $0xb8] sm:$0xff] %v1769
  %1798 = vst [vmem:[%s3 + $0xc0] sm:$0xff] %v1770
  %1799 = vst [vmem:[%s3 + $0xc8] sm:$0xff] %v1771
  %1800 = vst [vmem:[%s3 + $0xd0] sm:$0xff] %v1772
  %1801 = vst [vmem:[%s3 + $0xd8] sm:$0xff] %v1773
  // Predicated region
  $region14: #{_lambda_.6} parent=0 // pred_check
    _
  $region15: #{_lambda_.6} parent=0 // pred_check_branch
    %1803 = sbr.rel (0) target = $region17
  $region16: #{_lambda_.6} parent=0 // pred_region
    _
  $region17: #{_lambda_.6} parent=0 // pred_fallthru
    _
  // Predicated region
  $region18: #{_lambda_.6} parent=0 // pred_check
    _
  $region19: #{_lambda_.6} parent=0 // pred_check_branch
    %1805 = sbr.rel (0) target = $region21
  $region20: #{_lambda_.6} parent=0 // pred_region
    _
  $region21: #{_lambda_.6} parent=0 // pred_fallthru
    _

// kernel: _lambda_.8
$region0: #{_lambda_.8}
  #allocation0 [shape = 'u32[]', space=smem, size = 0x4, offset = 0x4, fixed_abs, tag = 'smem constant byte address 0x4 - core index']
  #allocation1 [shape = 'u32[144,128]{1,0:T(1,128)}', space=vmem, size = 0x12000, scoped, tag = 'internal scratch']
  %s0 = inlined_call_operand.vmem [shape: f32[32,4], index: 0, kind: input, shape index: {}]
  %s1 = inlined_call_operand.vmem [shape: f32[4,128], index: 1, kind: input, shape index: {}]
  %s2 = inlined_call_operand.vmem [shape: f32[1,128], index: 2, kind: input, shape index: {}]
  %s3 = inlined_call_operand.vmem [shape: f32[32,128], index: 3, kind: output, shape index: {}]
  %s4 = sld [smem:[#allocation0]]
  $region22: #{_lambda_.8} parent=0
    _
  %s6 = ssub.s32 1, %s4
  %s7 = scalar_select 0, %s6, %s4
  // Predicated region
  $region2: #{_lambda_.8} parent=0 // pred_check
    _
  $region3: #{_lambda_.8} parent=0 // pred_check_branch
    %9 = sbr.rel (0) target = $region5
  $region4: #{_lambda_.8} parent=0 // pred_region
    _
  $region5: #{_lambda_.8} parent=0 // pred_fallthru
    _
  // Predicated region
  $region6: #{_lambda_.8} parent=0 // pred_check
    _
  $region7: #{_lambda_.8} parent=0 // pred_check_branch
    %11 = sbr.rel (0) target = $region9
  $region8: #{_lambda_.8} parent=0 // pred_region
    _
  $region9: #{_lambda_.8} parent=0 // pred_fallthru
    _
  // Predicated region
  $region10: #{_lambda_.8} parent=0 // pred_check
    _
  $region11: #{_lambda_.8} parent=0 // pred_check_branch
    %13 = sbr.rel (0) target = $region13
  $region12: #{_lambda_.8} parent=0 // pred_region
    _
  $region13: #{_lambda_.8} parent=0 // pred_fallthru
    _
  %v14 = vld [vmem:[%s0] sm:$0xff]
  %v15 = vld [vmem:[%s0 + $0x8] sm:$0xff]
  %v16 = vld [vmem:[%s0 + $0x10] sm:$0xff]
  %v17 = vld [vmem:[%s0 + $0x18] sm:$0xff]
  %v18 = vld [vmem:[%s1] sm:$0xf]
  %v19 = vld [vmem:[%s2] sm:$0x1]
  %v21 = vlaneseq
  %v22 = vshrl.u32 %v21, 7
  %v23 = vsub.s32 0, %v22
  %v24 = vrot.slane %v19, %v23
  %vm26 = vcmask 31744
  %v28 = vsel %vm26, %v14, 0
  %v31 = vsel %vm26, %v15, 0
  %v34 = vsel %vm26, %v16, 0
  %v37 = vsel %vm26, %v17, 0
  %vm39 = vcmask 1043456
  %v41 = vsel %vm39, %v18, 0
  %43 = vmatprep.subr.mxu0 0.0
  %v44 = vand.u32 %v41, 4294901760
  %45 = vmatpush1.msra.mxu0 %v44
  %46 = vmatprep.subr.mxu0 0.0
  %47 = vmatpush1.msra.mxu0 0.0
  %48 = vmatprep.subr.mxu0 0.0
  %49 = vmatpush1.msra.mxu0 0.0
  %50 = vmatprep.subr.mxu0 0.0
  %51 = vmatpush1.msra.mxu0 0.0
  %52 = vmatprep.subr.mxu0 0.0
  %53 = vmatpush1.msra.mxu0 0.0
  %54 = vmatprep.subr.mxu0 0.0
  %55 = vmatpush1.msra.mxu0 0.0
  %56 = vmatprep.subr.mxu0 0.0
  %57 = vmatpush1.msra.mxu0 0.0
  %58 = vmatprep.subr.mxu0 0.0
  %59 = vmatpush1.msra.mxu0 0.0
  %60 = vmatprep.subr.mxu0 0.0
  %61 = vmatpush1.msra.mxu0 0.0
  %62 = vmatprep.subr.mxu0 0.0
  %63 = vmatpush1.msra.mxu0 0.0
  %64 = vmatprep.subr.mxu0 0.0
  %65 = vmatpush1.msra.mxu0 0.0
  %66 = vmatprep.subr.mxu0 0.0
  %67 = vmatpush1.msra.mxu0 0.0
  %68 = vmatprep.subr.mxu0 0.0
  %69 = vmatpush1.msra.mxu0 0.0
  %70 = vmatprep.subr.mxu0 0.0
  %71 = vmatpush1.msra.mxu0 0.0
  %72 = vmatprep.subr.mxu0 0.0
  %73 = vmatpush1.msra.mxu0 0.0
  %74 = vmatprep.subr.mxu0 0.0
  %75 = vmatpush1.msra.mxu0 0.0
  %76 = vmatprep.subr.mxu0 0.0
  %77 = vmatpush1.msra.mxu0 0.0
  %78 = vmatprep.subr.mxu0 0.0
  %79 = vmatpush1.msra.mxu0 0.0
  %80 = vmatprep.subr.mxu0 0.0
  %81 = vmatpush1.msra.mxu0 0.0
  %82 = vmatprep.subr.mxu0 0.0
  %83 = vmatpush1.msra.mxu0 0.0
  %84 = vmatprep.subr.mxu0 0.0
  %85 = vmatpush1.msra.mxu0 0.0
  %86 = vmatprep.subr.mxu0 0.0
  %87 = vmatpush1.msra.mxu0 0.0
  %88 = vmatprep.subr.mxu0 0.0
  %89 = vmatpush1.msra.mxu0 0.0
  %90 = vmatprep.subr.mxu0 0.0
  %91 = vmatpush1.msra.mxu0 0.0
  %92 = vmatprep.subr.mxu0 0.0
  %93 = vmatpush1.msra.mxu0 0.0
  %94 = vmatprep.subr.mxu0 0.0
  %95 = vmatpush1.msra.mxu0 0.0
  %96 = vmatprep.subr.mxu0 0.0
  %97 = vmatpush1.msra.mxu0 0.0
  %98 = vmatprep.subr.mxu0 0.0
  %99 = vmatpush1.msra.mxu0 0.0
  %100 = vmatprep.subr.mxu0 0.0
  %101 = vmatpush1.msra.mxu0 0.0
  %102 = vmatprep.subr.mxu0 0.0
  %103 = vmatpush1.msra.mxu0 0.0
  %104 = vmatprep.subr.mxu0 0.0
  %105 = vmatpush1.msra.mxu0 0.0
  %106 = vmatprep.subr.mxu0 0.0
  %107 = vmatpush1.msra.mxu0 0.0
  %108 = vmatprep.mubr.f32.mxu0 0.0
  %v109 = vand.u32 %v28, 4294901760
  %v110 = vsub.f32 %v28, %v109
  %v111 = vand.u32 %v110, 4294901760
  %v112 = vsub.f32 %v110, %v111
  %v113 = vand.u32 %v112, 4294901760
  %114 = vmatmul.mubr.f32.gmra.mrb[0].mxu0 %v113
  %v115 = vpop.f32.mrb[0].mxu0
  %v116 = vadd.f32 %v24, %v115
  %v117 = vpop.f32.mrb[0].mxu0
  %118 = vmatprep.mubr.f32.mxu0 0.0
  %v119 = vand.u32 %v31, 4294901760
  %v120 = vsub.f32 %v31, %v119
  %v121 = vand.u32 %v120, 4294901760
  %v122 = vsub.f32 %v120, %v121
  %v123 = vand.u32 %v122, 4294901760
  %124 = vmatmul.mubr.f32.gmra.mrb[0].mxu0 %v123
  %v125 = vpop.f32.mrb[0].mxu0
  %v126 = vadd.f32 %v24, %v125
  %v127 = vpop.f32.mrb[0].mxu0
  %128 = vmatprep.mubr.f32.mxu0 0.0
  %v129 = vand.u32 %v34, 4294901760
  %v130 = vsub.f32 %v34, %v129
  %v131 = vand.u32 %v130, 4294901760
  %v132 = vsub.f32 %v130, %v131
  %v133 = vand.u32 %v132, 4294901760
  %134 = vmatmul.mubr.f32.gmra.mrb[0].mxu0 %v133
  %v135 = vpop.f32.mrb[0].mxu0
  %v136 = vadd.f32 %v24, %v135
  %v137 = vpop.f32.mrb[0].mxu0
  %138 = vmatprep.mubr.f32.mxu0 0.0
  %v139 = vand.u32 %v37, 4294901760
  %v140 = vsub.f32 %v37, %v139
  %v141 = vand.u32 %v140, 4294901760
  %v142 = vsub.f32 %v140, %v141
  %v143 = vand.u32 %v142, 4294901760
  %144 = vmatmul.mubr.f32.gmra.mrb[0].mxu0 %v143
  %v145 = vpop.f32.mrb[0].mxu0
  %v146 = vadd.f32 %v24, %v145
  %v147 = vpop.f32.mrb[0].mxu0
  %148 = vdwg.mxu0
  %149 = vmatprep.subr.mxu0 0.0
  %v150 = vand.u32 %v41, 4294901760
  %v151 = vsub.f32 %v41, %v150
  %v152 = vand.u32 %v151, 4294901760
  %v153 = vsub.f32 %v151, %v152
  %v154 = vand.u32 %v153, 4294901760
  %155 = vmatpush1.msra.mxu0 %v154
  %156 = vmatprep.subr.mxu0 0.0
  %157 = vmatpush1.msra.mxu0 0.0
  %158 = vmatprep.subr.mxu0 0.0
  %159 = vmatpush1.msra.mxu0 0.0
  %160 = vmatprep.subr.mxu0 0.0
  %161 = vmatpush1.msra.mxu0 0.0
  %162 = vmatprep.subr.mxu0 0.0
  %163 = vmatpush1.msra.mxu0 0.0
  %164 = vmatprep.subr.mxu0 0.0
  %165 = vmatpush1.msra.mxu0 0.0
  %166 = vmatprep.subr.mxu0 0.0
  %167 = vmatpush1.msra.mxu0 0.0
  %168 = vmatprep.subr.mxu0 0.0
  %169 = vmatpush1.msra.mxu0 0.0
  %170 = vmatprep.subr.mxu0 0.0
  %171 = vmatpush1.msra.mxu0 0.0
  %172 = vmatprep.subr.mxu0 0.0
  %173 = vmatpush1.msra.mxu0 0.0
  %174 = vmatprep.subr.mxu0 0.0
  %175 = vmatpush1.msra.mxu0 0.0
  %176 = vmatprep.subr.mxu0 0.0
  %177 = vmatpush1.msra.mxu0 0.0
  %178 = vmatprep.subr.mxu0 0.0
  %179 = vmatpush1.msra.mxu0 0.0
  %180 = vmatprep.subr.mxu0 0.0
  %181 = vmatpush1.msra.mxu0 0.0
  %182 = vmatprep.subr.mxu0 0.0
  %183 = vmatpush1.msra.mxu0 0.0
  %184 = vmatprep.subr.mxu0 0.0
  %185 = vmatpush1.msra.mxu0 0.0
  %186 = vmatprep.subr.mxu0 0.0
  %187 = vmatpush1.msra.mxu0 0.0
  %188 = vmatprep.subr.mxu0 0.0
  %189 = vmatpush1.msra.mxu0 0.0
  %190 = vmatprep.subr.mxu0 0.0
  %191 = vmatpush1.msra.mxu0 0.0
  %192 = vmatprep.subr.mxu0 0.0
  %193 = vmatpush1.msra.mxu0 0.0
  %194 = vmatprep.subr.mxu0 0.0
  %195 = vmatpush1.msra.mxu0 0.0
  %196 = vmatprep.subr.mxu0 0.0
  %197 = vmatpush1.msra.mxu0 0.0
  %198 = vmatprep.subr.mxu0 0.0
  %199 = vmatpush1.msra.mxu0 0.0
  %200 = vmatprep.subr.mxu0 0.0
  %201 = vmatpush1.msra.mxu0 0.0
  %202 = vmatprep.subr.mxu0 0.0
  %203 = vmatpush1.msra.mxu0 0.0
  %204 = vmatprep.subr.mxu0 0.0
  %205 = vmatpush1.msra.mxu0 0.0
  %206 = vmatprep.subr.mxu0 0.0
  %207 = vmatpush1.msra.mxu0 0.0
  %208 = vmatprep.subr.mxu0 0.0
  %209 = vmatpush1.msra.mxu0 0.0
  %210 = vmatprep.subr.mxu0 0.0
  %211 = vmatpush1.msra.mxu0 0.0
  %212 = vmatprep.subr.mxu0 0.0
  %213 = vmatpush1.msra.mxu0 0.0
  %214 = vmatprep.subr.mxu0 0.0
  %215 = vmatpush1.msra.mxu0 0.0
  %216 = vmatprep.subr.mxu0 0.0
  %217 = vmatpush1.msra.mxu0 0.0
  %218 = vmatprep.mubr.f32.mxu0 0.0
  %v219 = vand.u32 %v28, 4294901760
  %220 = vmatmul.mubr.f32.gmra.mrb[0].mxu0 %v219
  %v221 = vpop.f32.mrb[0].mxu0
  %v222 = vadd.f32 %v116, %v221
  %v223 = vpop.f32.mrb[0].mxu0
  %224 = vmatprep.mubr.f32.mxu0 0.0
  %v225 = vand.u32 %v31, 4294901760
  %226 = vmatmul.mubr.f32.gmra.mrb[0].mxu0 %v225
  %v227 = vpop.f32.mrb[0].mxu0
  %v228 = vadd.f32 %v126, %v227
  %v229 = vpop.f32.mrb[0].mxu0
  %230 = vmatprep.mubr.f32.mxu0 0.0
  %v231 = vand.u32 %v34, 4294901760
  %232 = vmatmul.mubr.f32.gmra.mrb[0].mxu0 %v231
  %v233 = vpop.f32.mrb[0].mxu0
  %v234 = vadd.f32 %v136, %v233
  %v235 = vpop.f32.mrb[0].mxu0
  %236 = vmatprep.mubr.f32.mxu0 0.0
  %v237 = vand.u32 %v37, 4294901760
  %238 = vmatmul.mubr.f32.gmra.mrb[0].mxu0 %v237
  %v239 = vpop.f32.mrb[0].mxu0
  %v240 = vadd.f32 %v146, %v239
  %v241 = vpop.f32.mrb[0].mxu0
  %242 = vdwg.mxu0
  %243 = vmatprep.subr.mxu0 0.0
  %v244 = vand.u32 %v41, 4294901760
  %v245 = vsub.f32 %v41, %v244
  %246 = vmatpush1.msra.mxu0 %v245
  %247 = vmatprep.subr.mxu0 0.0
  %248 = vmatpush1.msra.mxu0 0.0
  %249 = vmatprep.subr.mxu0 0.0
  %250 = vmatpush1.msra.mxu0 0.0
  %251 = vmatprep.subr.mxu0 0.0
  %252 = vmatpush1.msra.mxu0 0.0
  %253 = vmatprep.subr.mxu0 0.0
  %254 = vmatpush1.msra.mxu0 0.0
  %255 = vmatprep.subr.mxu0 0.0
  %256 = vmatpush1.msra.mxu0 0.0
  %257 = vmatprep.subr.mxu0 0.0
  %258 = vmatpush1.msra.mxu0 0.0
  %259 = vmatprep.subr.mxu0 0.0
  %260 = vmatpush1.msra.mxu0 0.0
  %261 = vmatprep.subr.mxu0 0.0
  %262 = vmatpush1.msra.mxu0 0.0
  %263 = vmatprep.subr.mxu0 0.0
  %264 = vmatpush1.msra.mxu0 0.0
  %265 = vmatprep.subr.mxu0 0.0
  %266 = vmatpush1.msra.mxu0 0.0
  %267 = vmatprep.subr.mxu0 0.0
  %268 = vmatpush1.msra.mxu0 0.0
  %269 = vmatprep.subr.mxu0 0.0
  %270 = vmatpush1.msra.mxu0 0.0
  %271 = vmatprep.subr.mxu0 0.0
  %272 = vmatpush1.msra.mxu0 0.0
  %273 = vmatprep.subr.mxu0 0.0
  %274 = vmatpush1.msra.mxu0 0.0
  %275 = vmatprep.subr.mxu0 0.0
  %276 = vmatpush1.msra.mxu0 0.0
  %277 = vmatprep.subr.mxu0 0.0
  %278 = vmatpush1.msra.mxu0 0.0
  %279 = vmatprep.subr.mxu0 0.0
  %280 = vmatpush1.msra.mxu0 0.0
  %281 = vmatprep.subr.mxu0 0.0
  %282 = vmatpush1.msra.mxu0 0.0
  %283 = vmatprep.subr.mxu0 0.0
  %284 = vmatpush1.msra.mxu0 0.0
  %285 = vmatprep.subr.mxu0 0.0
  %286 = vmatpush1.msra.mxu0 0.0
  %287 = vmatprep.subr.mxu0 0.0
  %288 = vmatpush1.msra.mxu0 0.0
  %289 = vmatprep.subr.mxu0 0.0
  %290 = vmatpush1.msra.mxu0 0.0
  %291 = vmatprep.subr.mxu0 0.0
  %292 = vmatpush1.msra.mxu0 0.0
  %293 = vmatprep.subr.mxu0 0.0
  %294 = vmatpush1.msra.mxu0 0.0
  %295 = vmatprep.subr.mxu0 0.0
  %296 = vmatpush1.msra.mxu0 0.0
  %297 = vmatprep.subr.mxu0 0.0
  %298 = vmatpush1.msra.mxu0 0.0
  %299 = vmatprep.subr.mxu0 0.0
  %300 = vmatpush1.msra.mxu0 0.0
  %301 = vmatprep.subr.mxu0 0.0
  %302 = vmatpush1.msra.mxu0 0.0
  %303 = vmatprep.subr.mxu0 0.0
  %304 = vmatpush1.msra.mxu0 0.0
  %305 = vmatprep.subr.mxu0 0.0
  %306 = vmatpush1.msra.mxu0 0.0
  %307 = vmatprep.subr.mxu0 0.0
  %308 = vmatpush1.msra.mxu0 0.0
  %309 = vmatprep.mubr.f32.mxu0 0.0
  %v310 = vand.u32 %v28, 4294901760
  %v311 = vsub.f32 %v28, %v310
  %312 = vmatmul.mubr.f32.gmra.mrb[0].mxu0 %v311
  %v313 = vpop.f32.mrb[0].mxu0
  %v314 = vadd.f32 %v222, %v313
  %v315 = vpop.f32.mrb[0].mxu0
  %316 = vmatprep.mubr.f32.mxu0 0.0
  %v317 = vand.u32 %v31, 4294901760
  %v318 = vsub.f32 %v31, %v317
  %319 = vmatmul.mubr.f32.gmra.mrb[0].mxu0 %v318
  %v320 = vpop.f32.mrb[0].mxu0
  %v321 = vadd.f32 %v228, %v320
  %v322 = vpop.f32.mrb[0].mxu0
  %323 = vmatprep.mubr.f32.mxu0 0.0
  %v324 = vand.u32 %v34, 4294901760
  %v325 = vsub.f32 %v34, %v324
  %326 = vmatmul.mubr.f32.gmra.mrb[0].mxu0 %v325
  %v327 = vpop.f32.mrb[0].mxu0
  %v328 = vadd.f32 %v234, %v327
  %v329 = vpop.f32.mrb[0].mxu0
  %330 = vmatprep.mubr.f32.mxu0 0.0
  %v331 = vand.u32 %v37, 4294901760
  %v332 = vsub.f32 %v37, %v331
  %333 = vmatmul.mubr.f32.gmra.mrb[0].mxu0 %v332
  %v334 = vpop.f32.mrb[0].mxu0
  %v335 = vadd.f32 %v240, %v334
  %v336 = vpop.f32.mrb[0].mxu0
  %337 = vdwg.mxu0
  %338 = vmatprep.subr.mxu0 0.0
  %v339 = vand.u32 %v41, 4294901760
  %340 = vmatpush1.msra.mxu0 %v339
  %341 = vmatprep.subr.mxu0 0.0
  %342 = vmatpush1.msra.mxu0 0.0
  %343 = vmatprep.subr.mxu0 0.0
  %344 = vmatpush1.msra.mxu0 0.0
  %345 = vmatprep.subr.mxu0 0.0
  %346 = vmatpush1.msra.mxu0 0.0
  %347 = vmatprep.subr.mxu0 0.0
  %348 = vmatpush1.msra.mxu0 0.0
  %349 = vmatprep.subr.mxu0 0.0
  %350 = vmatpush1.msra.mxu0 0.0
  %351 = vmatprep.subr.mxu0 0.0
  %352 = vmatpush1.msra.mxu0 0.0
  %353 = vmatprep.subr.mxu0 0.0
  %354 = vmatpush1.msra.mxu0 0.0
  %355 = vmatprep.subr.mxu0 0.0
  %356 = vmatpush1.msra.mxu0 0.0
  %357 = vmatprep.subr.mxu0 0.0
  %358 = vmatpush1.msra.mxu0 0.0
  %359 = vmatprep.subr.mxu0 0.0
  %360 = vmatpush1.msra.mxu0 0.0
  %361 = vmatprep.subr.mxu0 0.0
  %362 = vmatpush1.msra.mxu0 0.0
  %363 = vmatprep.subr.mxu0 0.0
  %364 = vmatpush1.msra.mxu0 0.0
  %365 = vmatprep.subr.mxu0 0.0
  %366 = vmatpush1.msra.mxu0 0.0
  %367 = vmatprep.subr.mxu0 0.0
  %368 = vmatpush1.msra.mxu0 0.0
  %369 = vmatprep.subr.mxu0 0.0
  %370 = vmatpush1.msra.mxu0 0.0
  %371 = vmatprep.subr.mxu0 0.0
  %372 = vmatpush1.msra.mxu0 0.0
  %373 = vmatprep.subr.mxu0 0.0
  %374 = vmatpush1.msra.mxu0 0.0
  %375 = vmatprep.subr.mxu0 0.0
  %376 = vmatpush1.msra.mxu0 0.0
  %377 = vmatprep.subr.mxu0 0.0
  %378 = vmatpush1.msra.mxu0 0.0
  %379 = vmatprep.subr.mxu0 0.0
  %380 = vmatpush1.msra.mxu0 0.0
  %381 = vmatprep.subr.mxu0 0.0
  %382 = vmatpush1.msra.mxu0 0.0
  %383 = vmatprep.subr.mxu0 0.0
  %384 = vmatpush1.msra.mxu0 0.0
  %385 = vmatprep.subr.mxu0 0.0
  %386 = vmatpush1.msra.mxu0 0.0
  %387 = vmatprep.subr.mxu0 0.0
  %388 = vmatpush1.msra.mxu0 0.0
  %389 = vmatprep.subr.mxu0 0.0
  %390 = vmatpush1.msra.mxu0 0.0
  %391 = vmatprep.subr.mxu0 0.0
  %392 = vmatpush1.msra.mxu0 0.0
  %393 = vmatprep.subr.mxu0 0.0
  %394 = vmatpush1.msra.mxu0 0.0
  %395 = vmatprep.subr.mxu0 0.0
  %396 = vmatpush1.msra.mxu0 0.0
  %397 = vmatprep.subr.mxu0 0.0
  %398 = vmatpush1.msra.mxu0 0.0
  %399 = vmatprep.subr.mxu0 0.0
  %400 = vmatpush1.msra.mxu0 0.0
  %401 = vmatprep.subr.mxu0 0.0
  %402 = vmatpush1.msra.mxu0 0.0
  %403 = vmatprep.mubr.f32.mxu0 0.0
  %v404 = vand.u32 %v28, 4294901760
  %v405 = vsub.f32 %v28, %v404
  %v406 = vand.u32 %v405, 4294901760
  %407 = vmatmul.mubr.f32.gmra.mrb[0].mxu0 %v406
  %v408 = vpop.f32.mrb[0].mxu0
  %v409 = vadd.f32 %v314, %v408
  %v410 = vpop.f32.mrb[0].mxu0
  %411 = vmatprep.mubr.f32.mxu0 0.0
  %v412 = vand.u32 %v31, 4294901760
  %v413 = vsub.f32 %v31, %v412
  %v414 = vand.u32 %v413, 4294901760
  %415 = vmatmul.mubr.f32.gmra.mrb[0].mxu0 %v414
  %v416 = vpop.f32.mrb[0].mxu0
  %v417 = vadd.f32 %v321, %v416
  %v418 = vpop.f32.mrb[0].mxu0
  %419 = vmatprep.mubr.f32.mxu0 0.0
  %v420 = vand.u32 %v34, 4294901760
  %v421 = vsub.f32 %v34, %v420
  %v422 = vand.u32 %v421, 4294901760
  %423 = vmatmul.mubr.f32.gmra.mrb[0].mxu0 %v422
  %v424 = vpop.f32.mrb[0].mxu0
  %v425 = vadd.f32 %v328, %v424
  %v426 = vpop.f32.mrb[0].mxu0
  %427 = vmatprep.mubr.f32.mxu0 0.0
  %v428 = vand.u32 %v37, 4294901760
  %v429 = vsub.f32 %v37, %v428
  %v430 = vand.u32 %v429, 4294901760
  %431 = vmatmul.mubr.f32.gmra.mrb[0].mxu0 %v430
  %v432 = vpop.f32.mrb[0].mxu0
  %v433 = vadd.f32 %v335, %v432
  %v434 = vpop.f32.mrb[0].mxu0
  %435 = vdwg.mxu0
  %436 = vmatprep.subr.mxu0 0.0
  %v437 = vand.u32 %v41, 4294901760
  %v438 = vsub.f32 %v41, %v437
  %v439 = vand.u32 %v438, 4294901760
  %440 = vmatpush1.msra.mxu0 %v439
  %441 = vmatprep.subr.mxu0 0.0
  %442 = vmatpush1.msra.mxu0 0.0
  %443 = vmatprep.subr.mxu0 0.0
  %444 = vmatpush1.msra.mxu0 0.0
  %445 = vmatprep.subr.mxu0 0.0
  %446 = vmatpush1.msra.mxu0 0.0
  %447 = vmatprep.subr.mxu0 0.0
  %448 = vmatpush1.msra.mxu0 0.0
  %449 = vmatprep.subr.mxu0 0.0
  %450 = vmatpush1.msra.mxu0 0.0
  %451 = vmatprep.subr.mxu0 0.0
  %452 = vmatpush1.msra.mxu0 0.0
  %453 = vmatprep.subr.mxu0 0.0
  %454 = vmatpush1.msra.mxu0 0.0
  %455 = vmatprep.subr.mxu0 0.0
  %456 = vmatpush1.msra.mxu0 0.0
  %457 = vmatprep.subr.mxu0 0.0
  %458 = vmatpush1.msra.mxu0 0.0
  %459 = vmatprep.subr.mxu0 0.0
  %460 = vmatpush1.msra.mxu0 0.0
  %461 = vmatprep.subr.mxu0 0.0
  %462 = vmatpush1.msra.mxu0 0.0
  %463 = vmatprep.subr.mxu0 0.0
  %464 = vmatpush1.msra.mxu0 0.0
  %465 = vmatprep.subr.mxu0 0.0
  %466 = vmatpush1.msra.mxu0 0.0
  %467 = vmatprep.subr.mxu0 0.0
  %468 = vmatpush1.msra.mxu0 0.0
  %469 = vmatprep.subr.mxu0 0.0
  %470 = vmatpush1.msra.mxu0 0.0
  %471 = vmatprep.subr.mxu0 0.0
  %472 = vmatpush1.msra.mxu0 0.0
  %473 = vmatprep.subr.mxu0 0.0
  %474 = vmatpush1.msra.mxu0 0.0
  %475 = vmatprep.subr.mxu0 0.0
  %476 = vmatpush1.msra.mxu0 0.0
  %477 = vmatprep.subr.mxu0 0.0
  %478 = vmatpush1.msra.mxu0 0.0
  %479 = vmatprep.subr.mxu0 0.0
  %480 = vmatpush1.msra.mxu0 0.0
  %481 = vmatprep.subr.mxu0 0.0
  %482 = vmatpush1.msra.mxu0 0.0
  %483 = vmatprep.subr.mxu0 0.0
  %484 = vmatpush1.msra.mxu0 0.0
  %485 = vmatprep.subr.mxu0 0.0
  %486 = vmatpush1.msra.mxu0 0.0
  %487 = vmatprep.subr.mxu0 0.0
  %488 = vmatpush1.msra.mxu0 0.0
  %489 = vmatprep.subr.mxu0 0.0
  %490 = vmatpush1.msra.mxu0 0.0
  %491 = vmatprep.subr.mxu0 0.0
  %492 = vmatpush1.msra.mxu0 0.0
  %493 = vmatprep.subr.mxu0 0.0
  %494 = vmatpush1.msra.mxu0 0.0
  %495 = vmatprep.subr.mxu0 0.0
  %496 = vmatpush1.msra.mxu0 0.0
  %497 = vmatprep.subr.mxu0 0.0
  %498 = vmatpush1.msra.mxu0 0.0
  %499 = vmatprep.subr.mxu0 0.0
  %500 = vmatpush1.msra.mxu0 0.0
  %501 = vmatprep.subr.mxu0 0.0
  %502 = vmatpush1.msra.mxu0 0.0
  %503 = vmatprep.mubr.f32.mxu0 0.0
  %v504 = vand.u32 %v28, 4294901760
  %505 = vmatmul.mubr.f32.gmra.mrb[0].mxu0 %v504
  %v506 = vpop.f32.mrb[0].mxu0
  %v507 = vadd.f32 %v409, %v506
  %v508 = vpop.f32.mrb[0].mxu0
  %509 = vmatprep.mubr.f32.mxu0 0.0
  %v510 = vand.u32 %v31, 4294901760
  %511 = vmatmul.mubr.f32.gmra.mrb[0].mxu0 %v510
  %v512 = vpop.f32.mrb[0].mxu0
  %v513 = vadd.f32 %v417, %v512
  %v514 = vpop.f32.mrb[0].mxu0
  %515 = vmatprep.mubr.f32.mxu0 0.0
  %v516 = vand.u32 %v34, 4294901760
  %517 = vmatmul.mubr.f32.gmra.mrb[0].mxu0 %v516
  %v518 = vpop.f32.mrb[0].mxu0
  %v519 = vadd.f32 %v425, %v518
  %v520 = vpop.f32.mrb[0].mxu0
  %521 = vmatprep.mubr.f32.mxu0 0.0
  %v522 = vand.u32 %v37, 4294901760
  %523 = vmatmul.mubr.f32.gmra.mrb[0].mxu0 %v522
  %v524 = vpop.f32.mrb[0].mxu0
  %v525 = vadd.f32 %v433, %v524
  %v526 = vpop.f32.mrb[0].mxu0
  %527 = vdwg.mxu0
  %528 = vmatprep.subr.mxu0 0.0
  %v529 = vand.u32 %v41, 4294901760
  %530 = vmatpush1.msra.mxu0 %v529
  %531 = vmatprep.subr.mxu0 0.0
  %532 = vmatpush1.msra.mxu0 0.0
  %533 = vmatprep.subr.mxu0 0.0
  %534 = vmatpush1.msra.mxu0 0.0
  %535 = vmatprep.subr.mxu0 0.0
  %536 = vmatpush1.msra.mxu0 0.0
  %537 = vmatprep.subr.mxu0 0.0
  %538 = vmatpush1.msra.mxu0 0.0
  %539 = vmatprep.subr.mxu0 0.0
  %540 = vmatpush1.msra.mxu0 0.0
  %541 = vmatprep.subr.mxu0 0.0
  %542 = vmatpush1.msra.mxu0 0.0
  %543 = vmatprep.subr.mxu0 0.0
  %544 = vmatpush1.msra.mxu0 0.0
  %545 = vmatprep.subr.mxu0 0.0
  %546 = vmatpush1.msra.mxu0 0.0
  %547 = vmatprep.subr.mxu0 0.0
  %548 = vmatpush1.msra.mxu0 0.0
  %549 = vmatprep.subr.mxu0 0.0
  %550 = vmatpush1.msra.mxu0 0.0
  %551 = vmatprep.subr.mxu0 0.0
  %552 = vmatpush1.msra.mxu0 0.0
  %553 = vmatprep.subr.mxu0 0.0
  %554 = vmatpush1.msra.mxu0 0.0
  %555 = vmatprep.subr.mxu0 0.0
  %556 = vmatpush1.msra.mxu0 0.0
  %557 = vmatprep.subr.mxu0 0.0
  %558 = vmatpush1.msra.mxu0 0.0
  %559 = vmatprep.subr.mxu0 0.0
  %560 = vmatpush1.msra.mxu0 0.0
  %561 = vmatprep.subr.mxu0 0.0
  %562 = vmatpush1.msra.mxu0 0.0
  %563 = vmatprep.subr.mxu0 0.0
  %564 = vmatpush1.msra.mxu0 0.0
  %565 = vmatprep.subr.mxu0 0.0
  %566 = vmatpush1.msra.mxu0 0.0
  %567 = vmatprep.subr.mxu0 0.0
  %568 = vmatpush1.msra.mxu0 0.0
  %569 = vmatprep.subr.mxu0 0.0
  %570 = vmatpush1.msra.mxu0 0.0
  %571 = vmatprep.subr.mxu0 0.0
  %572 = vmatpush1.msra.mxu0 0.0
  %573 = vmatprep.subr.mxu0 0.0
  %574 = vmatpush1.msra.mxu0 0.0
  %575 = vmatprep.subr.mxu0 0.0
  %576 = vmatpush1.msra.mxu0 0.0
  %577 = vmatprep.subr.mxu0 0.0
  %578 = vmatpush1.msra.mxu0 0.0
  %579 = vmatprep.subr.mxu0 0.0
  %580 = vmatpush1.msra.mxu0 0.0
  %581 = vmatprep.subr.mxu0 0.0
  %582 = vmatpush1.msra.mxu0 0.0
  %583 = vmatprep.subr.mxu0 0.0
  %584 = vmatpush1.msra.mxu0 0.0
  %585 = vmatprep.subr.mxu0 0.0
  %586 = vmatpush1.msra.mxu0 0.0
  %587 = vmatprep.subr.mxu0 0.0
  %588 = vmatpush1.msra.mxu0 0.0
  %589 = vmatprep.subr.mxu0 0.0
  %590 = vmatpush1.msra.mxu0 0.0
  %591 = vmatprep.subr.mxu0 0.0
  %592 = vmatpush1.msra.mxu0 0.0
  %593 = vmatprep.mubr.f32.mxu0 0.0
  %v594 = vand.u32 %v28, 4294901760
  %595 = vmatmul.mubr.f32.gmra.mrb[0].mxu0 %v594
  %v596 = vpop.f32.mrb[0].mxu0
  %v597 = vadd.f32 %v507, %v596
  %v598 = vpop.f32.mrb[0].mxu0
  %599 = vmatprep.mubr.f32.mxu0 0.0
  %v600 = vand.u32 %v31, 4294901760
  %601 = vmatmul.mubr.f32.gmra.mrb[0].mxu0 %v600
  %v602 = vpop.f32.mrb[0].mxu0
  %v603 = vadd.f32 %v513, %v602
  %v604 = vpop.f32.mrb[0].mxu0
  %605 = vmatprep.mubr.f32.mxu0 0.0
  %v606 = vand.u32 %v34, 4294901760
  %607 = vmatmul.mubr.f32.gmra.mrb[0].mxu0 %v606
  %v608 = vpop.f32.mrb[0].mxu0
  %v609 = vadd.f32 %v519, %v608
  %v610 = vpop.f32.mrb[0].mxu0
  %611 = vmatprep.mubr.f32.mxu0 0.0
  %v612 = vand.u32 %v37, 4294901760
  %613 = vmatmul.mubr.f32.gmra.mrb[0].mxu0 %v612
  %v614 = vpop.f32.mrb[0].mxu0
  %v615 = vadd.f32 %v525, %v614
  %v616 = vpop.f32.mrb[0].mxu0
  %617 = vdwg.mxu0
  %v618 = vmax.f32 %v597, 0.0
  %v619 = vmax.f32 %v603, 0.0
  %v620 = vmax.f32 %v609, 0.0
  %v621 = vmax.f32 %v615, 0.0
  %622 = vst [vmem:[%s3] sm:$0xff] %v618
  %623 = vst [vmem:[%s3 + $0x8] sm:$0xff] %v619
  %624 = vst [vmem:[%s3 + $0x10] sm:$0xff] %v620
  %625 = vst [vmem:[%s3 + $0x18] sm:$0xff] %v621
  // Predicated region
  $region14: #{_lambda_.8} parent=0 // pred_check
    _
  $region15: #{_lambda_.8} parent=0 // pred_check_branch
    %627 = sbr.rel (0) target = $region17
  $region16: #{_lambda_.8} parent=0 // pred_region
    _
  $region17: #{_lambda_.8} parent=0 // pred_fallthru
    _
  // Predicated region
  $region18: #{_lambda_.8} parent=0 // pred_check
    _
  $region19: #{_lambda_.8} parent=0 // pred_check_branch
    %629 = sbr.rel (0) target = $region21
  $region20: #{_lambda_.8} parent=0 // pred_region
    _
  $region21: #{_lambda_.8} parent=0 // pred_fallthru
    _

// kernel: _lambda_.9
$region0: #{_lambda_.9}
  #allocation0 [shape = 'u32[]', space=smem, size = 0x4, offset = 0x4, fixed_abs, tag = 'smem constant byte address 0x4 - core index']
  #allocation1 [shape = 'u32[144,128]{1,0:T(1,128)}', space=vmem, size = 0x12000, scoped, tag = 'internal scratch']
  %s0 = inlined_call_operand.vmem [shape: f32[32,57], index: 0, kind: input, shape index: {}]
  %s1 = inlined_call_operand.vmem [shape: f32[57,128], index: 1, kind: input, shape index: {}]
  %s2 = inlined_call_operand.vmem [shape: f32[1,128], index: 2, kind: input, shape index: {}]
  %s3 = inlined_call_operand.vmem [shape: f32[32,128], index: 3, kind: output, shape index: {}]
  %s4 = sld [smem:[#allocation0]]
  $region22: #{_lambda_.9} parent=0
    _
  %s6 = ssub.s32 1, %s4
  %s7 = scalar_select 0, %s6, %s4
  // Predicated region
  $region2: #{_lambda_.9} parent=0 // pred_check
    _
  $region3: #{_lambda_.9} parent=0 // pred_check_branch
    %9 = sbr.rel (0) target = $region5
  $region4: #{_lambda_.9} parent=0 // pred_region
    _
  $region5: #{_lambda_.9} parent=0 // pred_fallthru
    _
  // Predicated region
  $region6: #{_lambda_.9} parent=0 // pred_check
    _
  $region7: #{_lambda_.9} parent=0 // pred_check_branch
    %11 = sbr.rel (0) target = $region9
  $region8: #{_lambda_.9} parent=0 // pred_region
    _
  $region9: #{_lambda_.9} parent=0 // pred_fallthru
    _
  // Predicated region
  $region10: #{_lambda_.9} parent=0 // pred_check
    _
  $region11: #{_lambda_.9} parent=0 // pred_check_branch
    %13 = sbr.rel (0) target = $region13
  $region12: #{_lambda_.9} parent=0 // pred_region
    _
  $region13: #{_lambda_.9} parent=0 // pred_fallthru
    _
  %v14 = vld [vmem:[%s0] sm:$0xff]
  %v15 = vld [vmem:[%s0 + $0x8] sm:$0xff]
  %v16 = vld [vmem:[%s0 + $0x10] sm:$0xff]
  %v17 = vld [vmem:[%s0 + $0x18] sm:$0xff]
  %v18 = vld [vmem:[%s1] sm:$0xff]
  %v19 = vld [vmem:[%s1 + $0x8] sm:$0xff]
  %v20 = vld [vmem:[%s1 + $0x10] sm:$0xff]
  %v21 = vld [vmem:[%s1 + $0x18] sm:$0xff]
  %v22 = vld [vmem:[%s1 + $0x20] sm:$0xff]
  %v23 = vld [vmem:[%s1 + $0x28] sm:$0xff]
  %v24 = vld [vmem:[%s1 + $0x30] sm:$0xff]
  %v25 = vld [vmem:[%s1 + $0x38] sm:$0x1]
  %v26 = vld [vmem:[%s2] sm:$0x1]
  %v28 = vlaneseq
  %v29 = vshrl.u32 %v28, 7
  %v30 = vsub.s32 0, %v29
  %v31 = vrot.slane %v26, %v30
  %vm33 = vcmask 465920
  %v35 = vsel %vm33, %v14, 0
  %v38 = vsel %vm33, %v15, 0
  %v41 = vsel %vm33, %v16, 0
  %v44 = vsel %vm33, %v17, 0
  %vm46 = vcmask 1040384
  %v48 = vsel %vm46, %v25, 0
  %50 = vmatprep.subr.mxu0 0.0
  %v51 = vand.u32 %v18, 4294901760
  %52 = vmatpush1.msra.mxu0 %v51
  %53 = vmatprep.subr.mxu0 0.0
  %v54 = vand.u32 %v19, 4294901760
  %55 = vmatpush1.msra.mxu0 %v54
  %56 = vmatprep.subr.mxu0 0.0
  %v57 = vand.u32 %v20, 4294901760
  %58 = vmatpush1.msra.mxu0 %v57
  %59 = vmatprep.subr.mxu0 0.0
  %v60 = vand.u32 %v21, 4294901760
  %61 = vmatpush1.msra.mxu0 %v60
  %62 = vmatprep.subr.mxu0 0.0
  %v63 = vand.u32 %v22, 4294901760
  %64 = vmatpush1.msra.mxu0 %v63
  %65 = vmatprep.subr.mxu0 0.0
  %v66 = vand.u32 %v23, 4294901760
  %67 = vmatpush1.msra.mxu0 %v66
  %68 = vmatprep.subr.mxu0 0.0
  %v69 = vand.u32 %v24, 4294901760
  %70 = vmatpush1.msra.mxu0 %v69
  %71 = vmatprep.subr.mxu0 0.0
  %v72 = vand.u32 %v48, 4294901760
  %73 = vmatpush1.msra.mxu0 %v72
  %74 = vmatprep.subr.mxu0 0.0
  %75 = vmatpush1.msra.mxu0 0.0
  %76 = vmatprep.subr.mxu0 0.0
  %77 = vmatpush1.msra.mxu0 0.0
  %78 = vmatprep.subr.mxu0 0.0
  %79 = vmatpush1.msra.mxu0 0.0
  %80 = vmatprep.subr.mxu0 0.0
  %81 = vmatpush1.msra.mxu0 0.0
  %82 = vmatprep.subr.mxu0 0.0
  %83 = vmatpush1.msra.mxu0 0.0
  %84 = vmatprep.subr.mxu0 0.0
  %85 = vmatpush1.msra.mxu0 0.0
  %86 = vmatprep.subr.mxu0 0.0
  %87 = vmatpush1.msra.mxu0 0.0
  %88 = vmatprep.subr.mxu0 0.0
  %89 = vmatpush1.msra.mxu0 0.0
  %90 = vmatprep.subr.mxu0 0.0
  %91 = vmatpush1.msra.mxu0 0.0
  %92 = vmatprep.subr.mxu0 0.0
  %93 = vmatpush1.msra.mxu0 0.0
  %94 = vmatprep.subr.mxu0 0.0
  %95 = vmatpush1.msra.mxu0 0.0
  %96 = vmatprep.subr.mxu0 0.0
  %97 = vmatpush1.msra.mxu0 0.0
  %98 = vmatprep.subr.mxu0 0.0
  %99 = vmatpush1.msra.mxu0 0.0
  %100 = vmatprep.subr.mxu0 0.0
  %101 = vmatpush1.msra.mxu0 0.0
  %102 = vmatprep.subr.mxu0 0.0
  %103 = vmatpush1.msra.mxu0 0.0
  %104 = vmatprep.subr.mxu0 0.0
  %105 = vmatpush1.msra.mxu0 0.0
  %106 = vmatprep.subr.mxu0 0.0
  %107 = vmatpush1.msra.mxu0 0.0
  %108 = vmatprep.subr.mxu0 0.0
  %109 = vmatpush1.msra.mxu0 0.0
  %110 = vmatprep.subr.mxu0 0.0
  %111 = vmatpush1.msra.mxu0 0.0
  %112 = vmatprep.subr.mxu0 0.0
  %113 = vmatpush1.msra.mxu0 0.0
  %114 = vmatprep.subr.mxu0 0.0
  %115 = vmatpush1.msra.mxu0 0.0
  %116 = vmatprep.subr.mxu0 0.0
  %117 = vmatpush1.msra.mxu0 0.0
  %118 = vmatprep.subr.mxu0 0.0
  %119 = vmatpush1.msra.mxu0 0.0
  %120 = vmatprep.subr.mxu0 0.0
  %121 = vmatpush1.msra.mxu0 0.0
  %122 = vmatprep.mubr.f32.mxu0 0.0
  %v123 = vand.u32 %v35, 4294901760
  %v124 = vsub.f32 %v35, %v123
  %v125 = vand.u32 %v124, 4294901760
  %v126 = vsub.f32 %v124, %v125
  %v127 = vand.u32 %v126, 4294901760
  %128 = vmatmul.mubr.f32.gmra.mrb[0].mxu0 %v127
  %v129 = vpop.f32.mrb[0].mxu0
  %v130 = vadd.f32 %v31, %v129
  %v131 = vpop.f32.mrb[0].mxu0
  %132 = vmatprep.mubr.f32.mxu0 0.0
  %v133 = vand.u32 %v38, 4294901760
  %v134 = vsub.f32 %v38, %v133
  %v135 = vand.u32 %v134, 4294901760
  %v136 = vsub.f32 %v134, %v135
  %v137 = vand.u32 %v136, 4294901760
  %138 = vmatmul.mubr.f32.gmra.mrb[0].mxu0 %v137
  %v139 = vpop.f32.mrb[0].mxu0
  %v140 = vadd.f32 %v31, %v139
  %v141 = vpop.f32.mrb[0].mxu0
  %142 = vmatprep.mubr.f32.mxu0 0.0
  %v143 = vand.u32 %v41, 4294901760
  %v144 = vsub.f32 %v41, %v143
  %v145 = vand.u32 %v144, 4294901760
  %v146 = vsub.f32 %v144, %v145
  %v147 = vand.u32 %v146, 4294901760
  %148 = vmatmul.mubr.f32.gmra.mrb[0].mxu0 %v147
  %v149 = vpop.f32.mrb[0].mxu0
  %v150 = vadd.f32 %v31, %v149
  %v151 = vpop.f32.mrb[0].mxu0
  %152 = vmatprep.mubr.f32.mxu0 0.0
  %v153 = vand.u32 %v44, 4294901760
  %v154 = vsub.f32 %v44, %v153
  %v155 = vand.u32 %v154, 4294901760
  %v156 = vsub.f32 %v154, %v155
  %v157 = vand.u32 %v156, 4294901760
  %158 = vmatmul.mubr.f32.gmra.mrb[0].mxu0 %v157
  %v159 = vpop.f32.mrb[0].mxu0
  %v160 = vadd.f32 %v31, %v159
  %v161 = vpop.f32.mrb[0].mxu0
  %162 = vdwg.mxu0
  %163 = vmatprep.subr.mxu0 0.0
  %v164 = vand.u32 %v18, 4294901760
  %v165 = vsub.f32 %v18, %v164
  %v166 = vand.u32 %v165, 4294901760
  %v167 = vsub.f32 %v165, %v166
  %v168 = vand.u32 %v167, 4294901760
  %169 = vmatpush1.msra.mxu0 %v168
  %170 = vmatprep.subr.mxu0 0.0
  %v171 = vand.u32 %v19, 4294901760
  %v172 = vsub.f32 %v19, %v171
  %v173 = vand.u32 %v172, 4294901760
  %v174 = vsub.f32 %v172, %v173
  %v175 = vand.u32 %v174, 4294901760
  %176 = vmatpush1.msra.mxu0 %v175
  %177 = vmatprep.subr.mxu0 0.0
  %v178 = vand.u32 %v20, 4294901760
  %v179 = vsub.f32 %v20, %v178
  %v180 = vand.u32 %v179, 4294901760
  %v181 = vsub.f32 %v179, %v180
  %v182 = vand.u32 %v181, 4294901760
  %183 = vmatpush1.msra.mxu0 %v182
  %184 = vmatprep.subr.mxu0 0.0
  %v185 = vand.u32 %v21, 4294901760
  %v186 = vsub.f32 %v21, %v185
  %v187 = vand.u32 %v186, 4294901760
  %v188 = vsub.f32 %v186, %v187
  %v189 = vand.u32 %v188, 4294901760
  %190 = vmatpush1.msra.mxu0 %v189
  %191 = vmatprep.subr.mxu0 0.0
  %v192 = vand.u32 %v22, 4294901760
  %v193 = vsub.f32 %v22, %v192
  %v194 = vand.u32 %v193, 4294901760
  %v195 = vsub.f32 %v193, %v194
  %v196 = vand.u32 %v195, 4294901760
  %197 = vmatpush1.msra.mxu0 %v196
  %198 = vmatprep.subr.mxu0 0.0
  %v199 = vand.u32 %v23, 4294901760
  %v200 = vsub.f32 %v23, %v199
  %v201 = vand.u32 %v200, 4294901760
  %v202 = vsub.f32 %v200, %v201
  %v203 = vand.u32 %v202, 4294901760
  %204 = vmatpush1.msra.mxu0 %v203
  %205 = vmatprep.subr.mxu0 0.0
  %v206 = vand.u32 %v24, 4294901760
  %v207 = vsub.f32 %v24, %v206
  %v208 = vand.u32 %v207, 4294901760
  %v209 = vsub.f32 %v207, %v208
  %v210 = vand.u32 %v209, 4294901760
  %211 = vmatpush1.msra.mxu0 %v210
  %212 = vmatprep.subr.mxu0 0.0
  %v213 = vand.u32 %v48, 4294901760
  %v214 = vsub.f32 %v48, %v213
  %v215 = vand.u32 %v214, 4294901760
  %v216 = vsub.f32 %v214, %v215
  %v217 = vand.u32 %v216, 4294901760
  %218 = vmatpush1.msra.mxu0 %v217
  %219 = vmatprep.subr.mxu0 0.0
  %220 = vmatpush1.msra.mxu0 0.0
  %221 = vmatprep.subr.mxu0 0.0
  %222 = vmatpush1.msra.mxu0 0.0
  %223 = vmatprep.subr.mxu0 0.0
  %224 = vmatpush1.msra.mxu0 0.0
  %225 = vmatprep.subr.mxu0 0.0
  %226 = vmatpush1.msra.mxu0 0.0
  %227 = vmatprep.subr.mxu0 0.0
  %228 = vmatpush1.msra.mxu0 0.0
  %229 = vmatprep.subr.mxu0 0.0
  %230 = vmatpush1.msra.mxu0 0.0
  %231 = vmatprep.subr.mxu0 0.0
  %232 = vmatpush1.msra.mxu0 0.0
  %233 = vmatprep.subr.mxu0 0.0
  %234 = vmatpush1.msra.mxu0 0.0
  %235 = vmatprep.subr.mxu0 0.0
  %236 = vmatpush1.msra.mxu0 0.0
  %237 = vmatprep.subr.mxu0 0.0
  %238 = vmatpush1.msra.mxu0 0.0
  %239 = vmatprep.subr.mxu0 0.0
  %240 = vmatpush1.msra.mxu0 0.0
  %241 = vmatprep.subr.mxu0 0.0
  %242 = vmatpush1.msra.mxu0 0.0
  %243 = vmatprep.subr.mxu0 0.0
  %244 = vmatpush1.msra.mxu0 0.0
  %245 = vmatprep.subr.mxu0 0.0
  %246 = vmatpush1.msra.mxu0 0.0
  %247 = vmatprep.subr.mxu0 0.0
  %248 = vmatpush1.msra.mxu0 0.0
  %249 = vmatprep.subr.mxu0 0.0
  %250 = vmatpush1.msra.mxu0 0.0
  %251 = vmatprep.subr.mxu0 0.0
  %252 = vmatpush1.msra.mxu0 0.0
  %253 = vmatprep.subr.mxu0 0.0
  %254 = vmatpush1.msra.mxu0 0.0
  %255 = vmatprep.subr.mxu0 0.0
  %256 = vmatpush1.msra.mxu0 0.0
  %257 = vmatprep.subr.mxu0 0.0
  %258 = vmatpush1.msra.mxu0 0.0
  %259 = vmatprep.subr.mxu0 0.0
  %260 = vmatpush1.msra.mxu0 0.0
  %261 = vmatprep.subr.mxu0 0.0
  %262 = vmatpush1.msra.mxu0 0.0
  %263 = vmatprep.subr.mxu0 0.0
  %264 = vmatpush1.msra.mxu0 0.0
  %265 = vmatprep.subr.mxu0 0.0
  %266 = vmatpush1.msra.mxu0 0.0
  %267 = vmatprep.mubr.f32.mxu0 0.0
  %v268 = vand.u32 %v35, 4294901760
  %269 = vmatmul.mubr.f32.gmra.mrb[0].mxu0 %v268
  %v270 = vpop.f32.mrb[0].mxu0
  %v271 = vadd.f32 %v130, %v270
  %v272 = vpop.f32.mrb[0].mxu0
  %273 = vmatprep.mubr.f32.mxu0 0.0
  %v274 = vand.u32 %v38, 4294901760
  %275 = vmatmul.mubr.f32.gmra.mrb[0].mxu0 %v274
  %v276 = vpop.f32.mrb[0].mxu0
  %v277 = vadd.f32 %v140, %v276
  %v278 = vpop.f32.mrb[0].mxu0
  %279 = vmatprep.mubr.f32.mxu0 0.0
  %v280 = vand.u32 %v41, 4294901760
  %281 = vmatmul.mubr.f32.gmra.mrb[0].mxu0 %v280
  %v282 = vpop.f32.mrb[0].mxu0
  %v283 = vadd.f32 %v150, %v282
  %v284 = vpop.f32.mrb[0].mxu0
  %285 = vmatprep.mubr.f32.mxu0 0.0
  %v286 = vand.u32 %v44, 4294901760
  %287 = vmatmul.mubr.f32.gmra.mrb[0].mxu0 %v286
  %v288 = vpop.f32.mrb[0].mxu0
  %v289 = vadd.f32 %v160, %v288
  %v290 = vpop.f32.mrb[0].mxu0
  %291 = vdwg.mxu0
  %292 = vmatprep.subr.mxu0 0.0
  %v293 = vand.u32 %v18, 4294901760
  %v294 = vsub.f32 %v18, %v293
  %295 = vmatpush1.msra.mxu0 %v294
  %296 = vmatprep.subr.mxu0 0.0
  %v297 = vand.u32 %v19, 4294901760
  %v298 = vsub.f32 %v19, %v297
  %299 = vmatpush1.msra.mxu0 %v298
  %300 = vmatprep.subr.mxu0 0.0
  %v301 = vand.u32 %v20, 4294901760
  %v302 = vsub.f32 %v20, %v301
  %303 = vmatpush1.msra.mxu0 %v302
  %304 = vmatprep.subr.mxu0 0.0
  %v305 = vand.u32 %v21, 4294901760
  %v306 = vsub.f32 %v21, %v305
  %307 = vmatpush1.msra.mxu0 %v306
  %308 = vmatprep.subr.mxu0 0.0
  %v309 = vand.u32 %v22, 4294901760
  %v310 = vsub.f32 %v22, %v309
  %311 = vmatpush1.msra.mxu0 %v310
  %312 = vmatprep.subr.mxu0 0.0
  %v313 = vand.u32 %v23, 4294901760
  %v314 = vsub.f32 %v23, %v313
  %315 = vmatpush1.msra.mxu0 %v314
  %316 = vmatprep.subr.mxu0 0.0
  %v317 = vand.u32 %v24, 4294901760
  %v318 = vsub.f32 %v24, %v317
  %319 = vmatpush1.msra.mxu0 %v318
  %320 = vmatprep.subr.mxu0 0.0
  %v321 = vand.u32 %v48, 4294901760
  %v322 = vsub.f32 %v48, %v321
  %323 = vmatpush1.msra.mxu0 %v322
  %324 = vmatprep.subr.mxu0 0.0
  %325 = vmatpush1.msra.mxu0 0.0
  %326 = vmatprep.subr.mxu0 0.0
  %327 = vmatpush1.msra.mxu0 0.0
  %328 = vmatprep.subr.mxu0 0.0
  %329 = vmatpush1.msra.mxu0 0.0
  %330 = vmatprep.subr.mxu0 0.0
  %331 = vmatpush1.msra.mxu0 0.0
  %332 = vmatprep.subr.mxu0 0.0
  %333 = vmatpush1.msra.mxu0 0.0
  %334 = vmatprep.subr.mxu0 0.0
  %335 = vmatpush1.msra.mxu0 0.0
  %336 = vmatprep.subr.mxu0 0.0
  %337 = vmatpush1.msra.mxu0 0.0
  %338 = vmatprep.subr.mxu0 0.0
  %339 = vmatpush1.msra.mxu0 0.0
  %340 = vmatprep.subr.mxu0 0.0
  %341 = vmatpush1.msra.mxu0 0.0
  %342 = vmatprep.subr.mxu0 0.0
  %343 = vmatpush1.msra.mxu0 0.0
  %344 = vmatprep.subr.mxu0 0.0
  %345 = vmatpush1.msra.mxu0 0.0
  %346 = vmatprep.subr.mxu0 0.0
  %347 = vmatpush1.msra.mxu0 0.0
  %348 = vmatprep.subr.mxu0 0.0
  %349 = vmatpush1.msra.mxu0 0.0
  %350 = vmatprep.subr.mxu0 0.0
  %351 = vmatpush1.msra.mxu0 0.0
  %352 = vmatprep.subr.mxu0 0.0
  %353 = vmatpush1.msra.mxu0 0.0
  %354 = vmatprep.subr.mxu0 0.0
  %355 = vmatpush1.msra.mxu0 0.0
  %356 = vmatprep.subr.mxu0 0.0
  %357 = vmatpush1.msra.mxu0 0.0
  %358 = vmatprep.subr.mxu0 0.0
  %359 = vmatpush1.msra.mxu0 0.0
  %360 = vmatprep.subr.mxu0 0.0
  %361 = vmatpush1.msra.mxu0 0.0
  %362 = vmatprep.subr.mxu0 0.0
  %363 = vmatpush1.msra.mxu0 0.0
  %364 = vmatprep.subr.mxu0 0.0
  %365 = vmatpush1.msra.mxu0 0.0
  %366 = vmatprep.subr.mxu0 0.0
  %367 = vmatpush1.msra.mxu0 0.0
  %368 = vmatprep.subr.mxu0 0.0
  %369 = vmatpush1.msra.mxu0 0.0
  %370 = vmatprep.subr.mxu0 0.0
  %371 = vmatpush1.msra.mxu0 0.0
  %372 = vmatprep.mubr.f32.mxu0 0.0
  %v373 = vand.u32 %v35, 4294901760
  %v374 = vsub.f32 %v35, %v373
  %375 = vmatmul.mubr.f32.gmra.mrb[0].mxu0 %v374
  %v376 = vpop.f32.mrb[0].mxu0
  %v377 = vadd.f32 %v271, %v376
  %v378 = vpop.f32.mrb[0].mxu0
  %379 = vmatprep.mubr.f32.mxu0 0.0
  %v380 = vand.u32 %v38, 4294901760
  %v381 = vsub.f32 %v38, %v380
  %382 = vmatmul.mubr.f32.gmra.mrb[0].mxu0 %v381
  %v383 = vpop.f32.mrb[0].mxu0
  %v384 = vadd.f32 %v277, %v383
  %v385 = vpop.f32.mrb[0].mxu0
  %386 = vmatprep.mubr.f32.mxu0 0.0
  %v387 = vand.u32 %v41, 4294901760
  %v388 = vsub.f32 %v41, %v387
  %389 = vmatmul.mubr.f32.gmra.mrb[0].mxu0 %v388
  %v390 = vpop.f32.mrb[0].mxu0
  %v391 = vadd.f32 %v283, %v390
  %v392 = vpop.f32.mrb[0].mxu0
  %393 = vmatprep.mubr.f32.mxu0 0.0
  %v394 = vand.u32 %v44, 4294901760
  %v395 = vsub.f32 %v44, %v394
  %396 = vmatmul.mubr.f32.gmra.mrb[0].mxu0 %v395
  %v397 = vpop.f32.mrb[0].mxu0
  %v398 = vadd.f32 %v289, %v397
  %v399 = vpop.f32.mrb[0].mxu0
  %400 = vdwg.mxu0
  %401 = vmatprep.subr.mxu0 0.0
  %v402 = vand.u32 %v18, 4294901760
  %403 = vmatpush1.msra.mxu0 %v402
  %404 = vmatprep.subr.mxu0 0.0
  %v405 = vand.u32 %v19, 4294901760
  %406 = vmatpush1.msra.mxu0 %v405
  %407 = vmatprep.subr.mxu0 0.0
  %v408 = vand.u32 %v20, 4294901760
  %409 = vmatpush1.msra.mxu0 %v408
  %410 = vmatprep.subr.mxu0 0.0
  %v411 = vand.u32 %v21, 4294901760
  %412 = vmatpush1.msra.mxu0 %v411
  %413 = vmatprep.subr.mxu0 0.0
  %v414 = vand.u32 %v22, 4294901760
  %415 = vmatpush1.msra.mxu0 %v414
  %416 = vmatprep.subr.mxu0 0.0
  %v417 = vand.u32 %v23, 4294901760
  %418 = vmatpush1.msra.mxu0 %v417
  %419 = vmatprep.subr.mxu0 0.0
  %v420 = vand.u32 %v24, 4294901760
  %421 = vmatpush1.msra.mxu0 %v420
  %422 = vmatprep.subr.mxu0 0.0
  %v423 = vand.u32 %v48, 4294901760
  %424 = vmatpush1.msra.mxu0 %v423
  %425 = vmatprep.subr.mxu0 0.0
  %426 = vmatpush1.msra.mxu0 0.0
  %427 = vmatprep.subr.mxu0 0.0
  %428 = vmatpush1.msra.mxu0 0.0
  %429 = vmatprep.subr.mxu0 0.0
  %430 = vmatpush1.msra.mxu0 0.0
  %431 = vmatprep.subr.mxu0 0.0
  %432 = vmatpush1.msra.mxu0 0.0
  %433 = vmatprep.subr.mxu0 0.0
  %434 = vmatpush1.msra.mxu0 0.0
  %435 = vmatprep.subr.mxu0 0.0
  %436 = vmatpush1.msra.mxu0 0.0
  %437 = vmatprep.subr.mxu0 0.0
  %438 = vmatpush1.msra.mxu0 0.0
  %439 = vmatprep.subr.mxu0 0.0
  %440 = vmatpush1.msra.mxu0 0.0
  %441 = vmatprep.subr.mxu0 0.0
  %442 = vmatpush1.msra.mxu0 0.0
  %443 = vmatprep.subr.mxu0 0.0
  %444 = vmatpush1.msra.mxu0 0.0
  %445 = vmatprep.subr.mxu0 0.0
  %446 = vmatpush1.msra.mxu0 0.0
  %447 = vmatprep.subr.mxu0 0.0
  %448 = vmatpush1.msra.mxu0 0.0
  %449 = vmatprep.subr.mxu0 0.0
  %450 = vmatpush1.msra.mxu0 0.0
  %451 = vmatprep.subr.mxu0 0.0
  %452 = vmatpush1.msra.mxu0 0.0
  %453 = vmatprep.subr.mxu0 0.0
  %454 = vmatpush1.msra.mxu0 0.0
  %455 = vmatprep.subr.mxu0 0.0
  %456 = vmatpush1.msra.mxu0 0.0
  %457 = vmatprep.subr.mxu0 0.0
  %458 = vmatpush1.msra.mxu0 0.0
  %459 = vmatprep.subr.mxu0 0.0
  %460 = vmatpush1.msra.mxu0 0.0
  %461 = vmatprep.subr.mxu0 0.0
  %462 = vmatpush1.msra.mxu0 0.0
  %463 = vmatprep.subr.mxu0 0.0
  %464 = vmatpush1.msra.mxu0 0.0
  %465 = vmatprep.subr.mxu0 0.0
  %466 = vmatpush1.msra.mxu0 0.0
  %467 = vmatprep.subr.mxu0 0.0
  %468 = vmatpush1.msra.mxu0 0.0
  %469 = vmatprep.subr.mxu0 0.0
  %470 = vmatpush1.msra.mxu0 0.0
  %471 = vmatprep.subr.mxu0 0.0
  %472 = vmatpush1.msra.mxu0 0.0
  %473 = vmatprep.mubr.f32.mxu0 0.0
  %v474 = vand.u32 %v35, 4294901760
  %v475 = vsub.f32 %v35, %v474
  %v476 = vand.u32 %v475, 4294901760
  %477 = vmatmul.mubr.f32.gmra.mrb[0].mxu0 %v476
  %v478 = vpop.f32.mrb[0].mxu0
  %v479 = vadd.f32 %v377, %v478
  %v480 = vpop.f32.mrb[0].mxu0
  %481 = vmatprep.mubr.f32.mxu0 0.0
  %v482 = vand.u32 %v38, 4294901760
  %v483 = vsub.f32 %v38, %v482
  %v484 = vand.u32 %v483, 4294901760
  %485 = vmatmul.mubr.f32.gmra.mrb[0].mxu0 %v484
  %v486 = vpop.f32.mrb[0].mxu0
  %v487 = vadd.f32 %v384, %v486
  %v488 = vpop.f32.mrb[0].mxu0
  %489 = vmatprep.mubr.f32.mxu0 0.0
  %v490 = vand.u32 %v41, 4294901760
  %v491 = vsub.f32 %v41, %v490
  %v492 = vand.u32 %v491, 4294901760
  %493 = vmatmul.mubr.f32.gmra.mrb[0].mxu0 %v492
  %v494 = vpop.f32.mrb[0].mxu0
  %v495 = vadd.f32 %v391, %v494
  %v496 = vpop.f32.mrb[0].mxu0
  %497 = vmatprep.mubr.f32.mxu0 0.0
  %v498 = vand.u32 %v44, 4294901760
  %v499 = vsub.f32 %v44, %v498
  %v500 = vand.u32 %v499, 4294901760
  %501 = vmatmul.mubr.f32.gmra.mrb[0].mxu0 %v500
  %v502 = vpop.f32.mrb[0].mxu0
  %v503 = vadd.f32 %v398, %v502
  %v504 = vpop.f32.mrb[0].mxu0
  %505 = vdwg.mxu0
  %506 = vmatprep.subr.mxu0 0.0
  %v507 = vand.u32 %v18, 4294901760
  %v508 = vsub.f32 %v18, %v507
  %v509 = vand.u32 %v508, 4294901760
  %510 = vmatpush1.msra.mxu0 %v509
  %511 = vmatprep.subr.mxu0 0.0
  %v512 = vand.u32 %v19, 4294901760
  %v513 = vsub.f32 %v19, %v512
  %v514 = vand.u32 %v513, 4294901760
  %515 = vmatpush1.msra.mxu0 %v514
  %516 = vmatprep.subr.mxu0 0.0
  %v517 = vand.u32 %v20, 4294901760
  %v518 = vsub.f32 %v20, %v517
  %v519 = vand.u32 %v518, 4294901760
  %520 = vmatpush1.msra.mxu0 %v519
  %521 = vmatprep.subr.mxu0 0.0
  %v522 = vand.u32 %v21, 4294901760
  %v523 = vsub.f32 %v21, %v522
  %v524 = vand.u32 %v523, 4294901760
  %525 = vmatpush1.msra.mxu0 %v524
  %526 = vmatprep.subr.mxu0 0.0
  %v527 = vand.u32 %v22, 4294901760
  %v528 = vsub.f32 %v22, %v527
  %v529 = vand.u32 %v528, 4294901760
  %530 = vmatpush1.msra.mxu0 %v529
  %531 = vmatprep.subr.mxu0 0.0
  %v532 = vand.u32 %v23, 4294901760
  %v533 = vsub.f32 %v23, %v532
  %v534 = vand.u32 %v533, 4294901760
  %535 = vmatpush1.msra.mxu0 %v534
  %536 = vmatprep.subr.mxu0 0.0
  %v537 = vand.u32 %v24, 4294901760
  %v538 = vsub.f32 %v24, %v537
  %v539 = vand.u32 %v538, 4294901760
  %540 = vmatpush1.msra.mxu0 %v539
  %541 = vmatprep.subr.mxu0 0.0
  %v542 = vand.u32 %v48, 4294901760
  %v543 = vsub.f32 %v48, %v542
  %v544 = vand.u32 %v543, 4294901760
  %545 = vmatpush1.msra.mxu0 %v544
  %546 = vmatprep.subr.mxu0 0.0
  %547 = vmatpush1.msra.mxu0 0.0
  %548 = vmatprep.subr.mxu0 0.0
  %549 = vmatpush1.msra.mxu0 0.0
  %550 = vmatprep.subr.mxu0 0.0
  %551 = vmatpush1.msra.mxu0 0.0
  %552 = vmatprep.subr.mxu0 0.0
  %553 = vmatpush1.msra.mxu0 0.0
  %554 = vmatprep.subr.mxu0 0.0
  %555 = vmatpush1.msra.mxu0 0.0
  %556 = vmatprep.subr.mxu0 0.0
  %557 = vmatpush1.msra.mxu0 0.0
  %558 = vmatprep.subr.mxu0 0.0
  %559 = vmatpush1.msra.mxu0 0.0
  %560 = vmatprep.subr.mxu0 0.0
  %561 = vmatpush1.msra.mxu0 0.0
  %562 = vmatprep.subr.mxu0 0.0
  %563 = vmatpush1.msra.mxu0 0.0
  %564 = vmatprep.subr.mxu0 0.0
  %565 = vmatpush1.msra.mxu0 0.0
  %566 = vmatprep.subr.mxu0 0.0
  %567 = vmatpush1.msra.mxu0 0.0
  %568 = vmatprep.subr.mxu0 0.0
  %569 = vmatpush1.msra.mxu0 0.0
  %570 = vmatprep.subr.mxu0 0.0
  %571 = vmatpush1.msra.mxu0 0.0
  %572 = vmatprep.subr.mxu0 0.0
  %573 = vmatpush1.msra.mxu0 0.0
  %574 = vmatprep.subr.mxu0 0.0
  %575 = vmatpush1.msra.mxu0 0.0
  %576 = vmatprep.subr.mxu0 0.0
  %577 = vmatpush1.msra.mxu0 0.0
  %578 = vmatprep.subr.mxu0 0.0
  %579 = vmatpush1.msra.mxu0 0.0
  %580 = vmatprep.subr.mxu0 0.0
  %581 = vmatpush1.msra.mxu0 0.0
  %582 = vmatprep.subr.mxu0 0.0
  %583 = vmatpush1.msra.mxu0 0.0
  %584 = vmatprep.subr.mxu0 0.0
  %585 = vmatpush1.msra.mxu0 0.0
  %586 = vmatprep.subr.mxu0 0.0
  %587 = vmatpush1.msra.mxu0 0.0
  %588 = vmatprep.subr.mxu0 0.0
  %589 = vmatpush1.msra.mxu0 0.0
  %590 = vmatprep.subr.mxu0 0.0
  %591 = vmatpush1.msra.mxu0 0.0
  %592 = vmatprep.subr.mxu0 0.0
  %593 = vmatpush1.msra.mxu0 0.0
  %594 = vmatprep.mubr.f32.mxu0 0.0
  %v595 = vand.u32 %v35, 4294901760
  %596 = vmatmul.mubr.f32.gmra.mrb[0].mxu0 %v595
  %v597 = vpop.f32.mrb[0].mxu0
  %v598 = vadd.f32 %v479, %v597
  %v599 = vpop.f32.mrb[0].mxu0
  %600 = vmatprep.mubr.f32.mxu0 0.0
  %v601 = vand.u32 %v38, 4294901760
  %602 = vmatmul.mubr.f32.gmra.mrb[0].mxu0 %v601
  %v603 = vpop.f32.mrb[0].mxu0
  %v604 = vadd.f32 %v487, %v603
  %v605 = vpop.f32.mrb[0].mxu0
  %606 = vmatprep.mubr.f32.mxu0 0.0
  %v607 = vand.u32 %v41, 4294901760
  %608 = vmatmul.mubr.f32.gmra.mrb[0].mxu0 %v607
  %v609 = vpop.f32.mrb[0].mxu0
  %v610 = vadd.f32 %v495, %v609
  %v611 = vpop.f32.mrb[0].mxu0
  %612 = vmatprep.mubr.f32.mxu0 0.0
  %v613 = vand.u32 %v44, 4294901760
  %614 = vmatmul.mubr.f32.gmra.mrb[0].mxu0 %v613
  %v615 = vpop.f32.mrb[0].mxu0
  %v616 = vadd.f32 %v503, %v615
  %v617 = vpop.f32.mrb[0].mxu0
  %618 = vdwg.mxu0
  %619 = vmatprep.subr.mxu0 0.0
  %v620 = vand.u32 %v18, 4294901760
  %621 = vmatpush1.msra.mxu0 %v620
  %622 = vmatprep.subr.mxu0 0.0
  %v623 = vand.u32 %v19, 4294901760
  %624 = vmatpush1.msra.mxu0 %v623
  %625 = vmatprep.subr.mxu0 0.0
  %v626 = vand.u32 %v20, 4294901760
  %627 = vmatpush1.msra.mxu0 %v626
  %628 = vmatprep.subr.mxu0 0.0
  %v629 = vand.u32 %v21, 4294901760
  %630 = vmatpush1.msra.mxu0 %v629
  %631 = vmatprep.subr.mxu0 0.0
  %v632 = vand.u32 %v22, 4294901760
  %633 = vmatpush1.msra.mxu0 %v632
  %634 = vmatprep.subr.mxu0 0.0
  %v635 = vand.u32 %v23, 4294901760
  %636 = vmatpush1.msra.mxu0 %v635
  %637 = vmatprep.subr.mxu0 0.0
  %v638 = vand.u32 %v24, 4294901760
  %639 = vmatpush1.msra.mxu0 %v638
  %640 = vmatprep.subr.mxu0 0.0
  %v641 = vand.u32 %v48, 4294901760
  %642 = vmatpush1.msra.mxu0 %v641
  %643 = vmatprep.subr.mxu0 0.0
  %644 = vmatpush1.msra.mxu0 0.0
  %645 = vmatprep.subr.mxu0 0.0
  %646 = vmatpush1.msra.mxu0 0.0
  %647 = vmatprep.subr.mxu0 0.0
  %648 = vmatpush1.msra.mxu0 0.0
  %649 = vmatprep.subr.mxu0 0.0
  %650 = vmatpush1.msra.mxu0 0.0
  %651 = vmatprep.subr.mxu0 0.0
  %652 = vmatpush1.msra.mxu0 0.0
  %653 = vmatprep.subr.mxu0 0.0
  %654 = vmatpush1.msra.mxu0 0.0
  %655 = vmatprep.subr.mxu0 0.0
  %656 = vmatpush1.msra.mxu0 0.0
  %657 = vmatprep.subr.mxu0 0.0
  %658 = vmatpush1.msra.mxu0 0.0
  %659 = vmatprep.subr.mxu0 0.0
  %660 = vmatpush1.msra.mxu0 0.0
  %661 = vmatprep.subr.mxu0 0.0
  %662 = vmatpush1.msra.mxu0 0.0
  %663 = vmatprep.subr.mxu0 0.0
  %664 = vmatpush1.msra.mxu0 0.0
  %665 = vmatprep.subr.mxu0 0.0
  %666 = vmatpush1.msra.mxu0 0.0
  %667 = vmatprep.subr.mxu0 0.0
  %668 = vmatpush1.msra.mxu0 0.0
  %669 = vmatprep.subr.mxu0 0.0
  %670 = vmatpush1.msra.mxu0 0.0
  %671 = vmatprep.subr.mxu0 0.0
  %672 = vmatpush1.msra.mxu0 0.0
  %673 = vmatprep.subr.mxu0 0.0
  %674 = vmatpush1.msra.mxu0 0.0
  %675 = vmatprep.subr.mxu0 0.0
  %676 = vmatpush1.msra.mxu0 0.0
  %677 = vmatprep.subr.mxu0 0.0
  %678 = vmatpush1.msra.mxu0 0.0
  %679 = vmatprep.subr.mxu0 0.0
  %680 = vmatpush1.msra.mxu0 0.0
  %681 = vmatprep.subr.mxu0 0.0
  %682 = vmatpush1.msra.mxu0 0.0
  %683 = vmatprep.subr.mxu0 0.0
  %684 = vmatpush1.msra.mxu0 0.0
  %685 = vmatprep.subr.mxu0 0.0
  %686 = vmatpush1.msra.mxu0 0.0
  %687 = vmatprep.subr.mxu0 0.0
  %688 = vmatpush1.msra.mxu0 0.0
  %689 = vmatprep.subr.mxu0 0.0
  %690 = vmatpush1.msra.mxu0 0.0
  %691 = vmatprep.mubr.f32.mxu0 0.0
  %v692 = vand.u32 %v35, 4294901760
  %693 = vmatmul.mubr.f32.gmra.mrb[0].mxu0 %v692
  %v694 = vpop.f32.mrb[0].mxu0
  %v695 = vadd.f32 %v598, %v694
  %v696 = vpop.f32.mrb[0].mxu0
  %697 = vmatprep.mubr.f32.mxu0 0.0
  %v698 = vand.u32 %v38, 4294901760
  %699 = vmatmul.mubr.f32.gmra.mrb[0].mxu0 %v698
  %v700 = vpop.f32.mrb[0].mxu0
  %v701 = vadd.f32 %v604, %v700
  %v702 = vpop.f32.mrb[0].mxu0
  %703 = vmatprep.mubr.f32.mxu0 0.0
  %v704 = vand.u32 %v41, 4294901760
  %705 = vmatmul.mubr.f32.gmra.mrb[0].mxu0 %v704
  %v706 = vpop.f32.mrb[0].mxu0
  %v707 = vadd.f32 %v610, %v706
  %v708 = vpop.f32.mrb[0].mxu0
  %709 = vmatprep.mubr.f32.mxu0 0.0
  %v710 = vand.u32 %v44, 4294901760
  %711 = vmatmul.mubr.f32.gmra.mrb[0].mxu0 %v710
  %v712 = vpop.f32.mrb[0].mxu0
  %v713 = vadd.f32 %v616, %v712
  %v714 = vpop.f32.mrb[0].mxu0
  %715 = vdwg.mxu0
  %716 = vst [vmem:[%s3] sm:$0xff] %v695
  %717 = vst [vmem:[%s3 + $0x8] sm:$0xff] %v701
  %718 = vst [vmem:[%s3 + $0x10] sm:$0xff] %v707
  %719 = vst [vmem:[%s3 + $0x18] sm:$0xff] %v713
  // Predicated region
  $region14: #{_lambda_.9} parent=0 // pred_check
    _
  $region15: #{_lambda_.9} parent=0 // pred_check_branch
    %721 = sbr.rel (0) target = $region17
  $region16: #{_lambda_.9} parent=0 // pred_region
    _
  $region17: #{_lambda_.9} parent=0 // pred_fallthru
    _
  // Predicated region
  $region18: #{_lambda_.9} parent=0 // pred_check
    _
  $region19: #{_lambda_.9} parent=0 // pred_check_branch
    %723 = sbr.rel (0) target = $region21
  $region20: #{_lambda_.9} parent=0 // pred_region
    _
  $region21: #{_lambda_.9} parent=0 // pred_fallthru
    _

// kernel: _lambda_.11
$region0: #{_lambda_.11}
  #allocation0 [shape = 'u32[]', space=smem, size = 0x4, offset = 0x4, fixed_abs, tag = 'smem constant byte address 0x4 - core index']
  #allocation1 [shape = 'u32[144,128]{1,0:T(1,128)}', space=vmem, size = 0x12000, scoped, tag = 'internal scratch']
  %s0 = inlined_call_operand.vmem [shape: f32[32,32], index: 0, kind: input, shape index: {}]
  %s1 = inlined_call_operand.vmem [shape: f32[32,128], index: 1, kind: input, shape index: {}]
  %s2 = inlined_call_operand.vmem [shape: f32[1,128], index: 2, kind: input, shape index: {}]
  %s3 = inlined_call_operand.vmem [shape: f32[32,128], index: 3, kind: output, shape index: {}]
  %s4 = sld [smem:[#allocation0]]
  $region22: #{_lambda_.11} parent=0
    _
  %s6 = ssub.s32 1, %s4
  %s7 = scalar_select 0, %s6, %s4
  // Predicated region
  $region2: #{_lambda_.11} parent=0 // pred_check
    _
  $region3: #{_lambda_.11} parent=0 // pred_check_branch
    %9 = sbr.rel (0) target = $region5
  $region4: #{_lambda_.11} parent=0 // pred_region
    _
  $region5: #{_lambda_.11} parent=0 // pred_fallthru
    _
  // Predicated region
  $region6: #{_lambda_.11} parent=0 // pred_check
    _
  $region7: #{_lambda_.11} parent=0 // pred_check_branch
    %11 = sbr.rel (0) target = $region9
  $region8: #{_lambda_.11} parent=0 // pred_region
    _
  $region9: #{_lambda_.11} parent=0 // pred_fallthru
    _
  // Predicated region
  $region10: #{_lambda_.11} parent=0 // pred_check
    _
  $region11: #{_lambda_.11} parent=0 // pred_check_branch
    %13 = sbr.rel (0) target = $region13
  $region12: #{_lambda_.11} parent=0 // pred_region
    _
  $region13: #{_lambda_.11} parent=0 // pred_fallthru
    _
  %v14 = vld [vmem:[%s0] sm:$0xff]
  %v15 = vld [vmem:[%s0 + $0x8] sm:$0xff]
  %v16 = vld [vmem:[%s0 + $0x10] sm:$0xff]
  %v17 = vld [vmem:[%s0 + $0x18] sm:$0xff]
  %v18 = vld [vmem:[%s1] sm:$0xff]
  %v19 = vld [vmem:[%s1 + $0x8] sm:$0xff]
  %v20 = vld [vmem:[%s1 + $0x10] sm:$0xff]
  %v21 = vld [vmem:[%s1 + $0x18] sm:$0xff]
  %v22 = vld [vmem:[%s2] sm:$0x1]
  %v24 = vlaneseq
  %v25 = vshrl.u32 %v24, 7
  %v26 = vsub.s32 0, %v25
  %v27 = vrot.slane %v22, %v26
  %vm29 = vcmask 261120
  %v31 = vsel %vm29, %v14, 0
  %v34 = vsel %vm29, %v15, 0
  %v37 = vsel %vm29, %v16, 0
  %v40 = vsel %vm29, %v17, 0
  %42 = vmatprep.subr.mxu0 0.0
  %v43 = vand.u32 %v18, 4294901760
  %44 = vmatpush1.msra.mxu0 %v43
  %45 = vmatprep.subr.mxu0 0.0
  %v46 = vand.u32 %v19, 4294901760
  %47 = vmatpush1.msra.mxu0 %v46
  %48 = vmatprep.subr.mxu0 0.0
  %v49 = vand.u32 %v20, 4294901760
  %50 = vmatpush1.msra.mxu0 %v49
  %51 = vmatprep.subr.mxu0 0.0
  %v52 = vand.u32 %v21, 4294901760
  %53 = vmatpush1.msra.mxu0 %v52
  %54 = vmatprep.subr.mxu0 0.0
  %55 = vmatpush1.msra.mxu0 0.0
  %56 = vmatprep.subr.mxu0 0.0
  %57 = vmatpush1.msra.mxu0 0.0
  %58 = vmatprep.subr.mxu0 0.0
  %59 = vmatpush1.msra.mxu0 0.0
  %60 = vmatprep.subr.mxu0 0.0
  %61 = vmatpush1.msra.mxu0 0.0
  %62 = vmatprep.subr.mxu0 0.0
  %63 = vmatpush1.msra.mxu0 0.0
  %64 = vmatprep.subr.mxu0 0.0
  %65 = vmatpush1.msra.mxu0 0.0
  %66 = vmatprep.subr.mxu0 0.0
  %67 = vmatpush1.msra.mxu0 0.0
  %68 = vmatprep.subr.mxu0 0.0
  %69 = vmatpush1.msra.mxu0 0.0
  %70 = vmatprep.subr.mxu0 0.0
  %71 = vmatpush1.msra.mxu0 0.0
  %72 = vmatprep.subr.mxu0 0.0
  %73 = vmatpush1.msra.mxu0 0.0
  %74 = vmatprep.subr.mxu0 0.0
  %75 = vmatpush1.msra.mxu0 0.0
  %76 = vmatprep.subr.mxu0 0.0
  %77 = vmatpush1.msra.mxu0 0.0
  %78 = vmatprep.subr.mxu0 0.0
  %79 = vmatpush1.msra.mxu0 0.0
  %80 = vmatprep.subr.mxu0 0.0
  %81 = vmatpush1.msra.mxu0 0.0
  %82 = vmatprep.subr.mxu0 0.0
  %83 = vmatpush1.msra.mxu0 0.0
  %84 = vmatprep.subr.mxu0 0.0
  %85 = vmatpush1.msra.mxu0 0.0
  %86 = vmatprep.subr.mxu0 0.0
  %87 = vmatpush1.msra.mxu0 0.0
  %88 = vmatprep.subr.mxu0 0.0
  %89 = vmatpush1.msra.mxu0 0.0
  %90 = vmatprep.subr.mxu0 0.0
  %91 = vmatpush1.msra.mxu0 0.0
  %92 = vmatprep.subr.mxu0 0.0
  %93 = vmatpush1.msra.mxu0 0.0
  %94 = vmatprep.subr.mxu0 0.0
  %95 = vmatpush1.msra.mxu0 0.0
  %96 = vmatprep.subr.mxu0 0.0
  %97 = vmatpush1.msra.mxu0 0.0
  %98 = vmatprep.subr.mxu0 0.0
  %99 = vmatpush1.msra.mxu0 0.0
  %100 = vmatprep.subr.mxu0 0.0
  %101 = vmatpush1.msra.mxu0 0.0
  %102 = vmatprep.subr.mxu0 0.0
  %103 = vmatpush1.msra.mxu0 0.0
  %104 = vmatprep.subr.mxu0 0.0
  %105 = vmatpush1.msra.mxu0 0.0
  %106 = vmatprep.subr.mxu0 0.0
  %107 = vmatpush1.msra.mxu0 0.0
  %108 = vmatprep.subr.mxu0 0.0
  %109 = vmatpush1.msra.mxu0 0.0
  %110 = vmatprep.mubr.f32.mxu0 0.0
  %v111 = vand.u32 %v31, 4294901760
  %v112 = vsub.f32 %v31, %v111
  %v113 = vand.u32 %v112, 4294901760
  %v114 = vsub.f32 %v112, %v113
  %v115 = vand.u32 %v114, 4294901760
  %116 = vmatmul.mubr.f32.gmra.mrb[0].mxu0 %v115
  %v117 = vpop.f32.mrb[0].mxu0
  %v118 = vadd.f32 %v27, %v117
  %v119 = vpop.f32.mrb[0].mxu0
  %120 = vmatprep.mubr.f32.mxu0 0.0
  %v121 = vand.u32 %v34, 4294901760
  %v122 = vsub.f32 %v34, %v121
  %v123 = vand.u32 %v122, 4294901760
  %v124 = vsub.f32 %v122, %v123
  %v125 = vand.u32 %v124, 4294901760
  %126 = vmatmul.mubr.f32.gmra.mrb[0].mxu0 %v125
  %v127 = vpop.f32.mrb[0].mxu0
  %v128 = vadd.f32 %v27, %v127
  %v129 = vpop.f32.mrb[0].mxu0
  %130 = vmatprep.mubr.f32.mxu0 0.0
  %v131 = vand.u32 %v37, 4294901760
  %v132 = vsub.f32 %v37, %v131
  %v133 = vand.u32 %v132, 4294901760
  %v134 = vsub.f32 %v132, %v133
  %v135 = vand.u32 %v134, 4294901760
  %136 = vmatmul.mubr.f32.gmra.mrb[0].mxu0 %v135
  %v137 = vpop.f32.mrb[0].mxu0
  %v138 = vadd.f32 %v27, %v137
  %v139 = vpop.f32.mrb[0].mxu0
  %140 = vmatprep.mubr.f32.mxu0 0.0
  %v141 = vand.u32 %v40, 4294901760
  %v142 = vsub.f32 %v40, %v141
  %v143 = vand.u32 %v142, 4294901760
  %v144 = vsub.f32 %v142, %v143
  %v145 = vand.u32 %v144, 4294901760
  %146 = vmatmul.mubr.f32.gmra.mrb[0].mxu0 %v145
  %v147 = vpop.f32.mrb[0].mxu0
  %v148 = vadd.f32 %v27, %v147
  %v149 = vpop.f32.mrb[0].mxu0
  %150 = vdwg.mxu0
  %151 = vmatprep.subr.mxu0 0.0
  %v152 = vand.u32 %v18, 4294901760
  %v153 = vsub.f32 %v18, %v152
  %v154 = vand.u32 %v153, 4294901760
  %v155 = vsub.f32 %v153, %v154
  %v156 = vand.u32 %v155, 4294901760
  %157 = vmatpush1.msra.mxu0 %v156
  %158 = vmatprep.subr.mxu0 0.0
  %v159 = vand.u32 %v19, 4294901760
  %v160 = vsub.f32 %v19, %v159
  %v161 = vand.u32 %v160, 4294901760
  %v162 = vsub.f32 %v160, %v161
  %v163 = vand.u32 %v162, 4294901760
  %164 = vmatpush1.msra.mxu0 %v163
  %165 = vmatprep.subr.mxu0 0.0
  %v166 = vand.u32 %v20, 4294901760
  %v167 = vsub.f32 %v20, %v166
  %v168 = vand.u32 %v167, 4294901760
  %v169 = vsub.f32 %v167, %v168
  %v170 = vand.u32 %v169, 4294901760
  %171 = vmatpush1.msra.mxu0 %v170
  %172 = vmatprep.subr.mxu0 0.0
  %v173 = vand.u32 %v21, 4294901760
  %v174 = vsub.f32 %v21, %v173
  %v175 = vand.u32 %v174, 4294901760
  %v176 = vsub.f32 %v174, %v175
  %v177 = vand.u32 %v176, 4294901760
  %178 = vmatpush1.msra.mxu0 %v177
  %179 = vmatprep.subr.mxu0 0.0
  %180 = vmatpush1.msra.mxu0 0.0
  %181 = vmatprep.subr.mxu0 0.0
  %182 = vmatpush1.msra.mxu0 0.0
  %183 = vmatprep.subr.mxu0 0.0
  %184 = vmatpush1.msra.mxu0 0.0
  %185 = vmatprep.subr.mxu0 0.0
  %186 = vmatpush1.msra.mxu0 0.0
  %187 = vmatprep.subr.mxu0 0.0
  %188 = vmatpush1.msra.mxu0 0.0
  %189 = vmatprep.subr.mxu0 0.0
  %190 = vmatpush1.msra.mxu0 0.0
  %191 = vmatprep.subr.mxu0 0.0
  %192 = vmatpush1.msra.mxu0 0.0
  %193 = vmatprep.subr.mxu0 0.0
  %194 = vmatpush1.msra.mxu0 0.0
  %195 = vmatprep.subr.mxu0 0.0
  %196 = vmatpush1.msra.mxu0 0.0
  %197 = vmatprep.subr.mxu0 0.0
  %198 = vmatpush1.msra.mxu0 0.0
  %199 = vmatprep.subr.mxu0 0.0
  %200 = vmatpush1.msra.mxu0 0.0
  %201 = vmatprep.subr.mxu0 0.0
  %202 = vmatpush1.msra.mxu0 0.0
  %203 = vmatprep.subr.mxu0 0.0
  %204 = vmatpush1.msra.mxu0 0.0
  %205 = vmatprep.subr.mxu0 0.0
  %206 = vmatpush1.msra.mxu0 0.0
  %207 = vmatprep.subr.mxu0 0.0
  %208 = vmatpush1.msra.mxu0 0.0
  %209 = vmatprep.subr.mxu0 0.0
  %210 = vmatpush1.msra.mxu0 0.0
  %211 = vmatprep.subr.mxu0 0.0
  %212 = vmatpush1.msra.mxu0 0.0
  %213 = vmatprep.subr.mxu0 0.0
  %214 = vmatpush1.msra.mxu0 0.0
  %215 = vmatprep.subr.mxu0 0.0
  %216 = vmatpush1.msra.mxu0 0.0
  %217 = vmatprep.subr.mxu0 0.0
  %218 = vmatpush1.msra.mxu0 0.0
  %219 = vmatprep.subr.mxu0 0.0
  %220 = vmatpush1.msra.mxu0 0.0
  %221 = vmatprep.subr.mxu0 0.0
  %222 = vmatpush1.msra.mxu0 0.0
  %223 = vmatprep.subr.mxu0 0.0
  %224 = vmatpush1.msra.mxu0 0.0
  %225 = vmatprep.subr.mxu0 0.0
  %226 = vmatpush1.msra.mxu0 0.0
  %227 = vmatprep.subr.mxu0 0.0
  %228 = vmatpush1.msra.mxu0 0.0
  %229 = vmatprep.subr.mxu0 0.0
  %230 = vmatpush1.msra.mxu0 0.0
  %231 = vmatprep.subr.mxu0 0.0
  %232 = vmatpush1.msra.mxu0 0.0
  %233 = vmatprep.subr.mxu0 0.0
  %234 = vmatpush1.msra.mxu0 0.0
  %235 = vmatprep.mubr.f32.mxu0 0.0
  %v236 = vand.u32 %v31, 4294901760
  %237 = vmatmul.mubr.f32.gmra.mrb[0].mxu0 %v236
  %v238 = vpop.f32.mrb[0].mxu0
  %v239 = vadd.f32 %v118, %v238
  %v240 = vpop.f32.mrb[0].mxu0
  %241 = vmatprep.mubr.f32.mxu0 0.0
  %v242 = vand.u32 %v34, 4294901760
  %243 = vmatmul.mubr.f32.gmra.mrb[0].mxu0 %v242
  %v244 = vpop.f32.mrb[0].mxu0
  %v245 = vadd.f32 %v128, %v244
  %v246 = vpop.f32.mrb[0].mxu0
  %247 = vmatprep.mubr.f32.mxu0 0.0
  %v248 = vand.u32 %v37, 4294901760
  %249 = vmatmul.mubr.f32.gmra.mrb[0].mxu0 %v248
  %v250 = vpop.f32.mrb[0].mxu0
  %v251 = vadd.f32 %v138, %v250
  %v252 = vpop.f32.mrb[0].mxu0
  %253 = vmatprep.mubr.f32.mxu0 0.0
  %v254 = vand.u32 %v40, 4294901760
  %255 = vmatmul.mubr.f32.gmra.mrb[0].mxu0 %v254
  %v256 = vpop.f32.mrb[0].mxu0
  %v257 = vadd.f32 %v148, %v256
  %v258 = vpop.f32.mrb[0].mxu0
  %259 = vdwg.mxu0
  %260 = vmatprep.subr.mxu0 0.0
  %v261 = vand.u32 %v18, 4294901760
  %v262 = vsub.f32 %v18, %v261
  %263 = vmatpush1.msra.mxu0 %v262
  %264 = vmatprep.subr.mxu0 0.0
  %v265 = vand.u32 %v19, 4294901760
  %v266 = vsub.f32 %v19, %v265
  %267 = vmatpush1.msra.mxu0 %v266
  %268 = vmatprep.subr.mxu0 0.0
  %v269 = vand.u32 %v20, 4294901760
  %v270 = vsub.f32 %v20, %v269
  %271 = vmatpush1.msra.mxu0 %v270
  %272 = vmatprep.subr.mxu0 0.0
  %v273 = vand.u32 %v21, 4294901760
  %v274 = vsub.f32 %v21, %v273
  %275 = vmatpush1.msra.mxu0 %v274
  %276 = vmatprep.subr.mxu0 0.0
  %277 = vmatpush1.msra.mxu0 0.0
  %278 = vmatprep.subr.mxu0 0.0
  %279 = vmatpush1.msra.mxu0 0.0
  %280 = vmatprep.subr.mxu0 0.0
  %281 = vmatpush1.msra.mxu0 0.0
  %282 = vmatprep.subr.mxu0 0.0
  %283 = vmatpush1.msra.mxu0 0.0
  %284 = vmatprep.subr.mxu0 0.0
  %285 = vmatpush1.msra.mxu0 0.0
  %286 = vmatprep.subr.mxu0 0.0
  %287 = vmatpush1.msra.mxu0 0.0
  %288 = vmatprep.subr.mxu0 0.0
  %289 = vmatpush1.msra.mxu0 0.0
  %290 = vmatprep.subr.mxu0 0.0
  %291 = vmatpush1.msra.mxu0 0.0
  %292 = vmatprep.subr.mxu0 0.0
  %293 = vmatpush1.msra.mxu0 0.0
  %294 = vmatprep.subr.mxu0 0.0
  %295 = vmatpush1.msra.mxu0 0.0
  %296 = vmatprep.subr.mxu0 0.0
  %297 = vmatpush1.msra.mxu0 0.0
  %298 = vmatprep.subr.mxu0 0.0
  %299 = vmatpush1.msra.mxu0 0.0
  %300 = vmatprep.subr.mxu0 0.0
  %301 = vmatpush1.msra.mxu0 0.0
  %302 = vmatprep.subr.mxu0 0.0
  %303 = vmatpush1.msra.mxu0 0.0
  %304 = vmatprep.subr.mxu0 0.0
  %305 = vmatpush1.msra.mxu0 0.0
  %306 = vmatprep.subr.mxu0 0.0
  %307 = vmatpush1.msra.mxu0 0.0
  %308 = vmatprep.subr.mxu0 0.0
  %309 = vmatpush1.msra.mxu0 0.0
  %310 = vmatprep.subr.mxu0 0.0
  %311 = vmatpush1.msra.mxu0 0.0
  %312 = vmatprep.subr.mxu0 0.0
  %313 = vmatpush1.msra.mxu0 0.0
  %314 = vmatprep.subr.mxu0 0.0
  %315 = vmatpush1.msra.mxu0 0.0
  %316 = vmatprep.subr.mxu0 0.0
  %317 = vmatpush1.msra.mxu0 0.0
  %318 = vmatprep.subr.mxu0 0.0
  %319 = vmatpush1.msra.mxu0 0.0
  %320 = vmatprep.subr.mxu0 0.0
  %321 = vmatpush1.msra.mxu0 0.0
  %322 = vmatprep.subr.mxu0 0.0
  %323 = vmatpush1.msra.mxu0 0.0
  %324 = vmatprep.subr.mxu0 0.0
  %325 = vmatpush1.msra.mxu0 0.0
  %326 = vmatprep.subr.mxu0 0.0
  %327 = vmatpush1.msra.mxu0 0.0
  %328 = vmatprep.subr.mxu0 0.0
  %329 = vmatpush1.msra.mxu0 0.0
  %330 = vmatprep.subr.mxu0 0.0
  %331 = vmatpush1.msra.mxu0 0.0
  %332 = vmatprep.mubr.f32.mxu0 0.0
  %v333 = vand.u32 %v31, 4294901760
  %v334 = vsub.f32 %v31, %v333
  %335 = vmatmul.mubr.f32.gmra.mrb[0].mxu0 %v334
  %v336 = vpop.f32.mrb[0].mxu0
  %v337 = vadd.f32 %v239, %v336
  %v338 = vpop.f32.mrb[0].mxu0
  %339 = vmatprep.mubr.f32.mxu0 0.0
  %v340 = vand.u32 %v34, 4294901760
  %v341 = vsub.f32 %v34, %v340
  %342 = vmatmul.mubr.f32.gmra.mrb[0].mxu0 %v341
  %v343 = vpop.f32.mrb[0].mxu0
  %v344 = vadd.f32 %v245, %v343
  %v345 = vpop.f32.mrb[0].mxu0
  %346 = vmatprep.mubr.f32.mxu0 0.0
  %v347 = vand.u32 %v37, 4294901760
  %v348 = vsub.f32 %v37, %v347
  %349 = vmatmul.mubr.f32.gmra.mrb[0].mxu0 %v348
  %v350 = vpop.f32.mrb[0].mxu0
  %v351 = vadd.f32 %v251, %v350
  %v352 = vpop.f32.mrb[0].mxu0
  %353 = vmatprep.mubr.f32.mxu0 0.0
  %v354 = vand.u32 %v40, 4294901760
  %v355 = vsub.f32 %v40, %v354
  %356 = vmatmul.mubr.f32.gmra.mrb[0].mxu0 %v355
  %v357 = vpop.f32.mrb[0].mxu0
  %v358 = vadd.f32 %v257, %v357
  %v359 = vpop.f32.mrb[0].mxu0
  %360 = vdwg.mxu0
  %361 = vmatprep.subr.mxu0 0.0
  %v362 = vand.u32 %v18, 4294901760
  %363 = vmatpush1.msra.mxu0 %v362
  %364 = vmatprep.subr.mxu0 0.0
  %v365 = vand.u32 %v19, 4294901760
  %366 = vmatpush1.msra.mxu0 %v365
  %367 = vmatprep.subr.mxu0 0.0
  %v368 = vand.u32 %v20, 4294901760
  %369 = vmatpush1.msra.mxu0 %v368
  %370 = vmatprep.subr.mxu0 0.0
  %v371 = vand.u32 %v21, 4294901760
  %372 = vmatpush1.msra.mxu0 %v371
  %373 = vmatprep.subr.mxu0 0.0
  %374 = vmatpush1.msra.mxu0 0.0
  %375 = vmatprep.subr.mxu0 0.0
  %376 = vmatpush1.msra.mxu0 0.0
  %377 = vmatprep.subr.mxu0 0.0
  %378 = vmatpush1.msra.mxu0 0.0
  %379 = vmatprep.subr.mxu0 0.0
  %380 = vmatpush1.msra.mxu0 0.0
  %381 = vmatprep.subr.mxu0 0.0
  %382 = vmatpush1.msra.mxu0 0.0
  %383 = vmatprep.subr.mxu0 0.0
  %384 = vmatpush1.msra.mxu0 0.0
  %385 = vmatprep.subr.mxu0 0.0
  %386 = vmatpush1.msra.mxu0 0.0
  %387 = vmatprep.subr.mxu0 0.0
  %388 = vmatpush1.msra.mxu0 0.0
  %389 = vmatprep.subr.mxu0 0.0
  %390 = vmatpush1.msra.mxu0 0.0
  %391 = vmatprep.subr.mxu0 0.0
  %392 = vmatpush1.msra.mxu0 0.0
  %393 = vmatprep.subr.mxu0 0.0
  %394 = vmatpush1.msra.mxu0 0.0
  %395 = vmatprep.subr.mxu0 0.0
  %396 = vmatpush1.msra.mxu0 0.0
  %397 = vmatprep.subr.mxu0 0.0
  %398 = vmatpush1.msra.mxu0 0.0
  %399 = vmatprep.subr.mxu0 0.0
  %400 = vmatpush1.msra.mxu0 0.0
  %401 = vmatprep.subr.mxu0 0.0
  %402 = vmatpush1.msra.mxu0 0.0
  %403 = vmatprep.subr.mxu0 0.0
  %404 = vmatpush1.msra.mxu0 0.0
  %405 = vmatprep.subr.mxu0 0.0
  %406 = vmatpush1.msra.mxu0 0.0
  %407 = vmatprep.subr.mxu0 0.0
  %408 = vmatpush1.msra.mxu0 0.0
  %409 = vmatprep.subr.mxu0 0.0
  %410 = vmatpush1.msra.mxu0 0.0
  %411 = vmatprep.subr.mxu0 0.0
  %412 = vmatpush1.msra.mxu0 0.0
  %413 = vmatprep.subr.mxu0 0.0
  %414 = vmatpush1.msra.mxu0 0.0
  %415 = vmatprep.subr.mxu0 0.0
  %416 = vmatpush1.msra.mxu0 0.0
  %417 = vmatprep.subr.mxu0 0.0
  %418 = vmatpush1.msra.mxu0 0.0
  %419 = vmatprep.subr.mxu0 0.0
  %420 = vmatpush1.msra.mxu0 0.0
  %421 = vmatprep.subr.mxu0 0.0
  %422 = vmatpush1.msra.mxu0 0.0
  %423 = vmatprep.subr.mxu0 0.0
  %424 = vmatpush1.msra.mxu0 0.0
  %425 = vmatprep.subr.mxu0 0.0
  %426 = vmatpush1.msra.mxu0 0.0
  %427 = vmatprep.subr.mxu0 0.0
  %428 = vmatpush1.msra.mxu0 0.0
  %429 = vmatprep.mubr.f32.mxu0 0.0
  %v430 = vand.u32 %v31, 4294901760
  %v431 = vsub.f32 %v31, %v430
  %v432 = vand.u32 %v431, 4294901760
  %433 = vmatmul.mubr.f32.gmra.mrb[0].mxu0 %v432
  %v434 = vpop.f32.mrb[0].mxu0
  %v435 = vadd.f32 %v337, %v434
  %v436 = vpop.f32.mrb[0].mxu0
  %437 = vmatprep.mubr.f32.mxu0 0.0
  %v438 = vand.u32 %v34, 4294901760
  %v439 = vsub.f32 %v34, %v438
  %v440 = vand.u32 %v439, 4294901760
  %441 = vmatmul.mubr.f32.gmra.mrb[0].mxu0 %v440
  %v442 = vpop.f32.mrb[0].mxu0
  %v443 = vadd.f32 %v344, %v442
  %v444 = vpop.f32.mrb[0].mxu0
  %445 = vmatprep.mubr.f32.mxu0 0.0
  %v446 = vand.u32 %v37, 4294901760
  %v447 = vsub.f32 %v37, %v446
  %v448 = vand.u32 %v447, 4294901760
  %449 = vmatmul.mubr.f32.gmra.mrb[0].mxu0 %v448
  %v450 = vpop.f32.mrb[0].mxu0
  %v451 = vadd.f32 %v351, %v450
  %v452 = vpop.f32.mrb[0].mxu0
  %453 = vmatprep.mubr.f32.mxu0 0.0
  %v454 = vand.u32 %v40, 4294901760
  %v455 = vsub.f32 %v40, %v454
  %v456 = vand.u32 %v455, 4294901760
  %457 = vmatmul.mubr.f32.gmra.mrb[0].mxu0 %v456
  %v458 = vpop.f32.mrb[0].mxu0
  %v459 = vadd.f32 %v358, %v458
  %v460 = vpop.f32.mrb[0].mxu0
  %461 = vdwg.mxu0
  %462 = vmatprep.subr.mxu0 0.0
  %v463 = vand.u32 %v18, 4294901760
  %v464 = vsub.f32 %v18, %v463
  %v465 = vand.u32 %v464, 4294901760
  %466 = vmatpush1.msra.mxu0 %v465
  %467 = vmatprep.subr.mxu0 0.0
  %v468 = vand.u32 %v19, 4294901760
  %v469 = vsub.f32 %v19, %v468
  %v470 = vand.u32 %v469, 4294901760
  %471 = vmatpush1.msra.mxu0 %v470
  %472 = vmatprep.subr.mxu0 0.0
  %v473 = vand.u32 %v20, 4294901760
  %v474 = vsub.f32 %v20, %v473
  %v475 = vand.u32 %v474, 4294901760
  %476 = vmatpush1.msra.mxu0 %v475
  %477 = vmatprep.subr.mxu0 0.0
  %v478 = vand.u32 %v21, 4294901760
  %v479 = vsub.f32 %v21, %v478
  %v480 = vand.u32 %v479, 4294901760
  %481 = vmatpush1.msra.mxu0 %v480
  %482 = vmatprep.subr.mxu0 0.0
  %483 = vmatpush1.msra.mxu0 0.0
  %484 = vmatprep.subr.mxu0 0.0
  %485 = vmatpush1.msra.mxu0 0.0
  %486 = vmatprep.subr.mxu0 0.0
  %487 = vmatpush1.msra.mxu0 0.0
  %488 = vmatprep.subr.mxu0 0.0
  %489 = vmatpush1.msra.mxu0 0.0
  %490 = vmatprep.subr.mxu0 0.0
  %491 = vmatpush1.msra.mxu0 0.0
  %492 = vmatprep.subr.mxu0 0.0
  %493 = vmatpush1.msra.mxu0 0.0
  %494 = vmatprep.subr.mxu0 0.0
  %495 = vmatpush1.msra.mxu0 0.0
  %496 = vmatprep.subr.mxu0 0.0
  %497 = vmatpush1.msra.mxu0 0.0
  %498 = vmatprep.subr.mxu0 0.0
  %499 = vmatpush1.msra.mxu0 0.0
  %500 = vmatprep.subr.mxu0 0.0
  %501 = vmatpush1.msra.mxu0 0.0
  %502 = vmatprep.subr.mxu0 0.0
  %503 = vmatpush1.msra.mxu0 0.0
  %504 = vmatprep.subr.mxu0 0.0
  %505 = vmatpush1.msra.mxu0 0.0
  %506 = vmatprep.subr.mxu0 0.0
  %507 = vmatpush1.msra.mxu0 0.0
  %508 = vmatprep.subr.mxu0 0.0
  %509 = vmatpush1.msra.mxu0 0.0
  %510 = vmatprep.subr.mxu0 0.0
  %511 = vmatpush1.msra.mxu0 0.0
  %512 = vmatprep.subr.mxu0 0.0
  %513 = vmatpush1.msra.mxu0 0.0
  %514 = vmatprep.subr.mxu0 0.0
  %515 = vmatpush1.msra.mxu0 0.0
  %516 = vmatprep.subr.mxu0 0.0
  %517 = vmatpush1.msra.mxu0 0.0
  %518 = vmatprep.subr.mxu0 0.0
  %519 = vmatpush1.msra.mxu0 0.0
  %520 = vmatprep.subr.mxu0 0.0
  %521 = vmatpush1.msra.mxu0 0.0
  %522 = vmatprep.subr.mxu0 0.0
  %523 = vmatpush1.msra.mxu0 0.0
  %524 = vmatprep.subr.mxu0 0.0
  %525 = vmatpush1.msra.mxu0 0.0
  %526 = vmatprep.subr.mxu0 0.0
  %527 = vmatpush1.msra.mxu0 0.0
  %528 = vmatprep.subr.mxu0 0.0
  %529 = vmatpush1.msra.mxu0 0.0
  %530 = vmatprep.subr.mxu0 0.0
  %531 = vmatpush1.msra.mxu0 0.0
  %532 = vmatprep.subr.mxu0 0.0
  %533 = vmatpush1.msra.mxu0 0.0
  %534 = vmatprep.subr.mxu0 0.0
  %535 = vmatpush1.msra.mxu0 0.0
  %536 = vmatprep.subr.mxu0 0.0
  %537 = vmatpush1.msra.mxu0 0.0
  %538 = vmatprep.mubr.f32.mxu0 0.0
  %v539 = vand.u32 %v31, 4294901760
  %540 = vmatmul.mubr.f32.gmra.mrb[0].mxu0 %v539
  %v541 = vpop.f32.mrb[0].mxu0
  %v542 = vadd.f32 %v435, %v541
  %v543 = vpop.f32.mrb[0].mxu0
  %544 = vmatprep.mubr.f32.mxu0 0.0
  %v545 = vand.u32 %v34, 4294901760
  %546 = vmatmul.mubr.f32.gmra.mrb[0].mxu0 %v545
  %v547 = vpop.f32.mrb[0].mxu0
  %v548 = vadd.f32 %v443, %v547
  %v549 = vpop.f32.mrb[0].mxu0
  %550 = vmatprep.mubr.f32.mxu0 0.0
  %v551 = vand.u32 %v37, 4294901760
  %552 = vmatmul.mubr.f32.gmra.mrb[0].mxu0 %v551
  %v553 = vpop.f32.mrb[0].mxu0
  %v554 = vadd.f32 %v451, %v553
  %v555 = vpop.f32.mrb[0].mxu0
  %556 = vmatprep.mubr.f32.mxu0 0.0
  %v557 = vand.u32 %v40, 4294901760
  %558 = vmatmul.mubr.f32.gmra.mrb[0].mxu0 %v557
  %v559 = vpop.f32.mrb[0].mxu0
  %v560 = vadd.f32 %v459, %v559
  %v561 = vpop.f32.mrb[0].mxu0
  %562 = vdwg.mxu0
  %563 = vmatprep.subr.mxu0 0.0
  %v564 = vand.u32 %v18, 4294901760
  %565 = vmatpush1.msra.mxu0 %v564
  %566 = vmatprep.subr.mxu0 0.0
  %v567 = vand.u32 %v19, 4294901760
  %568 = vmatpush1.msra.mxu0 %v567
  %569 = vmatprep.subr.mxu0 0.0
  %v570 = vand.u32 %v20, 4294901760
  %571 = vmatpush1.msra.mxu0 %v570
  %572 = vmatprep.subr.mxu0 0.0
  %v573 = vand.u32 %v21, 4294901760
  %574 = vmatpush1.msra.mxu0 %v573
  %575 = vmatprep.subr.mxu0 0.0
  %576 = vmatpush1.msra.mxu0 0.0
  %577 = vmatprep.subr.mxu0 0.0
  %578 = vmatpush1.msra.mxu0 0.0
  %579 = vmatprep.subr.mxu0 0.0
  %580 = vmatpush1.msra.mxu0 0.0
  %581 = vmatprep.subr.mxu0 0.0
  %582 = vmatpush1.msra.mxu0 0.0
  %583 = vmatprep.subr.mxu0 0.0
  %584 = vmatpush1.msra.mxu0 0.0
  %585 = vmatprep.subr.mxu0 0.0
  %586 = vmatpush1.msra.mxu0 0.0
  %587 = vmatprep.subr.mxu0 0.0
  %588 = vmatpush1.msra.mxu0 0.0
  %589 = vmatprep.subr.mxu0 0.0
  %590 = vmatpush1.msra.mxu0 0.0
  %591 = vmatprep.subr.mxu0 0.0
  %592 = vmatpush1.msra.mxu0 0.0
  %593 = vmatprep.subr.mxu0 0.0
  %594 = vmatpush1.msra.mxu0 0.0
  %595 = vmatprep.subr.mxu0 0.0
  %596 = vmatpush1.msra.mxu0 0.0
  %597 = vmatprep.subr.mxu0 0.0
  %598 = vmatpush1.msra.mxu0 0.0
  %599 = vmatprep.subr.mxu0 0.0
  %600 = vmatpush1.msra.mxu0 0.0
  %601 = vmatprep.subr.mxu0 0.0
  %602 = vmatpush1.msra.mxu0 0.0
  %603 = vmatprep.subr.mxu0 0.0
  %604 = vmatpush1.msra.mxu0 0.0
  %605 = vmatprep.subr.mxu0 0.0
  %606 = vmatpush1.msra.mxu0 0.0
  %607 = vmatprep.subr.mxu0 0.0
  %608 = vmatpush1.msra.mxu0 0.0
  %609 = vmatprep.subr.mxu0 0.0
  %610 = vmatpush1.msra.mxu0 0.0
  %611 = vmatprep.subr.mxu0 0.0
  %612 = vmatpush1.msra.mxu0 0.0
  %613 = vmatprep.subr.mxu0 0.0
  %614 = vmatpush1.msra.mxu0 0.0
  %615 = vmatprep.subr.mxu0 0.0
  %616 = vmatpush1.msra.mxu0 0.0
  %617 = vmatprep.subr.mxu0 0.0
  %618 = vmatpush1.msra.mxu0 0.0
  %619 = vmatprep.subr.mxu0 0.0
  %620 = vmatpush1.msra.mxu0 0.0
  %621 = vmatprep.subr.mxu0 0.0
  %622 = vmatpush1.msra.mxu0 0.0
  %623 = vmatprep.subr.mxu0 0.0
  %624 = vmatpush1.msra.mxu0 0.0
  %625 = vmatprep.subr.mxu0 0.0
  %626 = vmatpush1.msra.mxu0 0.0
  %627 = vmatprep.subr.mxu0 0.0
  %628 = vmatpush1.msra.mxu0 0.0
  %629 = vmatprep.subr.mxu0 0.0
  %630 = vmatpush1.msra.mxu0 0.0
  %631 = vmatprep.mubr.f32.mxu0 0.0
  %v632 = vand.u32 %v31, 4294901760
  %633 = vmatmul.mubr.f32.gmra.mrb[0].mxu0 %v632
  %v634 = vpop.f32.mrb[0].mxu0
  %v635 = vadd.f32 %v542, %v634
  %v636 = vpop.f32.mrb[0].mxu0
  %637 = vmatprep.mubr.f32.mxu0 0.0
  %v638 = vand.u32 %v34, 4294901760
  %639 = vmatmul.mubr.f32.gmra.mrb[0].mxu0 %v638
  %v640 = vpop.f32.mrb[0].mxu0
  %v641 = vadd.f32 %v548, %v640
  %v642 = vpop.f32.mrb[0].mxu0
  %643 = vmatprep.mubr.f32.mxu0 0.0
  %v644 = vand.u32 %v37, 4294901760
  %645 = vmatmul.mubr.f32.gmra.mrb[0].mxu0 %v644
  %v646 = vpop.f32.mrb[0].mxu0
  %v647 = vadd.f32 %v554, %v646
  %v648 = vpop.f32.mrb[0].mxu0
  %649 = vmatprep.mubr.f32.mxu0 0.0
  %v650 = vand.u32 %v40, 4294901760
  %651 = vmatmul.mubr.f32.gmra.mrb[0].mxu0 %v650
  %v652 = vpop.f32.mrb[0].mxu0
  %v653 = vadd.f32 %v560, %v652
  %v654 = vpop.f32.mrb[0].mxu0
  %655 = vdwg.mxu0
  %656 = vst [vmem:[%s3] sm:$0xff] %v635
  %657 = vst [vmem:[%s3 + $0x8] sm:$0xff] %v641
  %658 = vst [vmem:[%s3 + $0x10] sm:$0xff] %v647
  %659 = vst [vmem:[%s3 + $0x18] sm:$0xff] %v653
  // Predicated region
  $region14: #{_lambda_.11} parent=0 // pred_check
    _
  $region15: #{_lambda_.11} parent=0 // pred_check_branch
    %661 = sbr.rel (0) target = $region17
  $region16: #{_lambda_.11} parent=0 // pred_region
    _
  $region17: #{_lambda_.11} parent=0 // pred_fallthru
    _
  // Predicated region
  $region18: #{_lambda_.11} parent=0 // pred_check
    _
  $region19: #{_lambda_.11} parent=0 // pred_check_branch
    %663 = sbr.rel (0) target = $region21
  $region20: #{_lambda_.11} parent=0 // pred_region
    _
  $region21: #{_lambda_.11} parent=0 // pred_fallthru
    _

// kernel: _lambda_.10
$region0: #{_lambda_.10}
  #allocation0 [shape = 'u32[]', space=smem, size = 0x4, offset = 0x4, fixed_abs, tag = 'smem constant byte address 0x4 - core index']
  #allocation1 [shape = 'u32[144,128]{1,0:T(1,128)}', space=vmem, size = 0x12000, scoped, tag = 'internal scratch']
  #allocation2 [shape = 'f32[4,32]{1,0:T(4,128)}', space=vmem, size = 0x800, scoped, tag = 'scratch operand']
  #allocation3 [shape = 'f32[4,32]{1,0:T(4,128)}', space=vmem, size = 0x800, scoped, tag = 'scratch operand']
  %s0 = inlined_call_operand.vmem [shape: f32[8,4,128], index: 0, kind: input, shape index: {}]
  %s1 = inlined_call_operand.vmem [shape: f32[32,128], index: 1, kind: input, shape index: {}]
  %s2 = inlined_call_operand.vmem [shape: f32[8,4,32], index: 2, kind: output, shape index: {}]
  %s3 = sld [smem:[#allocation0]]
  $region22: #{_lambda_.10} parent=0
    _
  %s5 = ssub.s32 1, %s3
  %s6 = scalar_select 0, %s5, %s3
  // Predicated region
  $region2: #{_lambda_.10} parent=0 // pred_check
    _
  $region3: #{_lambda_.10} parent=0 // pred_check_branch
    %8 = sbr.rel (0) target = $region5
  $region4: #{_lambda_.10} parent=0 // pred_region
    _
  $region5: #{_lambda_.10} parent=0 // pred_fallthru
    _
  // Predicated region
  $region6: #{_lambda_.10} parent=0 // pred_check
    _
  $region7: #{_lambda_.10} parent=0 // pred_check_branch
    %10 = sbr.rel (0) target = $region9
  $region8: #{_lambda_.10} parent=0 // pred_region
    _
  $region9: #{_lambda_.10} parent=0 // pred_fallthru
    _
  %p11 = scmp.eq.s32.totalorder 0, 0
  // Predicated region
  $region10: #{_lambda_.10} parent=0 // pred_check
    %p12 = pneg %p11
  $region11: #{_lambda_.10} parent=0 // pred_check_branch
    %14 = sbr.rel (%p12) target = $region13
  $region12: #{_lambda_.10} parent=0 // pred_region
    %vm15 = vcmask 257024
    %16 = vst.msk [vmem:[#allocation2] sm:$0xf] %vm15, 0.0
    %17 = vst.msk [vmem:[#allocation3] sm:$0xf] %vm15, 0.0
  $region13: #{_lambda_.10} parent=0 // pred_fallthru
    _
  %v18 = vld [vmem:[%s0] sm:$0xf]
  %v19 = vld [vmem:[#allocation2] sm:$0xf]
  %v20 = vld [vmem:[%s1] sm:$0xff]
  %v21 = vld [vmem:[%s1 + $0x8] sm:$0xff]
  %v22 = vld [vmem:[%s1 + $0x10] sm:$0xff]
  %v23 = vld [vmem:[%s1 + $0x18] sm:$0xff]
  %vm24 = vcmask 261120
  %v26 = vsel %vm24, %v19, 0
  %28 = vmatprep.subr.mxu0 0.0
  %v29 = vand.u32 %v20, 4294901760
  %30 = vmatpush1.msra.mxu0 %v29
  %31 = vmatprep.subr.mxu0 0.0
  %v32 = vand.u32 %v21, 4294901760
  %33 = vmatpush1.msra.mxu0 %v32
  %34 = vmatprep.subr.mxu0 0.0
  %v35 = vand.u32 %v22, 4294901760
  %36 = vmatpush1.msra.mxu0 %v35
  %37 = vmatprep.subr.mxu0 0.0
  %v38 = vand.u32 %v23, 4294901760
  %39 = vmatpush1.msra.mxu0 %v38
  %40 = vmatprep.subr.mxu0 0.0
  %41 = vmatpush1.msra.mxu0 0.0
  %42 = vmatprep.subr.mxu0 0.0
  %43 = vmatpush1.msra.mxu0 0.0
  %44 = vmatprep.subr.mxu0 0.0
  %45 = vmatpush1.msra.mxu0 0.0
  %46 = vmatprep.subr.mxu0 0.0
  %47 = vmatpush1.msra.mxu0 0.0
  %48 = vmatprep.subr.mxu0 0.0
  %49 = vmatpush1.msra.mxu0 0.0
  %50 = vmatprep.subr.mxu0 0.0
  %51 = vmatpush1.msra.mxu0 0.0
  %52 = vmatprep.subr.mxu0 0.0
  %53 = vmatpush1.msra.mxu0 0.0
  %54 = vmatprep.subr.mxu0 0.0
  %55 = vmatpush1.msra.mxu0 0.0
  %56 = vmatprep.subr.mxu0 0.0
  %57 = vmatpush1.msra.mxu0 0.0
  %58 = vmatprep.subr.mxu0 0.0
  %59 = vmatpush1.msra.mxu0 0.0
  %60 = vmatprep.subr.mxu0 0.0
  %61 = vmatpush1.msra.mxu0 0.0
  %62 = vmatprep.subr.mxu0 0.0
  %63 = vmatpush1.msra.mxu0 0.0
  %64 = vmatprep.subr.mxu0 0.0
  %65 = vmatpush1.msra.mxu0 0.0
  %66 = vmatprep.subr.mxu0 0.0
  %67 = vmatpush1.msra.mxu0 0.0
  %68 = vmatprep.subr.mxu0 0.0
  %69 = vmatpush1.msra.mxu0 0.0
  %70 = vmatprep.subr.mxu0 0.0
  %71 = vmatpush1.msra.mxu0 0.0
  %72 = vmatprep.subr.mxu0 0.0
  %73 = vmatpush1.msra.mxu0 0.0
  %74 = vmatprep.subr.mxu0 0.0
  %75 = vmatpush1.msra.mxu0 0.0
  %76 = vmatprep.subr.mxu0 0.0
  %77 = vmatpush1.msra.mxu0 0.0
  %78 = vmatprep.subr.mxu0 0.0
  %79 = vmatpush1.msra.mxu0 0.0
  %80 = vmatprep.subr.mxu0 0.0
  %81 = vmatpush1.msra.mxu0 0.0
  %82 = vmatprep.subr.mxu0 0.0
  %83 = vmatpush1.msra.mxu0 0.0
  %84 = vmatprep.subr.mxu0 0.0
  %85 = vmatpush1.msra.mxu0 0.0
  %86 = vmatprep.subr.mxu0 0.0
  %87 = vmatpush1.msra.mxu0 0.0
  %88 = vmatprep.subr.mxu0 0.0
  %89 = vmatpush1.msra.mxu0 0.0
  %90 = vmatprep.subr.mxu0 0.0
  %91 = vmatpush1.msra.mxu0 0.0
  %92 = vmatprep.subr.mxu0 0.0
  %93 = vmatpush1.msra.mxu0 0.0
  %94 = vmatprep.subr.mxu0 0.0
  %95 = vmatpush1.msra.mxu0 0.0
  %96 = vmatprep.mubr.f32.mxu0 0.0
  %v97 = vand.u32 %v26, 4294901760
  %v98 = vsub.f32 %v26, %v97
  %v99 = vand.u32 %v98, 4294901760
  %v100 = vsub.f32 %v98, %v99
  %v101 = vand.u32 %v100, 4294901760
  %102 = vmatmul.mubr.f32.gmra.mrb[0].mxu0 %v101
  %v103 = vpop.f32.mrb[0].mxu0
  %v104 = vadd.f32 0.0, %v103
  %v105 = vpop.f32.mrb[0].mxu0
  %106 = vdwg.mxu0
  %107 = vmatprep.subr.mxu0 0.0
  %v108 = vand.u32 %v20, 4294901760
  %v109 = vsub.f32 %v20, %v108
  %v110 = vand.u32 %v109, 4294901760
  %v111 = vsub.f32 %v109, %v110
  %v112 = vand.u32 %v111, 4294901760
  %113 = vmatpush1.msra.mxu0 %v112
  %114 = vmatprep.subr.mxu0 0.0
  %v115 = vand.u32 %v21, 4294901760
  %v116 = vsub.f32 %v21, %v115
  %v117 = vand.u32 %v116, 4294901760
  %v118 = vsub.f32 %v116, %v117
  %v119 = vand.u32 %v118, 4294901760
  %120 = vmatpush1.msra.mxu0 %v119
  %121 = vmatprep.subr.mxu0 0.0
  %v122 = vand.u32 %v22, 4294901760
  %v123 = vsub.f32 %v22, %v122
  %v124 = vand.u32 %v123, 4294901760
  %v125 = vsub.f32 %v123, %v124
  %v126 = vand.u32 %v125, 4294901760
  %127 = vmatpush1.msra.mxu0 %v126
  %128 = vmatprep.subr.mxu0 0.0
  %v129 = vand.u32 %v23, 4294901760
  %v130 = vsub.f32 %v23, %v129
  %v131 = vand.u32 %v130, 4294901760
  %v132 = vsub.f32 %v130, %v131
  %v133 = vand.u32 %v132, 4294901760
  %134 = vmatpush1.msra.mxu0 %v133
  %135 = vmatprep.subr.mxu0 0.0
  %136 = vmatpush1.msra.mxu0 0.0
  %137 = vmatprep.subr.mxu0 0.0
  %138 = vmatpush1.msra.mxu0 0.0
  %139 = vmatprep.subr.mxu0 0.0
  %140 = vmatpush1.msra.mxu0 0.0
  %141 = vmatprep.subr.mxu0 0.0
  %142 = vmatpush1.msra.mxu0 0.0
  %143 = vmatprep.subr.mxu0 0.0
  %144 = vmatpush1.msra.mxu0 0.0
  %145 = vmatprep.subr.mxu0 0.0
  %146 = vmatpush1.msra.mxu0 0.0
  %147 = vmatprep.subr.mxu0 0.0
  %148 = vmatpush1.msra.mxu0 0.0
  %149 = vmatprep.subr.mxu0 0.0
  %150 = vmatpush1.msra.mxu0 0.0
  %151 = vmatprep.subr.mxu0 0.0
  %152 = vmatpush1.msra.mxu0 0.0
  %153 = vmatprep.subr.mxu0 0.0
  %154 = vmatpush1.msra.mxu0 0.0
  %155 = vmatprep.subr.mxu0 0.0
  %156 = vmatpush1.msra.mxu0 0.0
  %157 = vmatprep.subr.mxu0 0.0
  %158 = vmatpush1.msra.mxu0 0.0
  %159 = vmatprep.subr.mxu0 0.0
  %160 = vmatpush1.msra.mxu0 0.0
  %161 = vmatprep.subr.mxu0 0.0
  %162 = vmatpush1.msra.mxu0 0.0
  %163 = vmatprep.subr.mxu0 0.0
  %164 = vmatpush1.msra.mxu0 0.0
  %165 = vmatprep.subr.mxu0 0.0
  %166 = vmatpush1.msra.mxu0 0.0
  %167 = vmatprep.subr.mxu0 0.0
  %168 = vmatpush1.msra.mxu0 0.0
  %169 = vmatprep.subr.mxu0 0.0
  %170 = vmatpush1.msra.mxu0 0.0
  %171 = vmatprep.subr.mxu0 0.0
  %172 = vmatpush1.msra.mxu0 0.0
  %173 = vmatprep.subr.mxu0 0.0
  %174 = vmatpush1.msra.mxu0 0.0
  %175 = vmatprep.subr.mxu0 0.0
  %176 = vmatpush1.msra.mxu0 0.0
  %177 = vmatprep.subr.mxu0 0.0
  %178 = vmatpush1.msra.mxu0 0.0
  %179 = vmatprep.subr.mxu0 0.0
  %180 = vmatpush1.msra.mxu0 0.0
  %181 = vmatprep.subr.mxu0 0.0
  %182 = vmatpush1.msra.mxu0 0.0
  %183 = vmatprep.subr.mxu0 0.0
  %184 = vmatpush1.msra.mxu0 0.0
  %185 = vmatprep.subr.mxu0 0.0
  %186 = vmatpush1.msra.mxu0 0.0
  %187 = vmatprep.subr.mxu0 0.0
  %188 = vmatpush1.msra.mxu0 0.0
  %189 = vmatprep.subr.mxu0 0.0
  %190 = vmatpush1.msra.mxu0 0.0
  %191 = vmatprep.mubr.f32.mxu0 0.0
  %v192 = vand.u32 %v26, 4294901760
  %193 = vmatmul.mubr.f32.gmra.mrb[0].mxu0 %v192
  %v194 = vpop.f32.mrb[0].mxu0
  %v195 = vadd.f32 %v104, %v194
  %v196 = vpop.f32.mrb[0].mxu0
  %197 = vdwg.mxu0
  %198 = vmatprep.subr.mxu0 0.0
  %v199 = vand.u32 %v20, 4294901760
  %v200 = vsub.f32 %v20, %v199
  %201 = vmatpush1.msra.mxu0 %v200
  %202 = vmatprep.subr.mxu0 0.0
  %v203 = vand.u32 %v21, 4294901760
  %v204 = vsub.f32 %v21, %v203
  %205 = vmatpush1.msra.mxu0 %v204
  %206 = vmatprep.subr.mxu0 0.0
  %v207 = vand.u32 %v22, 4294901760
  %v208 = vsub.f32 %v22, %v207
  %209 = vmatpush1.msra.mxu0 %v208
  %210 = vmatprep.subr.mxu0 0.0
  %v211 = vand.u32 %v23, 4294901760
  %v212 = vsub.f32 %v23, %v211
  %213 = vmatpush1.msra.mxu0 %v212
  %214 = vmatprep.subr.mxu0 0.0
  %215 = vmatpush1.msra.mxu0 0.0
  %216 = vmatprep.subr.mxu0 0.0
  %217 = vmatpush1.msra.mxu0 0.0
  %218 = vmatprep.subr.mxu0 0.0
  %219 = vmatpush1.msra.mxu0 0.0
  %220 = vmatprep.subr.mxu0 0.0
  %221 = vmatpush1.msra.mxu0 0.0
  %222 = vmatprep.subr.mxu0 0.0
  %223 = vmatpush1.msra.mxu0 0.0
  %224 = vmatprep.subr.mxu0 0.0
  %225 = vmatpush1.msra.mxu0 0.0
  %226 = vmatprep.subr.mxu0 0.0
  %227 = vmatpush1.msra.mxu0 0.0
  %228 = vmatprep.subr.mxu0 0.0
  %229 = vmatpush1.msra.mxu0 0.0
  %230 = vmatprep.subr.mxu0 0.0
  %231 = vmatpush1.msra.mxu0 0.0
  %232 = vmatprep.subr.mxu0 0.0
  %233 = vmatpush1.msra.mxu0 0.0
  %234 = vmatprep.subr.mxu0 0.0
  %235 = vmatpush1.msra.mxu0 0.0
  %236 = vmatprep.subr.mxu0 0.0
  %237 = vmatpush1.msra.mxu0 0.0
  %238 = vmatprep.subr.mxu0 0.0
  %239 = vmatpush1.msra.mxu0 0.0
  %240 = vmatprep.subr.mxu0 0.0
  %241 = vmatpush1.msra.mxu0 0.0
  %242 = vmatprep.subr.mxu0 0.0
  %243 = vmatpush1.msra.mxu0 0.0
  %244 = vmatprep.subr.mxu0 0.0
  %245 = vmatpush1.msra.mxu0 0.0
  %246 = vmatprep.subr.mxu0 0.0
  %247 = vmatpush1.msra.mxu0 0.0
  %248 = vmatprep.subr.mxu0 0.0
  %249 = vmatpush1.msra.mxu0 0.0
  %250 = vmatprep.subr.mxu0 0.0
  %251 = vmatpush1.msra.mxu0 0.0
  %252 = vmatprep.subr.mxu0 0.0
  %253 = vmatpush1.msra.mxu0 0.0
  %254 = vmatprep.subr.mxu0 0.0
  %255 = vmatpush1.msra.mxu0 0.0
  %256 = vmatprep.subr.mxu0 0.0
  %257 = vmatpush1.msra.mxu0 0.0
  %258 = vmatprep.subr.mxu0 0.0
  %259 = vmatpush1.msra.mxu0 0.0
  %260 = vmatprep.subr.mxu0 0.0
  %261 = vmatpush1.msra.mxu0 0.0
  %262 = vmatprep.subr.mxu0 0.0
  %263 = vmatpush1.msra.mxu0 0.0
  %264 = vmatprep.subr.mxu0 0.0
  %265 = vmatpush1.msra.mxu0 0.0
  %266 = vmatprep.subr.mxu0 0.0
  %267 = vmatpush1.msra.mxu0 0.0
  %268 = vmatprep.subr.mxu0 0.0
  %269 = vmatpush1.msra.mxu0 0.0
  %270 = vmatprep.mubr.f32.mxu0 0.0
  %v271 = vand.u32 %v26, 4294901760
  %v272 = vsub.f32 %v26, %v271
  %273 = vmatmul.mubr.f32.gmra.mrb[0].mxu0 %v272
  %v274 = vpop.f32.mrb[0].mxu0
  %v275 = vadd.f32 %v195, %v274
  %v276 = vpop.f32.mrb[0].mxu0
  %277 = vdwg.mxu0
  %278 = vmatprep.subr.mxu0 0.0
  %v279 = vand.u32 %v20, 4294901760
  %280 = vmatpush1.msra.mxu0 %v279
  %281 = vmatprep.subr.mxu0 0.0
  %v282 = vand.u32 %v21, 4294901760
  %283 = vmatpush1.msra.mxu0 %v282
  %284 = vmatprep.subr.mxu0 0.0
  %v285 = vand.u32 %v22, 4294901760
  %286 = vmatpush1.msra.mxu0 %v285
  %287 = vmatprep.subr.mxu0 0.0
  %v288 = vand.u32 %v23, 4294901760
  %289 = vmatpush1.msra.mxu0 %v288
  %290 = vmatprep.subr.mxu0 0.0
  %291 = vmatpush1.msra.mxu0 0.0
  %292 = vmatprep.subr.mxu0 0.0
  %293 = vmatpush1.msra.mxu0 0.0
  %294 = vmatprep.subr.mxu0 0.0
  %295 = vmatpush1.msra.mxu0 0.0
  %296 = vmatprep.subr.mxu0 0.0
  %297 = vmatpush1.msra.mxu0 0.0
  %298 = vmatprep.subr.mxu0 0.0
  %299 = vmatpush1.msra.mxu0 0.0
  %300 = vmatprep.subr.mxu0 0.0
  %301 = vmatpush1.msra.mxu0 0.0
  %302 = vmatprep.subr.mxu0 0.0
  %303 = vmatpush1.msra.mxu0 0.0
  %304 = vmatprep.subr.mxu0 0.0
  %305 = vmatpush1.msra.mxu0 0.0
  %306 = vmatprep.subr.mxu0 0.0
  %307 = vmatpush1.msra.mxu0 0.0
  %308 = vmatprep.subr.mxu0 0.0
  %309 = vmatpush1.msra.mxu0 0.0
  %310 = vmatprep.subr.mxu0 0.0
  %311 = vmatpush1.msra.mxu0 0.0
  %312 = vmatprep.subr.mxu0 0.0
  %313 = vmatpush1.msra.mxu0 0.0
  %314 = vmatprep.subr.mxu0 0.0
  %315 = vmatpush1.msra.mxu0 0.0
  %316 = vmatprep.subr.mxu0 0.0
  %317 = vmatpush1.msra.mxu0 0.0
  %318 = vmatprep.subr.mxu0 0.0
  %319 = vmatpush1.msra.mxu0 0.0
  %320 = vmatprep.subr.mxu0 0.0
  %321 = vmatpush1.msra.mxu0 0.0
  %322 = vmatprep.subr.mxu0 0.0
  %323 = vmatpush1.msra.mxu0 0.0
  %324 = vmatprep.subr.mxu0 0.0
  %325 = vmatpush1.msra.mxu0 0.0
  %326 = vmatprep.subr.mxu0 0.0
  %327 = vmatpush1.msra.mxu0 0.0
  %328 = vmatprep.subr.mxu0 0.0
  %329 = vmatpush1.msra.mxu0 0.0
  %330 = vmatprep.subr.mxu0 0.0
  %331 = vmatpush1.msra.mxu0 0.0
  %332 = vmatprep.subr.mxu0 0.0
  %333 = vmatpush1.msra.mxu0 0.0
  %334 = vmatprep.subr.mxu0 0.0
  %335 = vmatpush1.msra.mxu0 0.0
  %336 = vmatprep.subr.mxu0 0.0
  %337 = vmatpush1.msra.mxu0 0.0
  %338 = vmatprep.subr.mxu0 0.0
  %339 = vmatpush1.msra.mxu0 0.0
  %340 = vmatprep.subr.mxu0 0.0
  %341 = vmatpush1.msra.mxu0 0.0
  %342 = vmatprep.subr.mxu0 0.0
  %343 = vmatpush1.msra.mxu0 0.0
  %344 = vmatprep.subr.mxu0 0.0
  %345 = vmatpush1.msra.mxu0 0.0
  %346 = vmatprep.mubr.f32.mxu0 0.0
  %v347 = vand.u32 %v26, 4294901760
  %v348 = vsub.f32 %v26, %v347
  %v349 = vand.u32 %v348, 4294901760
  %350 = vmatmul.mubr.f32.gmra.mrb[0].mxu0 %v349
  %v351 = vpop.f32.mrb[0].mxu0
  %v352 = vadd.f32 %v275, %v351
  %v353 = vpop.f32.mrb[0].mxu0
  %354 = vdwg.mxu0
  %355 = vmatprep.subr.mxu0 0.0
  %v356 = vand.u32 %v20, 4294901760
  %v357 = vsub.f32 %v20, %v356
  %v358 = vand.u32 %v357, 4294901760
  %359 = vmatpush1.msra.mxu0 %v358
  %360 = vmatprep.subr.mxu0 0.0
  %v361 = vand.u32 %v21, 4294901760
  %v362 = vsub.f32 %v21, %v361
  %v363 = vand.u32 %v362, 4294901760
  %364 = vmatpush1.msra.mxu0 %v363
  %365 = vmatprep.subr.mxu0 0.0
  %v366 = vand.u32 %v22, 4294901760
  %v367 = vsub.f32 %v22, %v366
  %v368 = vand.u32 %v367, 4294901760
  %369 = vmatpush1.msra.mxu0 %v368
  %370 = vmatprep.subr.mxu0 0.0
  %v371 = vand.u32 %v23, 4294901760
  %v372 = vsub.f32 %v23, %v371
  %v373 = vand.u32 %v372, 4294901760
  %374 = vmatpush1.msra.mxu0 %v373
  %375 = vmatprep.subr.mxu0 0.0
  %376 = vmatpush1.msra.mxu0 0.0
  %377 = vmatprep.subr.mxu0 0.0
  %378 = vmatpush1.msra.mxu0 0.0
  %379 = vmatprep.subr.mxu0 0.0
  %380 = vmatpush1.msra.mxu0 0.0
  %381 = vmatprep.subr.mxu0 0.0
  %382 = vmatpush1.msra.mxu0 0.0
  %383 = vmatprep.subr.mxu0 0.0
  %384 = vmatpush1.msra.mxu0 0.0
  %385 = vmatprep.subr.mxu0 0.0
  %386 = vmatpush1.msra.mxu0 0.0
  %387 = vmatprep.subr.mxu0 0.0
  %388 = vmatpush1.msra.mxu0 0.0
  %389 = vmatprep.subr.mxu0 0.0
  %390 = vmatpush1.msra.mxu0 0.0
  %391 = vmatprep.subr.mxu0 0.0
  %392 = vmatpush1.msra.mxu0 0.0
  %393 = vmatprep.subr.mxu0 0.0
  %394 = vmatpush1.msra.mxu0 0.0
  %395 = vmatprep.subr.mxu0 0.0
  %396 = vmatpush1.msra.mxu0 0.0
  %397 = vmatprep.subr.mxu0 0.0
  %398 = vmatpush1.msra.mxu0 0.0
  %399 = vmatprep.subr.mxu0 0.0
  %400 = vmatpush1.msra.mxu0 0.0
  %401 = vmatprep.subr.mxu0 0.0
  %402 = vmatpush1.msra.mxu0 0.0
  %403 = vmatprep.subr.mxu0 0.0
  %404 = vmatpush1.msra.mxu0 0.0
  %405 = vmatprep.subr.mxu0 0.0
  %406 = vmatpush1.msra.mxu0 0.0
  %407 = vmatprep.subr.mxu0 0.0
  %408 = vmatpush1.msra.mxu0 0.0
  %409 = vmatprep.subr.mxu0 0.0
  %410 = vmatpush1.msra.mxu0 0.0
  %411 = vmatprep.subr.mxu0 0.0
  %412 = vmatpush1.msra.mxu0 0.0
  %413 = vmatprep.subr.mxu0 0.0
  %414 = vmatpush1.msra.mxu0 0.0
  %415 = vmatprep.subr.mxu0 0.0
  %416 = vmatpush1.msra.mxu0 0.0
  %417 = vmatprep.subr.mxu0 0.0
  %418 = vmatpush1.msra.mxu0 0.0
  %419 = vmatprep.subr.mxu0 0.0
  %420 = vmatpush1.msra.mxu0 0.0
  %421 = vmatprep.subr.mxu0 0.0
  %422 = vmatpush1.msra.mxu0 0.0
  %423 = vmatprep.subr.mxu0 0.0
  %424 = vmatpush1.msra.mxu0 0.0
  %425 = vmatprep.subr.mxu0 0.0
  %426 = vmatpush1.msra.mxu0 0.0
  %427 = vmatprep.subr.mxu0 0.0
  %428 = vmatpush1.msra.mxu0 0.0
  %429 = vmatprep.subr.mxu0 0.0
  %430 = vmatpush1.msra.mxu0 0.0
  %431 = vmatprep.mubr.f32.mxu0 0.0
  %v432 = vand.u32 %v26, 4294901760
  %433 = vmatmul.mubr.f32.gmra.mrb[0].mxu0 %v432
  %v434 = vpop.f32.mrb[0].mxu0
  %v435 = vadd.f32 %v352, %v434
  %v436 = vpop.f32.mrb[0].mxu0
  %437 = vdwg.mxu0
  %438 = vmatprep.subr.mxu0 0.0
  %v439 = vand.u32 %v20, 4294901760
  %440 = vmatpush1.msra.mxu0 %v439
  %441 = vmatprep.subr.mxu0 0.0
  %v442 = vand.u32 %v21, 4294901760
  %443 = vmatpush1.msra.mxu0 %v442
  %444 = vmatprep.subr.mxu0 0.0
  %v445 = vand.u32 %v22, 4294901760
  %446 = vmatpush1.msra.mxu0 %v445
  %447 = vmatprep.subr.mxu0 0.0
  %v448 = vand.u32 %v23, 4294901760
  %449 = vmatpush1.msra.mxu0 %v448
  %450 = vmatprep.subr.mxu0 0.0
  %451 = vmatpush1.msra.mxu0 0.0
  %452 = vmatprep.subr.mxu0 0.0
  %453 = vmatpush1.msra.mxu0 0.0
  %454 = vmatprep.subr.mxu0 0.0
  %455 = vmatpush1.msra.mxu0 0.0
  %456 = vmatprep.subr.mxu0 0.0
  %457 = vmatpush1.msra.mxu0 0.0
  %458 = vmatprep.subr.mxu0 0.0
  %459 = vmatpush1.msra.mxu0 0.0
  %460 = vmatprep.subr.mxu0 0.0
  %461 = vmatpush1.msra.mxu0 0.0
  %462 = vmatprep.subr.mxu0 0.0
  %463 = vmatpush1.msra.mxu0 0.0
  %464 = vmatprep.subr.mxu0 0.0
  %465 = vmatpush1.msra.mxu0 0.0
  %466 = vmatprep.subr.mxu0 0.0
  %467 = vmatpush1.msra.mxu0 0.0
  %468 = vmatprep.subr.mxu0 0.0
  %469 = vmatpush1.msra.mxu0 0.0
  %470 = vmatprep.subr.mxu0 0.0
  %471 = vmatpush1.msra.mxu0 0.0
  %472 = vmatprep.subr.mxu0 0.0
  %473 = vmatpush1.msra.mxu0 0.0
  %474 = vmatprep.subr.mxu0 0.0
  %475 = vmatpush1.msra.mxu0 0.0
  %476 = vmatprep.subr.mxu0 0.0
  %477 = vmatpush1.msra.mxu0 0.0
  %478 = vmatprep.subr.mxu0 0.0
  %479 = vmatpush1.msra.mxu0 0.0
  %480 = vmatprep.subr.mxu0 0.0
  %481 = vmatpush1.msra.mxu0 0.0
  %482 = vmatprep.subr.mxu0 0.0
  %483 = vmatpush1.msra.mxu0 0.0
  %484 = vmatprep.subr.mxu0 0.0
  %485 = vmatpush1.msra.mxu0 0.0
  %486 = vmatprep.subr.mxu0 0.0
  %487 = vmatpush1.msra.mxu0 0.0
  %488 = vmatprep.subr.mxu0 0.0
  %489 = vmatpush1.msra.mxu0 0.0
  %490 = vmatprep.subr.mxu0 0.0
  %491 = vmatpush1.msra.mxu0 0.0
  %492 = vmatprep.subr.mxu0 0.0
  %493 = vmatpush1.msra.mxu0 0.0
  %494 = vmatprep.subr.mxu0 0.0
  %495 = vmatpush1.msra.mxu0 0.0
  %496 = vmatprep.subr.mxu0 0.0
  %497 = vmatpush1.msra.mxu0 0.0
  %498 = vmatprep.subr.mxu0 0.0
  %499 = vmatpush1.msra.mxu0 0.0
  %500 = vmatprep.subr.mxu0 0.0
  %501 = vmatpush1.msra.mxu0 0.0
  %502 = vmatprep.subr.mxu0 0.0
  %503 = vmatpush1.msra.mxu0 0.0
  %504 = vmatprep.subr.mxu0 0.0
  %505 = vmatpush1.msra.mxu0 0.0
  %506 = vmatprep.mubr.f32.mxu0 0.0
  %v507 = vand.u32 %v26, 4294901760
  %508 = vmatmul.mubr.f32.gmra.mrb[0].mxu0 %v507
  %v509 = vpop.f32.mrb[0].mxu0
  %v510 = vadd.f32 %v435, %v509
  %v511 = vpop.f32.mrb[0].mxu0
  %512 = vdwg.mxu0
  %v513 = vadd.f32 %v18, %v510
  %v514 = vxor.u32 %v513, 2147483648
  %v515 = vmul.f32 %v514, 1.442695
  %v516 = vpow.pop %v515
  %v517 = vadd.f32 %v516, 1.0
  %v518 = vrcp.pop %v517
  %v519 = vmul.f32 1.0, %v518
  %v520 = vtanh.pop %v513
  %v521 = vld [vmem:[#allocation3] sm:$0xf]
  %523 = vrot.lane.b32.xlu0 %v521, 32
  %v524 = vpop.permute.xlu0 %523
  %v526 = vmul.f32 %v519, %v524
  %528 = vrot.lane.b32.xlu0 %v520, 64
  %v529 = vpop.permute.xlu0 %528
  %v531 = vmul.f32 %v519, %v529
  %533 = vrot.lane.b32.xlu0 %v531, 32
  %v534 = vpop.permute.xlu0 %533
  %v536 = vadd.f32 %v526, %v534
  %v537 = vtanh.pop %v536
  %539 = vrot.lane.b32.xlu0 %v537, 64
  %v540 = vpop.permute.xlu0 %539
  %v542 = vmul.f32 %v519, %v540
  %544 = vrot.lane.b32.xlu0 %v536, 96
  %v545 = vpop.permute.xlu0 %544
  %vm547 = vcmask 257024
  %548 = vst.msk [vmem:[#allocation3] sm:$0xf] %vm547, %v545
  %550 = vrot.lane.b32.xlu0 %v542, 32
  %v551 = vpop.permute.xlu0 %550
  %553 = vst.msk [vmem:[#allocation2] sm:$0xf] %vm547, %v551
  %554 = vst.msk [vmem:[%s2] sm:$0xf] %vm547, %v551
  %s555 = scalar_lea.vmem %s0, 4
  %v556 = vld [vmem:[%s555] sm:$0xf]
  %v557 = vld [vmem:[#allocation2] sm:$0xf]
  %v558 = vld [vmem:[%s1] sm:$0xff]
  %v559 = vld [vmem:[%s1 + $0x8] sm:$0xff]
  %v560 = vld [vmem:[%s1 + $0x10] sm:$0xff]
  %v561 = vld [vmem:[%s1 + $0x18] sm:$0xff]
  %v563 = vsel %vm24, %v557, 0
  %565 = vmatprep.subr.mxu0 0.0
  %v566 = vand.u32 %v558, 4294901760
  %567 = vmatpush1.msra.mxu0 %v566
  %568 = vmatprep.subr.mxu0 0.0
  %v569 = vand.u32 %v559, 4294901760
  %570 = vmatpush1.msra.mxu0 %v569
  %571 = vmatprep.subr.mxu0 0.0
  %v572 = vand.u32 %v560, 4294901760
  %573 = vmatpush1.msra.mxu0 %v572
  %574 = vmatprep.subr.mxu0 0.0
  %v575 = vand.u32 %v561, 4294901760
  %576 = vmatpush1.msra.mxu0 %v575
  %577 = vmatprep.subr.mxu0 0.0
  %578 = vmatpush1.msra.mxu0 0.0
  %579 = vmatprep.subr.mxu0 0.0
  %580 = vmatpush1.msra.mxu0 0.0
  %581 = vmatprep.subr.mxu0 0.0
  %582 = vmatpush1.msra.mxu0 0.0
  %583 = vmatprep.subr.mxu0 0.0
  %584 = vmatpush1.msra.mxu0 0.0
  %585 = vmatprep.subr.mxu0 0.0
  %586 = vmatpush1.msra.mxu0 0.0
  %587 = vmatprep.subr.mxu0 0.0
  %588 = vmatpush1.msra.mxu0 0.0
  %589 = vmatprep.subr.mxu0 0.0
  %590 = vmatpush1.msra.mxu0 0.0
  %591 = vmatprep.subr.mxu0 0.0
  %592 = vmatpush1.msra.mxu0 0.0
  %593 = vmatprep.subr.mxu0 0.0
  %594 = vmatpush1.msra.mxu0 0.0
  %595 = vmatprep.subr.mxu0 0.0
  %596 = vmatpush1.msra.mxu0 0.0
  %597 = vmatprep.subr.mxu0 0.0
  %598 = vmatpush1.msra.mxu0 0.0
  %599 = vmatprep.subr.mxu0 0.0
  %600 = vmatpush1.msra.mxu0 0.0
  %601 = vmatprep.subr.mxu0 0.0
  %602 = vmatpush1.msra.mxu0 0.0
  %603 = vmatprep.subr.mxu0 0.0
  %604 = vmatpush1.msra.mxu0 0.0
  %605 = vmatprep.subr.mxu0 0.0
  %606 = vmatpush1.msra.mxu0 0.0
  %607 = vmatprep.subr.mxu0 0.0
  %608 = vmatpush1.msra.mxu0 0.0
  %609 = vmatprep.subr.mxu0 0.0
  %610 = vmatpush1.msra.mxu0 0.0
  %611 = vmatprep.subr.mxu0 0.0
  %612 = vmatpush1.msra.mxu0 0.0
  %613 = vmatprep.subr.mxu0 0.0
  %614 = vmatpush1.msra.mxu0 0.0
  %615 = vmatprep.subr.mxu0 0.0
  %616 = vmatpush1.msra.mxu0 0.0
  %617 = vmatprep.subr.mxu0 0.0
  %618 = vmatpush1.msra.mxu0 0.0
  %619 = vmatprep.subr.mxu0 0.0
  %620 = vmatpush1.msra.mxu0 0.0
  %621 = vmatprep.subr.mxu0 0.0
  %622 = vmatpush1.msra.mxu0 0.0
  %623 = vmatprep.subr.mxu0 0.0
  %624 = vmatpush1.msra.mxu0 0.0
  %625 = vmatprep.subr.mxu0 0.0
  %626 = vmatpush1.msra.mxu0 0.0
  %627 = vmatprep.subr.mxu0 0.0
  %628 = vmatpush1.msra.mxu0 0.0
  %629 = vmatprep.subr.mxu0 0.0
  %630 = vmatpush1.msra.mxu0 0.0
  %631 = vmatprep.subr.mxu0 0.0
  %632 = vmatpush1.msra.mxu0 0.0
  %633 = vmatprep.mubr.f32.mxu0 0.0
  %v634 = vand.u32 %v563, 4294901760
  %v635 = vsub.f32 %v563, %v634
  %v636 = vand.u32 %v635, 4294901760
  %v637 = vsub.f32 %v635, %v636
  %v638 = vand.u32 %v637, 4294901760
  %639 = vmatmul.mubr.f32.gmra.mrb[0].mxu0 %v638
  %v640 = vpop.f32.mrb[0].mxu0
  %v641 = vadd.f32 0.0, %v640
  %v642 = vpop.f32.mrb[0].mxu0
  %643 = vdwg.mxu0
  %644 = vmatprep.subr.mxu0 0.0
  %v645 = vand.u32 %v558, 4294901760
  %v646 = vsub.f32 %v558, %v645
  %v647 = vand.u32 %v646, 4294901760
  %v648 = vsub.f32 %v646, %v647
  %v649 = vand.u32 %v648, 4294901760
  %650 = vmatpush1.msra.mxu0 %v649
  %651 = vmatprep.subr.mxu0 0.0
  %v652 = vand.u32 %v559, 4294901760
  %v653 = vsub.f32 %v559, %v652
  %v654 = vand.u32 %v653, 4294901760
  %v655 = vsub.f32 %v653, %v654
  %v656 = vand.u32 %v655, 4294901760
  %657 = vmatpush1.msra.mxu0 %v656
  %658 = vmatprep.subr.mxu0 0.0
  %v659 = vand.u32 %v560, 4294901760
  %v660 = vsub.f32 %v560, %v659
  %v661 = vand.u32 %v660, 4294901760
  %v662 = vsub.f32 %v660, %v661
  %v663 = vand.u32 %v662, 4294901760
  %664 = vmatpush1.msra.mxu0 %v663
  %665 = vmatprep.subr.mxu0 0.0
  %v666 = vand.u32 %v561, 4294901760
  %v667 = vsub.f32 %v561, %v666
  %v668 = vand.u32 %v667, 4294901760
  %v669 = vsub.f32 %v667, %v668
  %v670 = vand.u32 %v669, 4294901760
  %671 = vmatpush1.msra.mxu0 %v670
  %672 = vmatprep.subr.mxu0 0.0
  %673 = vmatpush1.msra.mxu0 0.0
  %674 = vmatprep.subr.mxu0 0.0
  %675 = vmatpush1.msra.mxu0 0.0
  %676 = vmatprep.subr.mxu0 0.0
  %677 = vmatpush1.msra.mxu0 0.0
  %678 = vmatprep.subr.mxu0 0.0
  %679 = vmatpush1.msra.mxu0 0.0
  %680 = vmatprep.subr.mxu0 0.0
  %681 = vmatpush1.msra.mxu0 0.0
  %682 = vmatprep.subr.mxu0 0.0
  %683 = vmatpush1.msra.mxu0 0.0
  %684 = vmatprep.subr.mxu0 0.0
  %685 = vmatpush1.msra.mxu0 0.0
  %686 = vmatprep.subr.mxu0 0.0
  %687 = vmatpush1.msra.mxu0 0.0
  %688 = vmatprep.subr.mxu0 0.0
  %689 = vmatpush1.msra.mxu0 0.0
  %690 = vmatprep.subr.mxu0 0.0
  %691 = vmatpush1.msra.mxu0 0.0
  %692 = vmatprep.subr.mxu0 0.0
  %693 = vmatpush1.msra.mxu0 0.0
  %694 = vmatprep.subr.mxu0 0.0
  %695 = vmatpush1.msra.mxu0 0.0
  %696 = vmatprep.subr.mxu0 0.0
  %697 = vmatpush1.msra.mxu0 0.0
  %698 = vmatprep.subr.mxu0 0.0
  %699 = vmatpush1.msra.mxu0 0.0
  %700 = vmatprep.subr.mxu0 0.0
  %701 = vmatpush1.msra.mxu0 0.0
  %702 = vmatprep.subr.mxu0 0.0
  %703 = vmatpush1.msra.mxu0 0.0
  %704 = vmatprep.subr.mxu0 0.0
  %705 = vmatpush1.msra.mxu0 0.0
  %706 = vmatprep.subr.mxu0 0.0
  %707 = vmatpush1.msra.mxu0 0.0
  %708 = vmatprep.subr.mxu0 0.0
  %709 = vmatpush1.msra.mxu0 0.0
  %710 = vmatprep.subr.mxu0 0.0
  %711 = vmatpush1.msra.mxu0 0.0
  %712 = vmatprep.subr.mxu0 0.0
  %713 = vmatpush1.msra.mxu0 0.0
  %714 = vmatprep.subr.mxu0 0.0
  %715 = vmatpush1.msra.mxu0 0.0
  %716 = vmatprep.subr.mxu0 0.0
  %717 = vmatpush1.msra.mxu0 0.0
  %718 = vmatprep.subr.mxu0 0.0
  %719 = vmatpush1.msra.mxu0 0.0
  %720 = vmatprep.subr.mxu0 0.0
  %721 = vmatpush1.msra.mxu0 0.0
  %722 = vmatprep.subr.mxu0 0.0
  %723 = vmatpush1.msra.mxu0 0.0
  %724 = vmatprep.subr.mxu0 0.0
  %725 = vmatpush1.msra.mxu0 0.0
  %726 = vmatprep.subr.mxu0 0.0
  %727 = vmatpush1.msra.mxu0 0.0
  %728 = vmatprep.mubr.f32.mxu0 0.0
  %v729 = vand.u32 %v563, 4294901760
  %730 = vmatmul.mubr.f32.gmra.mrb[0].mxu0 %v729
  %v731 = vpop.f32.mrb[0].mxu0
  %v732 = vadd.f32 %v641, %v731
  %v733 = vpop.f32.mrb[0].mxu0
  %734 = vdwg.mxu0
  %735 = vmatprep.subr.mxu0 0.0
  %v736 = vand.u32 %v558, 4294901760
  %v737 = vsub.f32 %v558, %v736
  %738 = vmatpush1.msra.mxu0 %v737
  %739 = vmatprep.subr.mxu0 0.0
  %v740 = vand.u32 %v559, 4294901760
  %v741 = vsub.f32 %v559, %v740
  %742 = vmatpush1.msra.mxu0 %v741
  %743 = vmatprep.subr.mxu0 0.0
  %v744 = vand.u32 %v560, 4294901760
  %v745 = vsub.f32 %v560, %v744
  %746 = vmatpush1.msra.mxu0 %v745
  %747 = vmatprep.subr.mxu0 0.0
  %v748 = vand.u32 %v561, 4294901760
  %v749 = vsub.f32 %v561, %v748
  %750 = vmatpush1.msra.mxu0 %v749
  %751 = vmatprep.subr.mxu0 0.0
  %752 = vmatpush1.msra.mxu0 0.0
  %753 = vmatprep.subr.mxu0 0.0
  %754 = vmatpush1.msra.mxu0 0.0
  %755 = vmatprep.subr.mxu0 0.0
  %756 = vmatpush1.msra.mxu0 0.0
  %757 = vmatprep.subr.mxu0 0.0
  %758 = vmatpush1.msra.mxu0 0.0
  %759 = vmatprep.subr.mxu0 0.0
  %760 = vmatpush1.msra.mxu0 0.0
  %761 = vmatprep.subr.mxu0 0.0
  %762 = vmatpush1.msra.mxu0 0.0
  %763 = vmatprep.subr.mxu0 0.0
  %764 = vmatpush1.msra.mxu0 0.0
  %765 = vmatprep.subr.mxu0 0.0
  %766 = vmatpush1.msra.mxu0 0.0
  %767 = vmatprep.subr.mxu0 0.0
  %768 = vmatpush1.msra.mxu0 0.0
  %769 = vmatprep.subr.mxu0 0.0
  %770 = vmatpush1.msra.mxu0 0.0
  %771 = vmatprep.subr.mxu0 0.0
  %772 = vmatpush1.msra.mxu0 0.0
  %773 = vmatprep.subr.mxu0 0.0
  %774 = vmatpush1.msra.mxu0 0.0
  %775 = vmatprep.subr.mxu0 0.0
  %776 = vmatpush1.msra.mxu0 0.0
  %777 = vmatprep.subr.mxu0 0.0
  %778 = vmatpush1.msra.mxu0 0.0
  %779 = vmatprep.subr.mxu0 0.0
  %780 = vmatpush1.msra.mxu0 0.0
  %781 = vmatprep.subr.mxu0 0.0
  %782 = vmatpush1.msra.mxu0 0.0
  %783 = vmatprep.subr.mxu0 0.0
  %784 = vmatpush1.msra.mxu0 0.0
  %785 = vmatprep.subr.mxu0 0.0
  %786 = vmatpush1.msra.mxu0 0.0
  %787 = vmatprep.subr.mxu0 0.0
  %788 = vmatpush1.msra.mxu0 0.0
  %789 = vmatprep.subr.mxu0 0.0
  %790 = vmatpush1.msra.mxu0 0.0
  %791 = vmatprep.subr.mxu0 0.0
  %792 = vmatpush1.msra.mxu0 0.0
  %793 = vmatprep.subr.mxu0 0.0
  %794 = vmatpush1.msra.mxu0 0.0
  %795 = vmatprep.subr.mxu0 0.0
  %796 = vmatpush1.msra.mxu0 0.0
  %797 = vmatprep.subr.mxu0 0.0
  %798 = vmatpush1.msra.mxu0 0.0
  %799 = vmatprep.subr.mxu0 0.0
  %800 = vmatpush1.msra.mxu0 0.0
  %801 = vmatprep.subr.mxu0 0.0
  %802 = vmatpush1.msra.mxu0 0.0
  %803 = vmatprep.subr.mxu0 0.0
  %804 = vmatpush1.msra.mxu0 0.0
  %805 = vmatprep.subr.mxu0 0.0
  %806 = vmatpush1.msra.mxu0 0.0
  %807 = vmatprep.mubr.f32.mxu0 0.0
  %v808 = vand.u32 %v563, 4294901760
  %v809 = vsub.f32 %v563, %v808
  %810 = vmatmul.mubr.f32.gmra.mrb[0].mxu0 %v809
  %v811 = vpop.f32.mrb[0].mxu0
  %v812 = vadd.f32 %v732, %v811
  %v813 = vpop.f32.mrb[0].mxu0
  %814 = vdwg.mxu0
  %815 = vmatprep.subr.mxu0 0.0
  %v816 = vand.u32 %v558, 4294901760
  %817 = vmatpush1.msra.mxu0 %v816
  %818 = vmatprep.subr.mxu0 0.0
  %v819 = vand.u32 %v559, 4294901760
  %820 = vmatpush1.msra.mxu0 %v819
  %821 = vmatprep.subr.mxu0 0.0
  %v822 = vand.u32 %v560, 4294901760
  %823 = vmatpush1.msra.mxu0 %v822
  %824 = vmatprep.subr.mxu0 0.0
  %v825 = vand.u32 %v561, 4294901760
  %826 = vmatpush1.msra.mxu0 %v825
  %827 = vmatprep.subr.mxu0 0.0
  %828 = vmatpush1.msra.mxu0 0.0
  %829 = vmatprep.subr.mxu0 0.0
  %830 = vmatpush1.msra.mxu0 0.0
  %831 = vmatprep.subr.mxu0 0.0
  %832 = vmatpush1.msra.mxu0 0.0
  %833 = vmatprep.subr.mxu0 0.0
  %834 = vmatpush1.msra.mxu0 0.0
  %835 = vmatprep.subr.mxu0 0.0
  %836 = vmatpush1.msra.mxu0 0.0
  %837 = vmatprep.subr.mxu0 0.0
  %838 = vmatpush1.msra.mxu0 0.0
  %839 = vmatprep.subr.mxu0 0.0
  %840 = vmatpush1.msra.mxu0 0.0
  %841 = vmatprep.subr.mxu0 0.0
  %842 = vmatpush1.msra.mxu0 0.0
  %843 = vmatprep.subr.mxu0 0.0
  %844 = vmatpush1.msra.mxu0 0.0
  %845 = vmatprep.subr.mxu0 0.0
  %846 = vmatpush1.msra.mxu0 0.0
  %847 = vmatprep.subr.mxu0 0.0
  %848 = vmatpush1.msra.mxu0 0.0
  %849 = vmatprep.subr.mxu0 0.0
  %850 = vmatpush1.msra.mxu0 0.0
  %851 = vmatprep.subr.mxu0 0.0
  %852 = vmatpush1.msra.mxu0 0.0
  %853 = vmatprep.subr.mxu0 0.0
  %854 = vmatpush1.msra.mxu0 0.0
  %855 = vmatprep.subr.mxu0 0.0
  %856 = vmatpush1.msra.mxu0 0.0
  %857 = vmatprep.subr.mxu0 0.0
  %858 = vmatpush1.msra.mxu0 0.0
  %859 = vmatprep.subr.mxu0 0.0
  %860 = vmatpush1.msra.mxu0 0.0
  %861 = vmatprep.subr.mxu0 0.0
  %862 = vmatpush1.msra.mxu0 0.0
  %863 = vmatprep.subr.mxu0 0.0
  %864 = vmatpush1.msra.mxu0 0.0
  %865 = vmatprep.subr.mxu0 0.0
  %866 = vmatpush1.msra.mxu0 0.0
  %867 = vmatprep.subr.mxu0 0.0
  %868 = vmatpush1.msra.mxu0 0.0
  %869 = vmatprep.subr.mxu0 0.0
  %870 = vmatpush1.msra.mxu0 0.0
  %871 = vmatprep.subr.mxu0 0.0
  %872 = vmatpush1.msra.mxu0 0.0
  %873 = vmatprep.subr.mxu0 0.0
  %874 = vmatpush1.msra.mxu0 0.0
  %875 = vmatprep.subr.mxu0 0.0
  %876 = vmatpush1.msra.mxu0 0.0
  %877 = vmatprep.subr.mxu0 0.0
  %878 = vmatpush1.msra.mxu0 0.0
  %879 = vmatprep.subr.mxu0 0.0
  %880 = vmatpush1.msra.mxu0 0.0
  %881 = vmatprep.subr.mxu0 0.0
  %882 = vmatpush1.msra.mxu0 0.0
  %883 = vmatprep.mubr.f32.mxu0 0.0
  %v884 = vand.u32 %v563, 4294901760
  %v885 = vsub.f32 %v563, %v884
  %v886 = vand.u32 %v885, 4294901760
  %887 = vmatmul.mubr.f32.gmra.mrb[0].mxu0 %v886
  %v888 = vpop.f32.mrb[0].mxu0
  %v889 = vadd.f32 %v812, %v888
  %v890 = vpop.f32.mrb[0].mxu0
  %891 = vdwg.mxu0
  %892 = vmatprep.subr.mxu0 0.0
  %v893 = vand.u32 %v558, 4294901760
  %v894 = vsub.f32 %v558, %v893
  %v895 = vand.u32 %v894, 4294901760
  %896 = vmatpush1.msra.mxu0 %v895
  %897 = vmatprep.subr.mxu0 0.0
  %v898 = vand.u32 %v559, 4294901760
  %v899 = vsub.f32 %v559, %v898
  %v900 = vand.u32 %v899, 4294901760
  %901 = vmatpush1.msra.mxu0 %v900
  %902 = vmatprep.subr.mxu0 0.0
  %v903 = vand.u32 %v560, 4294901760
  %v904 = vsub.f32 %v560, %v903
  %v905 = vand.u32 %v904, 4294901760
  %906 = vmatpush1.msra.mxu0 %v905
  %907 = vmatprep.subr.mxu0 0.0
  %v908 = vand.u32 %v561, 4294901760
  %v909 = vsub.f32 %v561, %v908
  %v910 = vand.u32 %v909, 4294901760
  %911 = vmatpush1.msra.mxu0 %v910
  %912 = vmatprep.subr.mxu0 0.0
  %913 = vmatpush1.msra.mxu0 0.0
  %914 = vmatprep.subr.mxu0 0.0
  %915 = vmatpush1.msra.mxu0 0.0
  %916 = vmatprep.subr.mxu0 0.0
  %917 = vmatpush1.msra.mxu0 0.0
  %918 = vmatprep.subr.mxu0 0.0
  %919 = vmatpush1.msra.mxu0 0.0
  %920 = vmatprep.subr.mxu0 0.0
  %921 = vmatpush1.msra.mxu0 0.0
  %922 = vmatprep.subr.mxu0 0.0
  %923 = vmatpush1.msra.mxu0 0.0
  %924 = vmatprep.subr.mxu0 0.0
  %925 = vmatpush1.msra.mxu0 0.0
  %926 = vmatprep.subr.mxu0 0.0
  %927 = vmatpush1.msra.mxu0 0.0
  %928 = vmatprep.subr.mxu0 0.0
  %929 = vmatpush1.msra.mxu0 0.0
  %930 = vmatprep.subr.mxu0 0.0
  %931 = vmatpush1.msra.mxu0 0.0
  %932 = vmatprep.subr.mxu0 0.0
  %933 = vmatpush1.msra.mxu0 0.0
  %934 = vmatprep.subr.mxu0 0.0
  %935 = vmatpush1.msra.mxu0 0.0
  %936 = vmatprep.subr.mxu0 0.0
  %937 = vmatpush1.msra.mxu0 0.0
  %938 = vmatprep.subr.mxu0 0.0
  %939 = vmatpush1.msra.mxu0 0.0
  %940 = vmatprep.subr.mxu0 0.0
  %941 = vmatpush1.msra.mxu0 0.0
  %942 = vmatprep.subr.mxu0 0.0
  %943 = vmatpush1.msra.mxu0 0.0
  %944 = vmatprep.subr.mxu0 0.0
  %945 = vmatpush1.msra.mxu0 0.0
  %946 = vmatprep.subr.mxu0 0.0
  %947 = vmatpush1.msra.mxu0 0.0
  %948 = vmatprep.subr.mxu0 0.0
  %949 = vmatpush1.msra.mxu0 0.0
  %950 = vmatprep.subr.mxu0 0.0
  %951 = vmatpush1.msra.mxu0 0.0
  %952 = vmatprep.subr.mxu0 0.0
  %953 = vmatpush1.msra.mxu0 0.0
  %954 = vmatprep.subr.mxu0 0.0
  %955 = vmatpush1.msra.mxu0 0.0
  %956 = vmatprep.subr.mxu0 0.0
  %957 = vmatpush1.msra.mxu0 0.0
  %958 = vmatprep.subr.mxu0 0.0
  %959 = vmatpush1.msra.mxu0 0.0
  %960 = vmatprep.subr.mxu0 0.0
  %961 = vmatpush1.msra.mxu0 0.0
  %962 = vmatprep.subr.mxu0 0.0
  %963 = vmatpush1.msra.mxu0 0.0
  %964 = vmatprep.subr.mxu0 0.0
  %965 = vmatpush1.msra.mxu0 0.0
  %966 = vmatprep.subr.mxu0 0.0
  %967 = vmatpush1.msra.mxu0 0.0
  %968 = vmatprep.mubr.f32.mxu0 0.0
  %v969 = vand.u32 %v563, 4294901760
  %970 = vmatmul.mubr.f32.gmra.mrb[0].mxu0 %v969
  %v971 = vpop.f32.mrb[0].mxu0
  %v972 = vadd.f32 %v889, %v971
  %v973 = vpop.f32.mrb[0].mxu0
  %974 = vdwg.mxu0
  %975 = vmatprep.subr.mxu0 0.0
  %v976 = vand.u32 %v558, 4294901760
  %977 = vmatpush1.msra.mxu0 %v976
  %978 = vmatprep.subr.mxu0 0.0
  %v979 = vand.u32 %v559, 4294901760
  %980 = vmatpush1.msra.mxu0 %v979
  %981 = vmatprep.subr.mxu0 0.0
  %v982 = vand.u32 %v560, 4294901760
  %983 = vmatpush1.msra.mxu0 %v982
  %984 = vmatprep.subr.mxu0 0.0
  %v985 = vand.u32 %v561, 4294901760
  %986 = vmatpush1.msra.mxu0 %v985
  %987 = vmatprep.subr.mxu0 0.0
  %988 = vmatpush1.msra.mxu0 0.0
  %989 = vmatprep.subr.mxu0 0.0
  %990 = vmatpush1.msra.mxu0 0.0
  %991 = vmatprep.subr.mxu0 0.0
  %992 = vmatpush1.msra.mxu0 0.0
  %993 = vmatprep.subr.mxu0 0.0
  %994 = vmatpush1.msra.mxu0 0.0
  %995 = vmatprep.subr.mxu0 0.0
  %996 = vmatpush1.msra.mxu0 0.0
  %997 = vmatprep.subr.mxu0 0.0
  %998 = vmatpush1.msra.mxu0 0.0
  %999 = vmatprep.subr.mxu0 0.0
  %1000 = vmatpush1.msra.mxu0 0.0
  %1001 = vmatprep.subr.mxu0 0.0
  %1002 = vmatpush1.msra.mxu0 0.0
  %1003 = vmatprep.subr.mxu0 0.0
  %1004 = vmatpush1.msra.mxu0 0.0
  %1005 = vmatprep.subr.mxu0 0.0
  %1006 = vmatpush1.msra.mxu0 0.0
  %1007 = vmatprep.subr.mxu0 0.0
  %1008 = vmatpush1.msra.mxu0 0.0
  %1009 = vmatprep.subr.mxu0 0.0
  %1010 = vmatpush1.msra.mxu0 0.0
  %1011 = vmatprep.subr.mxu0 0.0
  %1012 = vmatpush1.msra.mxu0 0.0
  %1013 = vmatprep.subr.mxu0 0.0
  %1014 = vmatpush1.msra.mxu0 0.0
  %1015 = vmatprep.subr.mxu0 0.0
  %1016 = vmatpush1.msra.mxu0 0.0
  %1017 = vmatprep.subr.mxu0 0.0
  %1018 = vmatpush1.msra.mxu0 0.0
  %1019 = vmatprep.subr.mxu0 0.0
  %1020 = vmatpush1.msra.mxu0 0.0
  %1021 = vmatprep.subr.mxu0 0.0
  %1022 = vmatpush1.msra.mxu0 0.0
  %1023 = vmatprep.subr.mxu0 0.0
  %1024 = vmatpush1.msra.mxu0 0.0
  %1025 = vmatprep.subr.mxu0 0.0
  %1026 = vmatpush1.msra.mxu0 0.0
  %1027 = vmatprep.subr.mxu0 0.0
  %1028 = vmatpush1.msra.mxu0 0.0
  %1029 = vmatprep.subr.mxu0 0.0
  %1030 = vmatpush1.msra.mxu0 0.0
  %1031 = vmatprep.subr.mxu0 0.0
  %1032 = vmatpush1.msra.mxu0 0.0
  %1033 = vmatprep.subr.mxu0 0.0
  %1034 = vmatpush1.msra.mxu0 0.0
  %1035 = vmatprep.subr.mxu0 0.0
  %1036 = vmatpush1.msra.mxu0 0.0
  %1037 = vmatprep.subr.mxu0 0.0
  %1038 = vmatpush1.msra.mxu0 0.0
  %1039 = vmatprep.subr.mxu0 0.0
  %1040 = vmatpush1.msra.mxu0 0.0
  %1041 = vmatprep.subr.mxu0 0.0
  %1042 = vmatpush1.msra.mxu0 0.0
  %1043 = vmatprep.mubr.f32.mxu0 0.0
  %v1044 = vand.u32 %v563, 4294901760
  %1045 = vmatmul.mubr.f32.gmra.mrb[0].mxu0 %v1044
  %v1046 = vpop.f32.mrb[0].mxu0
  %v1047 = vadd.f32 %v972, %v1046
  %v1048 = vpop.f32.mrb[0].mxu0
  %1049 = vdwg.mxu0
  %v1050 = vadd.f32 %v556, %v1047
  %v1051 = vxor.u32 %v1050, 2147483648
  %v1052 = vmul.f32 %v1051, 1.442695
  %v1053 = vpow.pop %v1052
  %v1054 = vadd.f32 %v1053, 1.0
  %v1055 = vrcp.pop %v1054
  %v1056 = vmul.f32 1.0, %v1055
  %v1057 = vtanh.pop %v1050
  %v1058 = vld [vmem:[#allocation3] sm:$0xf]
  %1060 = vrot.lane.b32.xlu0 %v1058, 32
  %v1061 = vpop.permute.xlu0 %1060
  %v1063 = vmul.f32 %v1056, %v1061
  %1065 = vrot.lane.b32.xlu0 %v1057, 64
  %v1066 = vpop.permute.xlu0 %1065
  %v1068 = vmul.f32 %v1056, %v1066
  %1070 = vrot.lane.b32.xlu0 %v1068, 32
  %v1071 = vpop.permute.xlu0 %1070
  %v1073 = vadd.f32 %v1063, %v1071
  %v1074 = vtanh.pop %v1073
  %1076 = vrot.lane.b32.xlu0 %v1074, 64
  %v1077 = vpop.permute.xlu0 %1076
  %v1079 = vmul.f32 %v1056, %v1077
  %1081 = vrot.lane.b32.xlu0 %v1073, 96
  %v1082 = vpop.permute.xlu0 %1081
  %1084 = vst.msk [vmem:[#allocation3] sm:$0xf] %vm547, %v1082
  %1086 = vrot.lane.b32.xlu0 %v1079, 32
  %v1087 = vpop.permute.xlu0 %1086
  %1089 = vst.msk [vmem:[#allocation2] sm:$0xf] %vm547, %v1087
  %s1090 = scalar_lea.vmem %s2, 4
  %1091 = vst.msk [vmem:[%s1090] sm:$0xf] %vm547, %v1087
  %s1092 = scalar_lea.vmem %s0, 8
  %v1093 = vld [vmem:[%s1092] sm:$0xf]
  %v1094 = vld [vmem:[#allocation2] sm:$0xf]
  %v1095 = vld [vmem:[%s1] sm:$0xff]
  %v1096 = vld [vmem:[%s1 + $0x8] sm:$0xff]
  %v1097 = vld [vmem:[%s1 + $0x10] sm:$0xff]
  %v1098 = vld [vmem:[%s1 + $0x18] sm:$0xff]
  %v1100 = vsel %vm24, %v1094, 0
  %1102 = vmatprep.subr.mxu0 0.0
  %v1103 = vand.u32 %v1095, 4294901760
  %1104 = vmatpush1.msra.mxu0 %v1103
  %1105 = vmatprep.subr.mxu0 0.0
  %v1106 = vand.u32 %v1096, 4294901760
  %1107 = vmatpush1.msra.mxu0 %v1106
  %1108 = vmatprep.subr.mxu0 0.0
  %v1109 = vand.u32 %v1097, 4294901760
  %1110 = vmatpush1.msra.mxu0 %v1109
  %1111 = vmatprep.subr.mxu0 0.0
  %v1112 = vand.u32 %v1098, 4294901760
  %1113 = vmatpush1.msra.mxu0 %v1112
  %1114 = vmatprep.subr.mxu0 0.0
  %1115 = vmatpush1.msra.mxu0 0.0
  %1116 = vmatprep.subr.mxu0 0.0
  %1117 = vmatpush1.msra.mxu0 0.0
  %1118 = vmatprep.subr.mxu0 0.0
  %1119 = vmatpush1.msra.mxu0 0.0
  %1120 = vmatprep.subr.mxu0 0.0
  %1121 = vmatpush1.msra.mxu0 0.0
  %1122 = vmatprep.subr.mxu0 0.0
  %1123 = vmatpush1.msra.mxu0 0.0
  %1124 = vmatprep.subr.mxu0 0.0
  %1125 = vmatpush1.msra.mxu0 0.0
  %1126 = vmatprep.subr.mxu0 0.0
  %1127 = vmatpush1.msra.mxu0 0.0
  %1128 = vmatprep.subr.mxu0 0.0
  %1129 = vmatpush1.msra.mxu0 0.0
  %1130 = vmatprep.subr.mxu0 0.0
  %1131 = vmatpush1.msra.mxu0 0.0
  %1132 = vmatprep.subr.mxu0 0.0
  %1133 = vmatpush1.msra.mxu0 0.0
  %1134 = vmatprep.subr.mxu0 0.0
  %1135 = vmatpush1.msra.mxu0 0.0
  %1136 = vmatprep.subr.mxu0 0.0
  %1137 = vmatpush1.msra.mxu0 0.0
  %1138 = vmatprep.subr.mxu0 0.0
  %1139 = vmatpush1.msra.mxu0 0.0
  %1140 = vmatprep.subr.mxu0 0.0
  %1141 = vmatpush1.msra.mxu0 0.0
  %1142 = vmatprep.subr.mxu0 0.0
  %1143 = vmatpush1.msra.mxu0 0.0
  %1144 = vmatprep.subr.mxu0 0.0
  %1145 = vmatpush1.msra.mxu0 0.0
  %1146 = vmatprep.subr.mxu0 0.0
  %1147 = vmatpush1.msra.mxu0 0.0
  %1148 = vmatprep.subr.mxu0 0.0
  %1149 = vmatpush1.msra.mxu0 0.0
  %1150 = vmatprep.subr.mxu0 0.0
  %1151 = vmatpush1.msra.mxu0 0.0
  %1152 = vmatprep.subr.mxu0 0.0
  %1153 = vmatpush1.msra.mxu0 0.0
  %1154 = vmatprep.subr.mxu0 0.0
  %1155 = vmatpush1.msra.mxu0 0.0
  %1156 = vmatprep.subr.mxu0 0.0
  %1157 = vmatpush1.msra.mxu0 0.0
  %1158 = vmatprep.subr.mxu0 0.0
  %1159 = vmatpush1.msra.mxu0 0.0
  %1160 = vmatprep.subr.mxu0 0.0
  %1161 = vmatpush1.msra.mxu0 0.0
  %1162 = vmatprep.subr.mxu0 0.0
  %1163 = vmatpush1.msra.mxu0 0.0
  %1164 = vmatprep.subr.mxu0 0.0
  %1165 = vmatpush1.msra.mxu0 0.0
  %1166 = vmatprep.subr.mxu0 0.0
  %1167 = vmatpush1.msra.mxu0 0.0
  %1168 = vmatprep.subr.mxu0 0.0
  %1169 = vmatpush1.msra.mxu0 0.0
  %1170 = vmatprep.mubr.f32.mxu0 0.0
  %v1171 = vand.u32 %v1100, 4294901760
  %v1172 = vsub.f32 %v1100, %v1171
  %v1173 = vand.u32 %v1172, 4294901760
  %v1174 = vsub.f32 %v1172, %v1173
  %v1175 = vand.u32 %v1174, 4294901760
  %1176 = vmatmul.mubr.f32.gmra.mrb[0].mxu0 %v1175
  %v1177 = vpop.f32.mrb[0].mxu0
  %v1178 = vadd.f32 0.0, %v1177
  %v1179 = vpop.f32.mrb[0].mxu0
  %1180 = vdwg.mxu0
  %1181 = vmatprep.subr.mxu0 0.0
  %v1182 = vand.u32 %v1095, 4294901760
  %v1183 = vsub.f32 %v1095, %v1182
  %v1184 = vand.u32 %v1183, 4294901760
  %v1185 = vsub.f32 %v1183, %v1184
  %v1186 = vand.u32 %v1185, 4294901760
  %1187 = vmatpush1.msra.mxu0 %v1186
  %1188 = vmatprep.subr.mxu0 0.0
  %v1189 = vand.u32 %v1096, 4294901760
  %v1190 = vsub.f32 %v1096, %v1189
  %v1191 = vand.u32 %v1190, 4294901760
  %v1192 = vsub.f32 %v1190, %v1191
  %v1193 = vand.u32 %v1192, 4294901760
  %1194 = vmatpush1.msra.mxu0 %v1193
  %1195 = vmatprep.subr.mxu0 0.0
  %v1196 = vand.u32 %v1097, 4294901760
  %v1197 = vsub.f32 %v1097, %v1196
  %v1198 = vand.u32 %v1197, 4294901760
  %v1199 = vsub.f32 %v1197, %v1198
  %v1200 = vand.u32 %v1199, 4294901760
  %1201 = vmatpush1.msra.mxu0 %v1200
  %1202 = vmatprep.subr.mxu0 0.0
  %v1203 = vand.u32 %v1098, 4294901760
  %v1204 = vsub.f32 %v1098, %v1203
  %v1205 = vand.u32 %v1204, 4294901760
  %v1206 = vsub.f32 %v1204, %v1205
  %v1207 = vand.u32 %v1206, 4294901760
  %1208 = vmatpush1.msra.mxu0 %v1207
  %1209 = vmatprep.subr.mxu0 0.0
  %1210 = vmatpush1.msra.mxu0 0.0
  %1211 = vmatprep.subr.mxu0 0.0
  %1212 = vmatpush1.msra.mxu0 0.0
  %1213 = vmatprep.subr.mxu0 0.0
  %1214 = vmatpush1.msra.mxu0 0.0
  %1215 = vmatprep.subr.mxu0 0.0
  %1216 = vmatpush1.msra.mxu0 0.0
  %1217 = vmatprep.subr.mxu0 0.0
  %1218 = vmatpush1.msra.mxu0 0.0
  %1219 = vmatprep.subr.mxu0 0.0
  %1220 = vmatpush1.msra.mxu0 0.0
  %1221 = vmatprep.subr.mxu0 0.0
  %1222 = vmatpush1.msra.mxu0 0.0
  %1223 = vmatprep.subr.mxu0 0.0
  %1224 = vmatpush1.msra.mxu0 0.0
  %1225 = vmatprep.subr.mxu0 0.0
  %1226 = vmatpush1.msra.mxu0 0.0
  %1227 = vmatprep.subr.mxu0 0.0
  %1228 = vmatpush1.msra.mxu0 0.0
  %1229 = vmatprep.subr.mxu0 0.0
  %1230 = vmatpush1.msra.mxu0 0.0
  %1231 = vmatprep.subr.mxu0 0.0
  %1232 = vmatpush1.msra.mxu0 0.0
  %1233 = vmatprep.subr.mxu0 0.0
  %1234 = vmatpush1.msra.mxu0 0.0
  %1235 = vmatprep.subr.mxu0 0.0
  %1236 = vmatpush1.msra.mxu0 0.0
  %1237 = vmatprep.subr.mxu0 0.0
  %1238 = vmatpush1.msra.mxu0 0.0
  %1239 = vmatprep.subr.mxu0 0.0
  %1240 = vmatpush1.msra.mxu0 0.0
  %1241 = vmatprep.subr.mxu0 0.0
  %1242 = vmatpush1.msra.mxu0 0.0
  %1243 = vmatprep.subr.mxu0 0.0
  %1244 = vmatpush1.msra.mxu0 0.0
  %1245 = vmatprep.subr.mxu0 0.0
  %1246 = vmatpush1.msra.mxu0 0.0
  %1247 = vmatprep.subr.mxu0 0.0
  %1248 = vmatpush1.msra.mxu0 0.0
  %1249 = vmatprep.subr.mxu0 0.0
  %1250 = vmatpush1.msra.mxu0 0.0
  %1251 = vmatprep.subr.mxu0 0.0
  %1252 = vmatpush1.msra.mxu0 0.0
  %1253 = vmatprep.subr.mxu0 0.0
  %1254 = vmatpush1.msra.mxu0 0.0
  %1255 = vmatprep.subr.mxu0 0.0
  %1256 = vmatpush1.msra.mxu0 0.0
  %1257 = vmatprep.subr.mxu0 0.0
  %1258 = vmatpush1.msra.mxu0 0.0
  %1259 = vmatprep.subr.mxu0 0.0
  %1260 = vmatpush1.msra.mxu0 0.0
  %1261 = vmatprep.subr.mxu0 0.0
  %1262 = vmatpush1.msra.mxu0 0.0
  %1263 = vmatprep.subr.mxu0 0.0
  %1264 = vmatpush1.msra.mxu0 0.0
  %1265 = vmatprep.mubr.f32.mxu0 0.0
  %v1266 = vand.u32 %v1100, 4294901760
  %1267 = vmatmul.mubr.f32.gmra.mrb[0].mxu0 %v1266
  %v1268 = vpop.f32.mrb[0].mxu0
  %v1269 = vadd.f32 %v1178, %v1268
  %v1270 = vpop.f32.mrb[0].mxu0
  %1271 = vdwg.mxu0
  %1272 = vmatprep.subr.mxu0 0.0
  %v1273 = vand.u32 %v1095, 4294901760
  %v1274 = vsub.f32 %v1095, %v1273
  %1275 = vmatpush1.msra.mxu0 %v1274
  %1276 = vmatprep.subr.mxu0 0.0
  %v1277 = vand.u32 %v1096, 4294901760
  %v1278 = vsub.f32 %v1096, %v1277
  %1279 = vmatpush1.msra.mxu0 %v1278
  %1280 = vmatprep.subr.mxu0 0.0
  %v1281 = vand.u32 %v1097, 4294901760
  %v1282 = vsub.f32 %v1097, %v1281
  %1283 = vmatpush1.msra.mxu0 %v1282
  %1284 = vmatprep.subr.mxu0 0.0
  %v1285 = vand.u32 %v1098, 4294901760
  %v1286 = vsub.f32 %v1098, %v1285
  %1287 = vmatpush1.msra.mxu0 %v1286
  %1288 = vmatprep.subr.mxu0 0.0
  %1289 = vmatpush1.msra.mxu0 0.0
  %1290 = vmatprep.subr.mxu0 0.0
  %1291 = vmatpush1.msra.mxu0 0.0
  %1292 = vmatprep.subr.mxu0 0.0
  %1293 = vmatpush1.msra.mxu0 0.0
  %1294 = vmatprep.subr.mxu0 0.0
  %1295 = vmatpush1.msra.mxu0 0.0
  %1296 = vmatprep.subr.mxu0 0.0
  %1297 = vmatpush1.msra.mxu0 0.0
  %1298 = vmatprep.subr.mxu0 0.0
  %1299 = vmatpush1.msra.mxu0 0.0
  %1300 = vmatprep.subr.mxu0 0.0
  %1301 = vmatpush1.msra.mxu0 0.0
  %1302 = vmatprep.subr.mxu0 0.0
  %1303 = vmatpush1.msra.mxu0 0.0
  %1304 = vmatprep.subr.mxu0 0.0
  %1305 = vmatpush1.msra.mxu0 0.0
  %1306 = vmatprep.subr.mxu0 0.0
  %1307 = vmatpush1.msra.mxu0 0.0
  %1308 = vmatprep.subr.mxu0 0.0
  %1309 = vmatpush1.msra.mxu0 0.0
  %1310 = vmatprep.subr.mxu0 0.0
  %1311 = vmatpush1.msra.mxu0 0.0
  %1312 = vmatprep.subr.mxu0 0.0
  %1313 = vmatpush1.msra.mxu0 0.0
  %1314 = vmatprep.subr.mxu0 0.0
  %1315 = vmatpush1.msra.mxu0 0.0
  %1316 = vmatprep.subr.mxu0 0.0
  %1317 = vmatpush1.msra.mxu0 0.0
  %1318 = vmatprep.subr.mxu0 0.0
  %1319 = vmatpush1.msra.mxu0 0.0
  %1320 = vmatprep.subr.mxu0 0.0
  %1321 = vmatpush1.msra.mxu0 0.0
  %1322 = vmatprep.subr.mxu0 0.0
  %1323 = vmatpush1.msra.mxu0 0.0
  %1324 = vmatprep.subr.mxu0 0.0
  %1325 = vmatpush1.msra.mxu0 0.0
  %1326 = vmatprep.subr.mxu0 0.0
  %1327 = vmatpush1.msra.mxu0 0.0
  %1328 = vmatprep.subr.mxu0 0.0
  %1329 = vmatpush1.msra.mxu0 0.0
  %1330 = vmatprep.subr.mxu0 0.0
  %1331 = vmatpush1.msra.mxu0 0.0
  %1332 = vmatprep.subr.mxu0 0.0
  %1333 = vmatpush1.msra.mxu0 0.0
  %1334 = vmatprep.subr.mxu0 0.0
  %1335 = vmatpush1.msra.mxu0 0.0
  %1336 = vmatprep.subr.mxu0 0.0
  %1337 = vmatpush1.msra.mxu0 0.0
  %1338 = vmatprep.subr.mxu0 0.0
  %1339 = vmatpush1.msra.mxu0 0.0
  %1340 = vmatprep.subr.mxu0 0.0
  %1341 = vmatpush1.msra.mxu0 0.0
  %1342 = vmatprep.subr.mxu0 0.0
  %1343 = vmatpush1.msra.mxu0 0.0
  %1344 = vmatprep.mubr.f32.mxu0 0.0
  %v1345 = vand.u32 %v1100, 4294901760
  %v1346 = vsub.f32 %v1100, %v1345
  %1347 = vmatmul.mubr.f32.gmra.mrb[0].mxu0 %v1346
  %v1348 = vpop.f32.mrb[0].mxu0
  %v1349 = vadd.f32 %v1269, %v1348
  %v1350 = vpop.f32.mrb[0].mxu0
  %1351 = vdwg.mxu0
  %1352 = vmatprep.subr.mxu0 0.0
  %v1353 = vand.u32 %v1095, 4294901760
  %1354 = vmatpush1.msra.mxu0 %v1353
  %1355 = vmatprep.subr.mxu0 0.0
  %v1356 = vand.u32 %v1096, 4294901760
  %1357 = vmatpush1.msra.mxu0 %v1356
  %1358 = vmatprep.subr.mxu0 0.0
  %v1359 = vand.u32 %v1097, 4294901760
  %1360 = vmatpush1.msra.mxu0 %v1359
  %1361 = vmatprep.subr.mxu0 0.0
  %v1362 = vand.u32 %v1098, 4294901760
  %1363 = vmatpush1.msra.mxu0 %v1362
  %1364 = vmatprep.subr.mxu0 0.0
  %1365 = vmatpush1.msra.mxu0 0.0
  %1366 = vmatprep.subr.mxu0 0.0
  %1367 = vmatpush1.msra.mxu0 0.0
  %1368 = vmatprep.subr.mxu0 0.0
  %1369 = vmatpush1.msra.mxu0 0.0
  %1370 = vmatprep.subr.mxu0 0.0
  %1371 = vmatpush1.msra.mxu0 0.0
  %1372 = vmatprep.subr.mxu0 0.0
  %1373 = vmatpush1.msra.mxu0 0.0
  %1374 = vmatprep.subr.mxu0 0.0
  %1375 = vmatpush1.msra.mxu0 0.0
  %1376 = vmatprep.subr.mxu0 0.0
  %1377 = vmatpush1.msra.mxu0 0.0
  %1378 = vmatprep.subr.mxu0 0.0
  %1379 = vmatpush1.msra.mxu0 0.0
  %1380 = vmatprep.subr.mxu0 0.0
  %1381 = vmatpush1.msra.mxu0 0.0
  %1382 = vmatprep.subr.mxu0 0.0
  %1383 = vmatpush1.msra.mxu0 0.0
  %1384 = vmatprep.subr.mxu0 0.0
  %1385 = vmatpush1.msra.mxu0 0.0
  %1386 = vmatprep.subr.mxu0 0.0
  %1387 = vmatpush1.msra.mxu0 0.0
  %1388 = vmatprep.subr.mxu0 0.0
  %1389 = vmatpush1.msra.mxu0 0.0
  %1390 = vmatprep.subr.mxu0 0.0
  %1391 = vmatpush1.msra.mxu0 0.0
  %1392 = vmatprep.subr.mxu0 0.0
  %1393 = vmatpush1.msra.mxu0 0.0
  %1394 = vmatprep.subr.mxu0 0.0
  %1395 = vmatpush1.msra.mxu0 0.0
  %1396 = vmatprep.subr.mxu0 0.0
  %1397 = vmatpush1.msra.mxu0 0.0
  %1398 = vmatprep.subr.mxu0 0.0
  %1399 = vmatpush1.msra.mxu0 0.0
  %1400 = vmatprep.subr.mxu0 0.0
  %1401 = vmatpush1.msra.mxu0 0.0
  %1402 = vmatprep.subr.mxu0 0.0
  %1403 = vmatpush1.msra.mxu0 0.0
  %1404 = vmatprep.subr.mxu0 0.0
  %1405 = vmatpush1.msra.mxu0 0.0
  %1406 = vmatprep.subr.mxu0 0.0
  %1407 = vmatpush1.msra.mxu0 0.0
  %1408 = vmatprep.subr.mxu0 0.0
  %1409 = vmatpush1.msra.mxu0 0.0
  %1410 = vmatprep.subr.mxu0 0.0
  %1411 = vmatpush1.msra.mxu0 0.0
  %1412 = vmatprep.subr.mxu0 0.0
  %1413 = vmatpush1.msra.mxu0 0.0
  %1414 = vmatprep.subr.mxu0 0.0
  %1415 = vmatpush1.msra.mxu0 0.0
  %1416 = vmatprep.subr.mxu0 0.0
  %1417 = vmatpush1.msra.mxu0 0.0
  %1418 = vmatprep.subr.mxu0 0.0
  %1419 = vmatpush1.msra.mxu0 0.0
  %1420 = vmatprep.mubr.f32.mxu0 0.0
  %v1421 = vand.u32 %v1100, 4294901760
  %v1422 = vsub.f32 %v1100, %v1421
  %v1423 = vand.u32 %v1422, 4294901760
  %1424 = vmatmul.mubr.f32.gmra.mrb[0].mxu0 %v1423
  %v1425 = vpop.f32.mrb[0].mxu0
  %v1426 = vadd.f32 %v1349, %v1425
  %v1427 = vpop.f32.mrb[0].mxu0
  %1428 = vdwg.mxu0
  %1429 = vmatprep.subr.mxu0 0.0
  %v1430 = vand.u32 %v1095, 4294901760
  %v1431 = vsub.f32 %v1095, %v1430
  %v1432 = vand.u32 %v1431, 4294901760
  %1433 = vmatpush1.msra.mxu0 %v1432
  %1434 = vmatprep.subr.mxu0 0.0
  %v1435 = vand.u32 %v1096, 4294901760
  %v1436 = vsub.f32 %v1096, %v1435
  %v1437 = vand.u32 %v1436, 4294901760
  %1438 = vmatpush1.msra.mxu0 %v1437
  %1439 = vmatprep.subr.mxu0 0.0
  %v1440 = vand.u32 %v1097, 4294901760
  %v1441 = vsub.f32 %v1097, %v1440
  %v1442 = vand.u32 %v1441, 4294901760
  %1443 = vmatpush1.msra.mxu0 %v1442
  %1444 = vmatprep.subr.mxu0 0.0
  %v1445 = vand.u32 %v1098, 4294901760
  %v1446 = vsub.f32 %v1098, %v1445
  %v1447 = vand.u32 %v1446, 4294901760
  %1448 = vmatpush1.msra.mxu0 %v1447
  %1449 = vmatprep.subr.mxu0 0.0
  %1450 = vmatpush1.msra.mxu0 0.0
  %1451 = vmatprep.subr.mxu0 0.0
  %1452 = vmatpush1.msra.mxu0 0.0
  %1453 = vmatprep.subr.mxu0 0.0
  %1454 = vmatpush1.msra.mxu0 0.0
  %1455 = vmatprep.subr.mxu0 0.0
  %1456 = vmatpush1.msra.mxu0 0.0
  %1457 = vmatprep.subr.mxu0 0.0
  %1458 = vmatpush1.msra.mxu0 0.0
  %1459 = vmatprep.subr.mxu0 0.0
  %1460 = vmatpush1.msra.mxu0 0.0
  %1461 = vmatprep.subr.mxu0 0.0
  %1462 = vmatpush1.msra.mxu0 0.0
  %1463 = vmatprep.subr.mxu0 0.0
  %1464 = vmatpush1.msra.mxu0 0.0
  %1465 = vmatprep.subr.mxu0 0.0
  %1466 = vmatpush1.msra.mxu0 0.0
  %1467 = vmatprep.subr.mxu0 0.0
  %1468 = vmatpush1.msra.mxu0 0.0
  %1469 = vmatprep.subr.mxu0 0.0
  %1470 = vmatpush1.msra.mxu0 0.0
  %1471 = vmatprep.subr.mxu0 0.0
  %1472 = vmatpush1.msra.mxu0 0.0
  %1473 = vmatprep.subr.mxu0 0.0
  %1474 = vmatpush1.msra.mxu0 0.0
  %1475 = vmatprep.subr.mxu0 0.0
  %1476 = vmatpush1.msra.mxu0 0.0
  %1477 = vmatprep.subr.mxu0 0.0
  %1478 = vmatpush1.msra.mxu0 0.0
  %1479 = vmatprep.subr.mxu0 0.0
  %1480 = vmatpush1.msra.mxu0 0.0
  %1481 = vmatprep.subr.mxu0 0.0
  %1482 = vmatpush1.msra.mxu0 0.0
  %1483 = vmatprep.subr.mxu0 0.0
  %1484 = vmatpush1.msra.mxu0 0.0
  %1485 = vmatprep.subr.mxu0 0.0
  %1486 = vmatpush1.msra.mxu0 0.0
  %1487 = vmatprep.subr.mxu0 0.0
  %1488 = vmatpush1.msra.mxu0 0.0
  %1489 = vmatprep.subr.mxu0 0.0
  %1490 = vmatpush1.msra.mxu0 0.0
  %1491 = vmatprep.subr.mxu0 0.0
  %1492 = vmatpush1.msra.mxu0 0.0
  %1493 = vmatprep.subr.mxu0 0.0
  %1494 = vmatpush1.msra.mxu0 0.0
  %1495 = vmatprep.subr.mxu0 0.0
  %1496 = vmatpush1.msra.mxu0 0.0
  %1497 = vmatprep.subr.mxu0 0.0
  %1498 = vmatpush1.msra.mxu0 0.0
  %1499 = vmatprep.subr.mxu0 0.0
  %1500 = vmatpush1.msra.mxu0 0.0
  %1501 = vmatprep.subr.mxu0 0.0
  %1502 = vmatpush1.msra.mxu0 0.0
  %1503 = vmatprep.subr.mxu0 0.0
  %1504 = vmatpush1.msra.mxu0 0.0
  %1505 = vmatprep.mubr.f32.mxu0 0.0
  %v1506 = vand.u32 %v1100, 4294901760
  %1507 = vmatmul.mubr.f32.gmra.mrb[0].mxu0 %v1506
  %v1508 = vpop.f32.mrb[0].mxu0
  %v1509 = vadd.f32 %v1426, %v1508
  %v1510 = vpop.f32.mrb[0].mxu0
  %1511 = vdwg.mxu0
  %1512 = vmatprep.subr.mxu0 0.0
  %v1513 = vand.u32 %v1095, 4294901760
  %1514 = vmatpush1.msra.mxu0 %v1513
  %1515 = vmatprep.subr.mxu0 0.0
  %v1516 = vand.u32 %v1096, 4294901760
  %1517 = vmatpush1.msra.mxu0 %v1516
  %1518 = vmatprep.subr.mxu0 0.0
  %v1519 = vand.u32 %v1097, 4294901760
  %1520 = vmatpush1.msra.mxu0 %v1519
  %1521 = vmatprep.subr.mxu0 0.0
  %v1522 = vand.u32 %v1098, 4294901760
  %1523 = vmatpush1.msra.mxu0 %v1522
  %1524 = vmatprep.subr.mxu0 0.0
  %1525 = vmatpush1.msra.mxu0 0.0
  %1526 = vmatprep.subr.mxu0 0.0
  %1527 = vmatpush1.msra.mxu0 0.0
  %1528 = vmatprep.subr.mxu0 0.0
  %1529 = vmatpush1.msra.mxu0 0.0
  %1530 = vmatprep.subr.mxu0 0.0
  %1531 = vmatpush1.msra.mxu0 0.0
  %1532 = vmatprep.subr.mxu0 0.0
  %1533 = vmatpush1.msra.mxu0 0.0
  %1534 = vmatprep.subr.mxu0 0.0
  %1535 = vmatpush1.msra.mxu0 0.0
  %1536 = vmatprep.subr.mxu0 0.0
  %1537 = vmatpush1.msra.mxu0 0.0
  %1538 = vmatprep.subr.mxu0 0.0
  %1539 = vmatpush1.msra.mxu0 0.0
  %1540 = vmatprep.subr.mxu0 0.0
  %1541 = vmatpush1.msra.mxu0 0.0
  %1542 = vmatprep.subr.mxu0 0.0
  %1543 = vmatpush1.msra.mxu0 0.0
  %1544 = vmatprep.subr.mxu0 0.0
  %1545 = vmatpush1.msra.mxu0 0.0
  %1546 = vmatprep.subr.mxu0 0.0
  %1547 = vmatpush1.msra.mxu0 0.0
  %1548 = vmatprep.subr.mxu0 0.0
  %1549 = vmatpush1.msra.mxu0 0.0
  %1550 = vmatprep.subr.mxu0 0.0
  %1551 = vmatpush1.msra.mxu0 0.0
  %1552 = vmatprep.subr.mxu0 0.0
  %1553 = vmatpush1.msra.mxu0 0.0
  %1554 = vmatprep.subr.mxu0 0.0
  %1555 = vmatpush1.msra.mxu0 0.0
  %1556 = vmatprep.subr.mxu0 0.0
  %1557 = vmatpush1.msra.mxu0 0.0
  %1558 = vmatprep.subr.mxu0 0.0
  %1559 = vmatpush1.msra.mxu0 0.0
  %1560 = vmatprep.subr.mxu0 0.0
  %1561 = vmatpush1.msra.mxu0 0.0
  %1562 = vmatprep.subr.mxu0 0.0
  %1563 = vmatpush1.msra.mxu0 0.0
  %1564 = vmatprep.subr.mxu0 0.0
  %1565 = vmatpush1.msra.mxu0 0.0
  %1566 = vmatprep.subr.mxu0 0.0
  %1567 = vmatpush1.msra.mxu0 0.0
  %1568 = vmatprep.subr.mxu0 0.0
  %1569 = vmatpush1.msra.mxu0 0.0
  %1570 = vmatprep.subr.mxu0 0.0
  %1571 = vmatpush1.msra.mxu0 0.0
  %1572 = vmatprep.subr.mxu0 0.0
  %1573 = vmatpush1.msra.mxu0 0.0
  %1574 = vmatprep.subr.mxu0 0.0
  %1575 = vmatpush1.msra.mxu0 0.0
  %1576 = vmatprep.subr.mxu0 0.0
  %1577 = vmatpush1.msra.mxu0 0.0
  %1578 = vmatprep.subr.mxu0 0.0
  %1579 = vmatpush1.msra.mxu0 0.0
  %1580 = vmatprep.mubr.f32.mxu0 0.0
  %v1581 = vand.u32 %v1100, 4294901760
  %1582 = vmatmul.mubr.f32.gmra.mrb[0].mxu0 %v1581
  %v1583 = vpop.f32.mrb[0].mxu0
  %v1584 = vadd.f32 %v1509, %v1583
  %v1585 = vpop.f32.mrb[0].mxu0
  %1586 = vdwg.mxu0
  %v1587 = vadd.f32 %v1093, %v1584
  %v1588 = vxor.u32 %v1587, 2147483648
  %v1589 = vmul.f32 %v1588, 1.442695
  %v1590 = vpow.pop %v1589
  %v1591 = vadd.f32 %v1590, 1.0
  %v1592 = vrcp.pop %v1591
  %v1593 = vmul.f32 1.0, %v1592
  %v1594 = vtanh.pop %v1587
  %v1595 = vld [vmem:[#allocation3] sm:$0xf]
  %1597 = vrot.lane.b32.xlu0 %v1595, 32
  %v1598 = vpop.permute.xlu0 %1597
  %v1600 = vmul.f32 %v1593, %v1598
  %1602 = vrot.lane.b32.xlu0 %v1594, 64
  %v1603 = vpop.permute.xlu0 %1602
  %v1605 = vmul.f32 %v1593, %v1603
  %1607 = vrot.lane.b32.xlu0 %v1605, 32
  %v1608 = vpop.permute.xlu0 %1607
  %v1610 = vadd.f32 %v1600, %v1608
  %v1611 = vtanh.pop %v1610
  %1613 = vrot.lane.b32.xlu0 %v1611, 64
  %v1614 = vpop.permute.xlu0 %1613
  %v1616 = vmul.f32 %v1593, %v1614
  %1618 = vrot.lane.b32.xlu0 %v1610, 96
  %v1619 = vpop.permute.xlu0 %1618
  %1621 = vst.msk [vmem:[#allocation3] sm:$0xf] %vm547, %v1619
  %1623 = vrot.lane.b32.xlu0 %v1616, 32
  %v1624 = vpop.permute.xlu0 %1623
  %1626 = vst.msk [vmem:[#allocation2] sm:$0xf] %vm547, %v1624
  %s1627 = scalar_lea.vmem %s2, 8
  %1628 = vst.msk [vmem:[%s1627] sm:$0xf] %vm547, %v1624
  %s1629 = scalar_lea.vmem %s0, 12
  %v1630 = vld [vmem:[%s1629] sm:$0xf]
  %v1631 = vld [vmem:[#allocation2] sm:$0xf]
  %v1632 = vld [vmem:[%s1] sm:$0xff]
  %v1633 = vld [vmem:[%s1 + $0x8] sm:$0xff]
  %v1634 = vld [vmem:[%s1 + $0x10] sm:$0xff]
  %v1635 = vld [vmem:[%s1 + $0x18] sm:$0xff]
  %v1637 = vsel %vm24, %v1631, 0
  %1639 = vmatprep.subr.mxu0 0.0
  %v1640 = vand.u32 %v1632, 4294901760
  %1641 = vmatpush1.msra.mxu0 %v1640
  %1642 = vmatprep.subr.mxu0 0.0
  %v1643 = vand.u32 %v1633, 4294901760
  %1644 = vmatpush1.msra.mxu0 %v1643
  %1645 = vmatprep.subr.mxu0 0.0
  %v1646 = vand.u32 %v1634, 4294901760
  %1647 = vmatpush1.msra.mxu0 %v1646
  %1648 = vmatprep.subr.mxu0 0.0
  %v1649 = vand.u32 %v1635, 4294901760
  %1650 = vmatpush1.msra.mxu0 %v1649
  %1651 = vmatprep.subr.mxu0 0.0
  %1652 = vmatpush1.msra.mxu0 0.0
  %1653 = vmatprep.subr.mxu0 0.0
  %1654 = vmatpush1.msra.mxu0 0.0
  %1655 = vmatprep.subr.mxu0 0.0
  %1656 = vmatpush1.msra.mxu0 0.0
  %1657 = vmatprep.subr.mxu0 0.0
  %1658 = vmatpush1.msra.mxu0 0.0
  %1659 = vmatprep.subr.mxu0 0.0
  %1660 = vmatpush1.msra.mxu0 0.0
  %1661 = vmatprep.subr.mxu0 0.0
  %1662 = vmatpush1.msra.mxu0 0.0
  %1663 = vmatprep.subr.mxu0 0.0
  %1664 = vmatpush1.msra.mxu0 0.0
  %1665 = vmatprep.subr.mxu0 0.0
  %1666 = vmatpush1.msra.mxu0 0.0
  %1667 = vmatprep.subr.mxu0 0.0
  %1668 = vmatpush1.msra.mxu0 0.0
  %1669 = vmatprep.subr.mxu0 0.0
  %1670 = vmatpush1.msra.mxu0 0.0
  %1671 = vmatprep.subr.mxu0 0.0
  %1672 = vmatpush1.msra.mxu0 0.0
  %1673 = vmatprep.subr.mxu0 0.0
  %1674 = vmatpush1.msra.mxu0 0.0
  %1675 = vmatprep.subr.mxu0 0.0
  %1676 = vmatpush1.msra.mxu0 0.0
  %1677 = vmatprep.subr.mxu0 0.0
  %1678 = vmatpush1.msra.mxu0 0.0
  %1679 = vmatprep.subr.mxu0 0.0
  %1680 = vmatpush1.msra.mxu0 0.0
  %1681 = vmatprep.subr.mxu0 0.0
  %1682 = vmatpush1.msra.mxu0 0.0
  %1683 = vmatprep.subr.mxu0 0.0
  %1684 = vmatpush1.msra.mxu0 0.0
  %1685 = vmatprep.subr.mxu0 0.0
  %1686 = vmatpush1.msra.mxu0 0.0
  %1687 = vmatprep.subr.mxu0 0.0
  %1688 = vmatpush1.msra.mxu0 0.0
  %1689 = vmatprep.subr.mxu0 0.0
  %1690 = vmatpush1.msra.mxu0 0.0
  %1691 = vmatprep.subr.mxu0 0.0
  %1692 = vmatpush1.msra.mxu0 0.0
  %1693 = vmatprep.subr.mxu0 0.0
  %1694 = vmatpush1.msra.mxu0 0.0
  %1695 = vmatprep.subr.mxu0 0.0
  %1696 = vmatpush1.msra.mxu0 0.0
  %1697 = vmatprep.subr.mxu0 0.0
  %1698 = vmatpush1.msra.mxu0 0.0
  %1699 = vmatprep.subr.mxu0 0.0
  %1700 = vmatpush1.msra.mxu0 0.0
  %1701 = vmatprep.subr.mxu0 0.0
  %1702 = vmatpush1.msra.mxu0 0.0
  %1703 = vmatprep.subr.mxu0 0.0
  %1704 = vmatpush1.msra.mxu0 0.0
  %1705 = vmatprep.subr.mxu0 0.0
  %1706 = vmatpush1.msra.mxu0 0.0
  %1707 = vmatprep.mubr.f32.mxu0 0.0
  %v1708 = vand.u32 %v1637, 4294901760
  %v1709 = vsub.f32 %v1637, %v1708
  %v1710 = vand.u32 %v1709, 4294901760
  %v1711 = vsub.f32 %v1709, %v1710
  %v1712 = vand.u32 %v1711, 4294901760
  %1713 = vmatmul.mubr.f32.gmra.mrb[0].mxu0 %v1712
  %v1714 = vpop.f32.mrb[0].mxu0
  %v1715 = vadd.f32 0.0, %v1714
  %v1716 = vpop.f32.mrb[0].mxu0
  %1717 = vdwg.mxu0
  %1718 = vmatprep.subr.mxu0 0.0
  %v1719 = vand.u32 %v1632, 4294901760
  %v1720 = vsub.f32 %v1632, %v1719
  %v1721 = vand.u32 %v1720, 4294901760
  %v1722 = vsub.f32 %v1720, %v1721
  %v1723 = vand.u32 %v1722, 4294901760
  %1724 = vmatpush1.msra.mxu0 %v1723
  %1725 = vmatprep.subr.mxu0 0.0
  %v1726 = vand.u32 %v1633, 4294901760
  %v1727 = vsub.f32 %v1633, %v1726
  %v1728 = vand.u32 %v1727, 4294901760
  %v1729 = vsub.f32 %v1727, %v1728
  %v1730 = vand.u32 %v1729, 4294901760
  %1731 = vmatpush1.msra.mxu0 %v1730
  %1732 = vmatprep.subr.mxu0 0.0
  %v1733 = vand.u32 %v1634, 4294901760
  %v1734 = vsub.f32 %v1634, %v1733
  %v1735 = vand.u32 %v1734, 4294901760
  %v1736 = vsub.f32 %v1734, %v1735
  %v1737 = vand.u32 %v1736, 4294901760
  %1738 = vmatpush1.msra.mxu0 %v1737
  %1739 = vmatprep.subr.mxu0 0.0
  %v1740 = vand.u32 %v1635, 4294901760
  %v1741 = vsub.f32 %v1635, %v1740
  %v1742 = vand.u32 %v1741, 4294901760
  %v1743 = vsub.f32 %v1741, %v1742
  %v1744 = vand.u32 %v1743, 4294901760
  %1745 = vmatpush1.msra.mxu0 %v1744
  %1746 = vmatprep.subr.mxu0 0.0
  %1747 = vmatpush1.msra.mxu0 0.0
  %1748 = vmatprep.subr.mxu0 0.0
  %1749 = vmatpush1.msra.mxu0 0.0
  %1750 = vmatprep.subr.mxu0 0.0
  %1751 = vmatpush1.msra.mxu0 0.0
  %1752 = vmatprep.subr.mxu0 0.0
  %1753 = vmatpush1.msra.mxu0 0.0
  %1754 = vmatprep.subr.mxu0 0.0
  %1755 = vmatpush1.msra.mxu0 0.0
  %1756 = vmatprep.subr.mxu0 0.0
  %1757 = vmatpush1.msra.mxu0 0.0
  %1758 = vmatprep.subr.mxu0 0.0
  %1759 = vmatpush1.msra.mxu0 0.0
  %1760 = vmatprep.subr.mxu0 0.0
  %1761 = vmatpush1.msra.mxu0 0.0
  %1762 = vmatprep.subr.mxu0 0.0
  %1763 = vmatpush1.msra.mxu0 0.0
  %1764 = vmatprep.subr.mxu0 0.0
  %1765 = vmatpush1.msra.mxu0 0.0
  %1766 = vmatprep.subr.mxu0 0.0
  %1767 = vmatpush1.msra.mxu0 0.0
  %1768 = vmatprep.subr.mxu0 0.0
  %1769 = vmatpush1.msra.mxu0 0.0
  %1770 = vmatprep.subr.mxu0 0.0
  %1771 = vmatpush1.msra.mxu0 0.0
  %1772 = vmatprep.subr.mxu0 0.0
  %1773 = vmatpush1.msra.mxu0 0.0
  %1774 = vmatprep.subr.mxu0 0.0
  %1775 = vmatpush1.msra.mxu0 0.0
  %1776 = vmatprep.subr.mxu0 0.0
  %1777 = vmatpush1.msra.mxu0 0.0
  %1778 = vmatprep.subr.mxu0 0.0
  %1779 = vmatpush1.msra.mxu0 0.0
  %1780 = vmatprep.subr.mxu0 0.0
  %1781 = vmatpush1.msra.mxu0 0.0
  %1782 = vmatprep.subr.mxu0 0.0
  %1783 = vmatpush1.msra.mxu0 0.0
  %1784 = vmatprep.subr.mxu0 0.0
  %1785 = vmatpush1.msra.mxu0 0.0
  %1786 = vmatprep.subr.mxu0 0.0
  %1787 = vmatpush1.msra.mxu0 0.0
  %1788 = vmatprep.subr.mxu0 0.0
  %1789 = vmatpush1.msra.mxu0 0.0
  %1790 = vmatprep.subr.mxu0 0.0
  %1791 = vmatpush1.msra.mxu0 0.0
  %1792 = vmatprep.subr.mxu0 0.0
  %1793 = vmatpush1.msra.mxu0 0.0
  %1794 = vmatprep.subr.mxu0 0.0
  %1795 = vmatpush1.msra.mxu0 0.0
  %1796 = vmatprep.subr.mxu0 0.0
  %1797 = vmatpush1.msra.mxu0 0.0
  %1798 = vmatprep.subr.mxu0 0.0
  %1799 = vmatpush1.msra.mxu0 0.0
  %1800 = vmatprep.subr.mxu0 0.0
  %1801 = vmatpush1.msra.mxu0 0.0
  %1802 = vmatprep.mubr.f32.mxu0 0.0
  %v1803 = vand.u32 %v1637, 4294901760
  %1804 = vmatmul.mubr.f32.gmra.mrb[0].mxu0 %v1803
  %v1805 = vpop.f32.mrb[0].mxu0
  %v1806 = vadd.f32 %v1715, %v1805
  %v1807 = vpop.f32.mrb[0].mxu0
  %1808 = vdwg.mxu0
  %1809 = vmatprep.subr.mxu0 0.0
  %v1810 = vand.u32 %v1632, 4294901760
  %v1811 = vsub.f32 %v1632, %v1810
  %1812 = vmatpush1.msra.mxu0 %v1811
  %1813 = vmatprep.subr.mxu0 0.0
  %v1814 = vand.u32 %v1633, 4294901760
  %v1815 = vsub.f32 %v1633, %v1814
  %1816 = vmatpush1.msra.mxu0 %v1815
  %1817 = vmatprep.subr.mxu0 0.0
  %v1818 = vand.u32 %v1634, 4294901760
  %v1819 = vsub.f32 %v1634, %v1818
  %1820 = vmatpush1.msra.mxu0 %v1819
  %1821 = vmatprep.subr.mxu0 0.0
  %v1822 = vand.u32 %v1635, 4294901760
  %v1823 = vsub.f32 %v1635, %v1822
  %1824 = vmatpush1.msra.mxu0 %v1823
  %1825 = vmatprep.subr.mxu0 0.0
  %1826 = vmatpush1.msra.mxu0 0.0
  %1827 = vmatprep.subr.mxu0 0.0
  %1828 = vmatpush1.msra.mxu0 0.0
  %1829 = vmatprep.subr.mxu0 0.0
  %1830 = vmatpush1.msra.mxu0 0.0
  %1831 = vmatprep.subr.mxu0 0.0
  %1832 = vmatpush1.msra.mxu0 0.0
  %1833 = vmatprep.subr.mxu0 0.0
  %1834 = vmatpush1.msra.mxu0 0.0
  %1835 = vmatprep.subr.mxu0 0.0
  %1836 = vmatpush1.msra.mxu0 0.0
  %1837 = vmatprep.subr.mxu0 0.0
  %1838 = vmatpush1.msra.mxu0 0.0
  %1839 = vmatprep.subr.mxu0 0.0
  %1840 = vmatpush1.msra.mxu0 0.0
  %1841 = vmatprep.subr.mxu0 0.0
  %1842 = vmatpush1.msra.mxu0 0.0
  %1843 = vmatprep.subr.mxu0 0.0
  %1844 = vmatpush1.msra.mxu0 0.0
  %1845 = vmatprep.subr.mxu0 0.0
  %1846 = vmatpush1.msra.mxu0 0.0
  %1847 = vmatprep.subr.mxu0 0.0
  %1848 = vmatpush1.msra.mxu0 0.0
  %1849 = vmatprep.subr.mxu0 0.0
  %1850 = vmatpush1.msra.mxu0 0.0
  %1851 = vmatprep.subr.mxu0 0.0
  %1852 = vmatpush1.msra.mxu0 0.0
  %1853 = vmatprep.subr.mxu0 0.0
  %1854 = vmatpush1.msra.mxu0 0.0
  %1855 = vmatprep.subr.mxu0 0.0
  %1856 = vmatpush1.msra.mxu0 0.0
  %1857 = vmatprep.subr.mxu0 0.0
  %1858 = vmatpush1.msra.mxu0 0.0
  %1859 = vmatprep.subr.mxu0 0.0
  %1860 = vmatpush1.msra.mxu0 0.0
  %1861 = vmatprep.subr.mxu0 0.0
  %1862 = vmatpush1.msra.mxu0 0.0
  %1863 = vmatprep.subr.mxu0 0.0
  %1864 = vmatpush1.msra.mxu0 0.0
  %1865 = vmatprep.subr.mxu0 0.0
  %1866 = vmatpush1.msra.mxu0 0.0
  %1867 = vmatprep.subr.mxu0 0.0
  %1868 = vmatpush1.msra.mxu0 0.0
  %1869 = vmatprep.subr.mxu0 0.0
  %1870 = vmatpush1.msra.mxu0 0.0
  %1871 = vmatprep.subr.mxu0 0.0
  %1872 = vmatpush1.msra.mxu0 0.0
  %1873 = vmatprep.subr.mxu0 0.0
  %1874 = vmatpush1.msra.mxu0 0.0
  %1875 = vmatprep.subr.mxu0 0.0
  %1876 = vmatpush1.msra.mxu0 0.0
  %1877 = vmatprep.subr.mxu0 0.0
  %1878 = vmatpush1.msra.mxu0 0.0
  %1879 = vmatprep.subr.mxu0 0.0
  %1880 = vmatpush1.msra.mxu0 0.0
  %1881 = vmatprep.mubr.f32.mxu0 0.0
  %v1882 = vand.u32 %v1637, 4294901760
  %v1883 = vsub.f32 %v1637, %v1882
  %1884 = vmatmul.mubr.f32.gmra.mrb[0].mxu0 %v1883
  %v1885 = vpop.f32.mrb[0].mxu0
  %v1886 = vadd.f32 %v1806, %v1885
  %v1887 = vpop.f32.mrb[0].mxu0
  %1888 = vdwg.mxu0
  %1889 = vmatprep.subr.mxu0 0.0
  %v1890 = vand.u32 %v1632, 4294901760
  %1891 = vmatpush1.msra.mxu0 %v1890
  %1892 = vmatprep.subr.mxu0 0.0
  %v1893 = vand.u32 %v1633, 4294901760
  %1894 = vmatpush1.msra.mxu0 %v1893
  %1895 = vmatprep.subr.mxu0 0.0
  %v1896 = vand.u32 %v1634, 4294901760
  %1897 = vmatpush1.msra.mxu0 %v1896
  %1898 = vmatprep.subr.mxu0 0.0
  %v1899 = vand.u32 %v1635, 4294901760
  %1900 = vmatpush1.msra.mxu0 %v1899
  %1901 = vmatprep.subr.mxu0 0.0
  %1902 = vmatpush1.msra.mxu0 0.0
  %1903 = vmatprep.subr.mxu0 0.0
  %1904 = vmatpush1.msra.mxu0 0.0
  %1905 = vmatprep.subr.mxu0 0.0
  %1906 = vmatpush1.msra.mxu0 0.0
  %1907 = vmatprep.subr.mxu0 0.0
  %1908 = vmatpush1.msra.mxu0 0.0
  %1909 = vmatprep.subr.mxu0 0.0
  %1910 = vmatpush1.msra.mxu0 0.0
  %1911 = vmatprep.subr.mxu0 0.0
  %1912 = vmatpush1.msra.mxu0 0.0
  %1913 = vmatprep.subr.mxu0 0.0
  %1914 = vmatpush1.msra.mxu0 0.0
  %1915 = vmatprep.subr.mxu0 0.0
  %1916 = vmatpush1.msra.mxu0 0.0
  %1917 = vmatprep.subr.mxu0 0.0
  %1918 = vmatpush1.msra.mxu0 0.0
  %1919 = vmatprep.subr.mxu0 0.0
  %1920 = vmatpush1.msra.mxu0 0.0
  %1921 = vmatprep.subr.mxu0 0.0
  %1922 = vmatpush1.msra.mxu0 0.0
  %1923 = vmatprep.subr.mxu0 0.0
  %1924 = vmatpush1.msra.mxu0 0.0
  %1925 = vmatprep.subr.mxu0 0.0
  %1926 = vmatpush1.msra.mxu0 0.0
  %1927 = vmatprep.subr.mxu0 0.0
  %1928 = vmatpush1.msra.mxu0 0.0
  %1929 = vmatprep.subr.mxu0 0.0
  %1930 = vmatpush1.msra.mxu0 0.0
  %1931 = vmatprep.subr.mxu0 0.0
  %1932 = vmatpush1.msra.mxu0 0.0
  %1933 = vmatprep.subr.mxu0 0.0
  %1934 = vmatpush1.msra.mxu0 0.0
  %1935 = vmatprep.subr.mxu0 0.0
  %1936 = vmatpush1.msra.mxu0 0.0
  %1937 = vmatprep.subr.mxu0 0.0
  %1938 = vmatpush1.msra.mxu0 0.0
  %1939 = vmatprep.subr.mxu0 0.0
  %1940 = vmatpush1.msra.mxu0 0.0
  %1941 = vmatprep.subr.mxu0 0.0
  %1942 = vmatpush1.msra.mxu0 0.0
  %1943 = vmatprep.subr.mxu0 0.0
  %1944 = vmatpush1.msra.mxu0 0.0
  %1945 = vmatprep.subr.mxu0 0.0
  %1946 = vmatpush1.msra.mxu0 0.0
  %1947 = vmatprep.subr.mxu0 0.0
  %1948 = vmatpush1.msra.mxu0 0.0
  %1949 = vmatprep.subr.mxu0 0.0
  %1950 = vmatpush1.msra.mxu0 0.0
  %1951 = vmatprep.subr.mxu0 0.0
  %1952 = vmatpush1.msra.mxu0 0.0
  %1953 = vmatprep.subr.mxu0 0.0
  %1954 = vmatpush1.msra.mxu0 0.0
  %1955 = vmatprep.subr.mxu0 0.0
  %1956 = vmatpush1.msra.mxu0 0.0
  %1957 = vmatprep.mubr.f32.mxu0 0.0
  %v1958 = vand.u32 %v1637, 4294901760
  %v1959 = vsub.f32 %v1637, %v1958
  %v1960 = vand.u32 %v1959, 4294901760
  %1961 = vmatmul.mubr.f32.gmra.mrb[0].mxu0 %v1960
  %v1962 = vpop.f32.mrb[0].mxu0
  %v1963 = vadd.f32 %v1886, %v1962
  %v1964 = vpop.f32.mrb[0].mxu0
  %1965 = vdwg.mxu0
  %1966 = vmatprep.subr.mxu0 0.0
  %v1967 = vand.u32 %v1632, 4294901760
  %v1968 = vsub.f32 %v1632, %v1967
  %v1969 = vand.u32 %v1968, 4294901760
  %1970 = vmatpush1.msra.mxu0 %v1969
  %1971 = vmatprep.subr.mxu0 0.0
  %v1972 = vand.u32 %v1633, 4294901760
  %v1973 = vsub.f32 %v1633, %v1972
  %v1974 = vand.u32 %v1973, 4294901760
  %1975 = vmatpush1.msra.mxu0 %v1974
  %1976 = vmatprep.subr.mxu0 0.0
  %v1977 = vand.u32 %v1634, 4294901760
  %v1978 = vsub.f32 %v1634, %v1977
  %v1979 = vand.u32 %v1978, 4294901760
  %1980 = vmatpush1.msra.mxu0 %v1979
  %1981 = vmatprep.subr.mxu0 0.0
  %v1982 = vand.u32 %v1635, 4294901760
  %v1983 = vsub.f32 %v1635, %v1982
  %v1984 = vand.u32 %v1983, 4294901760
  %1985 = vmatpush1.msra.mxu0 %v1984
  %1986 = vmatprep.subr.mxu0 0.0
  %1987 = vmatpush1.msra.mxu0 0.0
  %1988 = vmatprep.subr.mxu0 0.0
  %1989 = vmatpush1.msra.mxu0 0.0
  %1990 = vmatprep.subr.mxu0 0.0
  %1991 = vmatpush1.msra.mxu0 0.0
  %1992 = vmatprep.subr.mxu0 0.0
  %1993 = vmatpush1.msra.mxu0 0.0
  %1994 = vmatprep.subr.mxu0 0.0
  %1995 = vmatpush1.msra.mxu0 0.0
  %1996 = vmatprep.subr.mxu0 0.0
  %1997 = vmatpush1.msra.mxu0 0.0
  %1998 = vmatprep.subr.mxu0 0.0
  %1999 = vmatpush1.msra.mxu0 0.0
  %2000 = vmatprep.subr.mxu0 0.0
  %2001 = vmatpush1.msra.mxu0 0.0
  %2002 = vmatprep.subr.mxu0 0.0
  %2003 = vmatpush1.msra.mxu0 0.0
  %2004 = vmatprep.subr.mxu0 0.0
  %2005 = vmatpush1.msra.mxu0 0.0
  %2006 = vmatprep.subr.mxu0 0.0
  %2007 = vmatpush1.msra.mxu0 0.0
  %2008 = vmatprep.subr.mxu0 0.0
  %2009 = vmatpush1.msra.mxu0 0.0
  %2010 = vmatprep.subr.mxu0 0.0
  %2011 = vmatpush1.msra.mxu0 0.0
  %2012 = vmatprep.subr.mxu0 0.0
  %2013 = vmatpush1.msra.mxu0 0.0
  %2014 = vmatprep.subr.mxu0 0.0
  %2015 = vmatpush1.msra.mxu0 0.0
  %2016 = vmatprep.subr.mxu0 0.0
  %2017 = vmatpush1.msra.mxu0 0.0
  %2018 = vmatprep.subr.mxu0 0.0
  %2019 = vmatpush1.msra.mxu0 0.0
  %2020 = vmatprep.subr.mxu0 0.0
  %2021 = vmatpush1.msra.mxu0 0.0
  %2022 = vmatprep.subr.mxu0 0.0
  %2023 = vmatpush1.msra.mxu0 0.0
  %2024 = vmatprep.subr.mxu0 0.0
  %2025 = vmatpush1.msra.mxu0 0.0
  %2026 = vmatprep.subr.mxu0 0.0
  %2027 = vmatpush1.msra.mxu0 0.0
  %2028 = vmatprep.subr.mxu0 0.0
  %2029 = vmatpush1.msra.mxu0 0.0
  %2030 = vmatprep.subr.mxu0 0.0
  %2031 = vmatpush1.msra.mxu0 0.0
  %2032 = vmatprep.subr.mxu0 0.0
  %2033 = vmatpush1.msra.mxu0 0.0
  %2034 = vmatprep.subr.mxu0 0.0
  %2035 = vmatpush1.msra.mxu0 0.0
  %2036 = vmatprep.subr.mxu0 0.0
  %2037 = vmatpush1.msra.mxu0 0.0
  %2038 = vmatprep.subr.mxu0 0.0
  %2039 = vmatpush1.msra.mxu0 0.0
  %2040 = vmatprep.subr.mxu0 0.0
  %2041 = vmatpush1.msra.mxu0 0.0
  %2042 = vmatprep.mubr.f32.mxu0 0.0
  %v2043 = vand.u32 %v1637, 4294901760
  %2044 = vmatmul.mubr.f32.gmra.mrb[0].mxu0 %v2043
  %v2045 = vpop.f32.mrb[0].mxu0
  %v2046 = vadd.f32 %v1963, %v2045
  %v2047 = vpop.f32.mrb[0].mxu0
  %2048 = vdwg.mxu0
  %2049 = vmatprep.subr.mxu0 0.0
  %v2050 = vand.u32 %v1632, 4294901760
  %2051 = vmatpush1.msra.mxu0 %v2050
  %2052 = vmatprep.subr.mxu0 0.0
  %v2053 = vand.u32 %v1633, 4294901760
  %2054 = vmatpush1.msra.mxu0 %v2053
  %2055 = vmatprep.subr.mxu0 0.0
  %v2056 = vand.u32 %v1634, 4294901760
  %2057 = vmatpush1.msra.mxu0 %v2056
  %2058 = vmatprep.subr.mxu0 0.0
  %v2059 = vand.u32 %v1635, 4294901760
  %2060 = vmatpush1.msra.mxu0 %v2059
  %2061 = vmatprep.subr.mxu0 0.0
  %2062 = vmatpush1.msra.mxu0 0.0
  %2063 = vmatprep.subr.mxu0 0.0
  %2064 = vmatpush1.msra.mxu0 0.0
  %2065 = vmatprep.subr.mxu0 0.0
  %2066 = vmatpush1.msra.mxu0 0.0
  %2067 = vmatprep.subr.mxu0 0.0
  %2068 = vmatpush1.msra.mxu0 0.0
  %2069 = vmatprep.subr.mxu0 0.0
  %2070 = vmatpush1.msra.mxu0 0.0
  %2071 = vmatprep.subr.mxu0 0.0
  %2072 = vmatpush1.msra.mxu0 0.0
  %2073 = vmatprep.subr.mxu0 0.0
  %2074 = vmatpush1.msra.mxu0 0.0
  %2075 = vmatprep.subr.mxu0 0.0
  %2076 = vmatpush1.msra.mxu0 0.0
  %2077 = vmatprep.subr.mxu0 0.0
  %2078 = vmatpush1.msra.mxu0 0.0
  %2079 = vmatprep.subr.mxu0 0.0
  %2080 = vmatpush1.msra.mxu0 0.0
  %2081 = vmatprep.subr.mxu0 0.0
  %2082 = vmatpush1.msra.mxu0 0.0
  %2083 = vmatprep.subr.mxu0 0.0
  %2084 = vmatpush1.msra.mxu0 0.0
  %2085 = vmatprep.subr.mxu0 0.0
  %2086 = vmatpush1.msra.mxu0 0.0
  %2087 = vmatprep.subr.mxu0 0.0
  %2088 = vmatpush1.msra.mxu0 0.0
  %2089 = vmatprep.subr.mxu0 0.0
  %2090 = vmatpush1.msra.mxu0 0.0
  %2091 = vmatprep.subr.mxu0 0.0
  %2092 = vmatpush1.msra.mxu0 0.0
  %2093 = vmatprep.subr.mxu0 0.0
  %2094 = vmatpush1.msra.mxu0 0.0
  %2095 = vmatprep.subr.mxu0 0.0
  %2096 = vmatpush1.msra.mxu0 0.0
  %2097 = vmatprep.subr.mxu0 0.0
  %2098 = vmatpush1.msra.mxu0 0.0
  %2099 = vmatprep.subr.mxu0 0.0
  %2100 = vmatpush1.msra.mxu0 0.0
  %2101 = vmatprep.subr.mxu0 0.0
  %2102 = vmatpush1.msra.mxu0 0.0
  %2103 = vmatprep.subr.mxu0 0.0
  %2104 = vmatpush1.msra.mxu0 0.0
  %2105 = vmatprep.subr.mxu0 0.0
  %2106 = vmatpush1.msra.mxu0 0.0
  %2107 = vmatprep.subr.mxu0 0.0
  %2108 = vmatpush1.msra.mxu0 0.0
  %2109 = vmatprep.subr.mxu0 0.0
  %2110 = vmatpush1.msra.mxu0 0.0
  %2111 = vmatprep.subr.mxu0 0.0
  %2112 = vmatpush1.msra.mxu0 0.0
  %2113 = vmatprep.subr.mxu0 0.0
  %2114 = vmatpush1.msra.mxu0 0.0
  %2115 = vmatprep.subr.mxu0 0.0
  %2116 = vmatpush1.msra.mxu0 0.0
  %2117 = vmatprep.mubr.f32.mxu0 0.0
  %v2118 = vand.u32 %v1637, 4294901760
  %2119 = vmatmul.mubr.f32.gmra.mrb[0].mxu0 %v2118
  %v2120 = vpop.f32.mrb[0].mxu0
  %v2121 = vadd.f32 %v2046, %v2120
  %v2122 = vpop.f32.mrb[0].mxu0
  %2123 = vdwg.mxu0
  %v2124 = vadd.f32 %v1630, %v2121
  %v2125 = vxor.u32 %v2124, 2147483648
  %v2126 = vmul.f32 %v2125, 1.442695
  %v2127 = vpow.pop %v2126
  %v2128 = vadd.f32 %v2127, 1.0
  %v2129 = vrcp.pop %v2128
  %v2130 = vmul.f32 1.0, %v2129
  %v2131 = vtanh.pop %v2124
  %v2132 = vld [vmem:[#allocation3] sm:$0xf]
  %2134 = vrot.lane.b32.xlu0 %v2132, 32
  %v2135 = vpop.permute.xlu0 %2134
  %v2137 = vmul.f32 %v2130, %v2135
  %2139 = vrot.lane.b32.xlu0 %v2131, 64
  %v2140 = vpop.permute.xlu0 %2139
  %v2142 = vmul.f32 %v2130, %v2140
  %2144 = vrot.lane.b32.xlu0 %v2142, 32
  %v2145 = vpop.permute.xlu0 %2144
  %v2147 = vadd.f32 %v2137, %v2145
  %v2148 = vtanh.pop %v2147
  %2150 = vrot.lane.b32.xlu0 %v2148, 64
  %v2151 = vpop.permute.xlu0 %2150
  %v2153 = vmul.f32 %v2130, %v2151
  %2155 = vrot.lane.b32.xlu0 %v2147, 96
  %v2156 = vpop.permute.xlu0 %2155
  %2158 = vst.msk [vmem:[#allocation3] sm:$0xf] %vm547, %v2156
  %2160 = vrot.lane.b32.xlu0 %v2153, 32
  %v2161 = vpop.permute.xlu0 %2160
  %2163 = vst.msk [vmem:[#allocation2] sm:$0xf] %vm547, %v2161
  %s2164 = scalar_lea.vmem %s2, 12
  %2165 = vst.msk [vmem:[%s2164] sm:$0xf] %vm547, %v2161
  %s2166 = scalar_lea.vmem %s0, 16
  %v2167 = vld [vmem:[%s2166] sm:$0xf]
  %v2168 = vld [vmem:[#allocation2] sm:$0xf]
  %v2169 = vld [vmem:[%s1] sm:$0xff]
  %v2170 = vld [vmem:[%s1 + $0x8] sm:$0xff]
  %v2171 = vld [vmem:[%s1 + $0x10] sm:$0xff]
  %v2172 = vld [vmem:[%s1 + $0x18] sm:$0xff]
  %v2174 = vsel %vm24, %v2168, 0
  %2176 = vmatprep.subr.mxu0 0.0
  %v2177 = vand.u32 %v2169, 4294901760
  %2178 = vmatpush1.msra.mxu0 %v2177
  %2179 = vmatprep.subr.mxu0 0.0
  %v2180 = vand.u32 %v2170, 4294901760
  %2181 = vmatpush1.msra.mxu0 %v2180
  %2182 = vmatprep.subr.mxu0 0.0
  %v2183 = vand.u32 %v2171, 4294901760
  %2184 = vmatpush1.msra.mxu0 %v2183
  %2185 = vmatprep.subr.mxu0 0.0
  %v2186 = vand.u32 %v2172, 4294901760
  %2187 = vmatpush1.msra.mxu0 %v2186
  %2188 = vmatprep.subr.mxu0 0.0
  %2189 = vmatpush1.msra.mxu0 0.0
  %2190 = vmatprep.subr.mxu0 0.0
  %2191 = vmatpush1.msra.mxu0 0.0
  %2192 = vmatprep.subr.mxu0 0.0
  %2193 = vmatpush1.msra.mxu0 0.0
  %2194 = vmatprep.subr.mxu0 0.0
  %2195 = vmatpush1.msra.mxu0 0.0
  %2196 = vmatprep.subr.mxu0 0.0
  %2197 = vmatpush1.msra.mxu0 0.0
  %2198 = vmatprep.subr.mxu0 0.0
  %2199 = vmatpush1.msra.mxu0 0.0
  %2200 = vmatprep.subr.mxu0 0.0
  %2201 = vmatpush1.msra.mxu0 0.0
  %2202 = vmatprep.subr.mxu0 0.0
  %2203 = vmatpush1.msra.mxu0 0.0
  %2204 = vmatprep.subr.mxu0 0.0
  %2205 = vmatpush1.msra.mxu0 0.0
  %2206 = vmatprep.subr.mxu0 0.0
  %2207 = vmatpush1.msra.mxu0 0.0
  %2208 = vmatprep.subr.mxu0 0.0
  %2209 = vmatpush1.msra.mxu0 0.0
  %2210 = vmatprep.subr.mxu0 0.0
  %2211 = vmatpush1.msra.mxu0 0.0
  %2212 = vmatprep.subr.mxu0 0.0
  %2213 = vmatpush1.msra.mxu0 0.0
  %2214 = vmatprep.subr.mxu0 0.0
  %2215 = vmatpush1.msra.mxu0 0.0
  %2216 = vmatprep.subr.mxu0 0.0
  %2217 = vmatpush1.msra.mxu0 0.0
  %2218 = vmatprep.subr.mxu0 0.0
  %2219 = vmatpush1.msra.mxu0 0.0
  %2220 = vmatprep.subr.mxu0 0.0
  %2221 = vmatpush1.msra.mxu0 0.0
  %2222 = vmatprep.subr.mxu0 0.0
  %2223 = vmatpush1.msra.mxu0 0.0
  %2224 = vmatprep.subr.mxu0 0.0
  %2225 = vmatpush1.msra.mxu0 0.0
  %2226 = vmatprep.subr.mxu0 0.0
  %2227 = vmatpush1.msra.mxu0 0.0
  %2228 = vmatprep.subr.mxu0 0.0
  %2229 = vmatpush1.msra.mxu0 0.0
  %2230 = vmatprep.subr.mxu0 0.0
  %2231 = vmatpush1.msra.mxu0 0.0
  %2232 = vmatprep.subr.mxu0 0.0
  %2233 = vmatpush1.msra.mxu0 0.0
  %2234 = vmatprep.subr.mxu0 0.0
  %2235 = vmatpush1.msra.mxu0 0.0
  %2236 = vmatprep.subr.mxu0 0.0
  %2237 = vmatpush1.msra.mxu0 0.0
  %2238 = vmatprep.subr.mxu0 0.0
  %2239 = vmatpush1.msra.mxu0 0.0
  %2240 = vmatprep.subr.mxu0 0.0
  %2241 = vmatpush1.msra.mxu0 0.0
  %2242 = vmatprep.subr.mxu0 0.0
  %2243 = vmatpush1.msra.mxu0 0.0
  %2244 = vmatprep.mubr.f32.mxu0 0.0
  %v2245 = vand.u32 %v2174, 4294901760
  %v2246 = vsub.f32 %v2174, %v2245
  %v2247 = vand.u32 %v2246, 4294901760
  %v2248 = vsub.f32 %v2246, %v2247
  %v2249 = vand.u32 %v2248, 4294901760
  %2250 = vmatmul.mubr.f32.gmra.mrb[0].mxu0 %v2249
  %v2251 = vpop.f32.mrb[0].mxu0
  %v2252 = vadd.f32 0.0, %v2251
  %v2253 = vpop.f32.mrb[0].mxu0
  %2254 = vdwg.mxu0
  %2255 = vmatprep.subr.mxu0 0.0
  %v2256 = vand.u32 %v2169, 4294901760
  %v2257 = vsub.f32 %v2169, %v2256
  %v2258 = vand.u32 %v2257, 4294901760
  %v2259 = vsub.f32 %v2257, %v2258
  %v2260 = vand.u32 %v2259, 4294901760
  %2261 = vmatpush1.msra.mxu0 %v2260
  %2262 = vmatprep.subr.mxu0 0.0
  %v2263 = vand.u32 %v2170, 4294901760
  %v2264 = vsub.f32 %v2170, %v2263
  %v2265 = vand.u32 %v2264, 4294901760
  %v2266 = vsub.f32 %v2264, %v2265
  %v2267 = vand.u32 %v2266, 4294901760
  %2268 = vmatpush1.msra.mxu0 %v2267
  %2269 = vmatprep.subr.mxu0 0.0
  %v2270 = vand.u32 %v2171, 4294901760
  %v2271 = vsub.f32 %v2171, %v2270
  %v2272 = vand.u32 %v2271, 4294901760
  %v2273 = vsub.f32 %v2271, %v2272
  %v2274 = vand.u32 %v2273, 4294901760
  %2275 = vmatpush1.msra.mxu0 %v2274
  %2276 = vmatprep.subr.mxu0 0.0
  %v2277 = vand.u32 %v2172, 4294901760
  %v2278 = vsub.f32 %v2172, %v2277
  %v2279 = vand.u32 %v2278, 4294901760
  %v2280 = vsub.f32 %v2278, %v2279
  %v2281 = vand.u32 %v2280, 4294901760
  %2282 = vmatpush1.msra.mxu0 %v2281
  %2283 = vmatprep.subr.mxu0 0.0
  %2284 = vmatpush1.msra.mxu0 0.0
  %2285 = vmatprep.subr.mxu0 0.0
  %2286 = vmatpush1.msra.mxu0 0.0
  %2287 = vmatprep.subr.mxu0 0.0
  %2288 = vmatpush1.msra.mxu0 0.0
  %2289 = vmatprep.subr.mxu0 0.0
  %2290 = vmatpush1.msra.mxu0 0.0
  %2291 = vmatprep.subr.mxu0 0.0
  %2292 = vmatpush1.msra.mxu0 0.0
  %2293 = vmatprep.subr.mxu0 0.0
  %2294 = vmatpush1.msra.mxu0 0.0
  %2295 = vmatprep.subr.mxu0 0.0
  %2296 = vmatpush1.msra.mxu0 0.0
  %2297 = vmatprep.subr.mxu0 0.0
  %2298 = vmatpush1.msra.mxu0 0.0
  %2299 = vmatprep.subr.mxu0 0.0
  %2300 = vmatpush1.msra.mxu0 0.0
  %2301 = vmatprep.subr.mxu0 0.0
  %2302 = vmatpush1.msra.mxu0 0.0
  %2303 = vmatprep.subr.mxu0 0.0
  %2304 = vmatpush1.msra.mxu0 0.0
  %2305 = vmatprep.subr.mxu0 0.0
  %2306 = vmatpush1.msra.mxu0 0.0
  %2307 = vmatprep.subr.mxu0 0.0
  %2308 = vmatpush1.msra.mxu0 0.0
  %2309 = vmatprep.subr.mxu0 0.0
  %2310 = vmatpush1.msra.mxu0 0.0
  %2311 = vmatprep.subr.mxu0 0.0
  %2312 = vmatpush1.msra.mxu0 0.0
  %2313 = vmatprep.subr.mxu0 0.0
  %2314 = vmatpush1.msra.mxu0 0.0
  %2315 = vmatprep.subr.mxu0 0.0
  %2316 = vmatpush1.msra.mxu0 0.0
  %2317 = vmatprep.subr.mxu0 0.0
  %2318 = vmatpush1.msra.mxu0 0.0
  %2319 = vmatprep.subr.mxu0 0.0
  %2320 = vmatpush1.msra.mxu0 0.0
  %2321 = vmatprep.subr.mxu0 0.0
  %2322 = vmatpush1.msra.mxu0 0.0
  %2323 = vmatprep.subr.mxu0 0.0
  %2324 = vmatpush1.msra.mxu0 0.0
  %2325 = vmatprep.subr.mxu0 0.0
  %2326 = vmatpush1.msra.mxu0 0.0
  %2327 = vmatprep.subr.mxu0 0.0
  %2328 = vmatpush1.msra.mxu0 0.0
  %2329 = vmatprep.subr.mxu0 0.0
  %2330 = vmatpush1.msra.mxu0 0.0
  %2331 = vmatprep.subr.mxu0 0.0
  %2332 = vmatpush1.msra.mxu0 0.0
  %2333 = vmatprep.subr.mxu0 0.0
  %2334 = vmatpush1.msra.mxu0 0.0
  %2335 = vmatprep.subr.mxu0 0.0
  %2336 = vmatpush1.msra.mxu0 0.0
  %2337 = vmatprep.subr.mxu0 0.0
  %2338 = vmatpush1.msra.mxu0 0.0
  %2339 = vmatprep.mubr.f32.mxu0 0.0
  %v2340 = vand.u32 %v2174, 4294901760
  %2341 = vmatmul.mubr.f32.gmra.mrb[0].mxu0 %v2340
  %v2342 = vpop.f32.mrb[0].mxu0
  %v2343 = vadd.f32 %v2252, %v2342
  %v2344 = vpop.f32.mrb[0].mxu0
  %2345 = vdwg.mxu0
  %2346 = vmatprep.subr.mxu0 0.0
  %v2347 = vand.u32 %v2169, 4294901760
  %v2348 = vsub.f32 %v2169, %v2347
  %2349 = vmatpush1.msra.mxu0 %v2348
  %2350 = vmatprep.subr.mxu0 0.0
  %v2351 = vand.u32 %v2170, 4294901760
  %v2352 = vsub.f32 %v2170, %v2351
  %2353 = vmatpush1.msra.mxu0 %v2352
  %2354 = vmatprep.subr.mxu0 0.0
  %v2355 = vand.u32 %v2171, 4294901760
  %v2356 = vsub.f32 %v2171, %v2355
  %2357 = vmatpush1.msra.mxu0 %v2356
  %2358 = vmatprep.subr.mxu0 0.0
  %v2359 = vand.u32 %v2172, 4294901760
  %v2360 = vsub.f32 %v2172, %v2359
  %2361 = vmatpush1.msra.mxu0 %v2360
  %2362 = vmatprep.subr.mxu0 0.0
  %2363 = vmatpush1.msra.mxu0 0.0
  %2364 = vmatprep.subr.mxu0 0.0
  %2365 = vmatpush1.msra.mxu0 0.0
  %2366 = vmatprep.subr.mxu0 0.0
  %2367 = vmatpush1.msra.mxu0 0.0
  %2368 = vmatprep.subr.mxu0 0.0
  %2369 = vmatpush1.msra.mxu0 0.0
  %2370 = vmatprep.subr.mxu0 0.0
  %2371 = vmatpush1.msra.mxu0 0.0
  %2372 = vmatprep.subr.mxu0 0.0
  %2373 = vmatpush1.msra.mxu0 0.0
  %2374 = vmatprep.subr.mxu0 0.0
  %2375 = vmatpush1.msra.mxu0 0.0
  %2376 = vmatprep.subr.mxu0 0.0
  %2377 = vmatpush1.msra.mxu0 0.0
  %2378 = vmatprep.subr.mxu0 0.0
  %2379 = vmatpush1.msra.mxu0 0.0
  %2380 = vmatprep.subr.mxu0 0.0
  %2381 = vmatpush1.msra.mxu0 0.0
  %2382 = vmatprep.subr.mxu0 0.0
  %2383 = vmatpush1.msra.mxu0 0.0
  %2384 = vmatprep.subr.mxu0 0.0
  %2385 = vmatpush1.msra.mxu0 0.0
  %2386 = vmatprep.subr.mxu0 0.0
  %2387 = vmatpush1.msra.mxu0 0.0
  %2388 = vmatprep.subr.mxu0 0.0
  %2389 = vmatpush1.msra.mxu0 0.0
  %2390 = vmatprep.subr.mxu0 0.0
  %2391 = vmatpush1.msra.mxu0 0.0
  %2392 = vmatprep.subr.mxu0 0.0
  %2393 = vmatpush1.msra.mxu0 0.0
  %2394 = vmatprep.subr.mxu0 0.0
  %2395 = vmatpush1.msra.mxu0 0.0
  %2396 = vmatprep.subr.mxu0 0.0
  %2397 = vmatpush1.msra.mxu0 0.0
  %2398 = vmatprep.subr.mxu0 0.0
  %2399 = vmatpush1.msra.mxu0 0.0
  %2400 = vmatprep.subr.mxu0 0.0
  %2401 = vmatpush1.msra.mxu0 0.0
  %2402 = vmatprep.subr.mxu0 0.0
  %2403 = vmatpush1.msra.mxu0 0.0
  %2404 = vmatprep.subr.mxu0 0.0
  %2405 = vmatpush1.msra.mxu0 0.0
  %2406 = vmatprep.subr.mxu0 0.0
  %2407 = vmatpush1.msra.mxu0 0.0
  %2408 = vmatprep.subr.mxu0 0.0
  %2409 = vmatpush1.msra.mxu0 0.0
  %2410 = vmatprep.subr.mxu0 0.0
  %2411 = vmatpush1.msra.mxu0 0.0
  %2412 = vmatprep.subr.mxu0 0.0
  %2413 = vmatpush1.msra.mxu0 0.0
  %2414 = vmatprep.subr.mxu0 0.0
  %2415 = vmatpush1.msra.mxu0 0.0
  %2416 = vmatprep.subr.mxu0 0.0
  %2417 = vmatpush1.msra.mxu0 0.0
  %2418 = vmatprep.mubr.f32.mxu0 0.0
  %v2419 = vand.u32 %v2174, 4294901760
  %v2420 = vsub.f32 %v2174, %v2419
  %2421 = vmatmul.mubr.f32.gmra.mrb[0].mxu0 %v2420
  %v2422 = vpop.f32.mrb[0].mxu0
  %v2423 = vadd.f32 %v2343, %v2422
  %v2424 = vpop.f32.mrb[0].mxu0
  %2425 = vdwg.mxu0
  %2426 = vmatprep.subr.mxu0 0.0
  %v2427 = vand.u32 %v2169, 4294901760
  %2428 = vmatpush1.msra.mxu0 %v2427
  %2429 = vmatprep.subr.mxu0 0.0
  %v2430 = vand.u32 %v2170, 4294901760
  %2431 = vmatpush1.msra.mxu0 %v2430
  %2432 = vmatprep.subr.mxu0 0.0
  %v2433 = vand.u32 %v2171, 4294901760
  %2434 = vmatpush1.msra.mxu0 %v2433
  %2435 = vmatprep.subr.mxu0 0.0
  %v2436 = vand.u32 %v2172, 4294901760
  %2437 = vmatpush1.msra.mxu0 %v2436
  %2438 = vmatprep.subr.mxu0 0.0
  %2439 = vmatpush1.msra.mxu0 0.0
  %2440 = vmatprep.subr.mxu0 0.0
  %2441 = vmatpush1.msra.mxu0 0.0
  %2442 = vmatprep.subr.mxu0 0.0
  %2443 = vmatpush1.msra.mxu0 0.0
  %2444 = vmatprep.subr.mxu0 0.0
  %2445 = vmatpush1.msra.mxu0 0.0
  %2446 = vmatprep.subr.mxu0 0.0
  %2447 = vmatpush1.msra.mxu0 0.0
  %2448 = vmatprep.subr.mxu0 0.0
  %2449 = vmatpush1.msra.mxu0 0.0
  %2450 = vmatprep.subr.mxu0 0.0
  %2451 = vmatpush1.msra.mxu0 0.0
  %2452 = vmatprep.subr.mxu0 0.0
  %2453 = vmatpush1.msra.mxu0 0.0
  %2454 = vmatprep.subr.mxu0 0.0
  %2455 = vmatpush1.msra.mxu0 0.0
  %2456 = vmatprep.subr.mxu0 0.0
  %2457 = vmatpush1.msra.mxu0 0.0
  %2458 = vmatprep.subr.mxu0 0.0
  %2459 = vmatpush1.msra.mxu0 0.0
  %2460 = vmatprep.subr.mxu0 0.0
  %2461 = vmatpush1.msra.mxu0 0.0
  %2462 = vmatprep.subr.mxu0 0.0
  %2463 = vmatpush1.msra.mxu0 0.0
  %2464 = vmatprep.subr.mxu0 0.0
  %2465 = vmatpush1.msra.mxu0 0.0
  %2466 = vmatprep.subr.mxu0 0.0
  %2467 = vmatpush1.msra.mxu0 0.0
  %2468 = vmatprep.subr.mxu0 0.0
  %2469 = vmatpush1.msra.mxu0 0.0
  %2470 = vmatprep.subr.mxu0 0.0
  %2471 = vmatpush1.msra.mxu0 0.0
  %2472 = vmatprep.subr.mxu0 0.0
  %2473 = vmatpush1.msra.mxu0 0.0
  %2474 = vmatprep.subr.mxu0 0.0
  %2475 = vmatpush1.msra.mxu0 0.0
  %2476 = vmatprep.subr.mxu0 0.0
  %2477 = vmatpush1.msra.mxu0 0.0
  %2478 = vmatprep.subr.mxu0 0.0
  %2479 = vmatpush1.msra.mxu0 0.0
  %2480 = vmatprep.subr.mxu0 0.0
  %2481 = vmatpush1.msra.mxu0 0.0
  %2482 = vmatprep.subr.mxu0 0.0
  %2483 = vmatpush1.msra.mxu0 0.0
  %2484 = vmatprep.subr.mxu0 0.0
  %2485 = vmatpush1.msra.mxu0 0.0
  %2486 = vmatprep.subr.mxu0 0.0
  %2487 = vmatpush1.msra.mxu0 0.0
  %2488 = vmatprep.subr.mxu0 0.0
  %2489 = vmatpush1.msra.mxu0 0.0
  %2490 = vmatprep.subr.mxu0 0.0
  %2491 = vmatpush1.msra.mxu0 0.0
  %2492 = vmatprep.subr.mxu0 0.0
  %2493 = vmatpush1.msra.mxu0 0.0
  %2494 = vmatprep.mubr.f32.mxu0 0.0
  %v2495 = vand.u32 %v2174, 4294901760
  %v2496 = vsub.f32 %v2174, %v2495
  %v2497 = vand.u32 %v2496, 4294901760
  %2498 = vmatmul.mubr.f32.gmra.mrb[0].mxu0 %v2497
  %v2499 = vpop.f32.mrb[0].mxu0
  %v2500 = vadd.f32 %v2423, %v2499
  %v2501 = vpop.f32.mrb[0].mxu0
  %2502 = vdwg.mxu0
  %2503 = vmatprep.subr.mxu0 0.0
  %v2504 = vand.u32 %v2169, 4294901760
  %v2505 = vsub.f32 %v2169, %v2504
  %v2506 = vand.u32 %v2505, 4294901760
  %2507 = vmatpush1.msra.mxu0 %v2506
  %2508 = vmatprep.subr.mxu0 0.0
  %v2509 = vand.u32 %v2170, 4294901760
  %v2510 = vsub.f32 %v2170, %v2509
  %v2511 = vand.u32 %v2510, 4294901760
  %2512 = vmatpush1.msra.mxu0 %v2511
  %2513 = vmatprep.subr.mxu0 0.0
  %v2514 = vand.u32 %v2171, 4294901760
  %v2515 = vsub.f32 %v2171, %v2514
  %v2516 = vand.u32 %v2515, 4294901760
  %2517 = vmatpush1.msra.mxu0 %v2516
  %2518 = vmatprep.subr.mxu0 0.0
  %v2519 = vand.u32 %v2172, 4294901760
  %v2520 = vsub.f32 %v2172, %v2519
  %v2521 = vand.u32 %v2520, 4294901760
  %2522 = vmatpush1.msra.mxu0 %v2521
  %2523 = vmatprep.subr.mxu0 0.0
  %2524 = vmatpush1.msra.mxu0 0.0
  %2525 = vmatprep.subr.mxu0 0.0
  %2526 = vmatpush1.msra.mxu0 0.0
  %2527 = vmatprep.subr.mxu0 0.0
  %2528 = vmatpush1.msra.mxu0 0.0
  %2529 = vmatprep.subr.mxu0 0.0
  %2530 = vmatpush1.msra.mxu0 0.0
  %2531 = vmatprep.subr.mxu0 0.0
  %2532 = vmatpush1.msra.mxu0 0.0
  %2533 = vmatprep.subr.mxu0 0.0
  %2534 = vmatpush1.msra.mxu0 0.0
  %2535 = vmatprep.subr.mxu0 0.0
  %2536 = vmatpush1.msra.mxu0 0.0
  %2537 = vmatprep.subr.mxu0 0.0
  %2538 = vmatpush1.msra.mxu0 0.0
  %2539 = vmatprep.subr.mxu0 0.0
  %2540 = vmatpush1.msra.mxu0 0.0
  %2541 = vmatprep.subr.mxu0 0.0
  %2542 = vmatpush1.msra.mxu0 0.0
  %2543 = vmatprep.subr.mxu0 0.0
  %2544 = vmatpush1.msra.mxu0 0.0
  %2545 = vmatprep.subr.mxu0 0.0
  %2546 = vmatpush1.msra.mxu0 0.0
  %2547 = vmatprep.subr.mxu0 0.0
  %2548 = vmatpush1.msra.mxu0 0.0
  %2549 = vmatprep.subr.mxu0 0.0
  %2550 = vmatpush1.msra.mxu0 0.0
  %2551 = vmatprep.subr.mxu0 0.0
  %2552 = vmatpush1.msra.mxu0 0.0
  %2553 = vmatprep.subr.mxu0 0.0
  %2554 = vmatpush1.msra.mxu0 0.0
  %2555 = vmatprep.subr.mxu0 0.0
  %2556 = vmatpush1.msra.mxu0 0.0
  %2557 = vmatprep.subr.mxu0 0.0
  %2558 = vmatpush1.msra.mxu0 0.0
  %2559 = vmatprep.subr.mxu0 0.0
  %2560 = vmatpush1.msra.mxu0 0.0
  %2561 = vmatprep.subr.mxu0 0.0
  %2562 = vmatpush1.msra.mxu0 0.0
  %2563 = vmatprep.subr.mxu0 0.0
  %2564 = vmatpush1.msra.mxu0 0.0
  %2565 = vmatprep.subr.mxu0 0.0
  %2566 = vmatpush1.msra.mxu0 0.0
  %2567 = vmatprep.subr.mxu0 0.0
  %2568 = vmatpush1.msra.mxu0 0.0
  %2569 = vmatprep.subr.mxu0 0.0
  %2570 = vmatpush1.msra.mxu0 0.0
  %2571 = vmatprep.subr.mxu0 0.0
  %2572 = vmatpush1.msra.mxu0 0.0
  %2573 = vmatprep.subr.mxu0 0.0
  %2574 = vmatpush1.msra.mxu0 0.0
  %2575 = vmatprep.subr.mxu0 0.0
  %2576 = vmatpush1.msra.mxu0 0.0
  %2577 = vmatprep.subr.mxu0 0.0
  %2578 = vmatpush1.msra.mxu0 0.0
  %2579 = vmatprep.mubr.f32.mxu0 0.0
  %v2580 = vand.u32 %v2174, 4294901760
  %2581 = vmatmul.mubr.f32.gmra.mrb[0].mxu0 %v2580
  %v2582 = vpop.f32.mrb[0].mxu0
  %v2583 = vadd.f32 %v2500, %v2582
  %v2584 = vpop.f32.mrb[0].mxu0
  %2585 = vdwg.mxu0
  %2586 = vmatprep.subr.mxu0 0.0
  %v2587 = vand.u32 %v2169, 4294901760
  %2588 = vmatpush1.msra.mxu0 %v2587
  %2589 = vmatprep.subr.mxu0 0.0
  %v2590 = vand.u32 %v2170, 4294901760
  %2591 = vmatpush1.msra.mxu0 %v2590
  %2592 = vmatprep.subr.mxu0 0.0
  %v2593 = vand.u32 %v2171, 4294901760
  %2594 = vmatpush1.msra.mxu0 %v2593
  %2595 = vmatprep.subr.mxu0 0.0
  %v2596 = vand.u32 %v2172, 4294901760
  %2597 = vmatpush1.msra.mxu0 %v2596
  %2598 = vmatprep.subr.mxu0 0.0
  %2599 = vmatpush1.msra.mxu0 0.0
  %2600 = vmatprep.subr.mxu0 0.0
  %2601 = vmatpush1.msra.mxu0 0.0
  %2602 = vmatprep.subr.mxu0 0.0
  %2603 = vmatpush1.msra.mxu0 0.0
  %2604 = vmatprep.subr.mxu0 0.0
  %2605 = vmatpush1.msra.mxu0 0.0
  %2606 = vmatprep.subr.mxu0 0.0
  %2607 = vmatpush1.msra.mxu0 0.0
  %2608 = vmatprep.subr.mxu0 0.0
  %2609 = vmatpush1.msra.mxu0 0.0
  %2610 = vmatprep.subr.mxu0 0.0
  %2611 = vmatpush1.msra.mxu0 0.0
  %2612 = vmatprep.subr.mxu0 0.0
  %2613 = vmatpush1.msra.mxu0 0.0
  %2614 = vmatprep.subr.mxu0 0.0
  %2615 = vmatpush1.msra.mxu0 0.0
  %2616 = vmatprep.subr.mxu0 0.0
  %2617 = vmatpush1.msra.mxu0 0.0
  %2618 = vmatprep.subr.mxu0 0.0
  %2619 = vmatpush1.msra.mxu0 0.0
  %2620 = vmatprep.subr.mxu0 0.0
  %2621 = vmatpush1.msra.mxu0 0.0
  %2622 = vmatprep.subr.mxu0 0.0
  %2623 = vmatpush1.msra.mxu0 0.0
  %2624 = vmatprep.subr.mxu0 0.0
  %2625 = vmatpush1.msra.mxu0 0.0
  %2626 = vmatprep.subr.mxu0 0.0
  %2627 = vmatpush1.msra.mxu0 0.0
  %2628 = vmatprep.subr.mxu0 0.0
  %2629 = vmatpush1.msra.mxu0 0.0
  %2630 = vmatprep.subr.mxu0 0.0
  %2631 = vmatpush1.msra.mxu0 0.0
  %2632 = vmatprep.subr.mxu0 0.0
  %2633 = vmatpush1.msra.mxu0 0.0
  %2634 = vmatprep.subr.mxu0 0.0
  %2635 = vmatpush1.msra.mxu0 0.0
  %2636 = vmatprep.subr.mxu0 0.0
  %2637 = vmatpush1.msra.mxu0 0.0
  %2638 = vmatprep.subr.mxu0 0.0
  %2639 = vmatpush1.msra.mxu0 0.0
  %2640 = vmatprep.subr.mxu0 0.0
  %2641 = vmatpush1.msra.mxu0 0.0
  %2642 = vmatprep.subr.mxu0 0.0
  %2643 = vmatpush1.msra.mxu0 0.0
  %2644 = vmatprep.subr.mxu0 0.0
  %2645 = vmatpush1.msra.mxu0 0.0
  %2646 = vmatprep.subr.mxu0 0.0
  %2647 = vmatpush1.msra.mxu0 0.0
  %2648 = vmatprep.subr.mxu0 0.0
  %2649 = vmatpush1.msra.mxu0 0.0
  %2650 = vmatprep.subr.mxu0 0.0
  %2651 = vmatpush1.msra.mxu0 0.0
  %2652 = vmatprep.subr.mxu0 0.0
  %2653 = vmatpush1.msra.mxu0 0.0
  %2654 = vmatprep.mubr.f32.mxu0 0.0
  %v2655 = vand.u32 %v2174, 4294901760
  %2656 = vmatmul.mubr.f32.gmra.mrb[0].mxu0 %v2655
  %v2657 = vpop.f32.mrb[0].mxu0
  %v2658 = vadd.f32 %v2583, %v2657
  %v2659 = vpop.f32.mrb[0].mxu0
  %2660 = vdwg.mxu0
  %v2661 = vadd.f32 %v2167, %v2658
  %v2662 = vxor.u32 %v2661, 2147483648
  %v2663 = vmul.f32 %v2662, 1.442695
  %v2664 = vpow.pop %v2663
  %v2665 = vadd.f32 %v2664, 1.0
  %v2666 = vrcp.pop %v2665
  %v2667 = vmul.f32 1.0, %v2666
  %v2668 = vtanh.pop %v2661
  %v2669 = vld [vmem:[#allocation3] sm:$0xf]
  %2671 = vrot.lane.b32.xlu0 %v2669, 32
  %v2672 = vpop.permute.xlu0 %2671
  %v2674 = vmul.f32 %v2667, %v2672
  %2676 = vrot.lane.b32.xlu0 %v2668, 64
  %v2677 = vpop.permute.xlu0 %2676
  %v2679 = vmul.f32 %v2667, %v2677
  %2681 = vrot.lane.b32.xlu0 %v2679, 32
  %v2682 = vpop.permute.xlu0 %2681
  %v2684 = vadd.f32 %v2674, %v2682
  %v2685 = vtanh.pop %v2684
  %2687 = vrot.lane.b32.xlu0 %v2685, 64
  %v2688 = vpop.permute.xlu0 %2687
  %v2690 = vmul.f32 %v2667, %v2688
  %2692 = vrot.lane.b32.xlu0 %v2684, 96
  %v2693 = vpop.permute.xlu0 %2692
  %2695 = vst.msk [vmem:[#allocation3] sm:$0xf] %vm547, %v2693
  %2697 = vrot.lane.b32.xlu0 %v2690, 32
  %v2698 = vpop.permute.xlu0 %2697
  %2700 = vst.msk [vmem:[#allocation2] sm:$0xf] %vm547, %v2698
  %s2701 = scalar_lea.vmem %s2, 16
  %2702 = vst.msk [vmem:[%s2701] sm:$0xf] %vm547, %v2698
  %s2703 = scalar_lea.vmem %s0, 20
  %v2704 = vld [vmem:[%s2703] sm:$0xf]
  %v2705 = vld [vmem:[#allocation2] sm:$0xf]
  %v2706 = vld [vmem:[%s1] sm:$0xff]
  %v2707 = vld [vmem:[%s1 + $0x8] sm:$0xff]
  %v2708 = vld [vmem:[%s1 + $0x10] sm:$0xff]
  %v2709 = vld [vmem:[%s1 + $0x18] sm:$0xff]
  %v2711 = vsel %vm24, %v2705, 0
  %2713 = vmatprep.subr.mxu0 0.0
  %v2714 = vand.u32 %v2706, 4294901760
  %2715 = vmatpush1.msra.mxu0 %v2714
  %2716 = vmatprep.subr.mxu0 0.0
  %v2717 = vand.u32 %v2707, 4294901760
  %2718 = vmatpush1.msra.mxu0 %v2717
  %2719 = vmatprep.subr.mxu0 0.0
  %v2720 = vand.u32 %v2708, 4294901760
  %2721 = vmatpush1.msra.mxu0 %v2720
  %2722 = vmatprep.subr.mxu0 0.0
  %v2723 = vand.u32 %v2709, 4294901760
  %2724 = vmatpush1.msra.mxu0 %v2723
  %2725 = vmatprep.subr.mxu0 0.0
  %2726 = vmatpush1.msra.mxu0 0.0
  %2727 = vmatprep.subr.mxu0 0.0
  %2728 = vmatpush1.msra.mxu0 0.0
  %2729 = vmatprep.subr.mxu0 0.0
  %2730 = vmatpush1.msra.mxu0 0.0
  %2731 = vmatprep.subr.mxu0 0.0
  %2732 = vmatpush1.msra.mxu0 0.0
  %2733 = vmatprep.subr.mxu0 0.0
  %2734 = vmatpush1.msra.mxu0 0.0
  %2735 = vmatprep.subr.mxu0 0.0
  %2736 = vmatpush1.msra.mxu0 0.0
  %2737 = vmatprep.subr.mxu0 0.0
  %2738 = vmatpush1.msra.mxu0 0.0
  %2739 = vmatprep.subr.mxu0 0.0
  %2740 = vmatpush1.msra.mxu0 0.0
  %2741 = vmatprep.subr.mxu0 0.0
  %2742 = vmatpush1.msra.mxu0 0.0
  %2743 = vmatprep.subr.mxu0 0.0
  %2744 = vmatpush1.msra.mxu0 0.0
  %2745 = vmatprep.subr.mxu0 0.0
  %2746 = vmatpush1.msra.mxu0 0.0
  %2747 = vmatprep.subr.mxu0 0.0
  %2748 = vmatpush1.msra.mxu0 0.0
  %2749 = vmatprep.subr.mxu0 0.0
  %2750 = vmatpush1.msra.mxu0 0.0
  %2751 = vmatprep.subr.mxu0 0.0
  %2752 = vmatpush1.msra.mxu0 0.0
  %2753 = vmatprep.subr.mxu0 0.0
  %2754 = vmatpush1.msra.mxu0 0.0
  %2755 = vmatprep.subr.mxu0 0.0
  %2756 = vmatpush1.msra.mxu0 0.0
  %2757 = vmatprep.subr.mxu0 0.0
  %2758 = vmatpush1.msra.mxu0 0.0
  %2759 = vmatprep.subr.mxu0 0.0
  %2760 = vmatpush1.msra.mxu0 0.0
  %2761 = vmatprep.subr.mxu0 0.0
  %2762 = vmatpush1.msra.mxu0 0.0
  %2763 = vmatprep.subr.mxu0 0.0
  %2764 = vmatpush1.msra.mxu0 0.0
  %2765 = vmatprep.subr.mxu0 0.0
  %2766 = vmatpush1.msra.mxu0 0.0
  %2767 = vmatprep.subr.mxu0 0.0
  %2768 = vmatpush1.msra.mxu0 0.0
  %2769 = vmatprep.subr.mxu0 0.0
  %2770 = vmatpush1.msra.mxu0 0.0
  %2771 = vmatprep.subr.mxu0 0.0
  %2772 = vmatpush1.msra.mxu0 0.0
  %2773 = vmatprep.subr.mxu0 0.0
  %2774 = vmatpush1.msra.mxu0 0.0
  %2775 = vmatprep.subr.mxu0 0.0
  %2776 = vmatpush1.msra.mxu0 0.0
  %2777 = vmatprep.subr.mxu0 0.0
  %2778 = vmatpush1.msra.mxu0 0.0
  %2779 = vmatprep.subr.mxu0 0.0
  %2780 = vmatpush1.msra.mxu0 0.0
  %2781 = vmatprep.mubr.f32.mxu0 0.0
  %v2782 = vand.u32 %v2711, 4294901760
  %v2783 = vsub.f32 %v2711, %v2782
  %v2784 = vand.u32 %v2783, 4294901760
  %v2785 = vsub.f32 %v2783, %v2784
  %v2786 = vand.u32 %v2785, 4294901760
  %2787 = vmatmul.mubr.f32.gmra.mrb[0].mxu0 %v2786
  %v2788 = vpop.f32.mrb[0].mxu0
  %v2789 = vadd.f32 0.0, %v2788
  %v2790 = vpop.f32.mrb[0].mxu0
  %2791 = vdwg.mxu0
  %2792 = vmatprep.subr.mxu0 0.0
  %v2793 = vand.u32 %v2706, 4294901760
  %v2794 = vsub.f32 %v2706, %v2793
  %v2795 = vand.u32 %v2794, 4294901760
  %v2796 = vsub.f32 %v2794, %v2795
  %v2797 = vand.u32 %v2796, 4294901760
  %2798 = vmatpush1.msra.mxu0 %v2797
  %2799 = vmatprep.subr.mxu0 0.0
  %v2800 = vand.u32 %v2707, 4294901760
  %v2801 = vsub.f32 %v2707, %v2800
  %v2802 = vand.u32 %v2801, 4294901760
  %v2803 = vsub.f32 %v2801, %v2802
  %v2804 = vand.u32 %v2803, 4294901760
  %2805 = vmatpush1.msra.mxu0 %v2804
  %2806 = vmatprep.subr.mxu0 0.0
  %v2807 = vand.u32 %v2708, 4294901760
  %v2808 = vsub.f32 %v2708, %v2807
  %v2809 = vand.u32 %v2808, 4294901760
  %v2810 = vsub.f32 %v2808, %v2809
  %v2811 = vand.u32 %v2810, 4294901760
  %2812 = vmatpush1.msra.mxu0 %v2811
  %2813 = vmatprep.subr.mxu0 0.0
  %v2814 = vand.u32 %v2709, 4294901760
  %v2815 = vsub.f32 %v2709, %v2814
  %v2816 = vand.u32 %v2815, 4294901760
  %v2817 = vsub.f32 %v2815, %v2816
  %v2818 = vand.u32 %v2817, 4294901760
  %2819 = vmatpush1.msra.mxu0 %v2818
  %2820 = vmatprep.subr.mxu0 0.0
  %2821 = vmatpush1.msra.mxu0 0.0
  %2822 = vmatprep.subr.mxu0 0.0
  %2823 = vmatpush1.msra.mxu0 0.0
  %2824 = vmatprep.subr.mxu0 0.0
  %2825 = vmatpush1.msra.mxu0 0.0
  %2826 = vmatprep.subr.mxu0 0.0
  %2827 = vmatpush1.msra.mxu0 0.0
  %2828 = vmatprep.subr.mxu0 0.0
  %2829 = vmatpush1.msra.mxu0 0.0
  %2830 = vmatprep.subr.mxu0 0.0
  %2831 = vmatpush1.msra.mxu0 0.0
  %2832 = vmatprep.subr.mxu0 0.0
  %2833 = vmatpush1.msra.mxu0 0.0
  %2834 = vmatprep.subr.mxu0 0.0
  %2835 = vmatpush1.msra.mxu0 0.0
  %2836 = vmatprep.subr.mxu0 0.0
  %2837 = vmatpush1.msra.mxu0 0.0
  %2838 = vmatprep.subr.mxu0 0.0
  %2839 = vmatpush1.msra.mxu0 0.0
  %2840 = vmatprep.subr.mxu0 0.0
  %2841 = vmatpush1.msra.mxu0 0.0
  %2842 = vmatprep.subr.mxu0 0.0
  %2843 = vmatpush1.msra.mxu0 0.0
  %2844 = vmatprep.subr.mxu0 0.0
  %2845 = vmatpush1.msra.mxu0 0.0
  %2846 = vmatprep.subr.mxu0 0.0
  %2847 = vmatpush1.msra.mxu0 0.0
  %2848 = vmatprep.subr.mxu0 0.0
  %2849 = vmatpush1.msra.mxu0 0.0
  %2850 = vmatprep.subr.mxu0 0.0
  %2851 = vmatpush1.msra.mxu0 0.0
  %2852 = vmatprep.subr.mxu0 0.0
  %2853 = vmatpush1.msra.mxu0 0.0
  %2854 = vmatprep.subr.mxu0 0.0
  %2855 = vmatpush1.msra.mxu0 0.0
  %2856 = vmatprep.subr.mxu0 0.0
  %2857 = vmatpush1.msra.mxu0 0.0
  %2858 = vmatprep.subr.mxu0 0.0
  %2859 = vmatpush1.msra.mxu0 0.0
  %2860 = vmatprep.subr.mxu0 0.0
  %2861 = vmatpush1.msra.mxu0 0.0
  %2862 = vmatprep.subr.mxu0 0.0
  %2863 = vmatpush1.msra.mxu0 0.0
  %2864 = vmatprep.subr.mxu0 0.0
  %2865 = vmatpush1.msra.mxu0 0.0
  %2866 = vmatprep.subr.mxu0 0.0
  %2867 = vmatpush1.msra.mxu0 0.0
  %2868 = vmatprep.subr.mxu0 0.0
  %2869 = vmatpush1.msra.mxu0 0.0
  %2870 = vmatprep.subr.mxu0 0.0
  %2871 = vmatpush1.msra.mxu0 0.0
  %2872 = vmatprep.subr.mxu0 0.0
  %2873 = vmatpush1.msra.mxu0 0.0
  %2874 = vmatprep.subr.mxu0 0.0
  %2875 = vmatpush1.msra.mxu0 0.0
  %2876 = vmatprep.mubr.f32.mxu0 0.0
  %v2877 = vand.u32 %v2711, 4294901760
  %2878 = vmatmul.mubr.f32.gmra.mrb[0].mxu0 %v2877
  %v2879 = vpop.f32.mrb[0].mxu0
  %v2880 = vadd.f32 %v2789, %v2879
  %v2881 = vpop.f32.mrb[0].mxu0
  %2882 = vdwg.mxu0
  %2883 = vmatprep.subr.mxu0 0.0
  %v2884 = vand.u32 %v2706, 4294901760
  %v2885 = vsub.f32 %v2706, %v2884
  %2886 = vmatpush1.msra.mxu0 %v2885
  %2887 = vmatprep.subr.mxu0 0.0
  %v2888 = vand.u32 %v2707, 4294901760
  %v2889 = vsub.f32 %v2707, %v2888
  %2890 = vmatpush1.msra.mxu0 %v2889
  %2891 = vmatprep.subr.mxu0 0.0
  %v2892 = vand.u32 %v2708, 4294901760
  %v2893 = vsub.f32 %v2708, %v2892
  %2894 = vmatpush1.msra.mxu0 %v2893
  %2895 = vmatprep.subr.mxu0 0.0
  %v2896 = vand.u32 %v2709, 4294901760
  %v2897 = vsub.f32 %v2709, %v2896
  %2898 = vmatpush1.msra.mxu0 %v2897
  %2899 = vmatprep.subr.mxu0 0.0
  %2900 = vmatpush1.msra.mxu0 0.0
  %2901 = vmatprep.subr.mxu0 0.0
  %2902 = vmatpush1.msra.mxu0 0.0
  %2903 = vmatprep.subr.mxu0 0.0
  %2904 = vmatpush1.msra.mxu0 0.0
  %2905 = vmatprep.subr.mxu0 0.0
  %2906 = vmatpush1.msra.mxu0 0.0
  %2907 = vmatprep.subr.mxu0 0.0
  %2908 = vmatpush1.msra.mxu0 0.0
  %2909 = vmatprep.subr.mxu0 0.0
  %2910 = vmatpush1.msra.mxu0 0.0
  %2911 = vmatprep.subr.mxu0 0.0
  %2912 = vmatpush1.msra.mxu0 0.0
  %2913 = vmatprep.subr.mxu0 0.0
  %2914 = vmatpush1.msra.mxu0 0.0
  %2915 = vmatprep.subr.mxu0 0.0
  %2916 = vmatpush1.msra.mxu0 0.0
  %2917 = vmatprep.subr.mxu0 0.0
  %2918 = vmatpush1.msra.mxu0 0.0
  %2919 = vmatprep.subr.mxu0 0.0
  %2920 = vmatpush1.msra.mxu0 0.0
  %2921 = vmatprep.subr.mxu0 0.0
  %2922 = vmatpush1.msra.mxu0 0.0
  %2923 = vmatprep.subr.mxu0 0.0
  %2924 = vmatpush1.msra.mxu0 0.0
  %2925 = vmatprep.subr.mxu0 0.0
  %2926 = vmatpush1.msra.mxu0 0.0
  %2927 = vmatprep.subr.mxu0 0.0
  %2928 = vmatpush1.msra.mxu0 0.0
  %2929 = vmatprep.subr.mxu0 0.0
  %2930 = vmatpush1.msra.mxu0 0.0
  %2931 = vmatprep.subr.mxu0 0.0
  %2932 = vmatpush1.msra.mxu0 0.0
  %2933 = vmatprep.subr.mxu0 0.0
  %2934 = vmatpush1.msra.mxu0 0.0
  %2935 = vmatprep.subr.mxu0 0.0
  %2936 = vmatpush1.msra.mxu0 0.0
  %2937 = vmatprep.subr.mxu0 0.0
  %2938 = vmatpush1.msra.mxu0 0.0
  %2939 = vmatprep.subr.mxu0 0.0
  %2940 = vmatpush1.msra.mxu0 0.0
  %2941 = vmatprep.subr.mxu0 0.0
  %2942 = vmatpush1.msra.mxu0 0.0
  %2943 = vmatprep.subr.mxu0 0.0
  %2944 = vmatpush1.msra.mxu0 0.0
  %2945 = vmatprep.subr.mxu0 0.0
  %2946 = vmatpush1.msra.mxu0 0.0
  %2947 = vmatprep.subr.mxu0 0.0
  %2948 = vmatpush1.msra.mxu0 0.0
  %2949 = vmatprep.subr.mxu0 0.0
  %2950 = vmatpush1.msra.mxu0 0.0
  %2951 = vmatprep.subr.mxu0 0.0
  %2952 = vmatpush1.msra.mxu0 0.0
  %2953 = vmatprep.subr.mxu0 0.0
  %2954 = vmatpush1.msra.mxu0 0.0
  %2955 = vmatprep.mubr.f32.mxu0 0.0
  %v2956 = vand.u32 %v2711, 4294901760
  %v2957 = vsub.f32 %v2711, %v2956
  %2958 = vmatmul.mubr.f32.gmra.mrb[0].mxu0 %v2957
  %v2959 = vpop.f32.mrb[0].mxu0
  %v2960 = vadd.f32 %v2880, %v2959
  %v2961 = vpop.f32.mrb[0].mxu0
  %2962 = vdwg.mxu0
  %2963 = vmatprep.subr.mxu0 0.0
  %v2964 = vand.u32 %v2706, 4294901760
  %2965 = vmatpush1.msra.mxu0 %v2964
  %2966 = vmatprep.subr.mxu0 0.0
  %v2967 = vand.u32 %v2707, 4294901760
  %2968 = vmatpush1.msra.mxu0 %v2967
  %2969 = vmatprep.subr.mxu0 0.0
  %v2970 = vand.u32 %v2708, 4294901760
  %2971 = vmatpush1.msra.mxu0 %v2970
  %2972 = vmatprep.subr.mxu0 0.0
  %v2973 = vand.u32 %v2709, 4294901760
  %2974 = vmatpush1.msra.mxu0 %v2973
  %2975 = vmatprep.subr.mxu0 0.0
  %2976 = vmatpush1.msra.mxu0 0.0
  %2977 = vmatprep.subr.mxu0 0.0
  %2978 = vmatpush1.msra.mxu0 0.0
  %2979 = vmatprep.subr.mxu0 0.0
  %2980 = vmatpush1.msra.mxu0 0.0
  %2981 = vmatprep.subr.mxu0 0.0
  %2982 = vmatpush1.msra.mxu0 0.0
  %2983 = vmatprep.subr.mxu0 0.0
  %2984 = vmatpush1.msra.mxu0 0.0
  %2985 = vmatprep.subr.mxu0 0.0
  %2986 = vmatpush1.msra.mxu0 0.0
  %2987 = vmatprep.subr.mxu0 0.0
  %2988 = vmatpush1.msra.mxu0 0.0
  %2989 = vmatprep.subr.mxu0 0.0
  %2990 = vmatpush1.msra.mxu0 0.0
  %2991 = vmatprep.subr.mxu0 0.0
  %2992 = vmatpush1.msra.mxu0 0.0
  %2993 = vmatprep.subr.mxu0 0.0
  %2994 = vmatpush1.msra.mxu0 0.0
  %2995 = vmatprep.subr.mxu0 0.0
  %2996 = vmatpush1.msra.mxu0 0.0
  %2997 = vmatprep.subr.mxu0 0.0
  %2998 = vmatpush1.msra.mxu0 0.0
  %2999 = vmatprep.subr.mxu0 0.0
  %3000 = vmatpush1.msra.mxu0 0.0
  %3001 = vmatprep.subr.mxu0 0.0
  %3002 = vmatpush1.msra.mxu0 0.0
  %3003 = vmatprep.subr.mxu0 0.0
  %3004 = vmatpush1.msra.mxu0 0.0
  %3005 = vmatprep.subr.mxu0 0.0
  %3006 = vmatpush1.msra.mxu0 0.0
  %3007 = vmatprep.subr.mxu0 0.0
  %3008 = vmatpush1.msra.mxu0 0.0
  %3009 = vmatprep.subr.mxu0 0.0
  %3010 = vmatpush1.msra.mxu0 0.0
  %3011 = vmatprep.subr.mxu0 0.0
  %3012 = vmatpush1.msra.mxu0 0.0
  %3013 = vmatprep.subr.mxu0 0.0
  %3014 = vmatpush1.msra.mxu0 0.0
  %3015 = vmatprep.subr.mxu0 0.0
  %3016 = vmatpush1.msra.mxu0 0.0
  %3017 = vmatprep.subr.mxu0 0.0
  %3018 = vmatpush1.msra.mxu0 0.0
  %3019 = vmatprep.subr.mxu0 0.0
  %3020 = vmatpush1.msra.mxu0 0.0
  %3021 = vmatprep.subr.mxu0 0.0
  %3022 = vmatpush1.msra.mxu0 0.0
  %3023 = vmatprep.subr.mxu0 0.0
  %3024 = vmatpush1.msra.mxu0 0.0
  %3025 = vmatprep.subr.mxu0 0.0
  %3026 = vmatpush1.msra.mxu0 0.0
  %3027 = vmatprep.subr.mxu0 0.0
  %3028 = vmatpush1.msra.mxu0 0.0
  %3029 = vmatprep.subr.mxu0 0.0
  %3030 = vmatpush1.msra.mxu0 0.0
  %3031 = vmatprep.mubr.f32.mxu0 0.0
  %v3032 = vand.u32 %v2711, 4294901760
  %v3033 = vsub.f32 %v2711, %v3032
  %v3034 = vand.u32 %v3033, 4294901760
  %3035 = vmatmul.mubr.f32.gmra.mrb[0].mxu0 %v3034
  %v3036 = vpop.f32.mrb[0].mxu0
  %v3037 = vadd.f32 %v2960, %v3036
  %v3038 = vpop.f32.mrb[0].mxu0
  %3039 = vdwg.mxu0
  %3040 = vmatprep.subr.mxu0 0.0
  %v3041 = vand.u32 %v2706, 4294901760
  %v3042 = vsub.f32 %v2706, %v3041
  %v3043 = vand.u32 %v3042, 4294901760
  %3044 = vmatpush1.msra.mxu0 %v3043
  %3045 = vmatprep.subr.mxu0 0.0
  %v3046 = vand.u32 %v2707, 4294901760
  %v3047 = vsub.f32 %v2707, %v3046
  %v3048 = vand.u32 %v3047, 4294901760
  %3049 = vmatpush1.msra.mxu0 %v3048
  %3050 = vmatprep.subr.mxu0 0.0
  %v3051 = vand.u32 %v2708, 4294901760
  %v3052 = vsub.f32 %v2708, %v3051
  %v3053 = vand.u32 %v3052, 4294901760
  %3054 = vmatpush1.msra.mxu0 %v3053
  %3055 = vmatprep.subr.mxu0 0.0
  %v3056 = vand.u32 %v2709, 4294901760
  %v3057 = vsub.f32 %v2709, %v3056
  %v3058 = vand.u32 %v3057, 4294901760
  %3059 = vmatpush1.msra.mxu0 %v3058
  %3060 = vmatprep.subr.mxu0 0.0
  %3061 = vmatpush1.msra.mxu0 0.0
  %3062 = vmatprep.subr.mxu0 0.0
  %3063 = vmatpush1.msra.mxu0 0.0
  %3064 = vmatprep.subr.mxu0 0.0
  %3065 = vmatpush1.msra.mxu0 0.0
  %3066 = vmatprep.subr.mxu0 0.0
  %3067 = vmatpush1.msra.mxu0 0.0
  %3068 = vmatprep.subr.mxu0 0.0
  %3069 = vmatpush1.msra.mxu0 0.0
  %3070 = vmatprep.subr.mxu0 0.0
  %3071 = vmatpush1.msra.mxu0 0.0
  %3072 = vmatprep.subr.mxu0 0.0
  %3073 = vmatpush1.msra.mxu0 0.0
  %3074 = vmatprep.subr.mxu0 0.0
  %3075 = vmatpush1.msra.mxu0 0.0
  %3076 = vmatprep.subr.mxu0 0.0
  %3077 = vmatpush1.msra.mxu0 0.0
  %3078 = vmatprep.subr.mxu0 0.0
  %3079 = vmatpush1.msra.mxu0 0.0
  %3080 = vmatprep.subr.mxu0 0.0
  %3081 = vmatpush1.msra.mxu0 0.0
  %3082 = vmatprep.subr.mxu0 0.0
  %3083 = vmatpush1.msra.mxu0 0.0
  %3084 = vmatprep.subr.mxu0 0.0
  %3085 = vmatpush1.msra.mxu0 0.0
  %3086 = vmatprep.subr.mxu0 0.0
  %3087 = vmatpush1.msra.mxu0 0.0
  %3088 = vmatprep.subr.mxu0 0.0
  %3089 = vmatpush1.msra.mxu0 0.0
  %3090 = vmatprep.subr.mxu0 0.0
  %3091 = vmatpush1.msra.mxu0 0.0
  %3092 = vmatprep.subr.mxu0 0.0
  %3093 = vmatpush1.msra.mxu0 0.0
  %3094 = vmatprep.subr.mxu0 0.0
  %3095 = vmatpush1.msra.mxu0 0.0
  %3096 = vmatprep.subr.mxu0 0.0
  %3097 = vmatpush1.msra.mxu0 0.0
  %3098 = vmatprep.subr.mxu0 0.0
  %3099 = vmatpush1.msra.mxu0 0.0
  %3100 = vmatprep.subr.mxu0 0.0
  %3101 = vmatpush1.msra.mxu0 0.0
  %3102 = vmatprep.subr.mxu0 0.0
  %3103 = vmatpush1.msra.mxu0 0.0
  %3104 = vmatprep.subr.mxu0 0.0
  %3105 = vmatpush1.msra.mxu0 0.0
  %3106 = vmatprep.subr.mxu0 0.0
  %3107 = vmatpush1.msra.mxu0 0.0
  %3108 = vmatprep.subr.mxu0 0.0
  %3109 = vmatpush1.msra.mxu0 0.0
  %3110 = vmatprep.subr.mxu0 0.0
  %3111 = vmatpush1.msra.mxu0 0.0
  %3112 = vmatprep.subr.mxu0 0.0
  %3113 = vmatpush1.msra.mxu0 0.0
  %3114 = vmatprep.subr.mxu0 0.0
  %3115 = vmatpush1.msra.mxu0 0.0
  %3116 = vmatprep.mubr.f32.mxu0 0.0
  %v3117 = vand.u32 %v2711, 4294901760
  %3118 = vmatmul.mubr.f32.gmra.mrb[0].mxu0 %v3117
  %v3119 = vpop.f32.mrb[0].mxu0
  %v3120 = vadd.f32 %v3037, %v3119
  %v3121 = vpop.f32.mrb[0].mxu0
  %3122 = vdwg.mxu0
  %3123 = vmatprep.subr.mxu0 0.0
  %v3124 = vand.u32 %v2706, 4294901760
  %3125 = vmatpush1.msra.mxu0 %v3124
  %3126 = vmatprep.subr.mxu0 0.0
  %v3127 = vand.u32 %v2707, 4294901760
  %3128 = vmatpush1.msra.mxu0 %v3127
  %3129 = vmatprep.subr.mxu0 0.0
  %v3130 = vand.u32 %v2708, 4294901760
  %3131 = vmatpush1.msra.mxu0 %v3130
  %3132 = vmatprep.subr.mxu0 0.0
  %v3133 = vand.u32 %v2709, 4294901760
  %3134 = vmatpush1.msra.mxu0 %v3133
  %3135 = vmatprep.subr.mxu0 0.0
  %3136 = vmatpush1.msra.mxu0 0.0
  %3137 = vmatprep.subr.mxu0 0.0
  %3138 = vmatpush1.msra.mxu0 0.0
  %3139 = vmatprep.subr.mxu0 0.0
  %3140 = vmatpush1.msra.mxu0 0.0
  %3141 = vmatprep.subr.mxu0 0.0
  %3142 = vmatpush1.msra.mxu0 0.0
  %3143 = vmatprep.subr.mxu0 0.0
  %3144 = vmatpush1.msra.mxu0 0.0
  %3145 = vmatprep.subr.mxu0 0.0
  %3146 = vmatpush1.msra.mxu0 0.0
  %3147 = vmatprep.subr.mxu0 0.0
  %3148 = vmatpush1.msra.mxu0 0.0
  %3149 = vmatprep.subr.mxu0 0.0
  %3150 = vmatpush1.msra.mxu0 0.0
  %3151 = vmatprep.subr.mxu0 0.0
  %3152 = vmatpush1.msra.mxu0 0.0
  %3153 = vmatprep.subr.mxu0 0.0
  %3154 = vmatpush1.msra.mxu0 0.0
  %3155 = vmatprep.subr.mxu0 0.0
  %3156 = vmatpush1.msra.mxu0 0.0
  %3157 = vmatprep.subr.mxu0 0.0
  %3158 = vmatpush1.msra.mxu0 0.0
  %3159 = vmatprep.subr.mxu0 0.0
  %3160 = vmatpush1.msra.mxu0 0.0
  %3161 = vmatprep.subr.mxu0 0.0
  %3162 = vmatpush1.msra.mxu0 0.0
  %3163 = vmatprep.subr.mxu0 0.0
  %3164 = vmatpush1.msra.mxu0 0.0
  %3165 = vmatprep.subr.mxu0 0.0
  %3166 = vmatpush1.msra.mxu0 0.0
  %3167 = vmatprep.subr.mxu0 0.0
  %3168 = vmatpush1.msra.mxu0 0.0
  %3169 = vmatprep.subr.mxu0 0.0
  %3170 = vmatpush1.msra.mxu0 0.0
  %3171 = vmatprep.subr.mxu0 0.0
  %3172 = vmatpush1.msra.mxu0 0.0
  %3173 = vmatprep.subr.mxu0 0.0
  %3174 = vmatpush1.msra.mxu0 0.0
  %3175 = vmatprep.subr.mxu0 0.0
  %3176 = vmatpush1.msra.mxu0 0.0
  %3177 = vmatprep.subr.mxu0 0.0
  %3178 = vmatpush1.msra.mxu0 0.0
  %3179 = vmatprep.subr.mxu0 0.0
  %3180 = vmatpush1.msra.mxu0 0.0
  %3181 = vmatprep.subr.mxu0 0.0
  %3182 = vmatpush1.msra.mxu0 0.0
  %3183 = vmatprep.subr.mxu0 0.0
  %3184 = vmatpush1.msra.mxu0 0.0
  %3185 = vmatprep.subr.mxu0 0.0
  %3186 = vmatpush1.msra.mxu0 0.0
  %3187 = vmatprep.subr.mxu0 0.0
  %3188 = vmatpush1.msra.mxu0 0.0
  %3189 = vmatprep.subr.mxu0 0.0
  %3190 = vmatpush1.msra.mxu0 0.0
  %3191 = vmatprep.mubr.f32.mxu0 0.0
  %v3192 = vand.u32 %v2711, 4294901760
  %3193 = vmatmul.mubr.f32.gmra.mrb[0].mxu0 %v3192
  %v3194 = vpop.f32.mrb[0].mxu0
  %v3195 = vadd.f32 %v3120, %v3194
  %v3196 = vpop.f32.mrb[0].mxu0
  %3197 = vdwg.mxu0
  %v3198 = vadd.f32 %v2704, %v3195
  %v3199 = vxor.u32 %v3198, 2147483648
  %v3200 = vmul.f32 %v3199, 1.442695
  %v3201 = vpow.pop %v3200
  %v3202 = vadd.f32 %v3201, 1.0
  %v3203 = vrcp.pop %v3202
  %v3204 = vmul.f32 1.0, %v3203
  %v3205 = vtanh.pop %v3198
  %v3206 = vld [vmem:[#allocation3] sm:$0xf]
  %3208 = vrot.lane.b32.xlu0 %v3206, 32
  %v3209 = vpop.permute.xlu0 %3208
  %v3211 = vmul.f32 %v3204, %v3209
  %3213 = vrot.lane.b32.xlu0 %v3205, 64
  %v3214 = vpop.permute.xlu0 %3213
  %v3216 = vmul.f32 %v3204, %v3214
  %3218 = vrot.lane.b32.xlu0 %v3216, 32
  %v3219 = vpop.permute.xlu0 %3218
  %v3221 = vadd.f32 %v3211, %v3219
  %v3222 = vtanh.pop %v3221
  %3224 = vrot.lane.b32.xlu0 %v3222, 64
  %v3225 = vpop.permute.xlu0 %3224
  %v3227 = vmul.f32 %v3204, %v3225
  %3229 = vrot.lane.b32.xlu0 %v3221, 96
  %v3230 = vpop.permute.xlu0 %3229
  %3232 = vst.msk [vmem:[#allocation3] sm:$0xf] %vm547, %v3230
  %3234 = vrot.lane.b32.xlu0 %v3227, 32
  %v3235 = vpop.permute.xlu0 %3234
  %3237 = vst.msk [vmem:[#allocation2] sm:$0xf] %vm547, %v3235
  %s3238 = scalar_lea.vmem %s2, 20
  %3239 = vst.msk [vmem:[%s3238] sm:$0xf] %vm547, %v3235
  %s3240 = scalar_lea.vmem %s0, 24
  %v3241 = vld [vmem:[%s3240] sm:$0xf]
  %v3242 = vld [vmem:[#allocation2] sm:$0xf]
  %v3243 = vld [vmem:[%s1] sm:$0xff]
  %v3244 = vld [vmem:[%s1 + $0x8] sm:$0xff]
  %v3245 = vld [vmem:[%s1 + $0x10] sm:$0xff]
  %v3246 = vld [vmem:[%s1 + $0x18] sm:$0xff]
  %v3248 = vsel %vm24, %v3242, 0
  %3250 = vmatprep.subr.mxu0 0.0
  %v3251 = vand.u32 %v3243, 4294901760
  %3252 = vmatpush1.msra.mxu0 %v3251
  %3253 = vmatprep.subr.mxu0 0.0
  %v3254 = vand.u32 %v3244, 4294901760
  %3255 = vmatpush1.msra.mxu0 %v3254
  %3256 = vmatprep.subr.mxu0 0.0
  %v3257 = vand.u32 %v3245, 4294901760
  %3258 = vmatpush1.msra.mxu0 %v3257
  %3259 = vmatprep.subr.mxu0 0.0
  %v3260 = vand.u32 %v3246, 4294901760
  %3261 = vmatpush1.msra.mxu0 %v3260
  %3262 = vmatprep.subr.mxu0 0.0
  %3263 = vmatpush1.msra.mxu0 0.0
  %3264 = vmatprep.subr.mxu0 0.0
  %3265 = vmatpush1.msra.mxu0 0.0
  %3266 = vmatprep.subr.mxu0 0.0
  %3267 = vmatpush1.msra.mxu0 0.0
  %3268 = vmatprep.subr.mxu0 0.0
  %3269 = vmatpush1.msra.mxu0 0.0
  %3270 = vmatprep.subr.mxu0 0.0
  %3271 = vmatpush1.msra.mxu0 0.0
  %3272 = vmatprep.subr.mxu0 0.0
  %3273 = vmatpush1.msra.mxu0 0.0
  %3274 = vmatprep.subr.mxu0 0.0
  %3275 = vmatpush1.msra.mxu0 0.0
  %3276 = vmatprep.subr.mxu0 0.0
  %3277 = vmatpush1.msra.mxu0 0.0
  %3278 = vmatprep.subr.mxu0 0.0
  %3279 = vmatpush1.msra.mxu0 0.0
  %3280 = vmatprep.subr.mxu0 0.0
  %3281 = vmatpush1.msra.mxu0 0.0
  %3282 = vmatprep.subr.mxu0 0.0
  %3283 = vmatpush1.msra.mxu0 0.0
  %3284 = vmatprep.subr.mxu0 0.0
  %3285 = vmatpush1.msra.mxu0 0.0
  %3286 = vmatprep.subr.mxu0 0.0
  %3287 = vmatpush1.msra.mxu0 0.0
  %3288 = vmatprep.subr.mxu0 0.0
  %3289 = vmatpush1.msra.mxu0 0.0
  %3290 = vmatprep.subr.mxu0 0.0
  %3291 = vmatpush1.msra.mxu0 0.0
  %3292 = vmatprep.subr.mxu0 0.0
  %3293 = vmatpush1.msra.mxu0 0.0
  %3294 = vmatprep.subr.mxu0 0.0
  %3295 = vmatpush1.msra.mxu0 0.0
  %3296 = vmatprep.subr.mxu0 0.0
  %3297 = vmatpush1.msra.mxu0 0.0
  %3298 = vmatprep.subr.mxu0 0.0
  %3299 = vmatpush1.msra.mxu0 0.0
  %3300 = vmatprep.subr.mxu0 0.0
  %3301 = vmatpush1.msra.mxu0 0.0
  %3302 = vmatprep.subr.mxu0 0.0
  %3303 = vmatpush1.msra.mxu0 0.0
  %3304 = vmatprep.subr.mxu0 0.0
  %3305 = vmatpush1.msra.mxu0 0.0
  %3306 = vmatprep.subr.mxu0 0.0
  %3307 = vmatpush1.msra.mxu0 0.0
  %3308 = vmatprep.subr.mxu0 0.0
  %3309 = vmatpush1.msra.mxu0 0.0
  %3310 = vmatprep.subr.mxu0 0.0
  %3311 = vmatpush1.msra.mxu0 0.0
  %3312 = vmatprep.subr.mxu0 0.0
  %3313 = vmatpush1.msra.mxu0 0.0
  %3314 = vmatprep.subr.mxu0 0.0
  %3315 = vmatpush1.msra.mxu0 0.0
  %3316 = vmatprep.subr.mxu0 0.0
  %3317 = vmatpush1.msra.mxu0 0.0
  %3318 = vmatprep.mubr.f32.mxu0 0.0
  %v3319 = vand.u32 %v3248, 4294901760
  %v3320 = vsub.f32 %v3248, %v3319
  %v3321 = vand.u32 %v3320, 4294901760
  %v3322 = vsub.f32 %v3320, %v3321
  %v3323 = vand.u32 %v3322, 4294901760
  %3324 = vmatmul.mubr.f32.gmra.mrb[0].mxu0 %v3323
  %v3325 = vpop.f32.mrb[0].mxu0
  %v3326 = vadd.f32 0.0, %v3325
  %v3327 = vpop.f32.mrb[0].mxu0
  %3328 = vdwg.mxu0
  %3329 = vmatprep.subr.mxu0 0.0
  %v3330 = vand.u32 %v3243, 4294901760
  %v3331 = vsub.f32 %v3243, %v3330
  %v3332 = vand.u32 %v3331, 4294901760
  %v3333 = vsub.f32 %v3331, %v3332
  %v3334 = vand.u32 %v3333, 4294901760
  %3335 = vmatpush1.msra.mxu0 %v3334
  %3336 = vmatprep.subr.mxu0 0.0
  %v3337 = vand.u32 %v3244, 4294901760
  %v3338 = vsub.f32 %v3244, %v3337
  %v3339 = vand.u32 %v3338, 4294901760
  %v3340 = vsub.f32 %v3338, %v3339
  %v3341 = vand.u32 %v3340, 4294901760
  %3342 = vmatpush1.msra.mxu0 %v3341
  %3343 = vmatprep.subr.mxu0 0.0
  %v3344 = vand.u32 %v3245, 4294901760
  %v3345 = vsub.f32 %v3245, %v3344
  %v3346 = vand.u32 %v3345, 4294901760
  %v3347 = vsub.f32 %v3345, %v3346
  %v3348 = vand.u32 %v3347, 4294901760
  %3349 = vmatpush1.msra.mxu0 %v3348
  %3350 = vmatprep.subr.mxu0 0.0
  %v3351 = vand.u32 %v3246, 4294901760
  %v3352 = vsub.f32 %v3246, %v3351
  %v3353 = vand.u32 %v3352, 4294901760
  %v3354 = vsub.f32 %v3352, %v3353
  %v3355 = vand.u32 %v3354, 4294901760
  %3356 = vmatpush1.msra.mxu0 %v3355
  %3357 = vmatprep.subr.mxu0 0.0
  %3358 = vmatpush1.msra.mxu0 0.0
  %3359 = vmatprep.subr.mxu0 0.0
  %3360 = vmatpush1.msra.mxu0 0.0
  %3361 = vmatprep.subr.mxu0 0.0
  %3362 = vmatpush1.msra.mxu0 0.0
  %3363 = vmatprep.subr.mxu0 0.0
  %3364 = vmatpush1.msra.mxu0 0.0
  %3365 = vmatprep.subr.mxu0 0.0
  %3366 = vmatpush1.msra.mxu0 0.0
  %3367 = vmatprep.subr.mxu0 0.0
  %3368 = vmatpush1.msra.mxu0 0.0
  %3369 = vmatprep.subr.mxu0 0.0
  %3370 = vmatpush1.msra.mxu0 0.0
  %3371 = vmatprep.subr.mxu0 0.0
  %3372 = vmatpush1.msra.mxu0 0.0
  %3373 = vmatprep.subr.mxu0 0.0
  %3374 = vmatpush1.msra.mxu0 0.0
  %3375 = vmatprep.subr.mxu0 0.0
  %3376 = vmatpush1.msra.mxu0 0.0
  %3377 = vmatprep.subr.mxu0 0.0
  %3378 = vmatpush1.msra.mxu0 0.0
  %3379 = vmatprep.subr.mxu0 0.0
  %3380 = vmatpush1.msra.mxu0 0.0
  %3381 = vmatprep.subr.mxu0 0.0
  %3382 = vmatpush1.msra.mxu0 0.0
  %3383 = vmatprep.subr.mxu0 0.0
  %3384 = vmatpush1.msra.mxu0 0.0
  %3385 = vmatprep.subr.mxu0 0.0
  %3386 = vmatpush1.msra.mxu0 0.0
  %3387 = vmatprep.subr.mxu0 0.0
  %3388 = vmatpush1.msra.mxu0 0.0
  %3389 = vmatprep.subr.mxu0 0.0
  %3390 = vmatpush1.msra.mxu0 0.0
  %3391 = vmatprep.subr.mxu0 0.0
  %3392 = vmatpush1.msra.mxu0 0.0
  %3393 = vmatprep.subr.mxu0 0.0
  %3394 = vmatpush1.msra.mxu0 0.0
  %3395 = vmatprep.subr.mxu0 0.0
  %3396 = vmatpush1.msra.mxu0 0.0
  %3397 = vmatprep.subr.mxu0 0.0
  %3398 = vmatpush1.msra.mxu0 0.0
  %3399 = vmatprep.subr.mxu0 0.0
  %3400 = vmatpush1.msra.mxu0 0.0
  %3401 = vmatprep.subr.mxu0 0.0
  %3402 = vmatpush1.msra.mxu0 0.0
  %3403 = vmatprep.subr.mxu0 0.0
  %3404 = vmatpush1.msra.mxu0 0.0
  %3405 = vmatprep.subr.mxu0 0.0
  %3406 = vmatpush1.msra.mxu0 0.0
  %3407 = vmatprep.subr.mxu0 0.0
  %3408 = vmatpush1.msra.mxu0 0.0
  %3409 = vmatprep.subr.mxu0 0.0
  %3410 = vmatpush1.msra.mxu0 0.0
  %3411 = vmatprep.subr.mxu0 0.0
  %3412 = vmatpush1.msra.mxu0 0.0
  %3413 = vmatprep.mubr.f32.mxu0 0.0
  %v3414 = vand.u32 %v3248, 4294901760
  %3415 = vmatmul.mubr.f32.gmra.mrb[0].mxu0 %v3414
  %v3416 = vpop.f32.mrb[0].mxu0
  %v3417 = vadd.f32 %v3326, %v3416
  %v3418 = vpop.f32.mrb[0].mxu0
  %3419 = vdwg.mxu0
  %3420 = vmatprep.subr.mxu0 0.0
  %v3421 = vand.u32 %v3243, 4294901760
  %v3422 = vsub.f32 %v3243, %v3421
  %3423 = vmatpush1.msra.mxu0 %v3422
  %3424 = vmatprep.subr.mxu0 0.0
  %v3425 = vand.u32 %v3244, 4294901760
  %v3426 = vsub.f32 %v3244, %v3425
  %3427 = vmatpush1.msra.mxu0 %v3426
  %3428 = vmatprep.subr.mxu0 0.0
  %v3429 = vand.u32 %v3245, 4294901760
  %v3430 = vsub.f32 %v3245, %v3429
  %3431 = vmatpush1.msra.mxu0 %v3430
  %3432 = vmatprep.subr.mxu0 0.0
  %v3433 = vand.u32 %v3246, 4294901760
  %v3434 = vsub.f32 %v3246, %v3433
  %3435 = vmatpush1.msra.mxu0 %v3434
  %3436 = vmatprep.subr.mxu0 0.0
  %3437 = vmatpush1.msra.mxu0 0.0
  %3438 = vmatprep.subr.mxu0 0.0
  %3439 = vmatpush1.msra.mxu0 0.0
  %3440 = vmatprep.subr.mxu0 0.0
  %3441 = vmatpush1.msra.mxu0 0.0
  %3442 = vmatprep.subr.mxu0 0.0
  %3443 = vmatpush1.msra.mxu0 0.0
  %3444 = vmatprep.subr.mxu0 0.0
  %3445 = vmatpush1.msra.mxu0 0.0
  %3446 = vmatprep.subr.mxu0 0.0
  %3447 = vmatpush1.msra.mxu0 0.0
  %3448 = vmatprep.subr.mxu0 0.0
  %3449 = vmatpush1.msra.mxu0 0.0
  %3450 = vmatprep.subr.mxu0 0.0
  %3451 = vmatpush1.msra.mxu0 0.0
  %3452 = vmatprep.subr.mxu0 0.0
  %3453 = vmatpush1.msra.mxu0 0.0
  %3454 = vmatprep.subr.mxu0 0.0
  %3455 = vmatpush1.msra.mxu0 0.0
  %3456 = vmatprep.subr.mxu0 0.0
  %3457 = vmatpush1.msra.mxu0 0.0
  %3458 = vmatprep.subr.mxu0 0.0
  %3459 = vmatpush1.msra.mxu0 0.0
  %3460 = vmatprep.subr.mxu0 0.0
  %3461 = vmatpush1.msra.mxu0 0.0
  %3462 = vmatprep.subr.mxu0 0.0
  %3463 = vmatpush1.msra.mxu0 0.0
  %3464 = vmatprep.subr.mxu0 0.0
  %3465 = vmatpush1.msra.mxu0 0.0
  %3466 = vmatprep.subr.mxu0 0.0
  %3467 = vmatpush1.msra.mxu0 0.0
  %3468 = vmatprep.subr.mxu0 0.0
  %3469 = vmatpush1.msra.mxu0 0.0
  %3470 = vmatprep.subr.mxu0 0.0
  %3471 = vmatpush1.msra.mxu0 0.0
  %3472 = vmatprep.subr.mxu0 0.0
  %3473 = vmatpush1.msra.mxu0 0.0
  %3474 = vmatprep.subr.mxu0 0.0
  %3475 = vmatpush1.msra.mxu0 0.0
  %3476 = vmatprep.subr.mxu0 0.0
  %3477 = vmatpush1.msra.mxu0 0.0
  %3478 = vmatprep.subr.mxu0 0.0
  %3479 = vmatpush1.msra.mxu0 0.0
  %3480 = vmatprep.subr.mxu0 0.0
  %3481 = vmatpush1.msra.mxu0 0.0
  %3482 = vmatprep.subr.mxu0 0.0
  %3483 = vmatpush1.msra.mxu0 0.0
  %3484 = vmatprep.subr.mxu0 0.0
  %3485 = vmatpush1.msra.mxu0 0.0
  %3486 = vmatprep.subr.mxu0 0.0
  %3487 = vmatpush1.msra.mxu0 0.0
  %3488 = vmatprep.subr.mxu0 0.0
  %3489 = vmatpush1.msra.mxu0 0.0
  %3490 = vmatprep.subr.mxu0 0.0
  %3491 = vmatpush1.msra.mxu0 0.0
  %3492 = vmatprep.mubr.f32.mxu0 0.0
  %v3493 = vand.u32 %v3248, 4294901760
  %v3494 = vsub.f32 %v3248, %v3493
  %3495 = vmatmul.mubr.f32.gmra.mrb[0].mxu0 %v3494
  %v3496 = vpop.f32.mrb[0].mxu0
  %v3497 = vadd.f32 %v3417, %v3496
  %v3498 = vpop.f32.mrb[0].mxu0
  %3499 = vdwg.mxu0
  %3500 = vmatprep.subr.mxu0 0.0
  %v3501 = vand.u32 %v3243, 4294901760
  %3502 = vmatpush1.msra.mxu0 %v3501
  %3503 = vmatprep.subr.mxu0 0.0
  %v3504 = vand.u32 %v3244, 4294901760
  %3505 = vmatpush1.msra.mxu0 %v3504
  %3506 = vmatprep.subr.mxu0 0.0
  %v3507 = vand.u32 %v3245, 4294901760
  %3508 = vmatpush1.msra.mxu0 %v3507
  %3509 = vmatprep.subr.mxu0 0.0
  %v3510 = vand.u32 %v3246, 4294901760
  %3511 = vmatpush1.msra.mxu0 %v3510
  %3512 = vmatprep.subr.mxu0 0.0
  %3513 = vmatpush1.msra.mxu0 0.0
  %3514 = vmatprep.subr.mxu0 0.0
  %3515 = vmatpush1.msra.mxu0 0.0
  %3516 = vmatprep.subr.mxu0 0.0
  %3517 = vmatpush1.msra.mxu0 0.0
  %3518 = vmatprep.subr.mxu0 0.0
  %3519 = vmatpush1.msra.mxu0 0.0
  %3520 = vmatprep.subr.mxu0 0.0
  %3521 = vmatpush1.msra.mxu0 0.0
  %3522 = vmatprep.subr.mxu0 0.0
  %3523 = vmatpush1.msra.mxu0 0.0
  %3524 = vmatprep.subr.mxu0 0.0
  %3525 = vmatpush1.msra.mxu0 0.0
  %3526 = vmatprep.subr.mxu0 0.0
  %3527 = vmatpush1.msra.mxu0 0.0
  %3528 = vmatprep.subr.mxu0 0.0
  %3529 = vmatpush1.msra.mxu0 0.0
  %3530 = vmatprep.subr.mxu0 0.0
  %3531 = vmatpush1.msra.mxu0 0.0
  %3532 = vmatprep.subr.mxu0 0.0
  %3533 = vmatpush1.msra.mxu0 0.0
  %3534 = vmatprep.subr.mxu0 0.0
  %3535 = vmatpush1.msra.mxu0 0.0
  %3536 = vmatprep.subr.mxu0 0.0
  %3537 = vmatpush1.msra.mxu0 0.0
  %3538 = vmatprep.subr.mxu0 0.0
  %3539 = vmatpush1.msra.mxu0 0.0
  %3540 = vmatprep.subr.mxu0 0.0
  %3541 = vmatpush1.msra.mxu0 0.0
  %3542 = vmatprep.subr.mxu0 0.0
  %3543 = vmatpush1.msra.mxu0 0.0
  %3544 = vmatprep.subr.mxu0 0.0
  %3545 = vmatpush1.msra.mxu0 0.0
  %3546 = vmatprep.subr.mxu0 0.0
  %3547 = vmatpush1.msra.mxu0 0.0
  %3548 = vmatprep.subr.mxu0 0.0
  %3549 = vmatpush1.msra.mxu0 0.0
  %3550 = vmatprep.subr.mxu0 0.0
  %3551 = vmatpush1.msra.mxu0 0.0
  %3552 = vmatprep.subr.mxu0 0.0
  %3553 = vmatpush1.msra.mxu0 0.0
  %3554 = vmatprep.subr.mxu0 0.0
  %3555 = vmatpush1.msra.mxu0 0.0
  %3556 = vmatprep.subr.mxu0 0.0
  %3557 = vmatpush1.msra.mxu0 0.0
  %3558 = vmatprep.subr.mxu0 0.0
  %3559 = vmatpush1.msra.mxu0 0.0
  %3560 = vmatprep.subr.mxu0 0.0
  %3561 = vmatpush1.msra.mxu0 0.0
  %3562 = vmatprep.subr.mxu0 0.0
  %3563 = vmatpush1.msra.mxu0 0.0
  %3564 = vmatprep.subr.mxu0 0.0
  %3565 = vmatpush1.msra.mxu0 0.0
  %3566 = vmatprep.subr.mxu0 0.0
  %3567 = vmatpush1.msra.mxu0 0.0
  %3568 = vmatprep.mubr.f32.mxu0 0.0
  %v3569 = vand.u32 %v3248, 4294901760
  %v3570 = vsub.f32 %v3248, %v3569
  %v3571 = vand.u32 %v3570, 4294901760
  %3572 = vmatmul.mubr.f32.gmra.mrb[0].mxu0 %v3571
  %v3573 = vpop.f32.mrb[0].mxu0
  %v3574 = vadd.f32 %v3497, %v3573
  %v3575 = vpop.f32.mrb[0].mxu0
  %3576 = vdwg.mxu0
  %3577 = vmatprep.subr.mxu0 0.0
  %v3578 = vand.u32 %v3243, 4294901760
  %v3579 = vsub.f32 %v3243, %v3578
  %v3580 = vand.u32 %v3579, 4294901760
  %3581 = vmatpush1.msra.mxu0 %v3580
  %3582 = vmatprep.subr.mxu0 0.0
  %v3583 = vand.u32 %v3244, 4294901760
  %v3584 = vsub.f32 %v3244, %v3583
  %v3585 = vand.u32 %v3584, 4294901760
  %3586 = vmatpush1.msra.mxu0 %v3585
  %3587 = vmatprep.subr.mxu0 0.0
  %v3588 = vand.u32 %v3245, 4294901760
  %v3589 = vsub.f32 %v3245, %v3588
  %v3590 = vand.u32 %v3589, 4294901760
  %3591 = vmatpush1.msra.mxu0 %v3590
  %3592 = vmatprep.subr.mxu0 0.0
  %v3593 = vand.u32 %v3246, 4294901760
  %v3594 = vsub.f32 %v3246, %v3593
  %v3595 = vand.u32 %v3594, 4294901760
  %3596 = vmatpush1.msra.mxu0 %v3595
  %3597 = vmatprep.subr.mxu0 0.0
  %3598 = vmatpush1.msra.mxu0 0.0
  %3599 = vmatprep.subr.mxu0 0.0
  %3600 = vmatpush1.msra.mxu0 0.0
  %3601 = vmatprep.subr.mxu0 0.0
  %3602 = vmatpush1.msra.mxu0 0.0
  %3603 = vmatprep.subr.mxu0 0.0
  %3604 = vmatpush1.msra.mxu0 0.0
  %3605 = vmatprep.subr.mxu0 0.0
  %3606 = vmatpush1.msra.mxu0 0.0
  %3607 = vmatprep.subr.mxu0 0.0
  %3608 = vmatpush1.msra.mxu0 0.0
  %3609 = vmatprep.subr.mxu0 0.0
  %3610 = vmatpush1.msra.mxu0 0.0
  %3611 = vmatprep.subr.mxu0 0.0
  %3612 = vmatpush1.msra.mxu0 0.0
  %3613 = vmatprep.subr.mxu0 0.0
  %3614 = vmatpush1.msra.mxu0 0.0
  %3615 = vmatprep.subr.mxu0 0.0
  %3616 = vmatpush1.msra.mxu0 0.0
  %3617 = vmatprep.subr.mxu0 0.0
  %3618 = vmatpush1.msra.mxu0 0.0
  %3619 = vmatprep.subr.mxu0 0.0
  %3620 = vmatpush1.msra.mxu0 0.0
  %3621 = vmatprep.subr.mxu0 0.0
  %3622 = vmatpush1.msra.mxu0 0.0
  %3623 = vmatprep.subr.mxu0 0.0
  %3624 = vmatpush1.msra.mxu0 0.0
  %3625 = vmatprep.subr.mxu0 0.0
  %3626 = vmatpush1.msra.mxu0 0.0
  %3627 = vmatprep.subr.mxu0 0.0
  %3628 = vmatpush1.msra.mxu0 0.0
  %3629 = vmatprep.subr.mxu0 0.0
  %3630 = vmatpush1.msra.mxu0 0.0
  %3631 = vmatprep.subr.mxu0 0.0
  %3632 = vmatpush1.msra.mxu0 0.0
  %3633 = vmatprep.subr.mxu0 0.0
  %3634 = vmatpush1.msra.mxu0 0.0
  %3635 = vmatprep.subr.mxu0 0.0
  %3636 = vmatpush1.msra.mxu0 0.0
  %3637 = vmatprep.subr.mxu0 0.0
  %3638 = vmatpush1.msra.mxu0 0.0
  %3639 = vmatprep.subr.mxu0 0.0
  %3640 = vmatpush1.msra.mxu0 0.0
  %3641 = vmatprep.subr.mxu0 0.0
  %3642 = vmatpush1.msra.mxu0 0.0
  %3643 = vmatprep.subr.mxu0 0.0
  %3644 = vmatpush1.msra.mxu0 0.0
  %3645 = vmatprep.subr.mxu0 0.0
  %3646 = vmatpush1.msra.mxu0 0.0
  %3647 = vmatprep.subr.mxu0 0.0
  %3648 = vmatpush1.msra.mxu0 0.0
  %3649 = vmatprep.subr.mxu0 0.0
  %3650 = vmatpush1.msra.mxu0 0.0
  %3651 = vmatprep.subr.mxu0 0.0
  %3652 = vmatpush1.msra.mxu0 0.0
  %3653 = vmatprep.mubr.f32.mxu0 0.0
  %v3654 = vand.u32 %v3248, 4294901760
  %3655 = vmatmul.mubr.f32.gmra.mrb[0].mxu0 %v3654
  %v3656 = vpop.f32.mrb[0].mxu0
  %v3657 = vadd.f32 %v3574, %v3656
  %v3658 = vpop.f32.mrb[0].mxu0
  %3659 = vdwg.mxu0
  %3660 = vmatprep.subr.mxu0 0.0
  %v3661 = vand.u32 %v3243, 4294901760
  %3662 = vmatpush1.msra.mxu0 %v3661
  %3663 = vmatprep.subr.mxu0 0.0
  %v3664 = vand.u32 %v3244, 4294901760
  %3665 = vmatpush1.msra.mxu0 %v3664
  %3666 = vmatprep.subr.mxu0 0.0
  %v3667 = vand.u32 %v3245, 4294901760
  %3668 = vmatpush1.msra.mxu0 %v3667
  %3669 = vmatprep.subr.mxu0 0.0
  %v3670 = vand.u32 %v3246, 4294901760
  %3671 = vmatpush1.msra.mxu0 %v3670
  %3672 = vmatprep.subr.mxu0 0.0
  %3673 = vmatpush1.msra.mxu0 0.0
  %3674 = vmatprep.subr.mxu0 0.0
  %3675 = vmatpush1.msra.mxu0 0.0
  %3676 = vmatprep.subr.mxu0 0.0
  %3677 = vmatpush1.msra.mxu0 0.0
  %3678 = vmatprep.subr.mxu0 0.0
  %3679 = vmatpush1.msra.mxu0 0.0
  %3680 = vmatprep.subr.mxu0 0.0
  %3681 = vmatpush1.msra.mxu0 0.0
  %3682 = vmatprep.subr.mxu0 0.0
  %3683 = vmatpush1.msra.mxu0 0.0
  %3684 = vmatprep.subr.mxu0 0.0
  %3685 = vmatpush1.msra.mxu0 0.0
  %3686 = vmatprep.subr.mxu0 0.0
  %3687 = vmatpush1.msra.mxu0 0.0
  %3688 = vmatprep.subr.mxu0 0.0
  %3689 = vmatpush1.msra.mxu0 0.0
  %3690 = vmatprep.subr.mxu0 0.0
  %3691 = vmatpush1.msra.mxu0 0.0
  %3692 = vmatprep.subr.mxu0 0.0
  %3693 = vmatpush1.msra.mxu0 0.0
  %3694 = vmatprep.subr.mxu0 0.0
  %3695 = vmatpush1.msra.mxu0 0.0
  %3696 = vmatprep.subr.mxu0 0.0
  %3697 = vmatpush1.msra.mxu0 0.0
  %3698 = vmatprep.subr.mxu0 0.0
  %3699 = vmatpush1.msra.mxu0 0.0
  %3700 = vmatprep.subr.mxu0 0.0
  %3701 = vmatpush1.msra.mxu0 0.0
  %3702 = vmatprep.subr.mxu0 0.0
  %3703 = vmatpush1.msra.mxu0 0.0
  %3704 = vmatprep.subr.mxu0 0.0
  %3705 = vmatpush1.msra.mxu0 0.0
  %3706 = vmatprep.subr.mxu0 0.0
  %3707 = vmatpush1.msra.mxu0 0.0
  %3708 = vmatprep.subr.mxu0 0.0
  %3709 = vmatpush1.msra.mxu0 0.0
  %3710 = vmatprep.subr.mxu0 0.0
  %3711 = vmatpush1.msra.mxu0 0.0
  %3712 = vmatprep.subr.mxu0 0.0
  %3713 = vmatpush1.msra.mxu0 0.0
  %3714 = vmatprep.subr.mxu0 0.0
  %3715 = vmatpush1.msra.mxu0 0.0
  %3716 = vmatprep.subr.mxu0 0.0
  %3717 = vmatpush1.msra.mxu0 0.0
  %3718 = vmatprep.subr.mxu0 0.0
  %3719 = vmatpush1.msra.mxu0 0.0
  %3720 = vmatprep.subr.mxu0 0.0
  %3721 = vmatpush1.msra.mxu0 0.0
  %3722 = vmatprep.subr.mxu0 0.0
  %3723 = vmatpush1.msra.mxu0 0.0
  %3724 = vmatprep.subr.mxu0 0.0
  %3725 = vmatpush1.msra.mxu0 0.0
  %3726 = vmatprep.subr.mxu0 0.0
  %3727 = vmatpush1.msra.mxu0 0.0
  %3728 = vmatprep.mubr.f32.mxu0 0.0
  %v3729 = vand.u32 %v3248, 4294901760
  %3730 = vmatmul.mubr.f32.gmra.mrb[0].mxu0 %v3729
  %v3731 = vpop.f32.mrb[0].mxu0
  %v3732 = vadd.f32 %v3657, %v3731
  %v3733 = vpop.f32.mrb[0].mxu0
  %3734 = vdwg.mxu0
  %v3735 = vadd.f32 %v3241, %v3732
  %v3736 = vxor.u32 %v3735, 2147483648
  %v3737 = vmul.f32 %v3736, 1.442695
  %v3738 = vpow.pop %v3737
  %v3739 = vadd.f32 %v3738, 1.0
  %v3740 = vrcp.pop %v3739
  %v3741 = vmul.f32 1.0, %v3740
  %v3742 = vtanh.pop %v3735
  %v3743 = vld [vmem:[#allocation3] sm:$0xf]
  %3745 = vrot.lane.b32.xlu0 %v3743, 32
  %v3746 = vpop.permute.xlu0 %3745
  %v3748 = vmul.f32 %v3741, %v3746
  %3750 = vrot.lane.b32.xlu0 %v3742, 64
  %v3751 = vpop.permute.xlu0 %3750
  %v3753 = vmul.f32 %v3741, %v3751
  %3755 = vrot.lane.b32.xlu0 %v3753, 32
  %v3756 = vpop.permute.xlu0 %3755
  %v3758 = vadd.f32 %v3748, %v3756
  %v3759 = vtanh.pop %v3758
  %3761 = vrot.lane.b32.xlu0 %v3759, 64
  %v3762 = vpop.permute.xlu0 %3761
  %v3764 = vmul.f32 %v3741, %v3762
  %3766 = vrot.lane.b32.xlu0 %v3758, 96
  %v3767 = vpop.permute.xlu0 %3766
  %3769 = vst.msk [vmem:[#allocation3] sm:$0xf] %vm547, %v3767
  %3771 = vrot.lane.b32.xlu0 %v3764, 32
  %v3772 = vpop.permute.xlu0 %3771
  %3774 = vst.msk [vmem:[#allocation2] sm:$0xf] %vm547, %v3772
  %s3775 = scalar_lea.vmem %s2, 24
  %3776 = vst.msk [vmem:[%s3775] sm:$0xf] %vm547, %v3772
  %s3777 = scalar_lea.vmem %s0, 28
  %v3778 = vld [vmem:[%s3777] sm:$0xf]
  %v3779 = vld [vmem:[#allocation2] sm:$0xf]
  %v3780 = vld [vmem:[%s1] sm:$0xff]
  %v3781 = vld [vmem:[%s1 + $0x8] sm:$0xff]
  %v3782 = vld [vmem:[%s1 + $0x10] sm:$0xff]
  %v3783 = vld [vmem:[%s1 + $0x18] sm:$0xff]
  %v3785 = vsel %vm24, %v3779, 0
  %3787 = vmatprep.subr.mxu0 0.0
  %v3788 = vand.u32 %v3780, 4294901760
  %3789 = vmatpush1.msra.mxu0 %v3788
  %3790 = vmatprep.subr.mxu0 0.0
  %v3791 = vand.u32 %v3781, 4294901760
  %3792 = vmatpush1.msra.mxu0 %v3791
  %3793 = vmatprep.subr.mxu0 0.0
  %v3794 = vand.u32 %v3782, 4294901760
  %3795 = vmatpush1.msra.mxu0 %v3794
  %3796 = vmatprep.subr.mxu0 0.0
  %v3797 = vand.u32 %v3783, 4294901760
  %3798 = vmatpush1.msra.mxu0 %v3797
  %3799 = vmatprep.subr.mxu0 0.0
  %3800 = vmatpush1.msra.mxu0 0.0
  %3801 = vmatprep.subr.mxu0 0.0
  %3802 = vmatpush1.msra.mxu0 0.0
  %3803 = vmatprep.subr.mxu0 0.0
  %3804 = vmatpush1.msra.mxu0 0.0
  %3805 = vmatprep.subr.mxu0 0.0
  %3806 = vmatpush1.msra.mxu0 0.0
  %3807 = vmatprep.subr.mxu0 0.0
  %3808 = vmatpush1.msra.mxu0 0.0
  %3809 = vmatprep.subr.mxu0 0.0
  %3810 = vmatpush1.msra.mxu0 0.0
  %3811 = vmatprep.subr.mxu0 0.0
  %3812 = vmatpush1.msra.mxu0 0.0
  %3813 = vmatprep.subr.mxu0 0.0
  %3814 = vmatpush1.msra.mxu0 0.0
  %3815 = vmatprep.subr.mxu0 0.0
  %3816 = vmatpush1.msra.mxu0 0.0
  %3817 = vmatprep.subr.mxu0 0.0
  %3818 = vmatpush1.msra.mxu0 0.0
  %3819 = vmatprep.subr.mxu0 0.0
  %3820 = vmatpush1.msra.mxu0 0.0
  %3821 = vmatprep.subr.mxu0 0.0
  %3822 = vmatpush1.msra.mxu0 0.0
  %3823 = vmatprep.subr.mxu0 0.0
  %3824 = vmatpush1.msra.mxu0 0.0
  %3825 = vmatprep.subr.mxu0 0.0
  %3826 = vmatpush1.msra.mxu0 0.0
  %3827 = vmatprep.subr.mxu0 0.0
  %3828 = vmatpush1.msra.mxu0 0.0
  %3829 = vmatprep.subr.mxu0 0.0
  %3830 = vmatpush1.msra.mxu0 0.0
  %3831 = vmatprep.subr.mxu0 0.0
  %3832 = vmatpush1.msra.mxu0 0.0
  %3833 = vmatprep.subr.mxu0 0.0
  %3834 = vmatpush1.msra.mxu0 0.0
  %3835 = vmatprep.subr.mxu0 0.0
  %3836 = vmatpush1.msra.mxu0 0.0
  %3837 = vmatprep.subr.mxu0 0.0
  %3838 = vmatpush1.msra.mxu0 0.0
  %3839 = vmatprep.subr.mxu0 0.0
  %3840 = vmatpush1.msra.mxu0 0.0
  %3841 = vmatprep.subr.mxu0 0.0
  %3842 = vmatpush1.msra.mxu0 0.0
  %3843 = vmatprep.subr.mxu0 0.0
  %3844 = vmatpush1.msra.mxu0 0.0
  %3845 = vmatprep.subr.mxu0 0.0
  %3846 = vmatpush1.msra.mxu0 0.0
  %3847 = vmatprep.subr.mxu0 0.0
  %3848 = vmatpush1.msra.mxu0 0.0
  %3849 = vmatprep.subr.mxu0 0.0
  %3850 = vmatpush1.msra.mxu0 0.0
  %3851 = vmatprep.subr.mxu0 0.0
  %3852 = vmatpush1.msra.mxu0 0.0
  %3853 = vmatprep.subr.mxu0 0.0
  %3854 = vmatpush1.msra.mxu0 0.0
  %3855 = vmatprep.mubr.f32.mxu0 0.0
  %v3856 = vand.u32 %v3785, 4294901760
  %v3857 = vsub.f32 %v3785, %v3856
  %v3858 = vand.u32 %v3857, 4294901760
  %v3859 = vsub.f32 %v3857, %v3858
  %v3860 = vand.u32 %v3859, 4294901760
  %3861 = vmatmul.mubr.f32.gmra.mrb[0].mxu0 %v3860
  %v3862 = vpop.f32.mrb[0].mxu0
  %v3863 = vadd.f32 0.0, %v3862
  %v3864 = vpop.f32.mrb[0].mxu0
  %3865 = vdwg.mxu0
  %3866 = vmatprep.subr.mxu0 0.0
  %v3867 = vand.u32 %v3780, 4294901760
  %v3868 = vsub.f32 %v3780, %v3867
  %v3869 = vand.u32 %v3868, 4294901760
  %v3870 = vsub.f32 %v3868, %v3869
  %v3871 = vand.u32 %v3870, 4294901760
  %3872 = vmatpush1.msra.mxu0 %v3871
  %3873 = vmatprep.subr.mxu0 0.0
  %v3874 = vand.u32 %v3781, 4294901760
  %v3875 = vsub.f32 %v3781, %v3874
  %v3876 = vand.u32 %v3875, 4294901760
  %v3877 = vsub.f32 %v3875, %v3876
  %v3878 = vand.u32 %v3877, 4294901760
  %3879 = vmatpush1.msra.mxu0 %v3878
  %3880 = vmatprep.subr.mxu0 0.0
  %v3881 = vand.u32 %v3782, 4294901760
  %v3882 = vsub.f32 %v3782, %v3881
  %v3883 = vand.u32 %v3882, 4294901760
  %v3884 = vsub.f32 %v3882, %v3883
  %v3885 = vand.u32 %v3884, 4294901760
  %3886 = vmatpush1.msra.mxu0 %v3885
  %3887 = vmatprep.subr.mxu0 0.0
  %v3888 = vand.u32 %v3783, 4294901760
  %v3889 = vsub.f32 %v3783, %v3888
  %v3890 = vand.u32 %v3889, 4294901760
  %v3891 = vsub.f32 %v3889, %v3890
  %v3892 = vand.u32 %v3891, 4294901760
  %3893 = vmatpush1.msra.mxu0 %v3892
  %3894 = vmatprep.subr.mxu0 0.0
  %3895 = vmatpush1.msra.mxu0 0.0
  %3896 = vmatprep.subr.mxu0 0.0
  %3897 = vmatpush1.msra.mxu0 0.0
  %3898 = vmatprep.subr.mxu0 0.0
  %3899 = vmatpush1.msra.mxu0 0.0
  %3900 = vmatprep.subr.mxu0 0.0
  %3901 = vmatpush1.msra.mxu0 0.0
  %3902 = vmatprep.subr.mxu0 0.0
  %3903 = vmatpush1.msra.mxu0 0.0
  %3904 = vmatprep.subr.mxu0 0.0
  %3905 = vmatpush1.msra.mxu0 0.0
  %3906 = vmatprep.subr.mxu0 0.0
  %3907 = vmatpush1.msra.mxu0 0.0
  %3908 = vmatprep.subr.mxu0 0.0
  %3909 = vmatpush1.msra.mxu0 0.0
  %3910 = vmatprep.subr.mxu0 0.0
  %3911 = vmatpush1.msra.mxu0 0.0
  %3912 = vmatprep.subr.mxu0 0.0
  %3913 = vmatpush1.msra.mxu0 0.0
  %3914 = vmatprep.subr.mxu0 0.0
  %3915 = vmatpush1.msra.mxu0 0.0
  %3916 = vmatprep.subr.mxu0 0.0
  %3917 = vmatpush1.msra.mxu0 0.0
  %3918 = vmatprep.subr.mxu0 0.0
  %3919 = vmatpush1.msra.mxu0 0.0
  %3920 = vmatprep.subr.mxu0 0.0
  %3921 = vmatpush1.msra.mxu0 0.0
  %3922 = vmatprep.subr.mxu0 0.0
  %3923 = vmatpush1.msra.mxu0 0.0
  %3924 = vmatprep.subr.mxu0 0.0
  %3925 = vmatpush1.msra.mxu0 0.0
  %3926 = vmatprep.subr.mxu0 0.0
  %3927 = vmatpush1.msra.mxu0 0.0
  %3928 = vmatprep.subr.mxu0 0.0
  %3929 = vmatpush1.msra.mxu0 0.0
  %3930 = vmatprep.subr.mxu0 0.0
  %3931 = vmatpush1.msra.mxu0 0.0
  %3932 = vmatprep.subr.mxu0 0.0
  %3933 = vmatpush1.msra.mxu0 0.0
  %3934 = vmatprep.subr.mxu0 0.0
  %3935 = vmatpush1.msra.mxu0 0.0
  %3936 = vmatprep.subr.mxu0 0.0
  %3937 = vmatpush1.msra.mxu0 0.0
  %3938 = vmatprep.subr.mxu0 0.0
  %3939 = vmatpush1.msra.mxu0 0.0
  %3940 = vmatprep.subr.mxu0 0.0
  %3941 = vmatpush1.msra.mxu0 0.0
  %3942 = vmatprep.subr.mxu0 0.0
  %3943 = vmatpush1.msra.mxu0 0.0
  %3944 = vmatprep.subr.mxu0 0.0
  %3945 = vmatpush1.msra.mxu0 0.0
  %3946 = vmatprep.subr.mxu0 0.0
  %3947 = vmatpush1.msra.mxu0 0.0
  %3948 = vmatprep.subr.mxu0 0.0
  %3949 = vmatpush1.msra.mxu0 0.0
  %3950 = vmatprep.mubr.f32.mxu0 0.0
  %v3951 = vand.u32 %v3785, 4294901760
  %3952 = vmatmul.mubr.f32.gmra.mrb[0].mxu0 %v3951
  %v3953 = vpop.f32.mrb[0].mxu0
  %v3954 = vadd.f32 %v3863, %v3953
  %v3955 = vpop.f32.mrb[0].mxu0
  %3956 = vdwg.mxu0
  %3957 = vmatprep.subr.mxu0 0.0
  %v3958 = vand.u32 %v3780, 4294901760
  %v3959 = vsub.f32 %v3780, %v3958
  %3960 = vmatpush1.msra.mxu0 %v3959
  %3961 = vmatprep.subr.mxu0 0.0
  %v3962 = vand.u32 %v3781, 4294901760
  %v3963 = vsub.f32 %v3781, %v3962
  %3964 = vmatpush1.msra.mxu0 %v3963
  %3965 = vmatprep.subr.mxu0 0.0
  %v3966 = vand.u32 %v3782, 4294901760
  %v3967 = vsub.f32 %v3782, %v3966
  %3968 = vmatpush1.msra.mxu0 %v3967
  %3969 = vmatprep.subr.mxu0 0.0
  %v3970 = vand.u32 %v3783, 4294901760
  %v3971 = vsub.f32 %v3783, %v3970
  %3972 = vmatpush1.msra.mxu0 %v3971
  %3973 = vmatprep.subr.mxu0 0.0
  %3974 = vmatpush1.msra.mxu0 0.0
  %3975 = vmatprep.subr.mxu0 0.0
  %3976 = vmatpush1.msra.mxu0 0.0
  %3977 = vmatprep.subr.mxu0 0.0
  %3978 = vmatpush1.msra.mxu0 0.0
  %3979 = vmatprep.subr.mxu0 0.0
  %3980 = vmatpush1.msra.mxu0 0.0
  %3981 = vmatprep.subr.mxu0 0.0
  %3982 = vmatpush1.msra.mxu0 0.0
  %3983 = vmatprep.subr.mxu0 0.0
  %3984 = vmatpush1.msra.mxu0 0.0
  %3985 = vmatprep.subr.mxu0 0.0
  %3986 = vmatpush1.msra.mxu0 0.0
  %3987 = vmatprep.subr.mxu0 0.0
  %3988 = vmatpush1.msra.mxu0 0.0
  %3989 = vmatprep.subr.mxu0 0.0
  %3990 = vmatpush1.msra.mxu0 0.0
  %3991 = vmatprep.subr.mxu0 0.0
  %3992 = vmatpush1.msra.mxu0 0.0
  %3993 = vmatprep.subr.mxu0 0.0
  %3994 = vmatpush1.msra.mxu0 0.0
  %3995 = vmatprep.subr.mxu0 0.0
  %3996 = vmatpush1.msra.mxu0 0.0
  %3997 = vmatprep.subr.mxu0 0.0
  %3998 = vmatpush1.msra.mxu0 0.0
  %3999 = vmatprep.subr.mxu0 0.0
  %4000 = vmatpush1.msra.mxu0 0.0
  %4001 = vmatprep.subr.mxu0 0.0
  %4002 = vmatpush1.msra.mxu0 0.0
  %4003 = vmatprep.subr.mxu0 0.0
  %4004 = vmatpush1.msra.mxu0 0.0
  %4005 = vmatprep.subr.mxu0 0.0
  %4006 = vmatpush1.msra.mxu0 0.0
  %4007 = vmatprep.subr.mxu0 0.0
  %4008 = vmatpush1.msra.mxu0 0.0
  %4009 = vmatprep.subr.mxu0 0.0
  %4010 = vmatpush1.msra.mxu0 0.0
  %4011 = vmatprep.subr.mxu0 0.0
  %4012 = vmatpush1.msra.mxu0 0.0
  %4013 = vmatprep.subr.mxu0 0.0
  %4014 = vmatpush1.msra.mxu0 0.0
  %4015 = vmatprep.subr.mxu0 0.0
  %4016 = vmatpush1.msra.mxu0 0.0
  %4017 = vmatprep.subr.mxu0 0.0
  %4018 = vmatpush1.msra.mxu0 0.0
  %4019 = vmatprep.subr.mxu0 0.0
  %4020 = vmatpush1.msra.mxu0 0.0
  %4021 = vmatprep.subr.mxu0 0.0
  %4022 = vmatpush1.msra.mxu0 0.0
  %4023 = vmatprep.subr.mxu0 0.0
  %4024 = vmatpush1.msra.mxu0 0.0
  %4025 = vmatprep.subr.mxu0 0.0
  %4026 = vmatpush1.msra.mxu0 0.0
  %4027 = vmatprep.subr.mxu0 0.0
  %4028 = vmatpush1.msra.mxu0 0.0
  %4029 = vmatprep.mubr.f32.mxu0 0.0
  %v4030 = vand.u32 %v3785, 4294901760
  %v4031 = vsub.f32 %v3785, %v4030
  %4032 = vmatmul.mubr.f32.gmra.mrb[0].mxu0 %v4031
  %v4033 = vpop.f32.mrb[0].mxu0
  %v4034 = vadd.f32 %v3954, %v4033
  %v4035 = vpop.f32.mrb[0].mxu0
  %4036 = vdwg.mxu0
  %4037 = vmatprep.subr.mxu0 0.0
  %v4038 = vand.u32 %v3780, 4294901760
  %4039 = vmatpush1.msra.mxu0 %v4038
  %4040 = vmatprep.subr.mxu0 0.0
  %v4041 = vand.u32 %v3781, 4294901760
  %4042 = vmatpush1.msra.mxu0 %v4041
  %4043 = vmatprep.subr.mxu0 0.0
  %v4044 = vand.u32 %v3782, 4294901760
  %4045 = vmatpush1.msra.mxu0 %v4044
  %4046 = vmatprep.subr.mxu0 0.0
  %v4047 = vand.u32 %v3783, 4294901760
  %4048 = vmatpush1.msra.mxu0 %v4047
  %4049 = vmatprep.subr.mxu0 0.0
  %4050 = vmatpush1.msra.mxu0 0.0
  %4051 = vmatprep.subr.mxu0 0.0
  %4052 = vmatpush1.msra.mxu0 0.0
  %4053 = vmatprep.subr.mxu0 0.0
  %4054 = vmatpush1.msra.mxu0 0.0
  %4055 = vmatprep.subr.mxu0 0.0
  %4056 = vmatpush1.msra.mxu0 0.0
  %4057 = vmatprep.subr.mxu0 0.0
  %4058 = vmatpush1.msra.mxu0 0.0
  %4059 = vmatprep.subr.mxu0 0.0
  %4060 = vmatpush1.msra.mxu0 0.0
  %4061 = vmatprep.subr.mxu0 0.0
  %4062 = vmatpush1.msra.mxu0 0.0
  %4063 = vmatprep.subr.mxu0 0.0
  %4064 = vmatpush1.msra.mxu0 0.0
  %4065 = vmatprep.subr.mxu0 0.0
  %4066 = vmatpush1.msra.mxu0 0.0
  %4067 = vmatprep.subr.mxu0 0.0
  %4068 = vmatpush1.msra.mxu0 0.0
  %4069 = vmatprep.subr.mxu0 0.0
  %4070 = vmatpush1.msra.mxu0 0.0
  %4071 = vmatprep.subr.mxu0 0.0
  %4072 = vmatpush1.msra.mxu0 0.0
  %4073 = vmatprep.subr.mxu0 0.0
  %4074 = vmatpush1.msra.mxu0 0.0
  %4075 = vmatprep.subr.mxu0 0.0
  %4076 = vmatpush1.msra.mxu0 0.0
  %4077 = vmatprep.subr.mxu0 0.0
  %4078 = vmatpush1.msra.mxu0 0.0
  %4079 = vmatprep.subr.mxu0 0.0
  %4080 = vmatpush1.msra.mxu0 0.0
  %4081 = vmatprep.subr.mxu0 0.0
  %4082 = vmatpush1.msra.mxu0 0.0
  %4083 = vmatprep.subr.mxu0 0.0
  %4084 = vmatpush1.msra.mxu0 0.0
  %4085 = vmatprep.subr.mxu0 0.0
  %4086 = vmatpush1.msra.mxu0 0.0
  %4087 = vmatprep.subr.mxu0 0.0
  %4088 = vmatpush1.msra.mxu0 0.0
  %4089 = vmatprep.subr.mxu0 0.0
  %4090 = vmatpush1.msra.mxu0 0.0
  %4091 = vmatprep.subr.mxu0 0.0
  %4092 = vmatpush1.msra.mxu0 0.0
  %4093 = vmatprep.subr.mxu0 0.0
  %4094 = vmatpush1.msra.mxu0 0.0
  %4095 = vmatprep.subr.mxu0 0.0
  %4096 = vmatpush1.msra.mxu0 0.0
  %4097 = vmatprep.subr.mxu0 0.0
  %4098 = vmatpush1.msra.mxu0 0.0
  %4099 = vmatprep.subr.mxu0 0.0
  %4100 = vmatpush1.msra.mxu0 0.0
  %4101 = vmatprep.subr.mxu0 0.0
  %4102 = vmatpush1.msra.mxu0 0.0
  %4103 = vmatprep.subr.mxu0 0.0
  %4104 = vmatpush1.msra.mxu0 0.0
  %4105 = vmatprep.mubr.f32.mxu0 0.0
  %v4106 = vand.u32 %v3785, 4294901760
  %v4107 = vsub.f32 %v3785, %v4106
  %v4108 = vand.u32 %v4107, 4294901760
  %4109 = vmatmul.mubr.f32.gmra.mrb[0].mxu0 %v4108
  %v4110 = vpop.f32.mrb[0].mxu0
  %v4111 = vadd.f32 %v4034, %v4110
  %v4112 = vpop.f32.mrb[0].mxu0
  %4113 = vdwg.mxu0
  %4114 = vmatprep.subr.mxu0 0.0
  %v4115 = vand.u32 %v3780, 4294901760
  %v4116 = vsub.f32 %v3780, %v4115
  %v4117 = vand.u32 %v4116, 4294901760
  %4118 = vmatpush1.msra.mxu0 %v4117
  %4119 = vmatprep.subr.mxu0 0.0
  %v4120 = vand.u32 %v3781, 4294901760
  %v4121 = vsub.f32 %v3781, %v4120
  %v4122 = vand.u32 %v4121, 4294901760
  %4123 = vmatpush1.msra.mxu0 %v4122
  %4124 = vmatprep.subr.mxu0 0.0
  %v4125 = vand.u32 %v3782, 4294901760
  %v4126 = vsub.f32 %v3782, %v4125
  %v4127 = vand.u32 %v4126, 4294901760
  %4128 = vmatpush1.msra.mxu0 %v4127
  %4129 = vmatprep.subr.mxu0 0.0
  %v4130 = vand.u32 %v3783, 4294901760
  %v4131 = vsub.f32 %v3783, %v4130
  %v4132 = vand.u32 %v4131, 4294901760
  %4133 = vmatpush1.msra.mxu0 %v4132
  %4134 = vmatprep.subr.mxu0 0.0
  %4135 = vmatpush1.msra.mxu0 0.0
  %4136 = vmatprep.subr.mxu0 0.0
  %4137 = vmatpush1.msra.mxu0 0.0
  %4138 = vmatprep.subr.mxu0 0.0
  %4139 = vmatpush1.msra.mxu0 0.0
  %4140 = vmatprep.subr.mxu0 0.0
  %4141 = vmatpush1.msra.mxu0 0.0
  %4142 = vmatprep.subr.mxu0 0.0
  %4143 = vmatpush1.msra.mxu0 0.0
  %4144 = vmatprep.subr.mxu0 0.0
  %4145 = vmatpush1.msra.mxu0 0.0
  %4146 = vmatprep.subr.mxu0 0.0
  %4147 = vmatpush1.msra.mxu0 0.0
  %4148 = vmatprep.subr.mxu0 0.0
  %4149 = vmatpush1.msra.mxu0 0.0
  %4150 = vmatprep.subr.mxu0 0.0
  %4151 = vmatpush1.msra.mxu0 0.0
  %4152 = vmatprep.subr.mxu0 0.0
  %4153 = vmatpush1.msra.mxu0 0.0
  %4154 = vmatprep.subr.mxu0 0.0
  %4155 = vmatpush1.msra.mxu0 0.0
  %4156 = vmatprep.subr.mxu0 0.0
  %4157 = vmatpush1.msra.mxu0 0.0
  %4158 = vmatprep.subr.mxu0 0.0
  %4159 = vmatpush1.msra.mxu0 0.0
  %4160 = vmatprep.subr.mxu0 0.0
  %4161 = vmatpush1.msra.mxu0 0.0
  %4162 = vmatprep.subr.mxu0 0.0
  %4163 = vmatpush1.msra.mxu0 0.0
  %4164 = vmatprep.subr.mxu0 0.0
  %4165 = vmatpush1.msra.mxu0 0.0
  %4166 = vmatprep.subr.mxu0 0.0
  %4167 = vmatpush1.msra.mxu0 0.0
  %4168 = vmatprep.subr.mxu0 0.0
  %4169 = vmatpush1.msra.mxu0 0.0
  %4170 = vmatprep.subr.mxu0 0.0
  %4171 = vmatpush1.msra.mxu0 0.0
  %4172 = vmatprep.subr.mxu0 0.0
  %4173 = vmatpush1.msra.mxu0 0.0
  %4174 = vmatprep.subr.mxu0 0.0
  %4175 = vmatpush1.msra.mxu0 0.0
  %4176 = vmatprep.subr.mxu0 0.0
  %4177 = vmatpush1.msra.mxu0 0.0
  %4178 = vmatprep.subr.mxu0 0.0
  %4179 = vmatpush1.msra.mxu0 0.0
  %4180 = vmatprep.subr.mxu0 0.0
  %4181 = vmatpush1.msra.mxu0 0.0
  %4182 = vmatprep.subr.mxu0 0.0
  %4183 = vmatpush1.msra.mxu0 0.0
  %4184 = vmatprep.subr.mxu0 0.0
  %4185 = vmatpush1.msra.mxu0 0.0
  %4186 = vmatprep.subr.mxu0 0.0
  %4187 = vmatpush1.msra.mxu0 0.0
  %4188 = vmatprep.subr.mxu0 0.0
  %4189 = vmatpush1.msra.mxu0 0.0
  %4190 = vmatprep.mubr.f32.mxu0 0.0
  %v4191 = vand.u32 %v3785, 4294901760
  %4192 = vmatmul.mubr.f32.gmra.mrb[0].mxu0 %v4191
  %v4193 = vpop.f32.mrb[0].mxu0
  %v4194 = vadd.f32 %v4111, %v4193
  %v4195 = vpop.f32.mrb[0].mxu0
  %4196 = vdwg.mxu0
  %4197 = vmatprep.subr.mxu0 0.0
  %v4198 = vand.u32 %v3780, 4294901760
  %4199 = vmatpush1.msra.mxu0 %v4198
  %4200 = vmatprep.subr.mxu0 0.0
  %v4201 = vand.u32 %v3781, 4294901760
  %4202 = vmatpush1.msra.mxu0 %v4201
  %4203 = vmatprep.subr.mxu0 0.0
  %v4204 = vand.u32 %v3782, 4294901760
  %4205 = vmatpush1.msra.mxu0 %v4204
  %4206 = vmatprep.subr.mxu0 0.0
  %v4207 = vand.u32 %v3783, 4294901760
  %4208 = vmatpush1.msra.mxu0 %v4207
  %4209 = vmatprep.subr.mxu0 0.0
  %4210 = vmatpush1.msra.mxu0 0.0
  %4211 = vmatprep.subr.mxu0 0.0
  %4212 = vmatpush1.msra.mxu0 0.0
  %4213 = vmatprep.subr.mxu0 0.0
  %4214 = vmatpush1.msra.mxu0 0.0
  %4215 = vmatprep.subr.mxu0 0.0
  %4216 = vmatpush1.msra.mxu0 0.0
  %4217 = vmatprep.subr.mxu0 0.0
  %4218 = vmatpush1.msra.mxu0 0.0
  %4219 = vmatprep.subr.mxu0 0.0
  %4220 = vmatpush1.msra.mxu0 0.0
  %4221 = vmatprep.subr.mxu0 0.0
  %4222 = vmatpush1.msra.mxu0 0.0
  %4223 = vmatprep.subr.mxu0 0.0
  %4224 = vmatpush1.msra.mxu0 0.0
  %4225 = vmatprep.subr.mxu0 0.0
  %4226 = vmatpush1.msra.mxu0 0.0
  %4227 = vmatprep.subr.mxu0 0.0
  %4228 = vmatpush1.msra.mxu0 0.0
  %4229 = vmatprep.subr.mxu0 0.0
  %4230 = vmatpush1.msra.mxu0 0.0
  %4231 = vmatprep.subr.mxu0 0.0
  %4232 = vmatpush1.msra.mxu0 0.0
  %4233 = vmatprep.subr.mxu0 0.0
  %4234 = vmatpush1.msra.mxu0 0.0
  %4235 = vmatprep.subr.mxu0 0.0
  %4236 = vmatpush1.msra.mxu0 0.0
  %4237 = vmatprep.subr.mxu0 0.0
  %4238 = vmatpush1.msra.mxu0 0.0
  %4239 = vmatprep.subr.mxu0 0.0
  %4240 = vmatpush1.msra.mxu0 0.0
  %4241 = vmatprep.subr.mxu0 0.0
  %4242 = vmatpush1.msra.mxu0 0.0
  %4243 = vmatprep.subr.mxu0 0.0
  %4244 = vmatpush1.msra.mxu0 0.0
  %4245 = vmatprep.subr.mxu0 0.0
  %4246 = vmatpush1.msra.mxu0 0.0
  %4247 = vmatprep.subr.mxu0 0.0
  %4248 = vmatpush1.msra.mxu0 0.0
  %4249 = vmatprep.subr.mxu0 0.0
  %4250 = vmatpush1.msra.mxu0 0.0
  %4251 = vmatprep.subr.mxu0 0.0
  %4252 = vmatpush1.msra.mxu0 0.0
  %4253 = vmatprep.subr.mxu0 0.0
  %4254 = vmatpush1.msra.mxu0 0.0
  %4255 = vmatprep.subr.mxu0 0.0
  %4256 = vmatpush1.msra.mxu0 0.0
  %4257 = vmatprep.subr.mxu0 0.0
  %4258 = vmatpush1.msra.mxu0 0.0
  %4259 = vmatprep.subr.mxu0 0.0
  %4260 = vmatpush1.msra.mxu0 0.0
  %4261 = vmatprep.subr.mxu0 0.0
  %4262 = vmatpush1.msra.mxu0 0.0
  %4263 = vmatprep.subr.mxu0 0.0
  %4264 = vmatpush1.msra.mxu0 0.0
  %4265 = vmatprep.mubr.f32.mxu0 0.0
  %v4266 = vand.u32 %v3785, 4294901760
  %4267 = vmatmul.mubr.f32.gmra.mrb[0].mxu0 %v4266
  %v4268 = vpop.f32.mrb[0].mxu0
  %v4269 = vadd.f32 %v4194, %v4268
  %v4270 = vpop.f32.mrb[0].mxu0
  %4271 = vdwg.mxu0
  %v4272 = vadd.f32 %v3778, %v4269
  %v4273 = vxor.u32 %v4272, 2147483648
  %v4274 = vmul.f32 %v4273, 1.442695
  %v4275 = vpow.pop %v4274
  %v4276 = vadd.f32 %v4275, 1.0
  %v4277 = vrcp.pop %v4276
  %v4278 = vmul.f32 1.0, %v4277
  %v4279 = vtanh.pop %v4272
  %v4280 = vld [vmem:[#allocation3] sm:$0xf]
  %4282 = vrot.lane.b32.xlu0 %v4280, 32
  %v4283 = vpop.permute.xlu0 %4282
  %v4285 = vmul.f32 %v4278, %v4283
  %4287 = vrot.lane.b32.xlu0 %v4279, 64
  %v4288 = vpop.permute.xlu0 %4287
  %v4290 = vmul.f32 %v4278, %v4288
  %4292 = vrot.lane.b32.xlu0 %v4290, 32
  %v4293 = vpop.permute.xlu0 %4292
  %v4295 = vadd.f32 %v4285, %v4293
  %v4296 = vtanh.pop %v4295
  %4298 = vrot.lane.b32.xlu0 %v4296, 64
  %v4299 = vpop.permute.xlu0 %4298
  %v4301 = vmul.f32 %v4278, %v4299
  %4303 = vrot.lane.b32.xlu0 %v4295, 96
  %v4304 = vpop.permute.xlu0 %4303
  %4306 = vst.msk [vmem:[#allocation3] sm:$0xf] %vm547, %v4304
  %4308 = vrot.lane.b32.xlu0 %v4301, 32
  %v4309 = vpop.permute.xlu0 %4308
  %4311 = vst.msk [vmem:[#allocation2] sm:$0xf] %vm547, %v4309
  %s4312 = scalar_lea.vmem %s2, 28
  %4313 = vst.msk [vmem:[%s4312] sm:$0xf] %vm547, %v4309
  // Predicated region
  $region14: #{_lambda_.10} parent=0 // pred_check
    _
  $region15: #{_lambda_.10} parent=0 // pred_check_branch
    %4315 = sbr.rel (0) target = $region17
  $region16: #{_lambda_.10} parent=0 // pred_region
    _
  $region17: #{_lambda_.10} parent=0 // pred_fallthru
    _
  // Predicated region
  $region18: #{_lambda_.10} parent=0 // pred_check
    _
  $region19: #{_lambda_.10} parent=0 // pred_check_branch
    %4317 = sbr.rel (0) target = $region21
  $region20: #{_lambda_.10} parent=0 // pred_region
    _
  $region21: #{_lambda_.10} parent=0 // pred_fallthru
    _

</llo_original>
